<compile_context>
chip_gen: v7x
topology: tpu7x:2x2x1
jax: 0.10.0
libtpu: 0.0.40
codegen_flags: <defaults>
</compile_context>

<pallas_src>
import functools

import numpy as np

import jax
import jax.numpy as jnp
from jax.experimental import pallas as pl
from jax.experimental.pallas import tpu as pltpu


# ----------------------------------------------------------------------------
# Fused per-stage kernel
# ----------------------------------------------------------------------------
def _stage_kernel(x_ref, enc_ref, s_ref, wup_ref, bup_ref,
                  w1_ref, b1_ref, w2_ref, b2_ref, o_ref, *, W):
    """Fused decoder stage, one batch element per grid step.

    Layout: channels on sublanes, flattened spatial (Ho*Wo) on the lane axis.
      x_ref   : (1, Cin, H*W)      bf16  pre-upsample activations
      enc_ref : (1, Cenc, Ho*Wo)   bf16  skip connection
      s_ref   : (4, H*W, Ho*Wo)    bf16  constant 0/1 phase-scatter matrices
      wup_ref : (4, Cout, Cin)     bf16  ConvTranspose weights, phase major
      bup_ref : (Cout, 1)          f32
      w1_ref  : (3, Cout, 3*Ccat)  bf16  conv1 weights, split per kernel row dh
      w2_ref  : (3, Cout, 3*Cout)  bf16
      b1/b2   : (Cout, 1)          f32
      o_ref   : (1, Cout, Ho*Wo)
    """
    cout = o_ref.shape[1]
    HoWo = o_ref.shape[2]
    Wo = 2 * W
    cdt = x_ref.dtype  # compute (storage) dtype, bf16 by default

    # ---- ConvTranspose2d(k=2, s=2) + 2x2 pixel interleave, all in VMEM ----
    # Per phase p = dh*2+dw:  t_p = Wup_p @ x + b   (f32 accumulation),
    # then scatter t_p's columns to their interleaved (2y+dh, 2x+dw)
    # destinations with a constant 0/1 matmul (exactly one 1 per column).
    up_acc = jnp.zeros((cout, HoWo), jnp.float32)
    for p in range(4):
        t_p = jnp.dot(wup_ref[p], x_ref[0],
                      preferred_element_type=jnp.float32) + bup_ref[...]
        up_acc = up_acc + jnp.dot(t_p.astype(cdt), s_ref[p],
                                  preferred_element_type=jnp.float32)
    up = up_acc.astype(cdt)

    # ---- channel concat (stays in VMEM, never written to HBM) ----
    cat = jnp.concatenate([up, enc_ref[0].astype(cdt)], axis=0)

    # Masks cancelling the horizontal wrap-around of the flat row-major layout.
    xpos = jax.lax.broadcasted_iota(jnp.int32, (1, HoWo), 1) % Wo
    mask_l = xpos != 0           # left neighbour valid  (tap dw == 0)
    mask_r = xpos != (Wo - 1)    # right neighbour valid (tap dw == 2)
    zero = jnp.zeros((), cdt)
    margin = Wo + 1              # zero margin on each side of the flat image

    def conv3x3_relu(img, w_ref_, b_ref_):
        # img: [C, HoWo] (compute dtype) -> ReLU(conv3x3_same(img)) in f32.
        c = img.shape[0]
        co = w_ref_.shape[1]
        z = jnp.zeros((c, margin), cdt)
        padded = jnp.concatenate([z, img, z], axis=1)   # [C, HoWo + 2*Wo + 2]
        acc = jnp.zeros((co, HoWo), jnp.float32)
        for dh in range(3):                              # per-kernel-row matmul
            slabs = []
            for dw in range(3):
                s = dh * Wo + dw
                slab = padded[:, s:s + HoWo]             # constant lane shift
                if dw == 0:
                    slab = jnp.where(mask_l, slab, zero)
                elif dw == 2:
                    slab = jnp.where(mask_r, slab, zero)
                slabs.append(slab)
            col_dh = jnp.concatenate(slabs, axis=0)      # [3C, HoWo], K = 3C
            acc = acc + jnp.dot(w_ref_[dh], col_dh,
                                preferred_element_type=jnp.float32)
        return jnp.maximum(acc + b_ref_[...], 0.0)       # f32 epilogue

    h1 = conv3x3_relu(cat, w1_ref, b1_ref).astype(cdt)   # stays in VMEM
    h2 = conv3x3_relu(h1, w2_ref, b2_ref)
    o_ref[0] = h2.astype(o_ref.dtype)


# ----------------------------------------------------------------------------
# pallas_call wrapper
# ----------------------------------------------------------------------------
def _fused_stage(x_flat, enc_flat, s_all, w_up, b_up, w1, b1, w2, b2,
                 *, W, out_dtype):
    n, cin, hw = x_flat.shape
    cenc, howo = enc_flat.shape[1], enc_flat.shape[2]
    cout = w1.shape[1]
    kern = functools.partial(_stage_kernel, W=W)
    return pl.pallas_call(
        kern,
        out_shape=jax.ShapeDtypeStruct((n, cout, howo), out_dtype),
        grid=(n,),
        in_specs=[
            pl.BlockSpec((1, cin, hw), lambda i: (i, 0, 0)),
            pl.BlockSpec((1, cenc, howo), lambda i: (i, 0, 0)),
            pl.BlockSpec(s_all.shape, lambda i: (0, 0, 0)),
            pl.BlockSpec(w_up.shape, lambda i: (0, 0, 0)),
            pl.BlockSpec(b_up.shape, lambda i: (0, 0)),
            pl.BlockSpec(w1.shape, lambda i: (0, 0, 0)),
            pl.BlockSpec(b1.shape, lambda i: (0, 0)),
            pl.BlockSpec(w2.shape, lambda i: (0, 0, 0)),
            pl.BlockSpec(b2.shape, lambda i: (0, 0)),
        ],
        out_specs=pl.BlockSpec((1, cout, howo), lambda i: (i, 0, 0)),
        compiler_params=pltpu.CompilerParams(dimension_semantics=("parallel",)),
    )(x_flat, enc_flat, s_all, w_up, b_up, w1, b1, w2, b2)


# ----------------------------------------------------------------------------
# Host-side constant: 0/1 phase-scatter matrices for the 2x2 pixel interleave
# ----------------------------------------------------------------------------
def _phase_scatter_matrices(h, w):
    """S[p, y*w+x, (2y+dh)*(2w) + 2x+dw] = 1, with p = dh*2 + dw (numpy)."""
    wo = 2 * w
    yy, xx = np.meshgrid(np.arange(h), np.arange(w), indexing="ij")
    src = (yy * w + xx).reshape(-1)
    s = np.zeros((4, h * w, 4 * h * w), np.float32)
    for dh in range(2):
        for dw in range(2):
            dst = ((2 * yy + dh) * wo + (2 * xx + dw)).reshape(-1)
            s[dh * 2 + dw, src, dst] = 1.0
    return s


# ----------------------------------------------------------------------------
# Decoder parameters + forward (matches the PyTorch module semantics)
# ----------------------------------------------------------------------------
def init_decoder_params(key, channels):
    params = []
    for i in range(len(channels) - 1):
        cin, cout = channels[i], channels[i + 1]
        key, *ks = jax.random.split(key, 7)
        params.append({
            # ConvTranspose2d(cin, cout, 2, 2): weight [Cin, Cout, 2, 2]
            "up_w": 0.1 * jax.random.normal(ks[0], (cin, cout, 2, 2), jnp.float32),
            "up_b": 0.1 * jax.random.normal(ks[1], (cout,), jnp.float32),
            # ConvBlock: Conv2d(cin, cout, 3, 'same'), Conv2d(cout, cout, 3, 'same')
            "c1_w": 0.1 * jax.random.normal(ks[2], (cout, cin, 3, 3), jnp.float32),
            "c1_b": 0.1 * jax.random.normal(ks[3], (cout,), jnp.float32),
            "c2_w": 0.1 * jax.random.normal(ks[4], (cout, cout, 3, 3), jnp.float32),
            "c2_b": 0.1 * jax.random.normal(ks[5], (cout,), jnp.float32),
        })
    return params


def decoder_forward(params, x_nchw, encoder_features_nchw,
                    compute_dtype=jnp.bfloat16):
    """x: NCHW, encoder_features: list of NCHW (PyTorch convention)."""
    x = x_nchw
    n_stages = len(params)
    for idx, (stage, enc) in enumerate(zip(params, encoder_features_nchw)):
        n, cin, h, w = x.shape
        cout = stage["up_b"].shape[0]
        ho, wo = 2 * h, 2 * w
        cenc = enc.shape[1]

        x_flat = x.reshape(n, cin, h * w).astype(compute_dtype)
        enc_flat = enc.reshape(n, cenc, ho * wo).astype(compute_dtype)

        # ConvTranspose weight [Cin, Cout, 2, 2] -> phase-major [4, Cout, Cin]
        w_up = (jnp.transpose(stage["up_w"], (2, 3, 1, 0))
                .reshape(4, cout, cin).astype(compute_dtype))
        b_up = stage["up_b"].reshape(cout, 1).astype(jnp.float32)

        # Constant 0/1 phase-scatter matrices (2x2 pixel interleave on the MXU).
        s_all = jnp.asarray(_phase_scatter_matrices(h, w), compute_dtype)

        # Conv weights [Cout, C, 3, 3] -> per-kernel-row [3, Cout, 3*C],
        # columns ordered (dw, c) to match the in-kernel slab stacking.
        def conv_w(wt):
            co, ci = wt.shape[0], wt.shape[1]
            return (jnp.transpose(wt, (2, 0, 3, 1))        # (dh, o, dw, c)
                    .reshape(3, co, 3 * ci).astype(compute_dtype))
        w1 = conv_w(stage["c1_w"])
        w2 = conv_w(stage["c2_w"])
        b1 = stage["c1_b"].reshape(cout, 1).astype(jnp.float32)
        b2 = stage["c2_b"].reshape(cout, 1).astype(jnp.float32)

        out_dtype = jnp.float32 if idx == n_stages - 1 else compute_dtype
        y = _fused_stage(x_flat, enc_flat, s_all, w_up, b_up, w1, b1, w2, b2,
                         W=w, out_dtype=out_dtype)          # [N, Cout, Ho*Wo]
        x = y.reshape(n, cout, ho, wo)
    return x  # NCHW


# ----------------------------------------------------------------------------
# Pure-JAX reference (correctness check only, f32 / NCHW)
# ----------------------------------------------------------------------------
def _ref_conv3x3_relu(x, w, b):
    y = jax.lax.conv_general_dilated(
        x, w, window_strides=(1, 1), padding="SAME",
        dimension_numbers=("NCHW", "OIHW", "NCHW"))
    return jnp.maximum(y + b[None, :, None, None], 0.0)


def decoder_reference(params, x, encoder_features):
    for stage, enc in zip(params, encoder_features):
        n, cin, h, w = x.shape
        cout = stage["up_b"].shape[0]
        y = jnp.einsum("nchw,cokl->nohkwl", x, stage["up_w"])
        y = y.reshape(n, cout, 2 * h, 2 * w) + stage["up_b"][None, :, None, None]
        x = jnp.concatenate([y, enc], axis=1)
        x = _ref_conv3x3_relu(x, stage["c1_w"], stage["c1_b"])
        x = _ref_conv3x3_relu(x, stage["c2_w"], stage["c2_b"])
    return x


# ----------------------------------------------------------------------------
if __name__ == "__main__":
    # Small shapes consistent with the module (scaled-down U-Net channel pyramid).
    channels = (32, 16, 8)
    N, H, W = 2, 8, 8

    key = jax.random.PRNGKey(0)
    kp, kx, ke1, ke2 = jax.random.split(key, 4)
    params = init_decoder_params(kp, channels)

    x = jax.random.normal(kx, (N, channels[0], H, W), jnp.float32)            # [2,32,8,8]
    encoder_features = [
        jax.random.normal(ke1, (N, channels[1], 2 * H, 2 * W), jnp.float32),  # [2,16,16,16]
        jax.random.normal(ke2, (N, channels[2], 4 * H, 4 * W), jnp.float32),  # [2,8,32,32]
    ]

    out = jax.jit(decoder_forward)(params, x, encoder_features)
    out = jax.block_until_ready(out)

    assert out.shape == (N, channels[-1], 4 * H, 4 * W), out.shape
    ref = decoder_reference(params, x, encoder_features)
    # bf16 activations/weights at the MXU boundary (f32 accumulation) vs. an
    # f32 reference -> relaxed tolerance.
    err = float(jnp.max(jnp.abs(out - ref)))
    assert jnp.allclose(out, ref, atol=5e-2, rtol=5e-2), err

    print("KERNEL_OK")
</pallas_src>

<mosaic_0001>
module attributes {stable_mosaic.version = 11 : i64} {
  func.func @_stage_kernel(%arg0: i32, %arg1: memref<1x32x64xbf16, #tpu.memory_space<vmem>>, %arg2: memref<1x16x256xbf16, #tpu.memory_space<vmem>>, %arg3: memref<4x64x256xbf16, #tpu.memory_space<vmem>>, %arg4: memref<4x16x32xbf16, #tpu.memory_space<vmem>>, %arg5: memref<16x1xf32, #tpu.memory_space<vmem>>, %arg6: memref<3x16x96xbf16, #tpu.memory_space<vmem>>, %arg7: memref<16x1xf32, #tpu.memory_space<vmem>>, %arg8: memref<3x16x48xbf16, #tpu.memory_space<vmem>>, %arg9: memref<16x1xf32, #tpu.memory_space<vmem>>, %arg10: memref<1x16x256xbf16, #tpu.memory_space<vmem>>) attributes {dimension_semantics = [#tpu.dimension_semantics<parallel>], iteration_bounds = array<i64: 2>, scalar_prefetch = 0 : i64, scratch_operands = 0 : i64, tpu.core_type = #tpu.core_type<tc>, window_params = [{transform_indices = @transform_0, window_bounds = array<i64: 1, 32, 64>}, {transform_indices = @transform_1, window_bounds = array<i64: 1, 16, 256>}, {pipeline_mode = #tpu.pipeline_mode<synchronous>, transform_indices = @transform_2, window_bounds = array<i64: 4, 64, 256>}, {pipeline_mode = #tpu.pipeline_mode<synchronous>, transform_indices = @transform_3, window_bounds = array<i64: 4, 16, 32>}, {pipeline_mode = #tpu.pipeline_mode<synchronous>, transform_indices = @transform_4, window_bounds = array<i64: 16, 1>}, {pipeline_mode = #tpu.pipeline_mode<synchronous>, transform_indices = @transform_5, window_bounds = array<i64: 3, 16, 96>}, {pipeline_mode = #tpu.pipeline_mode<synchronous>, transform_indices = @transform_6, window_bounds = array<i64: 16, 1>}, {pipeline_mode = #tpu.pipeline_mode<synchronous>, transform_indices = @transform_7, window_bounds = array<i64: 3, 16, 48>}, {pipeline_mode = #tpu.pipeline_mode<synchronous>, transform_indices = @transform_8, window_bounds = array<i64: 16, 1>}, {transform_indices = @transform_9, window_bounds = array<i64: 1, 16, 256>}]} {
    %cst = arith.constant 0.000000e+00 : f32
    %0 = vector.broadcast %cst : f32 to vector<16x256xf32>
    %c0 = arith.constant 0 : index
    %c0_0 = arith.constant 0 : index
    %c0_1 = arith.constant 0 : index
    %1 = vector.load %arg4[%c0, %c0_0, %c0_1] : memref<4x16x32xbf16, #tpu.memory_space<vmem>>, vector<1x16x32xbf16>
    %2 = vector.shape_cast %1 : vector<1x16x32xbf16> to vector<16x32xbf16>
    %c0_2 = arith.constant 0 : index
    %c0_3 = arith.constant 0 : index
    %c0_4 = arith.constant 0 : index
    %3 = vector.load %arg1[%c0_2, %c0_3, %c0_4] : memref<1x32x64xbf16, #tpu.memory_space<vmem>>, vector<1x32x64xbf16>
    %4 = vector.shape_cast %3 : vector<1x32x64xbf16> to vector<32x64xbf16>
    %cst_5 = arith.constant dense<0.000000e+00> : vector<16x64xf32>
    %5 = tpu.matmul %2, %4, %cst_5 {dimension_numbers = #tpu.dot_dimension_numbers<[1], [0], [0], [1], [0, 0, 1, 1], [], []>} : vector<16x32xbf16>, vector<32x64xbf16>, vector<16x64xf32> -> vector<16x64xf32>
    %c0_6 = arith.constant 0 : index
    %c0_7 = arith.constant 0 : index
    %6 = vector.load %arg5[%c0_6, %c0_7] : memref<16x1xf32, #tpu.memory_space<vmem>>, vector<16x1xf32>
    %7 = vector.broadcast %6 : vector<16x1xf32> to vector<16x64xf32>
    %8 = arith.addf %5, %7 : vector<16x64xf32>
    %9 = arith.truncf %8 : vector<16x64xf32> to vector<16x64xbf16>
    %c0_8 = arith.constant 0 : index
    %c0_9 = arith.constant 0 : index
    %c0_10 = arith.constant 0 : index
    %10 = vector.load %arg3[%c0_8, %c0_9, %c0_10] : memref<4x64x256xbf16, #tpu.memory_space<vmem>>, vector<1x64x256xbf16>
    %11 = vector.shape_cast %10 : vector<1x64x256xbf16> to vector<64x256xbf16>
    %cst_11 = arith.constant dense<0.000000e+00> : vector<16x256xf32>
    %12 = tpu.matmul %9, %11, %cst_11 {dimension_numbers = #tpu.dot_dimension_numbers<[1], [0], [0], [1], [0, 0, 1, 1], [], []>} : vector<16x64xbf16>, vector<64x256xbf16>, vector<16x256xf32> -> vector<16x256xf32>
    %13 = arith.addf %0, %12 : vector<16x256xf32>
    %c1 = arith.constant 1 : index
    %c0_12 = arith.constant 0 : index
    %c0_13 = arith.constant 0 : index
    %14 = vector.load %arg4[%c1, %c0_12, %c0_13] : memref<4x16x32xbf16, #tpu.memory_space<vmem>>, vector<1x16x32xbf16>
    %15 = vector.shape_cast %14 : vector<1x16x32xbf16> to vector<16x32xbf16>
    %c0_14 = arith.constant 0 : index
    %c0_15 = arith.constant 0 : index
    %c0_16 = arith.constant 0 : index
    %16 = vector.load %arg1[%c0_14, %c0_15, %c0_16] : memref<1x32x64xbf16, #tpu.memory_space<vmem>>, vector<1x32x64xbf16>
    %17 = vector.shape_cast %16 : vector<1x32x64xbf16> to vector<32x64xbf16>
    %cst_17 = arith.constant dense<0.000000e+00> : vector<16x64xf32>
    %18 = tpu.matmul %15, %17, %cst_17 {dimension_numbers = #tpu.dot_dimension_numbers<[1], [0], [0], [1], [0, 0, 1, 1], [], []>} : vector<16x32xbf16>, vector<32x64xbf16>, vector<16x64xf32> -> vector<16x64xf32>
    %c0_18 = arith.constant 0 : index
    %c0_19 = arith.constant 0 : index
    %19 = vector.load %arg5[%c0_18, %c0_19] : memref<16x1xf32, #tpu.memory_space<vmem>>, vector<16x1xf32>
    %20 = vector.broadcast %19 : vector<16x1xf32> to vector<16x64xf32>
    %21 = arith.addf %18, %20 : vector<16x64xf32>
    %22 = arith.truncf %21 : vector<16x64xf32> to vector<16x64xbf16>
    %c1_20 = arith.constant 1 : index
    %c0_21 = arith.constant 0 : index
    %c0_22 = arith.constant 0 : index
    %23 = vector.load %arg3[%c1_20, %c0_21, %c0_22] : memref<4x64x256xbf16, #tpu.memory_space<vmem>>, vector<1x64x256xbf16>
    %24 = vector.shape_cast %23 : vector<1x64x256xbf16> to vector<64x256xbf16>
    %cst_23 = arith.constant dense<0.000000e+00> : vector<16x256xf32>
    %25 = tpu.matmul %22, %24, %cst_23 {dimension_numbers = #tpu.dot_dimension_numbers<[1], [0], [0], [1], [0, 0, 1, 1], [], []>} : vector<16x64xbf16>, vector<64x256xbf16>, vector<16x256xf32> -> vector<16x256xf32>
    %26 = arith.addf %13, %25 : vector<16x256xf32>
    %c2 = arith.constant 2 : index
    %c0_24 = arith.constant 0 : index
    %c0_25 = arith.constant 0 : index
    %27 = vector.load %arg4[%c2, %c0_24, %c0_25] : memref<4x16x32xbf16, #tpu.memory_space<vmem>>, vector<1x16x32xbf16>
    %28 = vector.shape_cast %27 : vector<1x16x32xbf16> to vector<16x32xbf16>
    %c0_26 = arith.constant 0 : index
    %c0_27 = arith.constant 0 : index
    %c0_28 = arith.constant 0 : index
    %29 = vector.load %arg1[%c0_26, %c0_27, %c0_28] : memref<1x32x64xbf16, #tpu.memory_space<vmem>>, vector<1x32x64xbf16>
    %30 = vector.shape_cast %29 : vector<1x32x64xbf16> to vector<32x64xbf16>
    %cst_29 = arith.constant dense<0.000000e+00> : vector<16x64xf32>
    %31 = tpu.matmul %28, %30, %cst_29 {dimension_numbers = #tpu.dot_dimension_numbers<[1], [0], [0], [1], [0, 0, 1, 1], [], []>} : vector<16x32xbf16>, vector<32x64xbf16>, vector<16x64xf32> -> vector<16x64xf32>
    %c0_30 = arith.constant 0 : index
    %c0_31 = arith.constant 0 : index
    %32 = vector.load %arg5[%c0_30, %c0_31] : memref<16x1xf32, #tpu.memory_space<vmem>>, vector<16x1xf32>
    %33 = vector.broadcast %32 : vector<16x1xf32> to vector<16x64xf32>
    %34 = arith.addf %31, %33 : vector<16x64xf32>
    %35 = arith.truncf %34 : vector<16x64xf32> to vector<16x64xbf16>
    %c2_32 = arith.constant 2 : index
    %c0_33 = arith.constant 0 : index
    %c0_34 = arith.constant 0 : index
    %36 = vector.load %arg3[%c2_32, %c0_33, %c0_34] : memref<4x64x256xbf16, #tpu.memory_space<vmem>>, vector<1x64x256xbf16>
    %37 = vector.shape_cast %36 : vector<1x64x256xbf16> to vector<64x256xbf16>
    %cst_35 = arith.constant dense<0.000000e+00> : vector<16x256xf32>
    %38 = tpu.matmul %35, %37, %cst_35 {dimension_numbers = #tpu.dot_dimension_numbers<[1], [0], [0], [1], [0, 0, 1, 1], [], []>} : vector<16x64xbf16>, vector<64x256xbf16>, vector<16x256xf32> -> vector<16x256xf32>
    %39 = arith.addf %26, %38 : vector<16x256xf32>
    %c3 = arith.constant 3 : index
    %c0_36 = arith.constant 0 : index
    %c0_37 = arith.constant 0 : index
    %40 = vector.load %arg4[%c3, %c0_36, %c0_37] : memref<4x16x32xbf16, #tpu.memory_space<vmem>>, vector<1x16x32xbf16>
    %41 = vector.shape_cast %40 : vector<1x16x32xbf16> to vector<16x32xbf16>
    %c0_38 = arith.constant 0 : index
    %c0_39 = arith.constant 0 : index
    %c0_40 = arith.constant 0 : index
    %42 = vector.load %arg1[%c0_38, %c0_39, %c0_40] : memref<1x32x64xbf16, #tpu.memory_space<vmem>>, vector<1x32x64xbf16>
    %43 = vector.shape_cast %42 : vector<1x32x64xbf16> to vector<32x64xbf16>
    %cst_41 = arith.constant dense<0.000000e+00> : vector<16x64xf32>
    %44 = tpu.matmul %41, %43, %cst_41 {dimension_numbers = #tpu.dot_dimension_numbers<[1], [0], [0], [1], [0, 0, 1, 1], [], []>} : vector<16x32xbf16>, vector<32x64xbf16>, vector<16x64xf32> -> vector<16x64xf32>
    %c0_42 = arith.constant 0 : index
    %c0_43 = arith.constant 0 : index
    %45 = vector.load %arg5[%c0_42, %c0_43] : memref<16x1xf32, #tpu.memory_space<vmem>>, vector<16x1xf32>
    %46 = vector.broadcast %45 : vector<16x1xf32> to vector<16x64xf32>
    %47 = arith.addf %44, %46 : vector<16x64xf32>
    %48 = arith.truncf %47 : vector<16x64xf32> to vector<16x64xbf16>
    %c3_44 = arith.constant 3 : index
    %c0_45 = arith.constant 0 : index
    %c0_46 = arith.constant 0 : index
    %49 = vector.load %arg3[%c3_44, %c0_45, %c0_46] : memref<4x64x256xbf16, #tpu.memory_space<vmem>>, vector<1x64x256xbf16>
    %50 = vector.shape_cast %49 : vector<1x64x256xbf16> to vector<64x256xbf16>
    %cst_47 = arith.constant dense<0.000000e+00> : vector<16x256xf32>
    %51 = tpu.matmul %48, %50, %cst_47 {dimension_numbers = #tpu.dot_dimension_numbers<[1], [0], [0], [1], [0, 0, 1, 1], [], []>} : vector<16x64xbf16>, vector<64x256xbf16>, vector<16x256xf32> -> vector<16x256xf32>
    %52 = arith.addf %39, %51 : vector<16x256xf32>
    %53 = arith.truncf %52 : vector<16x256xf32> to vector<16x256xbf16>
    %c0_48 = arith.constant 0 : index
    %c0_49 = arith.constant 0 : index
    %c0_50 = arith.constant 0 : index
    %54 = vector.load %arg2[%c0_48, %c0_49, %c0_50] : memref<1x16x256xbf16, #tpu.memory_space<vmem>>, vector<1x16x256xbf16>
    %55 = vector.shape_cast %54 : vector<1x16x256xbf16> to vector<16x256xbf16>
    %56 = tpu.concatenate %53, %55 in 0 : vector<16x256xbf16>, vector<16x256xbf16> -> vector<32x256xbf16>
    %57 = tpu.iota {dimensions = array<i32: 1>} : vector<1x256xi32>
    %c16_i32 = arith.constant 16 : i32
    %c0_i32 = arith.constant 0 : i32
    %58 = arith.cmpi eq, %c16_i32, %c0_i32 : i32
    %c1_i32 = arith.constant 1 : i32
    %59 = arith.select %58, %c1_i32, %c16_i32 : i32
    %60 = vector.broadcast %59 : i32 to vector<1x256xi32>
    %61 = arith.remsi %57, %60 : vector<1x256xi32>
    %c0_i32_51 = arith.constant 0 : i32
    %62 = vector.broadcast %c0_i32_51 : i32 to vector<1x256xi32>
    %63 = arith.cmpi ne, %61, %62 : vector<1x256xi32>
    %c0_i32_52 = arith.constant 0 : i32
    %64 = vector.broadcast %c0_i32_52 : i32 to vector<1x256xi32>
    %65 = arith.cmpi slt, %61, %64 : vector<1x256xi32>
    %c0_i32_53 = arith.constant 0 : i32
    %66 = arith.cmpi slt, %59, %c0_i32_53 : i32
    %67 = vector.broadcast %66 : i1 to vector<1x256xi1>
    %68 = vector.broadcast %67 : vector<1x256xi1> to vector<1x256xi1>
    %69 = arith.xori %65, %68 : vector<1x256xi1>
    %70 = arith.andi %69, %63 : vector<1x256xi1>
    %71 = vector.broadcast %59 : i32 to vector<1x256xi32>
    %72 = arith.addi %61, %71 : vector<1x256xi32>
    %73 = arith.select %70, %72, %61 : vector<1x256xi1>, vector<1x256xi32>
    %c0_i32_54 = arith.constant 0 : i32
    %74 = vector.broadcast %c0_i32_54 : i32 to vector<1x256xi32>
    %75 = arith.cmpi ne, %73, %74 : vector<1x256xi32>
    %c15_i32 = arith.constant 15 : i32
    %76 = vector.broadcast %c15_i32 : i32 to vector<1x256xi32>
    %77 = arith.cmpi ne, %73, %76 : vector<1x256xi32>
    %cst_55 = arith.constant 0.000000e+00 : bf16
    %78 = vector.broadcast %cst_55 : bf16 to vector<32x17xbf16>
    %79 = tpu.concatenate %78, %56, %78 in 1 : vector<32x17xbf16>, vector<32x256xbf16>, vector<32x17xbf16> -> vector<32x290xbf16>
    %cst_56 = arith.constant 0.000000e+00 : f32
    %80 = vector.broadcast %cst_56 : f32 to vector<16x256xf32>
    %81 = vector.extract_strided_slice %79 {offsets = [0, 0], sizes = [32, 256], strides = [1, 1]} : vector<32x290xbf16> to vector<32x256xbf16>
    %cst_57 = arith.constant 0.000000e+00 : bf16
    %82 = vector.shape_cast %75 : vector<1x256xi1> to vector<1x256xi1>
    %83 = vector.broadcast %82 : vector<1x256xi1> to vector<32x256xi1>
    %84 = vector.broadcast %cst_57 : bf16 to vector<32x256xbf16>
    %85 = arith.select %83, %81, %84 : vector<32x256xi1>, vector<32x256xbf16>
    %86 = vector.extract_strided_slice %79 {offsets = [0, 1], sizes = [32, 256], strides = [1, 1]} : vector<32x290xbf16> to vector<32x256xbf16>
    %87 = vector.extract_strided_slice %79 {offsets = [0, 2], sizes = [32, 256], strides = [1, 1]} : vector<32x290xbf16> to vector<32x256xbf16>
    %cst_58 = arith.constant 0.000000e+00 : bf16
    %88 = vector.shape_cast %77 : vector<1x256xi1> to vector<1x256xi1>
    %89 = vector.broadcast %88 : vector<1x256xi1> to vector<32x256xi1>
    %90 = vector.broadcast %cst_58 : bf16 to vector<32x256xbf16>
    %91 = arith.select %89, %87, %90 : vector<32x256xi1>, vector<32x256xbf16>
    %92 = tpu.concatenate %85, %86, %91 in 0 : vector<32x256xbf16>, vector<32x256xbf16>, vector<32x256xbf16> -> vector<96x256xbf16>
    %c0_59 = arith.constant 0 : index
    %c0_60 = arith.constant 0 : index
    %c0_61 = arith.constant 0 : index
    %93 = vector.load %arg6[%c0_59, %c0_60, %c0_61] : memref<3x16x96xbf16, #tpu.memory_space<vmem>>, vector<1x16x96xbf16>
    %94 = vector.shape_cast %93 : vector<1x16x96xbf16> to vector<16x96xbf16>
    %cst_62 = arith.constant dense<0.000000e+00> : vector<16x256xf32>
    %95 = tpu.matmul %94, %92, %cst_62 {dimension_numbers = #tpu.dot_dimension_numbers<[1], [0], [0], [1], [0, 0, 1, 1], [], []>} : vector<16x96xbf16>, vector<96x256xbf16>, vector<16x256xf32> -> vector<16x256xf32>
    %96 = arith.addf %80, %95 : vector<16x256xf32>
    %97 = vector.extract_strided_slice %79 {offsets = [0, 16], sizes = [32, 256], strides = [1, 1]} : vector<32x290xbf16> to vector<32x256xbf16>
    %cst_63 = arith.constant 0.000000e+00 : bf16
    %98 = vector.shape_cast %75 : vector<1x256xi1> to vector<1x256xi1>
    %99 = vector.broadcast %98 : vector<1x256xi1> to vector<32x256xi1>
    %100 = vector.broadcast %cst_63 : bf16 to vector<32x256xbf16>
    %101 = arith.select %99, %97, %100 : vector<32x256xi1>, vector<32x256xbf16>
    %102 = vector.extract_strided_slice %79 {offsets = [0, 17], sizes = [32, 256], strides = [1, 1]} : vector<32x290xbf16> to vector<32x256xbf16>
    %103 = vector.extract_strided_slice %79 {offsets = [0, 18], sizes = [32, 256], strides = [1, 1]} : vector<32x290xbf16> to vector<32x256xbf16>
    %cst_64 = arith.constant 0.000000e+00 : bf16
    %104 = vector.shape_cast %77 : vector<1x256xi1> to vector<1x256xi1>
    %105 = vector.broadcast %104 : vector<1x256xi1> to vector<32x256xi1>
    %106 = vector.broadcast %cst_64 : bf16 to vector<32x256xbf16>
    %107 = arith.select %105, %103, %106 : vector<32x256xi1>, vector<32x256xbf16>
    %108 = tpu.concatenate %101, %102, %107 in 0 : vector<32x256xbf16>, vector<32x256xbf16>, vector<32x256xbf16> -> vector<96x256xbf16>
    %c1_65 = arith.constant 1 : index
    %c0_66 = arith.constant 0 : index
    %c0_67 = arith.constant 0 : index
    %109 = vector.load %arg6[%c1_65, %c0_66, %c0_67] : memref<3x16x96xbf16, #tpu.memory_space<vmem>>, vector<1x16x96xbf16>
    %110 = vector.shape_cast %109 : vector<1x16x96xbf16> to vector<16x96xbf16>
    %cst_68 = arith.constant dense<0.000000e+00> : vector<16x256xf32>
    %111 = tpu.matmul %110, %108, %cst_68 {dimension_numbers = #tpu.dot_dimension_numbers<[1], [0], [0], [1], [0, 0, 1, 1], [], []>} : vector<16x96xbf16>, vector<96x256xbf16>, vector<16x256xf32> -> vector<16x256xf32>
    %112 = arith.addf %96, %111 : vector<16x256xf32>
    %113 = vector.extract_strided_slice %79 {offsets = [0, 32], sizes = [32, 256], strides = [1, 1]} : vector<32x290xbf16> to vector<32x256xbf16>
    %cst_69 = arith.constant 0.000000e+00 : bf16
    %114 = vector.shape_cast %75 : vector<1x256xi1> to vector<1x256xi1>
    %115 = vector.broadcast %114 : vector<1x256xi1> to vector<32x256xi1>
    %116 = vector.broadcast %cst_69 : bf16 to vector<32x256xbf16>
    %117 = arith.select %115, %113, %116 : vector<32x256xi1>, vector<32x256xbf16>
    %118 = vector.extract_strided_slice %79 {offsets = [0, 33], sizes = [32, 256], strides = [1, 1]} : vector<32x290xbf16> to vector<32x256xbf16>
    %119 = vector.extract_strided_slice %79 {offsets = [0, 34], sizes = [32, 256], strides = [1, 1]} : vector<32x290xbf16> to vector<32x256xbf16>
    %cst_70 = arith.constant 0.000000e+00 : bf16
    %120 = vector.shape_cast %77 : vector<1x256xi1> to vector<1x256xi1>
    %121 = vector.broadcast %120 : vector<1x256xi1> to vector<32x256xi1>
    %122 = vector.broadcast %cst_70 : bf16 to vector<32x256xbf16>
    %123 = arith.select %121, %119, %122 : vector<32x256xi1>, vector<32x256xbf16>
    %124 = tpu.concatenate %117, %118, %123 in 0 : vector<32x256xbf16>, vector<32x256xbf16>, vector<32x256xbf16> -> vector<96x256xbf16>
    %c2_71 = arith.constant 2 : index
    %c0_72 = arith.constant 0 : index
    %c0_73 = arith.constant 0 : index
    %125 = vector.load %arg6[%c2_71, %c0_72, %c0_73] : memref<3x16x96xbf16, #tpu.memory_space<vmem>>, vector<1x16x96xbf16>
    %126 = vector.shape_cast %125 : vector<1x16x96xbf16> to vector<16x96xbf16>
    %cst_74 = arith.constant dense<0.000000e+00> : vector<16x256xf32>
    %127 = tpu.matmul %126, %124, %cst_74 {dimension_numbers = #tpu.dot_dimension_numbers<[1], [0], [0], [1], [0, 0, 1, 1], [], []>} : vector<16x96xbf16>, vector<96x256xbf16>, vector<16x256xf32> -> vector<16x256xf32>
    %128 = arith.addf %112, %127 : vector<16x256xf32>
    %c0_75 = arith.constant 0 : index
    %c0_76 = arith.constant 0 : index
    %129 = vector.load %arg7[%c0_75, %c0_76] : memref<16x1xf32, #tpu.memory_space<vmem>>, vector<16x1xf32>
    %130 = vector.broadcast %129 : vector<16x1xf32> to vector<16x256xf32>
    %131 = arith.addf %128, %130 : vector<16x256xf32>
    %cst_77 = arith.constant 0.000000e+00 : f32
    %132 = vector.broadcast %cst_77 : f32 to vector<16x256xf32>
    %133 = arith.maximumf %131, %132 : vector<16x256xf32>
    %134 = arith.truncf %133 : vector<16x256xf32> to vector<16x256xbf16>
    %cst_78 = arith.constant 0.000000e+00 : bf16
    %135 = vector.broadcast %cst_78 : bf16 to vector<16x17xbf16>
    %136 = tpu.concatenate %135, %134, %135 in 1 : vector<16x17xbf16>, vector<16x256xbf16>, vector<16x17xbf16> -> vector<16x290xbf16>
    %cst_79 = arith.constant 0.000000e+00 : f32
    %137 = vector.broadcast %cst_79 : f32 to vector<16x256xf32>
    %138 = vector.extract_strided_slice %136 {offsets = [0, 0], sizes = [16, 256], strides = [1, 1]} : vector<16x290xbf16> to vector<16x256xbf16>
    %cst_80 = arith.constant 0.000000e+00 : bf16
    %139 = vector.shape_cast %75 : vector<1x256xi1> to vector<1x256xi1>
    %140 = vector.broadcast %139 : vector<1x256xi1> to vector<16x256xi1>
    %141 = vector.broadcast %cst_80 : bf16 to vector<16x256xbf16>
    %142 = arith.select %140, %138, %141 : vector<16x256xi1>, vector<16x256xbf16>
    %143 = vector.extract_strided_slice %136 {offsets = [0, 1], sizes = [16, 256], strides = [1, 1]} : vector<16x290xbf16> to vector<16x256xbf16>
    %144 = vector.extract_strided_slice %136 {offsets = [0, 2], sizes = [16, 256], strides = [1, 1]} : vector<16x290xbf16> to vector<16x256xbf16>
    %cst_81 = arith.constant 0.000000e+00 : bf16
    %145 = vector.shape_cast %77 : vector<1x256xi1> to vector<1x256xi1>
    %146 = vector.broadcast %145 : vector<1x256xi1> to vector<16x256xi1>
    %147 = vector.broadcast %cst_81 : bf16 to vector<16x256xbf16>
    %148 = arith.select %146, %144, %147 : vector<16x256xi1>, vector<16x256xbf16>
    %149 = tpu.concatenate %142, %143, %148 in 0 : vector<16x256xbf16>, vector<16x256xbf16>, vector<16x256xbf16> -> vector<48x256xbf16>
    %c0_82 = arith.constant 0 : index
    %c0_83 = arith.constant 0 : index
    %c0_84 = arith.constant 0 : index
    %150 = vector.load %arg8[%c0_82, %c0_83, %c0_84] : memref<3x16x48xbf16, #tpu.memory_space<vmem>>, vector<1x16x48xbf16>
    %151 = vector.shape_cast %150 : vector<1x16x48xbf16> to vector<16x48xbf16>
    %cst_85 = arith.constant dense<0.000000e+00> : vector<16x256xf32>
    %152 = tpu.matmul %151, %149, %cst_85 {dimension_numbers = #tpu.dot_dimension_numbers<[1], [0], [0], [1], [0, 0, 1, 1], [], []>} : vector<16x48xbf16>, vector<48x256xbf16>, vector<16x256xf32> -> vector<16x256xf32>
    %153 = arith.addf %137, %152 : vector<16x256xf32>
    %154 = vector.extract_strided_slice %136 {offsets = [0, 16], sizes = [16, 256], strides = [1, 1]} : vector<16x290xbf16> to vector<16x256xbf16>
    %cst_86 = arith.constant 0.000000e+00 : bf16
    %155 = vector.shape_cast %75 : vector<1x256xi1> to vector<1x256xi1>
    %156 = vector.broadcast %155 : vector<1x256xi1> to vector<16x256xi1>
    %157 = vector.broadcast %cst_86 : bf16 to vector<16x256xbf16>
    %158 = arith.select %156, %154, %157 : vector<16x256xi1>, vector<16x256xbf16>
    %159 = vector.extract_strided_slice %136 {offsets = [0, 17], sizes = [16, 256], strides = [1, 1]} : vector<16x290xbf16> to vector<16x256xbf16>
    %160 = vector.extract_strided_slice %136 {offsets = [0, 18], sizes = [16, 256], strides = [1, 1]} : vector<16x290xbf16> to vector<16x256xbf16>
    %cst_87 = arith.constant 0.000000e+00 : bf16
    %161 = vector.shape_cast %77 : vector<1x256xi1> to vector<1x256xi1>
    %162 = vector.broadcast %161 : vector<1x256xi1> to vector<16x256xi1>
    %163 = vector.broadcast %cst_87 : bf16 to vector<16x256xbf16>
    %164 = arith.select %162, %160, %163 : vector<16x256xi1>, vector<16x256xbf16>
    %165 = tpu.concatenate %158, %159, %164 in 0 : vector<16x256xbf16>, vector<16x256xbf16>, vector<16x256xbf16> -> vector<48x256xbf16>
    %c1_88 = arith.constant 1 : index
    %c0_89 = arith.constant 0 : index
    %c0_90 = arith.constant 0 : index
    %166 = vector.load %arg8[%c1_88, %c0_89, %c0_90] : memref<3x16x48xbf16, #tpu.memory_space<vmem>>, vector<1x16x48xbf16>
    %167 = vector.shape_cast %166 : vector<1x16x48xbf16> to vector<16x48xbf16>
    %cst_91 = arith.constant dense<0.000000e+00> : vector<16x256xf32>
    %168 = tpu.matmul %167, %165, %cst_91 {dimension_numbers = #tpu.dot_dimension_numbers<[1], [0], [0], [1], [0, 0, 1, 1], [], []>} : vector<16x48xbf16>, vector<48x256xbf16>, vector<16x256xf32> -> vector<16x256xf32>
    %169 = arith.addf %153, %168 : vector<16x256xf32>
    %170 = vector.extract_strided_slice %136 {offsets = [0, 32], sizes = [16, 256], strides = [1, 1]} : vector<16x290xbf16> to vector<16x256xbf16>
    %cst_92 = arith.constant 0.000000e+00 : bf16
    %171 = vector.shape_cast %75 : vector<1x256xi1> to vector<1x256xi1>
    %172 = vector.broadcast %171 : vector<1x256xi1> to vector<16x256xi1>
    %173 = vector.broadcast %cst_92 : bf16 to vector<16x256xbf16>
    %174 = arith.select %172, %170, %173 : vector<16x256xi1>, vector<16x256xbf16>
    %175 = vector.extract_strided_slice %136 {offsets = [0, 33], sizes = [16, 256], strides = [1, 1]} : vector<16x290xbf16> to vector<16x256xbf16>
    %176 = vector.extract_strided_slice %136 {offsets = [0, 34], sizes = [16, 256], strides = [1, 1]} : vector<16x290xbf16> to vector<16x256xbf16>
    %cst_93 = arith.constant 0.000000e+00 : bf16
    %177 = vector.shape_cast %77 : vector<1x256xi1> to vector<1x256xi1>
    %178 = vector.broadcast %177 : vector<1x256xi1> to vector<16x256xi1>
    %179 = vector.broadcast %cst_93 : bf16 to vector<16x256xbf16>
    %180 = arith.select %178, %176, %179 : vector<16x256xi1>, vector<16x256xbf16>
    %181 = tpu.concatenate %174, %175, %180 in 0 : vector<16x256xbf16>, vector<16x256xbf16>, vector<16x256xbf16> -> vector<48x256xbf16>
    %c2_94 = arith.constant 2 : index
    %c0_95 = arith.constant 0 : index
    %c0_96 = arith.constant 0 : index
    %182 = vector.load %arg8[%c2_94, %c0_95, %c0_96] : memref<3x16x48xbf16, #tpu.memory_space<vmem>>, vector<1x16x48xbf16>
    %183 = vector.shape_cast %182 : vector<1x16x48xbf16> to vector<16x48xbf16>
    %cst_97 = arith.constant dense<0.000000e+00> : vector<16x256xf32>
    %184 = tpu.matmul %183, %181, %cst_97 {dimension_numbers = #tpu.dot_dimension_numbers<[1], [0], [0], [1], [0, 0, 1, 1], [], []>} : vector<16x48xbf16>, vector<48x256xbf16>, vector<16x256xf32> -> vector<16x256xf32>
    %185 = arith.addf %169, %184 : vector<16x256xf32>
    %c0_98 = arith.constant 0 : index
    %c0_99 = arith.constant 0 : index
    %186 = vector.load %arg9[%c0_98, %c0_99] : memref<16x1xf32, #tpu.memory_space<vmem>>, vector<16x1xf32>
    %187 = vector.broadcast %186 : vector<16x1xf32> to vector<16x256xf32>
    %188 = arith.addf %185, %187 : vector<16x256xf32>
    %cst_100 = arith.constant 0.000000e+00 : f32
    %189 = vector.broadcast %cst_100 : f32 to vector<16x256xf32>
    %190 = arith.maximumf %188, %189 : vector<16x256xf32>
    %191 = arith.truncf %190 : vector<16x256xf32> to vector<16x256xbf16>
    %c0_101 = arith.constant 0 : index
    %c0_102 = arith.constant 0 : index
    %c0_103 = arith.constant 0 : index
    %192 = vector.load %arg10[%c0_101, %c0_102, %c0_103] : memref<1x16x256xbf16, #tpu.memory_space<vmem>>, vector<1x16x256xbf16>
    %193 = vector.shape_cast %192 : vector<1x16x256xbf16> to vector<16x256xbf16>
    %194 = vector.shape_cast %191 : vector<16x256xbf16> to vector<1x16x256xbf16>
    tpu.vector_store %arg10[%c0_101, %c0_102, %c0_103], %194 {strides = array<i32>} : memref<1x16x256xbf16, #tpu.memory_space<vmem>>, vector<1x16x256xbf16>,
    return
  }
  func.func @transform_0(%arg0: i32) -> (i32, i32, i32) {
    %c0_i32 = arith.constant 0 : i32
    %c0_i32_0 = arith.constant 0 : i32
    %c0_i32_1 = arith.constant 0 : i32
    return %arg0, %c0_i32, %c0_i32_0 : i32, i32, i32
  }
  func.func @transform_1(%arg0: i32) -> (i32, i32, i32) {
    %c0_i32 = arith.constant 0 : i32
    %c0_i32_0 = arith.constant 0 : i32
    %c0_i32_1 = arith.constant 0 : i32
    return %arg0, %c0_i32, %c0_i32_0 : i32, i32, i32
  }
  func.func @transform_2(%arg0: i32) -> (i32, i32, i32) {
    %c0_i32 = arith.constant 0 : i32
    %c0_i32_0 = arith.constant 0 : i32
    %c0_i32_1 = arith.constant 0 : i32
    %c0_i32_2 = arith.constant 0 : i32
    return %c0_i32, %c0_i32_0, %c0_i32_1 : i32, i32, i32
  }
  func.func @transform_3(%arg0: i32) -> (i32, i32, i32) {
    %c0_i32 = arith.constant 0 : i32
    %c0_i32_0 = arith.constant 0 : i32
    %c0_i32_1 = arith.constant 0 : i32
    %c0_i32_2 = arith.constant 0 : i32
    return %c0_i32, %c0_i32_0, %c0_i32_1 : i32, i32, i32
  }
  func.func @transform_4(%arg0: i32) -> (i32, i32) {
    %c0_i32 = arith.constant 0 : i32
    %c0_i32_0 = arith.constant 0 : i32
    %c0_i32_1 = arith.constant 0 : i32
    return %c0_i32, %c0_i32_0 : i32, i32
  }
  func.func @transform_5(%arg0: i32) -> (i32, i32, i32) {
    %c0_i32 = arith.constant 0 : i32
    %c0_i32_0 = arith.constant 0 : i32
    %c0_i32_1 = arith.constant 0 : i32
    %c0_i32_2 = arith.constant 0 : i32
    return %c0_i32, %c0_i32_0, %c0_i32_1 : i32, i32, i32
  }
  func.func @transform_6(%arg0: i32) -> (i32, i32) {
    %c0_i32 = arith.constant 0 : i32
    %c0_i32_0 = arith.constant 0 : i32
    %c0_i32_1 = arith.constant 0 : i32
    return %c0_i32, %c0_i32_0 : i32, i32
  }
  func.func @transform_7(%arg0: i32) -> (i32, i32, i32) {
    %c0_i32 = arith.constant 0 : i32
    %c0_i32_0 = arith.constant 0 : i32
    %c0_i32_1 = arith.constant 0 : i32
    %c0_i32_2 = arith.constant 0 : i32
    return %c0_i32, %c0_i32_0, %c0_i32_1 : i32, i32, i32
  }
  func.func @transform_8(%arg0: i32) -> (i32, i32) {
    %c0_i32 = arith.constant 0 : i32
    %c0_i32_0 = arith.constant 0 : i32
    %c0_i32_1 = arith.constant 0 : i32
    return %c0_i32, %c0_i32_0 : i32, i32
  }
  func.func @transform_9(%arg0: i32) -> (i32, i32, i32) {
    %c0_i32 = arith.constant 0 : i32
    %c0_i32_0 = arith.constant 0 : i32
    %c0_i32_1 = arith.constant 0 : i32
    return %arg0, %c0_i32, %c0_i32_0 : i32, i32, i32
  }
}

module attributes {stable_mosaic.version = 11 : i64} {
  func.func @_stage_kernel(%arg0: i32, %arg1: memref<1x16x256xbf16, #tpu.memory_space<vmem>>, %arg2: memref<1x8x1024xbf16, #tpu.memory_space<vmem>>, %arg3: memref<4x256x1024xbf16, #tpu.memory_space<vmem>>, %arg4: memref<4x8x16xbf16, #tpu.memory_space<vmem>>, %arg5: memref<8x1xf32, #tpu.memory_space<vmem>>, %arg6: memref<3x8x48xbf16, #tpu.memory_space<vmem>>, %arg7: memref<8x1xf32, #tpu.memory_space<vmem>>, %arg8: memref<3x8x24xbf16, #tpu.memory_space<vmem>>, %arg9: memref<8x1xf32, #tpu.memory_space<vmem>>, %arg10: memref<1x8x1024xf32, #tpu.memory_space<vmem>>) attributes {dimension_semantics = [#tpu.dimension_semantics<parallel>], iteration_bounds = array<i64: 2>, scalar_prefetch = 0 : i64, scratch_operands = 0 : i64, tpu.core_type = #tpu.core_type<tc>, window_params = [{transform_indices = @transform_0, window_bounds = array<i64: 1, 16, 256>}, {transform_indices = @transform_1, window_bounds = array<i64: 1, 8, 1024>}, {pipeline_mode = #tpu.pipeline_mode<synchronous>, transform_indices = @transform_2, window_bounds = array<i64: 4, 256, 1024>}, {pipeline_mode = #tpu.pipeline_mode<synchronous>, transform_indices = @transform_3, window_bounds = array<i64: 4, 8, 16>}, {pipeline_mode = #tpu.pipeline_mode<synchronous>, transform_indices = @transform_4, window_bounds = array<i64: 8, 1>}, {pipeline_mode = #tpu.pipeline_mode<synchronous>, transform_indices = @transform_5, window_bounds = array<i64: 3, 8, 48>}, {pipeline_mode = #tpu.pipeline_mode<synchronous>, transform_indices = @transform_6, window_bounds = array<i64: 8, 1>}, {pipeline_mode = #tpu.pipeline_mode<synchronous>, transform_indices = @transform_7, window_bounds = array<i64: 3, 8, 24>}, {pipeline_mode = #tpu.pipeline_mode<synchronous>, transform_indices = @transform_8, window_bounds = array<i64: 8, 1>}, {transform_indices = @transform_9, window_bounds = array<i64: 1, 8, 1024>}]} {
    %cst = arith.constant 0.000000e+00 : f32
    %0 = vector.broadcast %cst : f32 to vector<8x1024xf32>
    %c0 = arith.constant 0 : index
    %c0_0 = arith.constant 0 : index
    %c0_1 = arith.constant 0 : index
    %1 = vector.load %arg4[%c0, %c0_0, %c0_1] : memref<4x8x16xbf16, #tpu.memory_space<vmem>>, vector<1x8x16xbf16>
    %2 = vector.shape_cast %1 : vector<1x8x16xbf16> to vector<8x16xbf16>
    %c0_2 = arith.constant 0 : index
    %c0_3 = arith.constant 0 : index
    %c0_4 = arith.constant 0 : index
    %3 = vector.load %arg1[%c0_2, %c0_3, %c0_4] : memref<1x16x256xbf16, #tpu.memory_space<vmem>>, vector<1x16x256xbf16>
    %4 = vector.shape_cast %3 : vector<1x16x256xbf16> to vector<16x256xbf16>
    %cst_5 = arith.constant dense<0.000000e+00> : vector<8x256xf32>
    %5 = tpu.matmul %2, %4, %cst_5 {dimension_numbers = #tpu.dot_dimension_numbers<[1], [0], [0], [1], [0, 0, 1, 1], [], []>} : vector<8x16xbf16>, vector<16x256xbf16>, vector<8x256xf32> -> vector<8x256xf32>
    %c0_6 = arith.constant 0 : index
    %c0_7 = arith.constant 0 : index
    %6 = vector.load %arg5[%c0_6, %c0_7] : memref<8x1xf32, #tpu.memory_space<vmem>>, vector<8x1xf32>
    %7 = vector.broadcast %6 : vector<8x1xf32> to vector<8x256xf32>
    %8 = arith.addf %5, %7 : vector<8x256xf32>
    %9 = arith.truncf %8 : vector<8x256xf32> to vector<8x256xbf16>
    %c0_8 = arith.constant 0 : index
    %c0_9 = arith.constant 0 : index
    %c0_10 = arith.constant 0 : index
    %10 = vector.load %arg3[%c0_8, %c0_9, %c0_10] : memref<4x256x1024xbf16, #tpu.memory_space<vmem>>, vector<1x256x1024xbf16>
    %11 = vector.shape_cast %10 : vector<1x256x1024xbf16> to vector<256x1024xbf16>
    %cst_11 = arith.constant dense<0.000000e+00> : vector<8x1024xf32>
    %12 = tpu.matmul %9, %11, %cst_11 {dimension_numbers = #tpu.dot_dimension_numbers<[1], [0], [0], [1], [0, 0, 1, 1], [], []>} : vector<8x256xbf16>, vector<256x1024xbf16>, vector<8x1024xf32> -> vector<8x1024xf32>
    %13 = arith.addf %0, %12 : vector<8x1024xf32>
    %c1 = arith.constant 1 : index
    %c0_12 = arith.constant 0 : index
    %c0_13 = arith.constant 0 : index
    %14 = vector.load %arg4[%c1, %c0_12, %c0_13] : memref<4x8x16xbf16, #tpu.memory_space<vmem>>, vector<1x8x16xbf16>
    %15 = vector.shape_cast %14 : vector<1x8x16xbf16> to vector<8x16xbf16>
    %c0_14 = arith.constant 0 : index
    %c0_15 = arith.constant 0 : index
    %c0_16 = arith.constant 0 : index
    %16 = vector.load %arg1[%c0_14, %c0_15, %c0_16] : memref<1x16x256xbf16, #tpu.memory_space<vmem>>, vector<1x16x256xbf16>
    %17 = vector.shape_cast %16 : vector<1x16x256xbf16> to vector<16x256xbf16>
    %cst_17 = arith.constant dense<0.000000e+00> : vector<8x256xf32>
    %18 = tpu.matmul %15, %17, %cst_17 {dimension_numbers = #tpu.dot_dimension_numbers<[1], [0], [0], [1], [0, 0, 1, 1], [], []>} : vector<8x16xbf16>, vector<16x256xbf16>, vector<8x256xf32> -> vector<8x256xf32>
    %c0_18 = arith.constant 0 : index
    %c0_19 = arith.constant 0 : index
    %19 = vector.load %arg5[%c0_18, %c0_19] : memref<8x1xf32, #tpu.memory_space<vmem>>, vector<8x1xf32>
    %20 = vector.broadcast %19 : vector<8x1xf32> to vector<8x256xf32>
    %21 = arith.addf %18, %20 : vector<8x256xf32>
    %22 = arith.truncf %21 : vector<8x256xf32> to vector<8x256xbf16>
    %c1_20 = arith.constant 1 : index
    %c0_21 = arith.constant 0 : index
    %c0_22 = arith.constant 0 : index
    %23 = vector.load %arg3[%c1_20, %c0_21, %c0_22] : memref<4x256x1024xbf16, #tpu.memory_space<vmem>>, vector<1x256x1024xbf16>
    %24 = vector.shape_cast %23 : vector<1x256x1024xbf16> to vector<256x1024xbf16>
    %cst_23 = arith.constant dense<0.000000e+00> : vector<8x1024xf32>
    %25 = tpu.matmul %22, %24, %cst_23 {dimension_numbers = #tpu.dot_dimension_numbers<[1], [0], [0], [1], [0, 0, 1, 1], [], []>} : vector<8x256xbf16>, vector<256x1024xbf16>, vector<8x1024xf32> -> vector<8x1024xf32>
    %26 = arith.addf %13, %25 : vector<8x1024xf32>
    %c2 = arith.constant 2 : index
    %c0_24 = arith.constant 0 : index
    %c0_25 = arith.constant 0 : index
    %27 = vector.load %arg4[%c2, %c0_24, %c0_25] : memref<4x8x16xbf16, #tpu.memory_space<vmem>>, vector<1x8x16xbf16>
    %28 = vector.shape_cast %27 : vector<1x8x16xbf16> to vector<8x16xbf16>
    %c0_26 = arith.constant 0 : index
    %c0_27 = arith.constant 0 : index
    %c0_28 = arith.constant 0 : index
    %29 = vector.load %arg1[%c0_26, %c0_27, %c0_28] : memref<1x16x256xbf16, #tpu.memory_space<vmem>>, vector<1x16x256xbf16>
    %30 = vector.shape_cast %29 : vector<1x16x256xbf16> to vector<16x256xbf16>
    %cst_29 = arith.constant dense<0.000000e+00> : vector<8x256xf32>
    %31 = tpu.matmul %28, %30, %cst_29 {dimension_numbers = #tpu.dot_dimension_numbers<[1], [0], [0], [1], [0, 0, 1, 1], [], []>} : vector<8x16xbf16>, vector<16x256xbf16>, vector<8x256xf32> -> vector<8x256xf32>
    %c0_30 = arith.constant 0 : index
    %c0_31 = arith.constant 0 : index
    %32 = vector.load %arg5[%c0_30, %c0_31] : memref<8x1xf32, #tpu.memory_space<vmem>>, vector<8x1xf32>
    %33 = vector.broadcast %32 : vector<8x1xf32> to vector<8x256xf32>
    %34 = arith.addf %31, %33 : vector<8x256xf32>
    %35 = arith.truncf %34 : vector<8x256xf32> to vector<8x256xbf16>
    %c2_32 = arith.constant 2 : index
    %c0_33 = arith.constant 0 : index
    %c0_34 = arith.constant 0 : index
    %36 = vector.load %arg3[%c2_32, %c0_33, %c0_34] : memref<4x256x1024xbf16, #tpu.memory_space<vmem>>, vector<1x256x1024xbf16>
    %37 = vector.shape_cast %36 : vector<1x256x1024xbf16> to vector<256x1024xbf16>
    %cst_35 = arith.constant dense<0.000000e+00> : vector<8x1024xf32>
    %38 = tpu.matmul %35, %37, %cst_35 {dimension_numbers = #tpu.dot_dimension_numbers<[1], [0], [0], [1], [0, 0, 1, 1], [], []>} : vector<8x256xbf16>, vector<256x1024xbf16>, vector<8x1024xf32> -> vector<8x1024xf32>
    %39 = arith.addf %26, %38 : vector<8x1024xf32>
    %c3 = arith.constant 3 : index
    %c0_36 = arith.constant 0 : index
    %c0_37 = arith.constant 0 : index
    %40 = vector.load %arg4[%c3, %c0_36, %c0_37] : memref<4x8x16xbf16, #tpu.memory_space<vmem>>, vector<1x8x16xbf16>
    %41 = vector.shape_cast %40 : vector<1x8x16xbf16> to vector<8x16xbf16>
    %c0_38 = arith.constant 0 : index
    %c0_39 = arith.constant 0 : index
    %c0_40 = arith.constant 0 : index
    %42 = vector.load %arg1[%c0_38, %c0_39, %c0_40] : memref<1x16x256xbf16, #tpu.memory_space<vmem>>, vector<1x16x256xbf16>
    %43 = vector.shape_cast %42 : vector<1x16x256xbf16> to vector<16x256xbf16>
    %cst_41 = arith.constant dense<0.000000e+00> : vector<8x256xf32>
    %44 = tpu.matmul %41, %43, %cst_41 {dimension_numbers = #tpu.dot_dimension_numbers<[1], [0], [0], [1], [0, 0, 1, 1], [], []>} : vector<8x16xbf16>, vector<16x256xbf16>, vector<8x256xf32> -> vector<8x256xf32>
    %c0_42 = arith.constant 0 : index
    %c0_43 = arith.constant 0 : index
    %45 = vector.load %arg5[%c0_42, %c0_43] : memref<8x1xf32, #tpu.memory_space<vmem>>, vector<8x1xf32>
    %46 = vector.broadcast %45 : vector<8x1xf32> to vector<8x256xf32>
    %47 = arith.addf %44, %46 : vector<8x256xf32>
    %48 = arith.truncf %47 : vector<8x256xf32> to vector<8x256xbf16>
    %c3_44 = arith.constant 3 : index
    %c0_45 = arith.constant 0 : index
    %c0_46 = arith.constant 0 : index
    %49 = vector.load %arg3[%c3_44, %c0_45, %c0_46] : memref<4x256x1024xbf16, #tpu.memory_space<vmem>>, vector<1x256x1024xbf16>
    %50 = vector.shape_cast %49 : vector<1x256x1024xbf16> to vector<256x1024xbf16>
    %cst_47 = arith.constant dense<0.000000e+00> : vector<8x1024xf32>
    %51 = tpu.matmul %48, %50, %cst_47 {dimension_numbers = #tpu.dot_dimension_numbers<[1], [0], [0], [1], [0, 0, 1, 1], [], []>} : vector<8x256xbf16>, vector<256x1024xbf16>, vector<8x1024xf32> -> vector<8x1024xf32>
    %52 = arith.addf %39, %51 : vector<8x1024xf32>
    %53 = arith.truncf %52 : vector<8x1024xf32> to vector<8x1024xbf16>
    %c0_48 = arith.constant 0 : index
    %c0_49 = arith.constant 0 : index
    %c0_50 = arith.constant 0 : index
    %54 = vector.load %arg2[%c0_48, %c0_49, %c0_50] : memref<1x8x1024xbf16, #tpu.memory_space<vmem>>, vector<1x8x1024xbf16>
    %55 = vector.shape_cast %54 : vector<1x8x1024xbf16> to vector<8x1024xbf16>
    %56 = tpu.concatenate %53, %55 in 0 : vector<8x1024xbf16>, vector<8x1024xbf16> -> vector<16x1024xbf16>
    %57 = tpu.iota {dimensions = array<i32: 1>} : vector<1x1024xi32>
    %c32_i32 = arith.constant 32 : i32
    %c0_i32 = arith.constant 0 : i32
    %58 = arith.cmpi eq, %c32_i32, %c0_i32 : i32
    %c1_i32 = arith.constant 1 : i32
    %59 = arith.select %58, %c1_i32, %c32_i32 : i32
    %60 = vector.broadcast %59 : i32 to vector<1x1024xi32>
    %61 = arith.remsi %57, %60 : vector<1x1024xi32>
    %c0_i32_51 = arith.constant 0 : i32
    %62 = vector.broadcast %c0_i32_51 : i32 to vector<1x1024xi32>
    %63 = arith.cmpi ne, %61, %62 : vector<1x1024xi32>
    %c0_i32_52 = arith.constant 0 : i32
    %64 = vector.broadcast %c0_i32_52 : i32 to vector<1x1024xi32>
    %65 = arith.cmpi slt, %61, %64 : vector<1x1024xi32>
    %c0_i32_53 = arith.constant 0 : i32
    %66 = arith.cmpi slt, %59, %c0_i32_53 : i32
    %67 = vector.broadcast %66 : i1 to vector<1x1024xi1>
    %68 = vector.broadcast %67 : vector<1x1024xi1> to vector<1x1024xi1>
    %69 = arith.xori %65, %68 : vector<1x1024xi1>
    %70 = arith.andi %69, %63 : vector<1x1024xi1>
    %71 = vector.broadcast %59 : i32 to vector<1x1024xi32>
    %72 = arith.addi %61, %71 : vector<1x1024xi32>
    %73 = arith.select %70, %72, %61 : vector<1x1024xi1>, vector<1x1024xi32>
    %c0_i32_54 = arith.constant 0 : i32
    %74 = vector.broadcast %c0_i32_54 : i32 to vector<1x1024xi32>
    %75 = arith.cmpi ne, %73, %74 : vector<1x1024xi32>
    %c31_i32 = arith.constant 31 : i32
    %76 = vector.broadcast %c31_i32 : i32 to vector<1x1024xi32>
    %77 = arith.cmpi ne, %73, %76 : vector<1x1024xi32>
    %cst_55 = arith.constant 0.000000e+00 : bf16
    %78 = vector.broadcast %cst_55 : bf16 to vector<16x33xbf16>
    %79 = tpu.concatenate %78, %56, %78 in 1 : vector<16x33xbf16>, vector<16x1024xbf16>, vector<16x33xbf16> -> vector<16x1090xbf16>
    %cst_56 = arith.constant 0.000000e+00 : f32
    %80 = vector.broadcast %cst_56 : f32 to vector<8x1024xf32>
    %81 = vector.extract_strided_slice %79 {offsets = [0, 0], sizes = [16, 1024], strides = [1, 1]} : vector<16x1090xbf16> to vector<16x1024xbf16>
    %cst_57 = arith.constant 0.000000e+00 : bf16
    %82 = vector.shape_cast %75 : vector<1x1024xi1> to vector<1x1024xi1>
    %83 = vector.broadcast %82 : vector<1x1024xi1> to vector<16x1024xi1>
    %84 = vector.broadcast %cst_57 : bf16 to vector<16x1024xbf16>
    %85 = arith.select %83, %81, %84 : vector<16x1024xi1>, vector<16x1024xbf16>
    %86 = vector.extract_strided_slice %79 {offsets = [0, 1], sizes = [16, 1024], strides = [1, 1]} : vector<16x1090xbf16> to vector<16x1024xbf16>
    %87 = vector.extract_strided_slice %79 {offsets = [0, 2], sizes = [16, 1024], strides = [1, 1]} : vector<16x1090xbf16> to vector<16x1024xbf16>
    %cst_58 = arith.constant 0.000000e+00 : bf16
    %88 = vector.shape_cast %77 : vector<1x1024xi1> to vector<1x1024xi1>
    %89 = vector.broadcast %88 : vector<1x1024xi1> to vector<16x1024xi1>
    %90 = vector.broadcast %cst_58 : bf16 to vector<16x1024xbf16>
    %91 = arith.select %89, %87, %90 : vector<16x1024xi1>, vector<16x1024xbf16>
    %92 = tpu.concatenate %85, %86, %91 in 0 : vector<16x1024xbf16>, vector<16x1024xbf16>, vector<16x1024xbf16> -> vector<48x1024xbf16>
    %c0_59 = arith.constant 0 : index
    %c0_60 = arith.constant 0 : index
    %c0_61 = arith.constant 0 : index
    %93 = vector.load %arg6[%c0_59, %c0_60, %c0_61] : memref<3x8x48xbf16, #tpu.memory_space<vmem>>, vector<1x8x48xbf16>
    %94 = vector.shape_cast %93 : vector<1x8x48xbf16> to vector<8x48xbf16>
    %cst_62 = arith.constant dense<0.000000e+00> : vector<8x1024xf32>
    %95 = tpu.matmul %94, %92, %cst_62 {dimension_numbers = #tpu.dot_dimension_numbers<[1], [0], [0], [1], [0, 0, 1, 1], [], []>} : vector<8x48xbf16>, vector<48x1024xbf16>, vector<8x1024xf32> -> vector<8x1024xf32>
    %96 = arith.addf %80, %95 : vector<8x1024xf32>
    %97 = vector.extract_strided_slice %79 {offsets = [0, 32], sizes = [16, 1024], strides = [1, 1]} : vector<16x1090xbf16> to vector<16x1024xbf16>
    %cst_63 = arith.constant 0.000000e+00 : bf16
    %98 = vector.shape_cast %75 : vector<1x1024xi1> to vector<1x1024xi1>
    %99 = vector.broadcast %98 : vector<1x1024xi1> to vector<16x1024xi1>
    %100 = vector.broadcast %cst_63 : bf16 to vector<16x1024xbf16>
    %101 = arith.select %99, %97, %100 : vector<16x1024xi1>, vector<16x1024xbf16>
    %102 = vector.extract_strided_slice %79 {offsets = [0, 33], sizes = [16, 1024], strides = [1, 1]} : vector<16x1090xbf16> to vector<16x1024xbf16>
    %103 = vector.extract_strided_slice %79 {offsets = [0, 34], sizes = [16, 1024], strides = [1, 1]} : vector<16x1090xbf16> to vector<16x1024xbf16>
    %cst_64 = arith.constant 0.000000e+00 : bf16
    %104 = vector.shape_cast %77 : vector<1x1024xi1> to vector<1x1024xi1>
    %105 = vector.broadcast %104 : vector<1x1024xi1> to vector<16x1024xi1>
    %106 = vector.broadcast %cst_64 : bf16 to vector<16x1024xbf16>
    %107 = arith.select %105, %103, %106 : vector<16x1024xi1>, vector<16x1024xbf16>
    %108 = tpu.concatenate %101, %102, %107 in 0 : vector<16x1024xbf16>, vector<16x1024xbf16>, vector<16x1024xbf16> -> vector<48x1024xbf16>
    %c1_65 = arith.constant 1 : index
    %c0_66 = arith.constant 0 : index
    %c0_67 = arith.constant 0 : index
    %109 = vector.load %arg6[%c1_65, %c0_66, %c0_67] : memref<3x8x48xbf16, #tpu.memory_space<vmem>>, vector<1x8x48xbf16>
    %110 = vector.shape_cast %109 : vector<1x8x48xbf16> to vector<8x48xbf16>
    %cst_68 = arith.constant dense<0.000000e+00> : vector<8x1024xf32>
    %111 = tpu.matmul %110, %108, %cst_68 {dimension_numbers = #tpu.dot_dimension_numbers<[1], [0], [0], [1], [0, 0, 1, 1], [], []>} : vector<8x48xbf16>, vector<48x1024xbf16>, vector<8x1024xf32> -> vector<8x1024xf32>
    %112 = arith.addf %96, %111 : vector<8x1024xf32>
    %113 = vector.extract_strided_slice %79 {offsets = [0, 64], sizes = [16, 1024], strides = [1, 1]} : vector<16x1090xbf16> to vector<16x1024xbf16>
    %cst_69 = arith.constant 0.000000e+00 : bf16
    %114 = vector.shape_cast %75 : vector<1x1024xi1> to vector<1x1024xi1>
    %115 = vector.broadcast %114 : vector<1x1024xi1> to vector<16x1024xi1>
    %116 = vector.broadcast %cst_69 : bf16 to vector<16x1024xbf16>
    %117 = arith.select %115, %113, %116 : vector<16x1024xi1>, vector<16x1024xbf16>
    %118 = vector.extract_strided_slice %79 {offsets = [0, 65], sizes = [16, 1024], strides = [1, 1]} : vector<16x1090xbf16> to vector<16x1024xbf16>
    %119 = vector.extract_strided_slice %79 {offsets = [0, 66], sizes = [16, 1024], strides = [1, 1]} : vector<16x1090xbf16> to vector<16x1024xbf16>
    %cst_70 = arith.constant 0.000000e+00 : bf16
    %120 = vector.shape_cast %77 : vector<1x1024xi1> to vector<1x1024xi1>
    %121 = vector.broadcast %120 : vector<1x1024xi1> to vector<16x1024xi1>
    %122 = vector.broadcast %cst_70 : bf16 to vector<16x1024xbf16>
    %123 = arith.select %121, %119, %122 : vector<16x1024xi1>, vector<16x1024xbf16>
    %124 = tpu.concatenate %117, %118, %123 in 0 : vector<16x1024xbf16>, vector<16x1024xbf16>, vector<16x1024xbf16> -> vector<48x1024xbf16>
    %c2_71 = arith.constant 2 : index
    %c0_72 = arith.constant 0 : index
    %c0_73 = arith.constant 0 : index
    %125 = vector.load %arg6[%c2_71, %c0_72, %c0_73] : memref<3x8x48xbf16, #tpu.memory_space<vmem>>, vector<1x8x48xbf16>
    %126 = vector.shape_cast %125 : vector<1x8x48xbf16> to vector<8x48xbf16>
    %cst_74 = arith.constant dense<0.000000e+00> : vector<8x1024xf32>
    %127 = tpu.matmul %126, %124, %cst_74 {dimension_numbers = #tpu.dot_dimension_numbers<[1], [0], [0], [1], [0, 0, 1, 1], [], []>} : vector<8x48xbf16>, vector<48x1024xbf16>, vector<8x1024xf32> -> vector<8x1024xf32>
    %128 = arith.addf %112, %127 : vector<8x1024xf32>
    %c0_75 = arith.constant 0 : index
    %c0_76 = arith.constant 0 : index
    %129 = vector.load %arg7[%c0_75, %c0_76] : memref<8x1xf32, #tpu.memory_space<vmem>>, vector<8x1xf32>
    %130 = vector.broadcast %129 : vector<8x1xf32> to vector<8x1024xf32>
    %131 = arith.addf %128, %130 : vector<8x1024xf32>
    %cst_77 = arith.constant 0.000000e+00 : f32
    %132 = vector.broadcast %cst_77 : f32 to vector<8x1024xf32>
    %133 = arith.maximumf %131, %132 : vector<8x1024xf32>
    %134 = arith.truncf %133 : vector<8x1024xf32> to vector<8x1024xbf16>
    %cst_78 = arith.constant 0.000000e+00 : bf16
    %135 = vector.broadcast %cst_78 : bf16 to vector<8x33xbf16>
    %136 = tpu.concatenate %135, %134, %135 in 1 : vector<8x33xbf16>, vector<8x1024xbf16>, vector<8x33xbf16> -> vector<8x1090xbf16>
    %cst_79 = arith.constant 0.000000e+00 : f32
    %137 = vector.broadcast %cst_79 : f32 to vector<8x1024xf32>
    %138 = vector.extract_strided_slice %136 {offsets = [0, 0], sizes = [8, 1024], strides = [1, 1]} : vector<8x1090xbf16> to vector<8x1024xbf16>
    %cst_80 = arith.constant 0.000000e+00 : bf16
    %139 = vector.shape_cast %75 : vector<1x1024xi1> to vector<1x1024xi1>
    %140 = vector.broadcast %139 : vector<1x1024xi1> to vector<8x1024xi1>
    %141 = vector.broadcast %cst_80 : bf16 to vector<8x1024xbf16>
    %142 = arith.select %140, %138, %141 : vector<8x1024xi1>, vector<8x1024xbf16>
    %143 = vector.extract_strided_slice %136 {offsets = [0, 1], sizes = [8, 1024], strides = [1, 1]} : vector<8x1090xbf16> to vector<8x1024xbf16>
    %144 = vector.extract_strided_slice %136 {offsets = [0, 2], sizes = [8, 1024], strides = [1, 1]} : vector<8x1090xbf16> to vector<8x1024xbf16>
    %cst_81 = arith.constant 0.000000e+00 : bf16
    %145 = vector.shape_cast %77 : vector<1x1024xi1> to vector<1x1024xi1>
    %146 = vector.broadcast %145 : vector<1x1024xi1> to vector<8x1024xi1>
    %147 = vector.broadcast %cst_81 : bf16 to vector<8x1024xbf16>
    %148 = arith.select %146, %144, %147 : vector<8x1024xi1>, vector<8x1024xbf16>
    %149 = tpu.concatenate %142, %143, %148 in 0 : vector<8x1024xbf16>, vector<8x1024xbf16>, vector<8x1024xbf16> -> vector<24x1024xbf16>
    %c0_82 = arith.constant 0 : index
    %c0_83 = arith.constant 0 : index
    %c0_84 = arith.constant 0 : index
    %150 = vector.load %arg8[%c0_82, %c0_83, %c0_84] : memref<3x8x24xbf16, #tpu.memory_space<vmem>>, vector<1x8x24xbf16>
    %151 = vector.shape_cast %150 : vector<1x8x24xbf16> to vector<8x24xbf16>
    %cst_85 = arith.constant dense<0.000000e+00> : vector<8x1024xf32>
    %152 = tpu.matmul %151, %149, %cst_85 {dimension_numbers = #tpu.dot_dimension_numbers<[1], [0], [0], [1], [0, 0, 1, 1], [], []>} : vector<8x24xbf16>, vector<24x1024xbf16>, vector<8x1024xf32> -> vector<8x1024xf32>
    %153 = arith.addf %137, %152 : vector<8x1024xf32>
    %154 = vector.extract_strided_slice %136 {offsets = [0, 32], sizes = [8, 1024], strides = [1, 1]} : vector<8x1090xbf16> to vector<8x1024xbf16>
    %cst_86 = arith.constant 0.000000e+00 : bf16
    %155 = vector.shape_cast %75 : vector<1x1024xi1> to vector<1x1024xi1>
    %156 = vector.broadcast %155 : vector<1x1024xi1> to vector<8x1024xi1>
    %157 = vector.broadcast %cst_86 : bf16 to vector<8x1024xbf16>
    %158 = arith.select %156, %154, %157 : vector<8x1024xi1>, vector<8x1024xbf16>
    %159 = vector.extract_strided_slice %136 {offsets = [0, 33], sizes = [8, 1024], strides = [1, 1]} : vector<8x1090xbf16> to vector<8x1024xbf16>
    %160 = vector.extract_strided_slice %136 {offsets = [0, 34], sizes = [8, 1024], strides = [1, 1]} : vector<8x1090xbf16> to vector<8x1024xbf16>
    %cst_87 = arith.constant 0.000000e+00 : bf16
    %161 = vector.shape_cast %77 : vector<1x1024xi1> to vector<1x1024xi1>
    %162 = vector.broadcast %161 : vector<1x1024xi1> to vector<8x1024xi1>
    %163 = vector.broadcast %cst_87 : bf16 to vector<8x1024xbf16>
    %164 = arith.select %162, %160, %163 : vector<8x1024xi1>, vector<8x1024xbf16>
    %165 = tpu.concatenate %158, %159, %164 in 0 : vector<8x1024xbf16>, vector<8x1024xbf16>, vector<8x1024xbf16> -> vector<24x1024xbf16>
    %c1_88 = arith.constant 1 : index
    %c0_89 = arith.constant 0 : index
    %c0_90 = arith.constant 0 : index
    %166 = vector.load %arg8[%c1_88, %c0_89, %c0_90] : memref<3x8x24xbf16, #tpu.memory_space<vmem>>, vector<1x8x24xbf16>
    %167 = vector.shape_cast %166 : vector<1x8x24xbf16> to vector<8x24xbf16>
    %cst_91 = arith.constant dense<0.000000e+00> : vector<8x1024xf32>
    %168 = tpu.matmul %167, %165, %cst_91 {dimension_numbers = #tpu.dot_dimension_numbers<[1], [0], [0], [1], [0, 0, 1, 1], [], []>} : vector<8x24xbf16>, vector<24x1024xbf16>, vector<8x1024xf32> -> vector<8x1024xf32>
    %169 = arith.addf %153, %168 : vector<8x1024xf32>
    %170 = vector.extract_strided_slice %136 {offsets = [0, 64], sizes = [8, 1024], strides = [1, 1]} : vector<8x1090xbf16> to vector<8x1024xbf16>
    %cst_92 = arith.constant 0.000000e+00 : bf16
    %171 = vector.shape_cast %75 : vector<1x1024xi1> to vector<1x1024xi1>
    %172 = vector.broadcast %171 : vector<1x1024xi1> to vector<8x1024xi1>
    %173 = vector.broadcast %cst_92 : bf16 to vector<8x1024xbf16>
    %174 = arith.select %172, %170, %173 : vector<8x1024xi1>, vector<8x1024xbf16>
    %175 = vector.extract_strided_slice %136 {offsets = [0, 65], sizes = [8, 1024], strides = [1, 1]} : vector<8x1090xbf16> to vector<8x1024xbf16>
    %176 = vector.extract_strided_slice %136 {offsets = [0, 66], sizes = [8, 1024], strides = [1, 1]} : vector<8x1090xbf16> to vector<8x1024xbf16>
    %cst_93 = arith.constant 0.000000e+00 : bf16
    %177 = vector.shape_cast %77 : vector<1x1024xi1> to vector<1x1024xi1>
    %178 = vector.broadcast %177 : vector<1x1024xi1> to vector<8x1024xi1>
    %179 = vector.broadcast %cst_93 : bf16 to vector<8x1024xbf16>
    %180 = arith.select %178, %176, %179 : vector<8x1024xi1>, vector<8x1024xbf16>
    %181 = tpu.concatenate %174, %175, %180 in 0 : vector<8x1024xbf16>, vector<8x1024xbf16>, vector<8x1024xbf16> -> vector<24x1024xbf16>
    %c2_94 = arith.constant 2 : index
    %c0_95 = arith.constant 0 : index
    %c0_96 = arith.constant 0 : index
    %182 = vector.load %arg8[%c2_94, %c0_95, %c0_96] : memref<3x8x24xbf16, #tpu.memory_space<vmem>>, vector<1x8x24xbf16>
    %183 = vector.shape_cast %182 : vector<1x8x24xbf16> to vector<8x24xbf16>
    %cst_97 = arith.constant dense<0.000000e+00> : vector<8x1024xf32>
    %184 = tpu.matmul %183, %181, %cst_97 {dimension_numbers = #tpu.dot_dimension_numbers<[1], [0], [0], [1], [0, 0, 1, 1], [], []>} : vector<8x24xbf16>, vector<24x1024xbf16>, vector<8x1024xf32> -> vector<8x1024xf32>
    %185 = arith.addf %169, %184 : vector<8x1024xf32>
    %c0_98 = arith.constant 0 : index
    %c0_99 = arith.constant 0 : index
    %186 = vector.load %arg9[%c0_98, %c0_99] : memref<8x1xf32, #tpu.memory_space<vmem>>, vector<8x1xf32>
    %187 = vector.broadcast %186 : vector<8x1xf32> to vector<8x1024xf32>
    %188 = arith.addf %185, %187 : vector<8x1024xf32>
    %cst_100 = arith.constant 0.000000e+00 : f32
    %189 = vector.broadcast %cst_100 : f32 to vector<8x1024xf32>
    %190 = arith.maximumf %188, %189 : vector<8x1024xf32>
    %c0_101 = arith.constant 0 : index
    %c0_102 = arith.constant 0 : index
    %c0_103 = arith.constant 0 : index
    %191 = vector.load %arg10[%c0_101, %c0_102, %c0_103] : memref<1x8x1024xf32, #tpu.memory_space<vmem>>, vector<1x8x1024xf32>
    %192 = vector.shape_cast %191 : vector<1x8x1024xf32> to vector<8x1024xf32>
    %193 = vector.shape_cast %190 : vector<8x1024xf32> to vector<1x8x1024xf32>
    tpu.vector_store %arg10[%c0_101, %c0_102, %c0_103], %193 {strides = array<i32>} : memref<1x8x1024xf32, #tpu.memory_space<vmem>>, vector<1x8x1024xf32>,
    return
  }
  func.func @transform_0(%arg0: i32) -> (i32, i32, i32) {
    %c0_i32 = arith.constant 0 : i32
    %c0_i32_0 = arith.constant 0 : i32
    %c0_i32_1 = arith.constant 0 : i32
    return %arg0, %c0_i32, %c0_i32_0 : i32, i32, i32
  }
  func.func @transform_1(%arg0: i32) -> (i32, i32, i32) {
    %c0_i32 = arith.constant 0 : i32
    %c0_i32_0 = arith.constant 0 : i32
    %c0_i32_1 = arith.constant 0 : i32
    return %arg0, %c0_i32, %c0_i32_0 : i32, i32, i32
  }
  func.func @transform_2(%arg0: i32) -> (i32, i32, i32) {
    %c0_i32 = arith.constant 0 : i32
    %c0_i32_0 = arith.constant 0 : i32
    %c0_i32_1 = arith.constant 0 : i32
    %c0_i32_2 = arith.constant 0 : i32
    return %c0_i32, %c0_i32_0, %c0_i32_1 : i32, i32, i32
  }
  func.func @transform_3(%arg0: i32) -> (i32, i32, i32) {
    %c0_i32 = arith.constant 0 : i32
    %c0_i32_0 = arith.constant 0 : i32
    %c0_i32_1 = arith.constant 0 : i32
    %c0_i32_2 = arith.constant 0 : i32
    return %c0_i32, %c0_i32_0, %c0_i32_1 : i32, i32, i32
  }
  func.func @transform_4(%arg0: i32) -> (i32, i32) {
    %c0_i32 = arith.constant 0 : i32
    %c0_i32_0 = arith.constant 0 : i32
    %c0_i32_1 = arith.constant 0 : i32
    return %c0_i32, %c0_i32_0 : i32, i32
  }
  func.func @transform_5(%arg0: i32) -> (i32, i32, i32) {
    %c0_i32 = arith.constant 0 : i32
    %c0_i32_0 = arith.constant 0 : i32
    %c0_i32_1 = arith.constant 0 : i32
    %c0_i32_2 = arith.constant 0 : i32
    return %c0_i32, %c0_i32_0, %c0_i32_1 : i32, i32, i32
  }
  func.func @transform_6(%arg0: i32) -> (i32, i32) {
    %c0_i32 = arith.constant 0 : i32
    %c0_i32_0 = arith.constant 0 : i32
    %c0_i32_1 = arith.constant 0 : i32
    return %c0_i32, %c0_i32_0 : i32, i32
  }
  func.func @transform_7(%arg0: i32) -> (i32, i32, i32) {
    %c0_i32 = arith.constant 0 : i32
    %c0_i32_0 = arith.constant 0 : i32
    %c0_i32_1 = arith.constant 0 : i32
    %c0_i32_2 = arith.constant 0 : i32
    return %c0_i32, %c0_i32_0, %c0_i32_1 : i32, i32, i32
  }
  func.func @transform_8(%arg0: i32) -> (i32, i32) {
    %c0_i32 = arith.constant 0 : i32
    %c0_i32_0 = arith.constant 0 : i32
    %c0_i32_1 = arith.constant 0 : i32
    return %c0_i32, %c0_i32_0 : i32, i32
  }
  func.func @transform_9(%arg0: i32) -> (i32, i32, i32) {
    %c0_i32 = arith.constant 0 : i32
    %c0_i32_0 = arith.constant 0 : i32
    %c0_i32_1 = arith.constant 0 : i32
    return %arg0, %c0_i32, %c0_i32_0 : i32, i32, i32
  }
}

</mosaic_0001>

<llo_original>
// kernel: decoder_forward.2
$region0: #{decoder_forward.2}
  #allocation0 [shape = 'u32[]', space=smem, size = 0x4, offset = 0x4, fixed_abs, tag = 'smem constant byte address 0x4 - core index']
  #allocation1 [shape = 'u32[144,128]{1,0:T(1,128)}', space=vmem, size = 0x12000, scoped, tag = 'internal scratch']
  %s0 = inlined_call_operand.vmem [shape: bf16[2,32,64], index: 0, kind: input, shape index: {}]
  %s1 = inlined_call_operand.vmem [shape: bf16[2,16,256], index: 1, kind: input, shape index: {}]
  %s2 = inlined_call_operand.vmem [shape: bf16[4,64,256], index: 2, kind: input, shape index: {}]
  %s3 = inlined_call_operand.vmem [shape: bf16[4,16,32], index: 3, kind: input, shape index: {}]
  %s4 = inlined_call_operand.vmem [shape: f32[16,1], index: 4, kind: input, shape index: {}]
  %s5 = inlined_call_operand.vmem [shape: bf16[3,16,96], index: 5, kind: input, shape index: {}]
  %s6 = inlined_call_operand.vmem [shape: f32[16,1], index: 6, kind: input, shape index: {}]
  %s7 = inlined_call_operand.vmem [shape: bf16[3,16,48], index: 7, kind: input, shape index: {}]
  %s8 = inlined_call_operand.vmem [shape: f32[16,1], index: 8, kind: input, shape index: {}]
  %s9 = inlined_call_operand.vmem [shape: bf16[2,16,256], index: 9, kind: output, shape index: {}]
  %s10 = sld [smem:[#allocation0]]
  $region69: #{decoder_forward.2} parent=0
    _
  %s12 = ssub.s32 1, %s10
  %s13 = scalar_select 0, %s12, %s10
  loop: start=0, step=1, limit=4
  $region2: #{decoder_forward.2} parent=0 // loop_pre_header
    _
  $region3: #{decoder_forward.2} parent=0 // loop_header
    %s15 = sphi 0, %s19
    %p16 = scmp.ge.s32.totalorder %s15, 4
    %s25 = sphi 0, %s27
    %s28 = sphi 0, %s25
    %s29 = sphi 0, %s28
    %s45 = sphi 0, %s29
    %s51 = sphi 0, %s53
    %s54 = sphi 0, %s51
    %s55 = sphi 0, %s54
    %s71 = sphi 0, %s55
    %s75 = sphi 0, %s75
    %s77 = sphi 0, %s75
    %s78 = sphi 0, %s77
    %s92 = sphi 0, %s78
    %s96 = sphi 0, %s96
    %s98 = sphi 0, %s96
    %s99 = sphi 0, %s98
    %s113 = sphi 0, %s99
    %s117 = sphi 0, %s117
    %s119 = sphi 0, %s117
    %s120 = sphi 0, %s119
    %s134 = sphi 0, %s120
    %s138 = sphi 0, %s138
    %s140 = sphi 0, %s138
    %s141 = sphi 0, %s140
    %s155 = sphi 0, %s141
    %s159 = sphi 0, %s159
    %s161 = sphi 0, %s159
    %s162 = sphi 0, %s161
    %s176 = sphi 0, %s162
    %s180 = sphi 0, %s180
    %s182 = sphi 0, %s180
    %s183 = sphi 0, %s182
    %s197 = sphi 0, %s183
    %s201 = sphi 0, %s201
    %s203 = sphi 0, %s201
    %s204 = sphi 0, %s203
    %s218 = sphi 0, %s204
    %s224 = sphi 0, %s226
    %s227 = sphi 0, %s224
    %s228 = sphi 0, %s227
    %s244 = sphi 0, %s228
  $region4: #{decoder_forward.2} parent=0 // loop_header_branch
    %18 = sbr.rel (%p16) target = $region8
  $region5: #{decoder_forward.2} parent=0 // loop_body
    %s20 = ssub.s32 %s15, 1
    %s21 = ssub.s32 %s15, 2
    %s22 = sadd.s32 %s15, 1
    %s23 = ssub.s32 %s15, %s22
    %p24 = scmp.eq.s32.totalorder %s23, 0
    %s26 = sadd.s32 %s25, 1
    %s27 = scalar_select %p24, %s25, %s26
    %p30 = pneg %p24
    %p31 = scmp.eq.s32.totalorder %s15, 1
    %p32 = por %p30, %p31
    %p33 = scmp.ne.s32.totalorder %s25, %s28
    %p34 = scmp.eq.s32.totalorder %s15, 0
    %p35 = por %p33, %p34
    %p36 = scmp.ne.s32.totalorder %s25, %s28
    %p37 = scmp.eq.s32.totalorder %s20, 1
    %p38 = por %p36, %p37
    %p39 = scmp.ne.s32.totalorder %s28, %s29
    %p40 = scmp.eq.s32.totalorder %s20, 0
    %p41 = por %p39, %p40
    %p42 = scmp.ne.s32.totalorder %s28, %s29
    %p43 = scmp.eq.s32.totalorder %s21, 1
    %p44 = por %p42, %p43
    %p46 = scmp.ne.s32.totalorder %s29, %s45
    %p47 = scmp.eq.s32.totalorder %s21, 0
    %p48 = por %p46, %p47
    %s49 = ssub.s32 %s15, %s22
    %p50 = scmp.eq.s32.totalorder %s49, 0
    %s52 = sadd.s32 %s51, 1
    %s53 = scalar_select %p50, %s51, %s52
    %p56 = pneg %p50
    %p57 = scmp.eq.s32.totalorder %s15, 1
    %p58 = por %p56, %p57
    %p59 = scmp.ne.s32.totalorder %s51, %s54
    %p60 = scmp.eq.s32.totalorder %s15, 0
    %p61 = por %p59, %p60
    %p62 = scmp.ne.s32.totalorder %s51, %s54
    %p63 = scmp.eq.s32.totalorder %s20, 1
    %p64 = por %p62, %p63
    %p65 = scmp.ne.s32.totalorder %s54, %s55
    %p66 = scmp.eq.s32.totalorder %s20, 0
    %p67 = por %p65, %p66
    %p68 = scmp.ne.s32.totalorder %s54, %s55
    %p69 = scmp.eq.s32.totalorder %s21, 1
    %p70 = por %p68, %p69
    %p72 = scmp.ne.s32.totalorder %s55, %s71
    %p73 = scmp.eq.s32.totalorder %s21, 0
    %p74 = por %p72, %p73
    %s76 = sadd.s32 %s75, 1
    %p79 = scmp.eq.s32.totalorder %s15, 1
    %p80 = scmp.ne.s32.totalorder %s75, %s77
    %p81 = scmp.eq.s32.totalorder %s15, 0
    %p82 = por %p80, %p81
    %p83 = scmp.ne.s32.totalorder %s75, %s77
    %p84 = scmp.eq.s32.totalorder %s20, 1
    %p85 = por %p83, %p84
    %p86 = scmp.ne.s32.totalorder %s77, %s78
    %p87 = scmp.eq.s32.totalorder %s20, 0
    %p88 = por %p86, %p87
    %p89 = scmp.ne.s32.totalorder %s77, %s78
    %p90 = scmp.eq.s32.totalorder %s21, 1
    %p91 = por %p89, %p90
    %p93 = scmp.ne.s32.totalorder %s78, %s92
    %p94 = scmp.eq.s32.totalorder %s21, 0
    %p95 = por %p93, %p94
    %s97 = sadd.s32 %s96, 1
    %p100 = scmp.eq.s32.totalorder %s15, 1
    %p101 = scmp.ne.s32.totalorder %s96, %s98
    %p102 = scmp.eq.s32.totalorder %s15, 0
    %p103 = por %p101, %p102
    %p104 = scmp.ne.s32.totalorder %s96, %s98
    %p105 = scmp.eq.s32.totalorder %s20, 1
    %p106 = por %p104, %p105
    %p107 = scmp.ne.s32.totalorder %s98, %s99
    %p108 = scmp.eq.s32.totalorder %s20, 0
    %p109 = por %p107, %p108
    %p110 = scmp.ne.s32.totalorder %s98, %s99
    %p111 = scmp.eq.s32.totalorder %s21, 1
    %p112 = por %p110, %p111
    %p114 = scmp.ne.s32.totalorder %s99, %s113
    %p115 = scmp.eq.s32.totalorder %s21, 0
    %p116 = por %p114, %p115
    %s118 = sadd.s32 %s117, 1
    %p121 = scmp.eq.s32.totalorder %s15, 1
    %p122 = scmp.ne.s32.totalorder %s117, %s119
    %p123 = scmp.eq.s32.totalorder %s15, 0
    %p124 = por %p122, %p123
    %p125 = scmp.ne.s32.totalorder %s117, %s119
    %p126 = scmp.eq.s32.totalorder %s20, 1
    %p127 = por %p125, %p126
    %p128 = scmp.ne.s32.totalorder %s119, %s120
    %p129 = scmp.eq.s32.totalorder %s20, 0
    %p130 = por %p128, %p129
    %p131 = scmp.ne.s32.totalorder %s119, %s120
    %p132 = scmp.eq.s32.totalorder %s21, 1
    %p133 = por %p131, %p132
    %p135 = scmp.ne.s32.totalorder %s120, %s134
    %p136 = scmp.eq.s32.totalorder %s21, 0
    %p137 = por %p135, %p136
    %s139 = sadd.s32 %s138, 1
    %p142 = scmp.eq.s32.totalorder %s15, 1
    %p143 = scmp.ne.s32.totalorder %s138, %s140
    %p144 = scmp.eq.s32.totalorder %s15, 0
    %p145 = por %p143, %p144
    %p146 = scmp.ne.s32.totalorder %s138, %s140
    %p147 = scmp.eq.s32.totalorder %s20, 1
    %p148 = por %p146, %p147
    %p149 = scmp.ne.s32.totalorder %s140, %s141
    %p150 = scmp.eq.s32.totalorder %s20, 0
    %p151 = por %p149, %p150
    %p152 = scmp.ne.s32.totalorder %s140, %s141
    %p153 = scmp.eq.s32.totalorder %s21, 1
    %p154 = por %p152, %p153
    %p156 = scmp.ne.s32.totalorder %s141, %s155
    %p157 = scmp.eq.s32.totalorder %s21, 0
    %p158 = por %p156, %p157
    %s160 = sadd.s32 %s159, 1
    %p163 = scmp.eq.s32.totalorder %s15, 1
    %p164 = scmp.ne.s32.totalorder %s159, %s161
    %p165 = scmp.eq.s32.totalorder %s15, 0
    %p166 = por %p164, %p165
    %p167 = scmp.ne.s32.totalorder %s159, %s161
    %p168 = scmp.eq.s32.totalorder %s20, 1
    %p169 = por %p167, %p168
    %p170 = scmp.ne.s32.totalorder %s161, %s162
    %p171 = scmp.eq.s32.totalorder %s20, 0
    %p172 = por %p170, %p171
    %p173 = scmp.ne.s32.totalorder %s161, %s162
    %p174 = scmp.eq.s32.totalorder %s21, 1
    %p175 = por %p173, %p174
    %p177 = scmp.ne.s32.totalorder %s162, %s176
    %p178 = scmp.eq.s32.totalorder %s21, 0
    %p179 = por %p177, %p178
    %s181 = sadd.s32 %s180, 1
    %p184 = scmp.eq.s32.totalorder %s15, 1
    %p185 = scmp.ne.s32.totalorder %s180, %s182
    %p186 = scmp.eq.s32.totalorder %s15, 0
    %p187 = por %p185, %p186
    %p188 = scmp.ne.s32.totalorder %s180, %s182
    %p189 = scmp.eq.s32.totalorder %s20, 1
    %p190 = por %p188, %p189
    %p191 = scmp.ne.s32.totalorder %s182, %s183
    %p192 = scmp.eq.s32.totalorder %s20, 0
    %p193 = por %p191, %p192
    %p194 = scmp.ne.s32.totalorder %s182, %s183
    %p195 = scmp.eq.s32.totalorder %s21, 1
    %p196 = por %p194, %p195
    %p198 = scmp.ne.s32.totalorder %s183, %s197
    %p199 = scmp.eq.s32.totalorder %s21, 0
    %p200 = por %p198, %p199
    %s202 = sadd.s32 %s201, 1
    %p205 = scmp.eq.s32.totalorder %s15, 1
    %p206 = scmp.ne.s32.totalorder %s201, %s203
    %p207 = scmp.eq.s32.totalorder %s15, 0
    %p208 = por %p206, %p207
    %p209 = scmp.ne.s32.totalorder %s201, %s203
    %p210 = scmp.eq.s32.totalorder %s20, 1
    %p211 = por %p209, %p210
    %p212 = scmp.ne.s32.totalorder %s203, %s204
    %p213 = scmp.eq.s32.totalorder %s20, 0
    %p214 = por %p212, %p213
    %p215 = scmp.ne.s32.totalorder %s203, %s204
    %p216 = scmp.eq.s32.totalorder %s21, 1
    %p217 = por %p215, %p216
    %p219 = scmp.ne.s32.totalorder %s204, %s218
    %p220 = scmp.eq.s32.totalorder %s21, 0
    %p221 = por %p219, %p220
    %s222 = ssub.s32 %s15, %s22
    %p223 = scmp.eq.s32.totalorder %s222, 0
    %s225 = sadd.s32 %s224, 1
    %s226 = scalar_select %p223, %s224, %s225
    %p229 = pneg %p223
    %p230 = scmp.eq.s32.totalorder %s15, 1
    %p231 = por %p229, %p230
    %p232 = scmp.ne.s32.totalorder %s224, %s227
    %p233 = scmp.eq.s32.totalorder %s15, 0
    %p234 = por %p232, %p233
    %p235 = scmp.ne.s32.totalorder %s224, %s227
    %p236 = scmp.eq.s32.totalorder %s20, 1
    %p237 = por %p235, %p236
    %p238 = scmp.ne.s32.totalorder %s227, %s228
    %p239 = scmp.eq.s32.totalorder %s20, 0
    %p240 = por %p238, %p239
    %p241 = scmp.ne.s32.totalorder %s227, %s228
    %p242 = scmp.eq.s32.totalorder %s21, 1
    %p243 = por %p241, %p242
    %p245 = scmp.ne.s32.totalorder %s228, %s244
    %p246 = scmp.eq.s32.totalorder %s21, 0
    %p247 = por %p245, %p246
    %p248 = scmp.le.s32.totalorder 1, %s15
    %p249 = scmp.lt.s32.totalorder %s15, 3
    %p250 = pnand %p248, %p249
    %p251 = pneg %p250
    // Predicated region
    $region9: #{decoder_forward.2} parent=5 // pred_check
      _
    $region10: #{decoder_forward.2} parent=5 // pred_check_branch
      %253 = sbr.rel (%p250) target = $region12
    $region11: #{decoder_forward.2} parent=5 // pred_region
      %s254 = ssub.s32 %s15, 1
      // Predicated region
      $region13: #{decoder_forward.2} parent=11 // pred_check
        %p255 = pneg %p88
      $region14: #{decoder_forward.2} parent=11 // pred_check_branch
        %257 = sbr.rel (%p255) target = $region16
      $region15: #{decoder_forward.2} parent=11 // pred_region
        _
      $region16: #{decoder_forward.2} parent=11 // pred_fallthru
        _
      // Predicated region
      $region17: #{decoder_forward.2} parent=11 // pred_check
        %p258 = pneg %p109
      $region18: #{decoder_forward.2} parent=11 // pred_check_branch
        %260 = sbr.rel (%p258) target = $region20
      $region19: #{decoder_forward.2} parent=11 // pred_region
        _
      $region20: #{decoder_forward.2} parent=11 // pred_fallthru
        _
      // Predicated region
      $region21: #{decoder_forward.2} parent=11 // pred_check
        %p261 = pneg %p130
      $region22: #{decoder_forward.2} parent=11 // pred_check_branch
        %263 = sbr.rel (%p261) target = $region24
      $region23: #{decoder_forward.2} parent=11 // pred_region
        _
      $region24: #{decoder_forward.2} parent=11 // pred_fallthru
        _
      // Predicated region
      $region25: #{decoder_forward.2} parent=11 // pred_check
        %p264 = pneg %p151
      $region26: #{decoder_forward.2} parent=11 // pred_check_branch
        %266 = sbr.rel (%p264) target = $region28
      $region27: #{decoder_forward.2} parent=11 // pred_region
        _
      $region28: #{decoder_forward.2} parent=11 // pred_fallthru
        _
      // Predicated region
      $region29: #{decoder_forward.2} parent=11 // pred_check
        %p267 = pneg %p172
      $region30: #{decoder_forward.2} parent=11 // pred_check_branch
        %269 = sbr.rel (%p267) target = $region32
      $region31: #{decoder_forward.2} parent=11 // pred_region
        _
      $region32: #{decoder_forward.2} parent=11 // pred_fallthru
        _
      // Predicated region
      $region33: #{decoder_forward.2} parent=11 // pred_check
        %p270 = pneg %p193
      $region34: #{decoder_forward.2} parent=11 // pred_check_branch
        %272 = sbr.rel (%p270) target = $region36
      $region35: #{decoder_forward.2} parent=11 // pred_region
        _
      $region36: #{decoder_forward.2} parent=11 // pred_fallthru
        _
      // Predicated region
      $region37: #{decoder_forward.2} parent=11 // pred_check
        %p273 = pneg %p214
      $region38: #{decoder_forward.2} parent=11 // pred_check_branch
        %275 = sbr.rel (%p273) target = $region40
      $region39: #{decoder_forward.2} parent=11 // pred_region
        _
      $region40: #{decoder_forward.2} parent=11 // pred_fallthru
        _
    $region12: #{decoder_forward.2} parent=5 // pred_fallthru
      _
    %p276 = scmp.lt.s32.totalorder %s15, 2
    // Predicated region
    $region41: #{decoder_forward.2} parent=5 // pred_check
      %p277 = pneg %p276
    $region42: #{decoder_forward.2} parent=5 // pred_check_branch
      %279 = sbr.rel (%p277) target = $region44
    $region43: #{decoder_forward.2} parent=5 // pred_region
      // Predicated region
      $region45: #{decoder_forward.2} parent=43 // pred_check
        %p280 = pneg %p35
      $region46: #{decoder_forward.2} parent=43 // pred_check_branch
        %282 = sbr.rel (%p280) target = $region48
      $region47: #{decoder_forward.2} parent=43 // pred_region
        %p283 = scmp.lt.s32.totalorder %s15, 1
        %s284 = scalar_select %p283, %s15, 1
        %s285 = smul.addr %s284, 4
        %s286 = smul.addr %s285, 4
        %s287 = scalar_lea.vmem %s0, %s286
      $region48: #{decoder_forward.2} parent=43 // pred_fallthru
        _
      // Predicated region
      $region49: #{decoder_forward.2} parent=43 // pred_check
        %p288 = pneg %p61
      $region50: #{decoder_forward.2} parent=43 // pred_check_branch
        %290 = sbr.rel (%p288) target = $region52
      $region51: #{decoder_forward.2} parent=43 // pred_region
        %p291 = scmp.lt.s32.totalorder %s15, 1
        %s292 = scalar_select %p291, %s15, 1
        %s293 = smul.addr %s292, 4
        %s294 = smul.addr %s293, 4
        %s295 = scalar_lea.vmem %s1, %s294
      $region52: #{decoder_forward.2} parent=43 // pred_fallthru
        _
    $region44: #{decoder_forward.2} parent=5 // pred_fallthru
      _
    %p296 = scmp.le.s32.totalorder 1, %s15
    %p297 = scmp.lt.s32.totalorder %s15, 3
    %p298 = pnand %p296, %p297
    %p299 = pneg %p298
    // Predicated region
    $region53: #{decoder_forward.2} parent=5 // pred_check
      _
    $region54: #{decoder_forward.2} parent=5 // pred_check_branch
      %301 = sbr.rel (%p298) target = $region56
    $region55: #{decoder_forward.2} parent=5 // pred_region
      %s302 = ssub.s32 %s15, 1
      %p303 = scmp.lt.s32.totalorder %s20, 1
      %s304 = scalar_select %p303, %s20, 1
      %s305 = smul.addr %s304, 4
      %s306 = smul.addr %s305, 4
      %s307 = scalar_lea.vmem %s0, %s306
      %p308 = pneg %p41
      %p309 = pneg %p38
      %p310 = scmp.lt.s32.totalorder %s20, 1
      %s311 = scalar_select %p310, %s20, 1
      %s312 = smul.addr %s311, 4
      %s313 = smul.addr %s312, 4
      %s314 = scalar_lea.vmem %s1, %s313
      %p315 = pneg %p67
      %p316 = pneg %p64
      %p317 = pneg %p88
      %p318 = pneg %p85
      %p319 = pneg %p109
      %p320 = pneg %p106
      %p321 = pneg %p130
      %p322 = pneg %p127
      %p323 = pneg %p151
      %p324 = pneg %p148
      %p325 = pneg %p172
      %p326 = pneg %p169
      %p327 = pneg %p193
      %p328 = pneg %p190
      %p329 = pneg %p214
      %p330 = pneg %p211
      %p331 = pneg %p240
      %p332 = pneg %p237
      %p333 = scmp.lt.s32.totalorder %s20, 1
      %s334 = scalar_select %p333, %s20, 1
      %s335 = smul.addr %s334, 4
      %s336 = smul.addr %s335, 4
      %s337 = scalar_lea.vmem %s9, %s336
      %p338 = scmp.lt.s32.totalorder %s20, 1
      %s339 = scalar_select %p338, %s20, 1
      %s340 = smul.addr %s339, 4
      %s341 = smul.addr %s340, 4
      %s342 = scalar_lea.vmem %s0, %s341
      %p343 = scmp.lt.s32.totalorder %s20, 1
      %s344 = scalar_select %p343, %s20, 1
      %s345 = smul.addr %s344, 4
      %s346 = smul.addr %s345, 4
      %s347 = scalar_lea.vmem %s1, %s346
      %p348 = scmp.lt.s32.totalorder %s20, 1
      %s349 = scalar_select %p348, %s20, 1
      %s350 = smul.addr %s349, 4
      %s351 = smul.addr %s350, 4
      %s352 = scalar_lea.vmem %s9, %s351
      %v356 = vld [vmem:[%s3] sm:$0xf]
      %v357 = vld [vmem:[%s3 + $0x4] sm:$0xf]
      %v358 = vld [vmem:[%s342] sm:$0xf]
      %v359 = vld [vmem:[%s342 + $0x4] sm:$0xf]
      %v360 = vld [vmem:[%s342 + $0x8] sm:$0xf]
      %v361 = vld [vmem:[%s342 + $0xc] sm:$0xf]
      %v362 = vld [vmem:[%s4] sm:$0xff]
      %v363 = vld [vmem:[%s4 + $0x8] sm:$0xff]
      %365 = vset.pattern.permute.xlu0 0
      %366 = vperm.xlu0 %365, %v362
      %v367 = vpop.permute.xlu0 %366
      %370 = vset.pattern.permute.xlu0 0
      %371 = vperm.xlu0 %370, %v363
      %v372 = vpop.permute.xlu0 %371
      %v376 = vunpack.c.l.b16 %v356
      %v377 = vunpack.c.l.b16 %v357
      %v378 = vpack.c.b16 %v377, %v376
      %v383 = vunpack.c.l.b16 %v358
      %v384 = vunpack.c.l.b16 %v359
      %v385 = vunpack.c.l.b16 %v360
      %v386 = vunpack.c.l.b16 %v361
      %v387 = vpack.c.b16 %v384, %v383
      %v388 = vpack.c.b16 %v386, %v385
      %vm391 = vcmask 261120
      %v393 = vsel %vm391, %v378, 0
      %395 = vmatprep.subr.bf16.mxu0 0
      %396 = vmatpush1.bf16.msra.mxu0 %v387
      %397 = vmatprep.subr.bf16.mxu0 0
      %398 = vmatpush1.bf16.msra.mxu0 %v388
      %399 = vmatprep.subr.bf16.mxu0 0
      %400 = vmatpush1.bf16.msra.mxu0 0
      %401 = vmatprep.subr.bf16.mxu0 0
      %402 = vmatpush1.bf16.msra.mxu0 0
      %403 = vmatprep.subr.bf16.mxu0 0
      %404 = vmatpush1.bf16.msra.mxu0 0
      %405 = vmatprep.subr.bf16.mxu0 0
      %406 = vmatpush1.bf16.msra.mxu0 0
      %407 = vmatprep.subr.bf16.mxu0 0
      %408 = vmatpush1.bf16.msra.mxu0 0
      %409 = vmatprep.subr.bf16.mxu0 0
      %410 = vmatpush1.bf16.msra.mxu0 0
      %411 = vmatprep.subr.bf16.mxu0 0
      %412 = vmatpush1.bf16.msra.mxu0 0
      %413 = vmatprep.subr.bf16.mxu0 0
      %414 = vmatpush1.bf16.msra.mxu0 0
      %415 = vmatprep.subr.bf16.mxu0 0
      %416 = vmatpush1.bf16.msra.mxu0 0
      %417 = vmatprep.subr.bf16.mxu0 0
      %418 = vmatpush1.bf16.msra.mxu0 0
      %419 = vmatprep.subr.bf16.mxu0 0
      %420 = vmatpush1.bf16.msra.mxu0 0
      %421 = vmatprep.subr.bf16.mxu0 0
      %422 = vmatpush1.bf16.msra.mxu0 0
      %423 = vmatprep.subr.bf16.mxu0 0
      %424 = vmatpush1.bf16.msra.mxu0 0
      %425 = vmatprep.subr.bf16.mxu0 0
      %426 = vmatpush1.bf16.msra.mxu0 0
      %427 = vmatprep.mubr.bf16.mxu0 0
      %428 = vmatmul.mubr.bf16.gmra.mrb[0].mxu0 %v393
      %v429 = vpop.f32.mrb[0].mxu0
      %v430 = vadd.f32 %v367, %v429
      %v431 = vpop.f32.mrb[0].mxu0
      %v432 = vpop.f32.mrb[0].mxu0
      %v433 = vadd.f32 %v372, %v432
      %v434 = vpop.f32.mrb[0].mxu0
      %435 = vdwg.mxu0
      %v436 = vpack.c.bf16 %v433, %v430
      %v437 = vld [vmem:[%s2] sm:$0xff]
      %v438 = vld [vmem:[%s2 + $0x8] sm:$0xff]
      %v439 = vld [vmem:[%s2 + $0x10] sm:$0xff]
      %v440 = vld [vmem:[%s2 + $0x18] sm:$0xff]
      %v441 = vld [vmem:[%s2 + $0x20] sm:$0xff]
      %v442 = vld [vmem:[%s2 + $0x28] sm:$0xff]
      %v443 = vld [vmem:[%s2 + $0x30] sm:$0xff]
      %v444 = vld [vmem:[%s2 + $0x38] sm:$0xff]
      %s445 = scalar_lea.vmem %s3, 8
      %v446 = vld [vmem:[%s445] sm:$0xf]
      %v447 = vld [vmem:[%s445 + $0x4] sm:$0xf]
      %v450 = vunpack.c.l.b16 %v446
      %v451 = vunpack.c.l.b16 %v447
      %v452 = vpack.c.b16 %v451, %v450
      %v454 = vsel %vm391, %v452, 0
      %456 = vmatprep.subr.bf16.mxu0 0
      %457 = vmatpush1.bf16.msra.mxu0 %v387
      %458 = vmatprep.subr.bf16.mxu0 0
      %459 = vmatpush1.bf16.msra.mxu0 %v388
      %460 = vmatprep.subr.bf16.mxu0 0
      %461 = vmatpush1.bf16.msra.mxu0 0
      %462 = vmatprep.subr.bf16.mxu0 0
      %463 = vmatpush1.bf16.msra.mxu0 0
      %464 = vmatprep.subr.bf16.mxu0 0
      %465 = vmatpush1.bf16.msra.mxu0 0
      %466 = vmatprep.subr.bf16.mxu0 0
      %467 = vmatpush1.bf16.msra.mxu0 0
      %468 = vmatprep.subr.bf16.mxu0 0
      %469 = vmatpush1.bf16.msra.mxu0 0
      %470 = vmatprep.subr.bf16.mxu0 0
      %471 = vmatpush1.bf16.msra.mxu0 0
      %472 = vmatprep.subr.bf16.mxu0 0
      %473 = vmatpush1.bf16.msra.mxu0 0
      %474 = vmatprep.subr.bf16.mxu0 0
      %475 = vmatpush1.bf16.msra.mxu0 0
      %476 = vmatprep.subr.bf16.mxu0 0
      %477 = vmatpush1.bf16.msra.mxu0 0
      %478 = vmatprep.subr.bf16.mxu0 0
      %479 = vmatpush1.bf16.msra.mxu0 0
      %480 = vmatprep.subr.bf16.mxu0 0
      %481 = vmatpush1.bf16.msra.mxu0 0
      %482 = vmatprep.subr.bf16.mxu0 0
      %483 = vmatpush1.bf16.msra.mxu0 0
      %484 = vmatprep.subr.bf16.mxu0 0
      %485 = vmatpush1.bf16.msra.mxu0 0
      %486 = vmatprep.subr.bf16.mxu0 0
      %487 = vmatpush1.bf16.msra.mxu0 0
      %488 = vmatprep.mubr.bf16.mxu0 0
      %489 = vmatmul.mubr.bf16.gmra.mrb[0].mxu0 %v454
      %v490 = vpop.f32.mrb[0].mxu0
      %v491 = vadd.f32 %v367, %v490
      %v492 = vpop.f32.mrb[0].mxu0
      %v493 = vpop.f32.mrb[0].mxu0
      %v494 = vadd.f32 %v372, %v493
      %v495 = vpop.f32.mrb[0].mxu0
      %496 = vdwg.mxu0
      %v497 = vpack.c.bf16 %v494, %v491
      %s498 = scalar_lea.vmem %s2, 64
      %v499 = vld [vmem:[%s498] sm:$0xff]
      %v500 = vld [vmem:[%s498 + $0x8] sm:$0xff]
      %v501 = vld [vmem:[%s498 + $0x10] sm:$0xff]
      %v502 = vld [vmem:[%s498 + $0x18] sm:$0xff]
      %v503 = vld [vmem:[%s498 + $0x20] sm:$0xff]
      %v504 = vld [vmem:[%s498 + $0x28] sm:$0xff]
      %v505 = vld [vmem:[%s498 + $0x30] sm:$0xff]
      %v506 = vld [vmem:[%s498 + $0x38] sm:$0xff]
      %v515 = vunpack.c.l.b16 %v499
      %v516 = vunpack.c.h.b16 %v499
      %v517 = vunpack.c.l.b16 %v500
      %v518 = vunpack.c.h.b16 %v500
      %v519 = vunpack.c.l.b16 %v501
      %v520 = vunpack.c.h.b16 %v501
      %v521 = vunpack.c.l.b16 %v502
      %v522 = vunpack.c.h.b16 %v502
      %v523 = vunpack.c.l.b16 %v503
      %v524 = vunpack.c.h.b16 %v503
      %v525 = vunpack.c.l.b16 %v504
      %v526 = vunpack.c.h.b16 %v504
      %v527 = vunpack.c.l.b16 %v505
      %v528 = vunpack.c.h.b16 %v505
      %v529 = vunpack.c.l.b16 %v506
      %v530 = vunpack.c.h.b16 %v506
      %v531 = vpack.c.b16 %v517, %v515
      %v532 = vpack.c.b16 %v518, %v516
      %v533 = vpack.c.b16 %v521, %v519
      %v534 = vpack.c.b16 %v522, %v520
      %v535 = vpack.c.b16 %v525, %v523
      %v536 = vpack.c.b16 %v526, %v524
      %v537 = vpack.c.b16 %v529, %v527
      %v538 = vpack.c.b16 %v530, %v528
      %vm547 = vcmask 523264
      %v549 = vsel %vm547, %v497, 0
      %551 = vmatprep.subr.bf16.mxu0 %v532
      %552 = vmatpush1.bf16.msra.mxu0 %v531
      %553 = vmatprep.subr.bf16.mxu0 %v534
      %554 = vmatpush1.bf16.msra.mxu0 %v533
      %555 = vmatprep.subr.bf16.mxu0 %v536
      %556 = vmatpush1.bf16.msra.mxu0 %v535
      %557 = vmatprep.subr.bf16.mxu0 %v538
      %558 = vmatpush1.bf16.msra.mxu0 %v537
      %559 = vmatprep.subr.bf16.mxu0 0
      %560 = vmatpush1.bf16.msra.mxu0 0
      %561 = vmatprep.subr.bf16.mxu0 0
      %562 = vmatpush1.bf16.msra.mxu0 0
      %563 = vmatprep.subr.bf16.mxu0 0
      %564 = vmatpush1.bf16.msra.mxu0 0
      %565 = vmatprep.subr.bf16.mxu0 0
      %566 = vmatpush1.bf16.msra.mxu0 0
      %567 = vmatprep.subr.bf16.mxu0 0
      %568 = vmatpush1.bf16.msra.mxu0 0
      %569 = vmatprep.subr.bf16.mxu0 0
      %570 = vmatpush1.bf16.msra.mxu0 0
      %571 = vmatprep.subr.bf16.mxu0 0
      %572 = vmatpush1.bf16.msra.mxu0 0
      %573 = vmatprep.subr.bf16.mxu0 0
      %574 = vmatpush1.bf16.msra.mxu0 0
      %575 = vmatprep.subr.bf16.mxu0 0
      %576 = vmatpush1.bf16.msra.mxu0 0
      %577 = vmatprep.subr.bf16.mxu0 0
      %578 = vmatpush1.bf16.msra.mxu0 0
      %579 = vmatprep.subr.bf16.mxu0 0
      %580 = vmatpush1.bf16.msra.mxu0 0
      %581 = vmatprep.subr.bf16.mxu0 0
      %582 = vmatpush1.bf16.msra.mxu0 0
      %583 = vmatprep.mubr.bf16.mxu0 0
      %584 = vmatmul.mubr.bf16.gmra.mrb[0].mxu0 %v549
      %v585 = vpop.f32.mrb[0].mxu0
      %v586 = vadd.f32 0.0, %v585
      %v587 = vpop.f32.mrb[0].mxu0
      %v588 = vadd.f32 0.0, %v587
      %v589 = vpop.f32.mrb[0].mxu0
      %v590 = vadd.f32 0.0, %v589
      %v591 = vpop.f32.mrb[0].mxu0
      %v592 = vadd.f32 0.0, %v591
      %593 = vdwg.mxu0
      %v602 = vunpack.c.l.b16 %v437
      %v603 = vunpack.c.h.b16 %v437
      %v604 = vunpack.c.l.b16 %v438
      %v605 = vunpack.c.h.b16 %v438
      %v606 = vunpack.c.l.b16 %v439
      %v607 = vunpack.c.h.b16 %v439
      %v608 = vunpack.c.l.b16 %v440
      %v609 = vunpack.c.h.b16 %v440
      %v610 = vunpack.c.l.b16 %v441
      %v611 = vunpack.c.h.b16 %v441
      %v612 = vunpack.c.l.b16 %v442
      %v613 = vunpack.c.h.b16 %v442
      %v614 = vunpack.c.l.b16 %v443
      %v615 = vunpack.c.h.b16 %v443
      %v616 = vunpack.c.l.b16 %v444
      %v617 = vunpack.c.h.b16 %v444
      %v618 = vpack.c.b16 %v604, %v602
      %v619 = vpack.c.b16 %v605, %v603
      %v620 = vpack.c.b16 %v608, %v606
      %v621 = vpack.c.b16 %v609, %v607
      %v622 = vpack.c.b16 %v612, %v610
      %v623 = vpack.c.b16 %v613, %v611
      %v624 = vpack.c.b16 %v616, %v614
      %v625 = vpack.c.b16 %v617, %v615
      %v635 = vsel %vm547, %v436, 0
      %637 = vmatprep.subr.bf16.mxu0 %v619
      %638 = vmatpush1.bf16.msra.mxu0 %v618
      %639 = vmatprep.subr.bf16.mxu0 %v621
      %640 = vmatpush1.bf16.msra.mxu0 %v620
      %641 = vmatprep.subr.bf16.mxu0 %v623
      %642 = vmatpush1.bf16.msra.mxu0 %v622
      %643 = vmatprep.subr.bf16.mxu0 %v625
      %644 = vmatpush1.bf16.msra.mxu0 %v624
      %645 = vmatprep.subr.bf16.mxu0 0
      %646 = vmatpush1.bf16.msra.mxu0 0
      %647 = vmatprep.subr.bf16.mxu0 0
      %648 = vmatpush1.bf16.msra.mxu0 0
      %649 = vmatprep.subr.bf16.mxu0 0
      %650 = vmatpush1.bf16.msra.mxu0 0
      %651 = vmatprep.subr.bf16.mxu0 0
      %652 = vmatpush1.bf16.msra.mxu0 0
      %653 = vmatprep.subr.bf16.mxu0 0
      %654 = vmatpush1.bf16.msra.mxu0 0
      %655 = vmatprep.subr.bf16.mxu0 0
      %656 = vmatpush1.bf16.msra.mxu0 0
      %657 = vmatprep.subr.bf16.mxu0 0
      %658 = vmatpush1.bf16.msra.mxu0 0
      %659 = vmatprep.subr.bf16.mxu0 0
      %660 = vmatpush1.bf16.msra.mxu0 0
      %661 = vmatprep.subr.bf16.mxu0 0
      %662 = vmatpush1.bf16.msra.mxu0 0
      %663 = vmatprep.subr.bf16.mxu0 0
      %664 = vmatpush1.bf16.msra.mxu0 0
      %665 = vmatprep.subr.bf16.mxu0 0
      %666 = vmatpush1.bf16.msra.mxu0 0
      %667 = vmatprep.subr.bf16.mxu0 0
      %668 = vmatpush1.bf16.msra.mxu0 0
      %669 = vmatprep.mubr.bf16.mxu0 0
      %670 = vmatmul.mubr.bf16.gmra.mrb[0].mxu0 %v635
      %v671 = vpop.f32.mrb[0].mxu0
      %v672 = vadd.f32 %v586, %v671
      %v673 = vpop.f32.mrb[0].mxu0
      %v674 = vadd.f32 %v588, %v673
      %v675 = vpop.f32.mrb[0].mxu0
      %v676 = vadd.f32 %v590, %v675
      %v677 = vpop.f32.mrb[0].mxu0
      %v678 = vadd.f32 %v592, %v677
      %679 = vdwg.mxu0
      %s680 = scalar_lea.vmem %s3, 16
      %v681 = vld [vmem:[%s680] sm:$0xf]
      %v682 = vld [vmem:[%s680 + $0x4] sm:$0xf]
      %v685 = vunpack.c.l.b16 %v681
      %v686 = vunpack.c.l.b16 %v682
      %v687 = vpack.c.b16 %v686, %v685
      %v689 = vsel %vm391, %v687, 0
      %691 = vmatprep.subr.bf16.mxu0 0
      %692 = vmatpush1.bf16.msra.mxu0 %v387
      %693 = vmatprep.subr.bf16.mxu0 0
      %694 = vmatpush1.bf16.msra.mxu0 %v388
      %695 = vmatprep.subr.bf16.mxu0 0
      %696 = vmatpush1.bf16.msra.mxu0 0
      %697 = vmatprep.subr.bf16.mxu0 0
      %698 = vmatpush1.bf16.msra.mxu0 0
      %699 = vmatprep.subr.bf16.mxu0 0
      %700 = vmatpush1.bf16.msra.mxu0 0
      %701 = vmatprep.subr.bf16.mxu0 0
      %702 = vmatpush1.bf16.msra.mxu0 0
      %703 = vmatprep.subr.bf16.mxu0 0
      %704 = vmatpush1.bf16.msra.mxu0 0
      %705 = vmatprep.subr.bf16.mxu0 0
      %706 = vmatpush1.bf16.msra.mxu0 0
      %707 = vmatprep.subr.bf16.mxu0 0
      %708 = vmatpush1.bf16.msra.mxu0 0
      %709 = vmatprep.subr.bf16.mxu0 0
      %710 = vmatpush1.bf16.msra.mxu0 0
      %711 = vmatprep.subr.bf16.mxu0 0
      %712 = vmatpush1.bf16.msra.mxu0 0
      %713 = vmatprep.subr.bf16.mxu0 0
      %714 = vmatpush1.bf16.msra.mxu0 0
      %715 = vmatprep.subr.bf16.mxu0 0
      %716 = vmatpush1.bf16.msra.mxu0 0
      %717 = vmatprep.subr.bf16.mxu0 0
      %718 = vmatpush1.bf16.msra.mxu0 0
      %719 = vmatprep.subr.bf16.mxu0 0
      %720 = vmatpush1.bf16.msra.mxu0 0
      %721 = vmatprep.subr.bf16.mxu0 0
      %722 = vmatpush1.bf16.msra.mxu0 0
      %723 = vmatprep.mubr.bf16.mxu0 0
      %724 = vmatmul.mubr.bf16.gmra.mrb[0].mxu0 %v689
      %v725 = vpop.f32.mrb[0].mxu0
      %v726 = vadd.f32 %v367, %v725
      %v727 = vpop.f32.mrb[0].mxu0
      %v728 = vpop.f32.mrb[0].mxu0
      %v729 = vadd.f32 %v372, %v728
      %v730 = vpop.f32.mrb[0].mxu0
      %731 = vdwg.mxu0
      %v732 = vpack.c.bf16 %v729, %v726
      %s733 = scalar_lea.vmem %s2, 128
      %v734 = vld [vmem:[%s733] sm:$0xff]
      %v735 = vld [vmem:[%s733 + $0x8] sm:$0xff]
      %v736 = vld [vmem:[%s733 + $0x10] sm:$0xff]
      %v737 = vld [vmem:[%s733 + $0x18] sm:$0xff]
      %v738 = vld [vmem:[%s733 + $0x20] sm:$0xff]
      %v739 = vld [vmem:[%s733 + $0x28] sm:$0xff]
      %v740 = vld [vmem:[%s733 + $0x30] sm:$0xff]
      %v741 = vld [vmem:[%s733 + $0x38] sm:$0xff]
      %v750 = vunpack.c.l.b16 %v734
      %v751 = vunpack.c.h.b16 %v734
      %v752 = vunpack.c.l.b16 %v735
      %v753 = vunpack.c.h.b16 %v735
      %v754 = vunpack.c.l.b16 %v736
      %v755 = vunpack.c.h.b16 %v736
      %v756 = vunpack.c.l.b16 %v737
      %v757 = vunpack.c.h.b16 %v737
      %v758 = vunpack.c.l.b16 %v738
      %v759 = vunpack.c.h.b16 %v738
      %v760 = vunpack.c.l.b16 %v739
      %v761 = vunpack.c.h.b16 %v739
      %v762 = vunpack.c.l.b16 %v740
      %v763 = vunpack.c.h.b16 %v740
      %v764 = vunpack.c.l.b16 %v741
      %v765 = vunpack.c.h.b16 %v741
      %v766 = vpack.c.b16 %v752, %v750
      %v767 = vpack.c.b16 %v753, %v751
      %v768 = vpack.c.b16 %v756, %v754
      %v769 = vpack.c.b16 %v757, %v755
      %v770 = vpack.c.b16 %v760, %v758
      %v771 = vpack.c.b16 %v761, %v759
      %v772 = vpack.c.b16 %v764, %v762
      %v773 = vpack.c.b16 %v765, %v763
      %v783 = vsel %vm547, %v732, 0
      %785 = vmatprep.subr.bf16.mxu0 %v767
      %786 = vmatpush1.bf16.msra.mxu0 %v766
      %787 = vmatprep.subr.bf16.mxu0 %v769
      %788 = vmatpush1.bf16.msra.mxu0 %v768
      %789 = vmatprep.subr.bf16.mxu0 %v771
      %790 = vmatpush1.bf16.msra.mxu0 %v770
      %791 = vmatprep.subr.bf16.mxu0 %v773
      %792 = vmatpush1.bf16.msra.mxu0 %v772
      %793 = vmatprep.subr.bf16.mxu0 0
      %794 = vmatpush1.bf16.msra.mxu0 0
      %795 = vmatprep.subr.bf16.mxu0 0
      %796 = vmatpush1.bf16.msra.mxu0 0
      %797 = vmatprep.subr.bf16.mxu0 0
      %798 = vmatpush1.bf16.msra.mxu0 0
      %799 = vmatprep.subr.bf16.mxu0 0
      %800 = vmatpush1.bf16.msra.mxu0 0
      %801 = vmatprep.subr.bf16.mxu0 0
      %802 = vmatpush1.bf16.msra.mxu0 0
      %803 = vmatprep.subr.bf16.mxu0 0
      %804 = vmatpush1.bf16.msra.mxu0 0
      %805 = vmatprep.subr.bf16.mxu0 0
      %806 = vmatpush1.bf16.msra.mxu0 0
      %807 = vmatprep.subr.bf16.mxu0 0
      %808 = vmatpush1.bf16.msra.mxu0 0
      %809 = vmatprep.subr.bf16.mxu0 0
      %810 = vmatpush1.bf16.msra.mxu0 0
      %811 = vmatprep.subr.bf16.mxu0 0
      %812 = vmatpush1.bf16.msra.mxu0 0
      %813 = vmatprep.subr.bf16.mxu0 0
      %814 = vmatpush1.bf16.msra.mxu0 0
      %815 = vmatprep.subr.bf16.mxu0 0
      %816 = vmatpush1.bf16.msra.mxu0 0
      %817 = vmatprep.mubr.bf16.mxu0 0
      %818 = vmatmul.mubr.bf16.gmra.mrb[0].mxu0 %v783
      %v819 = vpop.f32.mrb[0].mxu0
      %v820 = vadd.f32 0.0, %v819
      %v821 = vpop.f32.mrb[0].mxu0
      %v822 = vadd.f32 0.0, %v821
      %v823 = vpop.f32.mrb[0].mxu0
      %v824 = vadd.f32 0.0, %v823
      %v825 = vpop.f32.mrb[0].mxu0
      %v826 = vadd.f32 0.0, %v825
      %827 = vdwg.mxu0
      %v828 = vadd.f32 %v672, %v820
      %v829 = vadd.f32 %v674, %v822
      %v830 = vadd.f32 %v676, %v824
      %v831 = vadd.f32 %v678, %v826
      %s832 = scalar_lea.vmem %s3, 24
      %v833 = vld [vmem:[%s832] sm:$0xf]
      %v834 = vld [vmem:[%s832 + $0x4] sm:$0xf]
      %v837 = vunpack.c.l.b16 %v833
      %v838 = vunpack.c.l.b16 %v834
      %v839 = vpack.c.b16 %v838, %v837
      %v841 = vsel %vm391, %v839, 0
      %843 = vmatprep.subr.bf16.mxu0 0
      %844 = vmatpush1.bf16.msra.mxu0 %v387
      %845 = vmatprep.subr.bf16.mxu0 0
      %846 = vmatpush1.bf16.msra.mxu0 %v388
      %847 = vmatprep.subr.bf16.mxu0 0
      %848 = vmatpush1.bf16.msra.mxu0 0
      %849 = vmatprep.subr.bf16.mxu0 0
      %850 = vmatpush1.bf16.msra.mxu0 0
      %851 = vmatprep.subr.bf16.mxu0 0
      %852 = vmatpush1.bf16.msra.mxu0 0
      %853 = vmatprep.subr.bf16.mxu0 0
      %854 = vmatpush1.bf16.msra.mxu0 0
      %855 = vmatprep.subr.bf16.mxu0 0
      %856 = vmatpush1.bf16.msra.mxu0 0
      %857 = vmatprep.subr.bf16.mxu0 0
      %858 = vmatpush1.bf16.msra.mxu0 0
      %859 = vmatprep.subr.bf16.mxu0 0
      %860 = vmatpush1.bf16.msra.mxu0 0
      %861 = vmatprep.subr.bf16.mxu0 0
      %862 = vmatpush1.bf16.msra.mxu0 0
      %863 = vmatprep.subr.bf16.mxu0 0
      %864 = vmatpush1.bf16.msra.mxu0 0
      %865 = vmatprep.subr.bf16.mxu0 0
      %866 = vmatpush1.bf16.msra.mxu0 0
      %867 = vmatprep.subr.bf16.mxu0 0
      %868 = vmatpush1.bf16.msra.mxu0 0
      %869 = vmatprep.subr.bf16.mxu0 0
      %870 = vmatpush1.bf16.msra.mxu0 0
      %871 = vmatprep.subr.bf16.mxu0 0
      %872 = vmatpush1.bf16.msra.mxu0 0
      %873 = vmatprep.subr.bf16.mxu0 0
      %874 = vmatpush1.bf16.msra.mxu0 0
      %875 = vmatprep.mubr.bf16.mxu0 0
      %876 = vmatmul.mubr.bf16.gmra.mrb[0].mxu0 %v841
      %v877 = vpop.f32.mrb[0].mxu0
      %v878 = vadd.f32 %v367, %v877
      %v879 = vpop.f32.mrb[0].mxu0
      %v880 = vpop.f32.mrb[0].mxu0
      %v881 = vadd.f32 %v372, %v880
      %v882 = vpop.f32.mrb[0].mxu0
      %883 = vdwg.mxu0
      %v884 = vpack.c.bf16 %v881, %v878
      %s885 = scalar_lea.vmem %s2, 192
      %v886 = vld [vmem:[%s885] sm:$0xff]
      %v887 = vld [vmem:[%s885 + $0x8] sm:$0xff]
      %v888 = vld [vmem:[%s885 + $0x10] sm:$0xff]
      %v889 = vld [vmem:[%s885 + $0x18] sm:$0xff]
      %v890 = vld [vmem:[%s885 + $0x20] sm:$0xff]
      %v891 = vld [vmem:[%s885 + $0x28] sm:$0xff]
      %v892 = vld [vmem:[%s885 + $0x30] sm:$0xff]
      %v893 = vld [vmem:[%s885 + $0x38] sm:$0xff]
      %v902 = vunpack.c.l.b16 %v886
      %v903 = vunpack.c.h.b16 %v886
      %v904 = vunpack.c.l.b16 %v887
      %v905 = vunpack.c.h.b16 %v887
      %v906 = vunpack.c.l.b16 %v888
      %v907 = vunpack.c.h.b16 %v888
      %v908 = vunpack.c.l.b16 %v889
      %v909 = vunpack.c.h.b16 %v889
      %v910 = vunpack.c.l.b16 %v890
      %v911 = vunpack.c.h.b16 %v890
      %v912 = vunpack.c.l.b16 %v891
      %v913 = vunpack.c.h.b16 %v891
      %v914 = vunpack.c.l.b16 %v892
      %v915 = vunpack.c.h.b16 %v892
      %v916 = vunpack.c.l.b16 %v893
      %v917 = vunpack.c.h.b16 %v893
      %v918 = vpack.c.b16 %v904, %v902
      %v919 = vpack.c.b16 %v905, %v903
      %v920 = vpack.c.b16 %v908, %v906
      %v921 = vpack.c.b16 %v909, %v907
      %v922 = vpack.c.b16 %v912, %v910
      %v923 = vpack.c.b16 %v913, %v911
      %v924 = vpack.c.b16 %v916, %v914
      %v925 = vpack.c.b16 %v917, %v915
      %v935 = vsel %vm547, %v884, 0
      %937 = vmatprep.subr.bf16.mxu0 %v919
      %938 = vmatpush1.bf16.msra.mxu0 %v918
      %939 = vmatprep.subr.bf16.mxu0 %v921
      %940 = vmatpush1.bf16.msra.mxu0 %v920
      %941 = vmatprep.subr.bf16.mxu0 %v923
      %942 = vmatpush1.bf16.msra.mxu0 %v922
      %943 = vmatprep.subr.bf16.mxu0 %v925
      %944 = vmatpush1.bf16.msra.mxu0 %v924
      %945 = vmatprep.subr.bf16.mxu0 0
      %946 = vmatpush1.bf16.msra.mxu0 0
      %947 = vmatprep.subr.bf16.mxu0 0
      %948 = vmatpush1.bf16.msra.mxu0 0
      %949 = vmatprep.subr.bf16.mxu0 0
      %950 = vmatpush1.bf16.msra.mxu0 0
      %951 = vmatprep.subr.bf16.mxu0 0
      %952 = vmatpush1.bf16.msra.mxu0 0
      %953 = vmatprep.subr.bf16.mxu0 0
      %954 = vmatpush1.bf16.msra.mxu0 0
      %955 = vmatprep.subr.bf16.mxu0 0
      %956 = vmatpush1.bf16.msra.mxu0 0
      %957 = vmatprep.subr.bf16.mxu0 0
      %958 = vmatpush1.bf16.msra.mxu0 0
      %959 = vmatprep.subr.bf16.mxu0 0
      %960 = vmatpush1.bf16.msra.mxu0 0
      %961 = vmatprep.subr.bf16.mxu0 0
      %962 = vmatpush1.bf16.msra.mxu0 0
      %963 = vmatprep.subr.bf16.mxu0 0
      %964 = vmatpush1.bf16.msra.mxu0 0
      %965 = vmatprep.subr.bf16.mxu0 0
      %966 = vmatpush1.bf16.msra.mxu0 0
      %967 = vmatprep.subr.bf16.mxu0 0
      %968 = vmatpush1.bf16.msra.mxu0 0
      %969 = vmatprep.mubr.bf16.mxu0 0
      %970 = vmatmul.mubr.bf16.gmra.mrb[0].mxu0 %v935
      %v971 = vpop.f32.mrb[0].mxu0
      %v972 = vadd.f32 0.0, %v971
      %v973 = vpop.f32.mrb[0].mxu0
      %v974 = vadd.f32 0.0, %v973
      %v975 = vpop.f32.mrb[0].mxu0
      %v976 = vadd.f32 0.0, %v975
      %v977 = vpop.f32.mrb[0].mxu0
      %v978 = vadd.f32 0.0, %v977
      %979 = vdwg.mxu0
      %v980 = vadd.f32 %v828, %v972
      %v981 = vadd.f32 %v829, %v974
      %v982 = vadd.f32 %v830, %v976
      %v983 = vadd.f32 %v831, %v978
      %v984 = vpack.c.bf16 %v982, %v980
      %v985 = vpack.c.bf16 %v983, %v981
      %v986 = vld [vmem:[%s347] sm:$0xff]
      %v987 = vld [vmem:[%s347 + $0x8] sm:$0xff]
      %v990 = vunpack.c.l.b16 %v986
      %v991 = vunpack.c.h.b16 %v986
      %v992 = vunpack.c.l.b16 %v987
      %v993 = vunpack.c.h.b16 %v987
      %v994 = vpack.c.b16 %v992, %v990
      %v995 = vpack.c.b16 %v993, %v991
      %v996 = vlaneseq
      %v997 = vand.u32 %v996, 127
      %v998 = vadd.s32 %v997, 128
      %vm999 = vcmp.lt.s32.totalorder %v997, 0
      %v1000 = vsub.s32 0, %v997
      %v1001 = vsel %vm999, %v1000, %v997
      %v1002 = vshrl.u32 %v1001, 4
      %v1003 = vand.u32 %v1001, 15
      %v1004 = vsub.s32 0, %v1003
      %v1005 = vsel %vm999, %v1004, %v1003
      %vm1006 = vcmp.lt.s32.totalorder %v998, 0
      %v1007 = vsub.s32 0, %v998
      %v1008 = vsel %vm1006, %v1007, %v998
      %v1009 = vshrl.u32 %v1008, 4
      %v1010 = vand.u32 %v1008, 15
      %v1011 = vsub.s32 0, %v1010
      %v1012 = vsel %vm1006, %v1011, %v1010
      %vm1013 = vcmp.ne.s32.totalorder %v1005, 0
      %vm1014 = vcmp.ne.s32.totalorder %v1012, 0
      %vm1015 = vcmp.lt.s32.totalorder %v1005, 0
      %vm1016 = vcmp.lt.s32.totalorder %v1012, 0
      %vm1017 = vmand %vm1015, %vm1013
      %vm1018 = vmand %vm1016, %vm1014
      %v1019 = vadd.s32 %v1005, 16
      %v1020 = vadd.s32 %v1012, 16
      %v1021 = vsel %vm1017, %v1019, %v1005
      %v1022 = vsel %vm1018, %v1020, %v1012
      %vm1023 = vcmp.ne.s32.totalorder %v1021, 0
      %vm1024 = vcmp.ne.s32.totalorder %v1022, 0
      %vm1025 = vcmp.ne.s32.totalorder %v1021, 15
      %vm1026 = vcmp.ne.s32.totalorder %v1022, 15
      %1029 = vrot.lane.b32.xlu0 %v984, 17
      %v1030 = vpop.permute.xlu0 %1029
      %1031 = vrot.lane.b32.xlu0 %v985, 17
      %v1032 = vpop.permute.xlu0 %1031
      %1033 = vrot.lane.b32.xlu0 %v994, 17
      %v1034 = vpop.permute.xlu0 %1033
      %1035 = vrot.lane.b32.xlu0 %v995, 17
      %v1036 = vpop.permute.xlu0 %1035
      %vm1037 = vcmask 138240
      %v1038 = vsel %vm1037, %v1030, %v1032
      %v1039 = vsel %vm1037, %v1034, %v1036
      %vm1042 = vcmask 138240
      %v1045 = vsel %vm1042, 0, %v1030
      %v1048 = vsel %vm1042, 0, %v1034
      %v1051 = vsel %vm1042, %v1032, 0
      %v1054 = vsel %vm1042, %v1036, 0
      %v1056 = vsel %vm1023, 1, 0
      %v1057 = vsel %vm1024, 1, 0
      %vm1058 = vcmp.eq.s32.totalorder %v1056, 1
      %vm1059 = vcmp.eq.s32.totalorder %v1057, 1
      %vm1060 = vmpackc.low %vm1059, %vm1058
      %v1061 = vsel %vm1060, 65537, 0
      %v1062 = vlaneseq
      %v1063 = vshrl.u32 %v1062, 7
      %v1064 = vsub.s32 0, %v1063
      %v1065 = vrot.slane %v1061, %v1064
      %v1066 = vlaneseq
      %v1067 = vshrl.u32 %v1066, 7
      %v1068 = vsub.s32 4, %v1067
      %v1069 = vrot.slane %v1061, %v1068
      %vm1070 = vcmp.ne.s16.totalorder %v1065, 0
      %vm1071 = vcmp.ne.s16.totalorder %v1069, 0
      %v1072 = vsel %vm1070, %v1045, 0
      %v1073 = vsel %vm1071, %v1038, 0
      %v1074 = vsel %vm1070, %v1048, 0
      %v1075 = vsel %vm1071, %v1039, 0
      %v1076 = vsel %vm1025, 1, 0
      %v1077 = vsel %vm1026, 1, 0
      %vm1078 = vcmp.eq.s32.totalorder %v1076, 1
      %vm1079 = vcmp.eq.s32.totalorder %v1077, 1
      %vm1080 = vmpackc.low %vm1079, %vm1078
      %v1081 = vsel %vm1080, 65537, 0
      %v1082 = vlaneseq
      %v1083 = vshrl.u32 %v1082, 7
      %v1084 = vsub.s32 0, %v1083
      %v1085 = vrot.slane %v1081, %v1084
      %v1086 = vlaneseq
      %v1087 = vshrl.u32 %v1086, 7
      %v1088 = vsub.s32 4, %v1087
      %v1089 = vrot.slane %v1081, %v1088
      %1090 = vrot.lane.b32.xlu0 %v1085, 2
      %v1091 = vpop.permute.xlu0 %1090
      %1092 = vrot.lane.b32.xlu0 %v1089, 2
      %v1093 = vpop.permute.xlu0 %1092
      %vm1094 = vcmask 15360
      %v1095 = vsel %vm1094, %v1091, %v1093
      %vm1096 = vcmp.ne.s16.totalorder %v1091, 0
      %vm1097 = vcmp.ne.s16.totalorder %v1095, 0
      %vm1098 = vcmp.ne.s16.totalorder %v1093, 0
      %v1099 = vsel %vm1096, %v1045, 0
      %v1100 = vsel %vm1097, %v1038, 0
      %v1101 = vsel %vm1098, %v1051, 0
      %v1102 = vsel %vm1096, %v1048, 0
      %v1103 = vsel %vm1097, %v1039, 0
      %v1104 = vsel %vm1098, %v1054, 0
      %1109 = vrot.lane.b32.xlu0 %v1045, 127
      %v1110 = vpop.permute.xlu0 %1109
      %1111 = vrot.lane.b32.xlu0 %v1038, 127
      %v1112 = vpop.permute.xlu0 %1111
      %1113 = vrot.lane.b32.xlu0 %v1051, 127
      %v1114 = vpop.permute.xlu0 %1113
      %1115 = vrot.lane.b32.xlu0 %v1048, 127
      %v1116 = vpop.permute.xlu0 %1115
      %1117 = vrot.lane.b32.xlu0 %v1039, 127
      %v1118 = vpop.permute.xlu0 %1117
      %1119 = vrot.lane.b32.xlu0 %v1054, 127
      %v1120 = vpop.permute.xlu0 %1119
      %vm1121 = vcmask 1039360
      %v1122 = vsel %vm1121, %v1110, %v1112
      %v1123 = vsel %vm1121, %v1112, %v1114
      %v1124 = vsel %vm1121, %v1116, %v1118
      %v1125 = vsel %vm1121, %v1118, %v1120
      %1136 = vrot.lane.b32.xlu0 %v1099, 126
      %v1137 = vpop.permute.xlu0 %1136
      %1138 = vrot.lane.b32.xlu0 %v1100, 126
      %v1139 = vpop.permute.xlu0 %1138
      %1140 = vrot.lane.b32.xlu0 %v1101, 126
      %v1141 = vpop.permute.xlu0 %1140
      %1142 = vrot.lane.b32.xlu0 %v1102, 126
      %v1143 = vpop.permute.xlu0 %1142
      %1144 = vrot.lane.b32.xlu0 %v1103, 126
      %v1145 = vpop.permute.xlu0 %1144
      %1146 = vrot.lane.b32.xlu0 %v1104, 126
      %v1147 = vpop.permute.xlu0 %1146
      %vm1148 = vcmask 1031168
      %v1149 = vsel %vm1148, %v1137, %v1139
      %v1150 = vsel %vm1148, %v1139, %v1141
      %v1151 = vsel %vm1148, %v1143, %v1145
      %v1152 = vsel %vm1148, %v1145, %v1147
      %v1157 = vld [vmem:[%s5] sm:$0xf]
      %v1158 = vld [vmem:[%s5 + $0x4] sm:$0xf]
      %1159 = vrot.lane.b32.xlu0 %v1065, 16
      %v1160 = vpop.permute.xlu0 %1159
      %1161 = vrot.lane.b32.xlu0 %v1069, 16
      %v1162 = vpop.permute.xlu0 %1161
      %vm1163 = vcmask 130048
      %v1164 = vsel %vm1163, %v1160, %v1162
      %vm1165 = vcmp.ne.s16.totalorder %v1160, 0
      %vm1166 = vcmp.ne.s16.totalorder %v1164, 0
      %vm1167 = vcmp.ne.s16.totalorder %v1162, 0
      %v1168 = vsel %vm1165, %v1045, 0
      %v1169 = vsel %vm1166, %v1038, 0
      %v1170 = vsel %vm1167, %v1051, 0
      %v1171 = vsel %vm1165, %v1048, 0
      %v1172 = vsel %vm1166, %v1039, 0
      %v1173 = vsel %vm1167, %v1054, 0
      %1174 = vrot.lane.b32.xlu0 %v1085, 18
      %v1175 = vpop.permute.xlu0 %1174
      %1176 = vrot.lane.b32.xlu0 %v1089, 18
      %v1177 = vpop.permute.xlu0 %1176
      %vm1178 = vcmask 146432
      %v1179 = vsel %vm1178, %v1175, %v1177
      %vm1180 = vcmp.ne.s16.totalorder %v1175, 0
      %vm1181 = vcmp.ne.s16.totalorder %v1179, 0
      %vm1182 = vcmp.ne.s16.totalorder %v1177, 0
      %v1183 = vsel %vm1180, %v1045, 0
      %v1184 = vsel %vm1181, %v1038, 0
      %v1185 = vsel %vm1182, %v1051, 0
      %v1186 = vsel %vm1180, %v1048, 0
      %v1187 = vsel %vm1181, %v1039, 0
      %v1188 = vsel %vm1182, %v1054, 0
      %1195 = vrot.lane.b32.xlu0 %v1183, 126
      %v1196 = vpop.permute.xlu0 %1195
      %1197 = vrot.lane.b32.xlu0 %v1184, 126
      %v1198 = vpop.permute.xlu0 %1197
      %1199 = vrot.lane.b32.xlu0 %v1185, 126
      %v1200 = vpop.permute.xlu0 %1199
      %1201 = vrot.lane.b32.xlu0 %v1186, 126
      %v1202 = vpop.permute.xlu0 %1201
      %1203 = vrot.lane.b32.xlu0 %v1187, 126
      %v1204 = vpop.permute.xlu0 %1203
      %1205 = vrot.lane.b32.xlu0 %v1188, 126
      %v1206 = vpop.permute.xlu0 %1205
      %v1207 = vsel %vm1148, %v1196, %v1198
      %v1208 = vsel %vm1148, %v1198, %v1200
      %v1209 = vsel %vm1148, %v1202, %v1204
      %v1210 = vsel %vm1148, %v1204, %v1206
      %s1211 = scalar_lea.vmem %s5, 8
      %v1212 = vld [vmem:[%s1211] sm:$0xf]
      %v1213 = vld [vmem:[%s1211 + $0x4] sm:$0xf]
      %v1216 = vunpack.c.l.b16 %v1212
      %v1217 = vunpack.c.l.b16 %v1213
      %v1218 = vpack.c.b16 %v1217, %v1216
      %1225 = vrot.lane.b32.xlu0 %v1168, 112
      %v1226 = vpop.permute.xlu0 %1225
      %1227 = vrot.lane.b32.xlu0 %v1169, 112
      %v1228 = vpop.permute.xlu0 %1227
      %1229 = vrot.lane.b32.xlu0 %v1170, 112
      %v1230 = vpop.permute.xlu0 %1229
      %1231 = vrot.lane.b32.xlu0 %v1171, 112
      %v1232 = vpop.permute.xlu0 %1231
      %1233 = vrot.lane.b32.xlu0 %v1172, 112
      %v1234 = vpop.permute.xlu0 %1233
      %1235 = vrot.lane.b32.xlu0 %v1173, 112
      %v1236 = vpop.permute.xlu0 %1235
      %1237 = vrot.lane.b32.xlu0 %v1122, 112
      %v1238 = vpop.permute.xlu0 %1237
      %1239 = vrot.lane.b32.xlu0 %v1123, 112
      %v1240 = vpop.permute.xlu0 %1239
      %1241 = vrot.lane.b32.xlu0 %v1114, 112
      %v1242 = vpop.permute.xlu0 %1241
      %1243 = vrot.lane.b32.xlu0 %v1124, 112
      %v1244 = vpop.permute.xlu0 %1243
      %1245 = vrot.lane.b32.xlu0 %v1125, 112
      %v1246 = vpop.permute.xlu0 %1245
      %1247 = vrot.lane.b32.xlu0 %v1120, 112
      %v1248 = vpop.permute.xlu0 %1247
      %1249 = vrot.lane.b32.xlu0 %v1207, 112
      %v1250 = vpop.permute.xlu0 %1249
      %1251 = vrot.lane.b32.xlu0 %v1208, 112
      %v1252 = vpop.permute.xlu0 %1251
      %1253 = vrot.lane.b32.xlu0 %v1200, 112
      %v1254 = vpop.permute.xlu0 %1253
      %1255 = vrot.lane.b32.xlu0 %v1209, 112
      %v1256 = vpop.permute.xlu0 %1255
      %1257 = vrot.lane.b32.xlu0 %v1210, 112
      %v1258 = vpop.permute.xlu0 %1257
      %1259 = vrot.lane.b32.xlu0 %v1206, 112
      %v1260 = vpop.permute.xlu0 %1259
      %vm1261 = vcmask 916480
      %v1262 = vsel %vm1261, %v1226, %v1228
      %v1263 = vsel %vm1261, %v1228, %v1230
      %v1264 = vsel %vm1261, %v1232, %v1234
      %v1265 = vsel %vm1261, %v1234, %v1236
      %v1266 = vsel %vm1261, %v1238, %v1240
      %v1267 = vsel %vm1261, %v1240, %v1242
      %v1268 = vsel %vm1261, %v1244, %v1246
      %v1269 = vsel %vm1261, %v1246, %v1248
      %v1270 = vsel %vm1261, %v1250, %v1252
      %v1271 = vsel %vm1261, %v1252, %v1254
      %v1272 = vsel %vm1261, %v1256, %v1258
      %v1273 = vsel %vm1261, %v1258, %v1260
      %vm1286 = vcmask 785408
      %v1288 = vsel %vm1286, %v1218, 0
      %1290 = vmatprep.subr.bf16.mxu0 %v1263
      %1291 = vmatpush1.bf16.msra.mxu0 %v1262
      %1292 = vmatprep.subr.bf16.mxu0 %v1265
      %1293 = vmatpush1.bf16.msra.mxu0 %v1264
      %1294 = vmatprep.subr.bf16.mxu0 %v1267
      %1295 = vmatpush1.bf16.msra.mxu0 %v1266
      %1296 = vmatprep.subr.bf16.mxu0 %v1269
      %1297 = vmatpush1.bf16.msra.mxu0 %v1268
      %1298 = vmatprep.subr.bf16.mxu0 %v1271
      %1299 = vmatpush1.bf16.msra.mxu0 %v1270
      %1300 = vmatprep.subr.bf16.mxu0 %v1273
      %1301 = vmatpush1.bf16.msra.mxu0 %v1272
      %1302 = vmatprep.subr.bf16.mxu0 0
      %1303 = vmatpush1.bf16.msra.mxu0 0
      %1304 = vmatprep.subr.bf16.mxu0 0
      %1305 = vmatpush1.bf16.msra.mxu0 0
      %1306 = vmatprep.subr.bf16.mxu0 0
      %1307 = vmatpush1.bf16.msra.mxu0 0
      %1308 = vmatprep.subr.bf16.mxu0 0
      %1309 = vmatpush1.bf16.msra.mxu0 0
      %1310 = vmatprep.subr.bf16.mxu0 0
      %1311 = vmatpush1.bf16.msra.mxu0 0
      %1312 = vmatprep.subr.bf16.mxu0 0
      %1313 = vmatpush1.bf16.msra.mxu0 0
      %1314 = vmatprep.subr.bf16.mxu0 0
      %1315 = vmatpush1.bf16.msra.mxu0 0
      %1316 = vmatprep.subr.bf16.mxu0 0
      %1317 = vmatpush1.bf16.msra.mxu0 0
      %1318 = vmatprep.subr.bf16.mxu0 0
      %1319 = vmatpush1.bf16.msra.mxu0 0
      %1320 = vmatprep.subr.bf16.mxu0 0
      %1321 = vmatpush1.bf16.msra.mxu0 0
      %1322 = vmatprep.mubr.bf16.mxu0 0
      %1323 = vmatmul.mubr.bf16.gmra.mrb[0].mxu0 %v1288
      %v1324 = vpop.f32.mrb[0].mxu0
      %v1325 = vadd.f32 0.0, %v1324
      %v1326 = vpop.f32.mrb[0].mxu0
      %v1327 = vadd.f32 0.0, %v1326
      %v1328 = vpop.f32.mrb[0].mxu0
      %v1329 = vadd.f32 0.0, %v1328
      %v1330 = vpop.f32.mrb[0].mxu0
      %v1331 = vadd.f32 0.0, %v1330
      %1332 = vdwg.mxu0
      %v1335 = vunpack.c.l.b16 %v1157
      %v1336 = vunpack.c.l.b16 %v1158
      %v1337 = vpack.c.b16 %v1336, %v1335
      %v1339 = vsel %vm1286, %v1337, 0
      %1341 = vmatprep.subr.bf16.mxu0 %v1073
      %1342 = vmatpush1.bf16.msra.mxu0 %v1072
      %1343 = vmatprep.subr.bf16.mxu0 %v1075
      %1344 = vmatpush1.bf16.msra.mxu0 %v1074
      %1345 = vmatprep.subr.bf16.mxu0 %v1123
      %1346 = vmatpush1.bf16.msra.mxu0 %v1122
      %1347 = vmatprep.subr.bf16.mxu0 %v1125
      %1348 = vmatpush1.bf16.msra.mxu0 %v1124
      %1349 = vmatprep.subr.bf16.mxu0 %v1150
      %1350 = vmatpush1.bf16.msra.mxu0 %v1149
      %1351 = vmatprep.subr.bf16.mxu0 %v1152
      %1352 = vmatpush1.bf16.msra.mxu0 %v1151
      %1353 = vmatprep.subr.bf16.mxu0 0
      %1354 = vmatpush1.bf16.msra.mxu0 0
      %1355 = vmatprep.subr.bf16.mxu0 0
      %1356 = vmatpush1.bf16.msra.mxu0 0
      %1357 = vmatprep.subr.bf16.mxu0 0
      %1358 = vmatpush1.bf16.msra.mxu0 0
      %1359 = vmatprep.subr.bf16.mxu0 0
      %1360 = vmatpush1.bf16.msra.mxu0 0
      %1361 = vmatprep.subr.bf16.mxu0 0
      %1362 = vmatpush1.bf16.msra.mxu0 0
      %1363 = vmatprep.subr.bf16.mxu0 0
      %1364 = vmatpush1.bf16.msra.mxu0 0
      %1365 = vmatprep.subr.bf16.mxu0 0
      %1366 = vmatpush1.bf16.msra.mxu0 0
      %1367 = vmatprep.subr.bf16.mxu0 0
      %1368 = vmatpush1.bf16.msra.mxu0 0
      %1369 = vmatprep.subr.bf16.mxu0 0
      %1370 = vmatpush1.bf16.msra.mxu0 0
      %1371 = vmatprep.subr.bf16.mxu0 0
      %1372 = vmatpush1.bf16.msra.mxu0 0
      %1373 = vmatprep.mubr.bf16.mxu0 0
      %1374 = vmatmul.mubr.bf16.gmra.mrb[0].mxu0 %v1339
      %v1375 = vpop.f32.mrb[0].mxu0
      %v1376 = vadd.f32 %v1325, %v1375
      %v1377 = vpop.f32.mrb[0].mxu0
      %v1378 = vadd.f32 %v1327, %v1377
      %v1379 = vpop.f32.mrb[0].mxu0
      %v1380 = vadd.f32 %v1329, %v1379
      %v1381 = vpop.f32.mrb[0].mxu0
      %v1382 = vadd.f32 %v1331, %v1381
      %1383 = vdwg.mxu0
      %1384 = vrot.lane.b32.xlu0 %v1065, 32
      %v1385 = vpop.permute.xlu0 %1384
      %1386 = vrot.lane.b32.xlu0 %v1069, 32
      %v1387 = vpop.permute.xlu0 %1386
      %vm1388 = vcmask 261120
      %v1389 = vsel %vm1388, %v1385, %v1387
      %vm1390 = vcmp.ne.s16.totalorder %v1385, 0
      %vm1391 = vcmp.ne.s16.totalorder %v1389, 0
      %vm1392 = vcmp.ne.s16.totalorder %v1387, 0
      %v1393 = vsel %vm1390, %v1045, 0
      %v1394 = vsel %vm1391, %v1038, 0
      %v1395 = vsel %vm1392, %v1051, 0
      %v1396 = vsel %vm1390, %v1048, 0
      %v1397 = vsel %vm1391, %v1039, 0
      %v1398 = vsel %vm1392, %v1054, 0
      %1399 = vrot.lane.b32.xlu0 %v1085, 34
      %v1400 = vpop.permute.xlu0 %1399
      %1401 = vrot.lane.b32.xlu0 %v1089, 34
      %v1402 = vpop.permute.xlu0 %1401
      %vm1403 = vcmask 277504
      %v1404 = vsel %vm1403, %v1400, %v1402
      %vm1405 = vcmp.ne.s16.totalorder %v1400, 0
      %vm1406 = vcmp.ne.s16.totalorder %v1404, 0
      %vm1407 = vcmp.ne.s16.totalorder %v1402, 0
      %v1408 = vsel %vm1405, %v1045, 0
      %v1409 = vsel %vm1406, %v1038, 0
      %v1410 = vsel %vm1407, %v1051, 0
      %v1411 = vsel %vm1405, %v1048, 0
      %v1412 = vsel %vm1406, %v1039, 0
      %v1413 = vsel %vm1407, %v1054, 0
      %1420 = vrot.lane.b32.xlu0 %v1408, 126
      %v1421 = vpop.permute.xlu0 %1420
      %1422 = vrot.lane.b32.xlu0 %v1409, 126
      %v1423 = vpop.permute.xlu0 %1422
      %1424 = vrot.lane.b32.xlu0 %v1410, 126
      %v1425 = vpop.permute.xlu0 %1424
      %1426 = vrot.lane.b32.xlu0 %v1411, 126
      %v1427 = vpop.permute.xlu0 %1426
      %1428 = vrot.lane.b32.xlu0 %v1412, 126
      %v1429 = vpop.permute.xlu0 %1428
      %1430 = vrot.lane.b32.xlu0 %v1413, 126
      %v1431 = vpop.permute.xlu0 %1430
      %v1432 = vsel %vm1148, %v1421, %v1423
      %v1433 = vsel %vm1148, %v1423, %v1425
      %v1434 = vsel %vm1148, %v1427, %v1429
      %v1435 = vsel %vm1148, %v1429, %v1431
      %s1436 = scalar_lea.vmem %s5, 16
      %v1437 = vld [vmem:[%s1436] sm:$0xf]
      %v1438 = vld [vmem:[%s1436 + $0x4] sm:$0xf]
      %v1441 = vunpack.c.l.b16 %v1437
      %v1442 = vunpack.c.l.b16 %v1438
      %v1443 = vpack.c.b16 %v1442, %v1441
      %1450 = vrot.lane.b32.xlu0 %v1393, 96
      %v1451 = vpop.permute.xlu0 %1450
      %1452 = vrot.lane.b32.xlu0 %v1394, 96
      %v1453 = vpop.permute.xlu0 %1452
      %1454 = vrot.lane.b32.xlu0 %v1395, 96
      %v1455 = vpop.permute.xlu0 %1454
      %1456 = vrot.lane.b32.xlu0 %v1396, 96
      %v1457 = vpop.permute.xlu0 %1456
      %1458 = vrot.lane.b32.xlu0 %v1397, 96
      %v1459 = vpop.permute.xlu0 %1458
      %1460 = vrot.lane.b32.xlu0 %v1398, 96
      %v1461 = vpop.permute.xlu0 %1460
      %1462 = vrot.lane.b32.xlu0 %v1122, 96
      %v1463 = vpop.permute.xlu0 %1462
      %1464 = vrot.lane.b32.xlu0 %v1123, 96
      %v1465 = vpop.permute.xlu0 %1464
      %1466 = vrot.lane.b32.xlu0 %v1114, 96
      %v1467 = vpop.permute.xlu0 %1466
      %1468 = vrot.lane.b32.xlu0 %v1124, 96
      %v1469 = vpop.permute.xlu0 %1468
      %1470 = vrot.lane.b32.xlu0 %v1125, 96
      %v1471 = vpop.permute.xlu0 %1470
      %1472 = vrot.lane.b32.xlu0 %v1120, 96
      %v1473 = vpop.permute.xlu0 %1472
      %1474 = vrot.lane.b32.xlu0 %v1432, 96
      %v1475 = vpop.permute.xlu0 %1474
      %1476 = vrot.lane.b32.xlu0 %v1433, 96
      %v1477 = vpop.permute.xlu0 %1476
      %1478 = vrot.lane.b32.xlu0 %v1425, 96
      %v1479 = vpop.permute.xlu0 %1478
      %1480 = vrot.lane.b32.xlu0 %v1434, 96
      %v1481 = vpop.permute.xlu0 %1480
      %1482 = vrot.lane.b32.xlu0 %v1435, 96
      %v1483 = vpop.permute.xlu0 %1482
      %1484 = vrot.lane.b32.xlu0 %v1431, 96
      %v1485 = vpop.permute.xlu0 %1484
      %vm1486 = vcmask 785408
      %v1487 = vsel %vm1486, %v1451, %v1453
      %v1488 = vsel %vm1486, %v1453, %v1455
      %v1489 = vsel %vm1486, %v1457, %v1459
      %v1490 = vsel %vm1486, %v1459, %v1461
      %v1491 = vsel %vm1486, %v1463, %v1465
      %v1492 = vsel %vm1486, %v1465, %v1467
      %v1493 = vsel %vm1486, %v1469, %v1471
      %v1494 = vsel %vm1486, %v1471, %v1473
      %v1495 = vsel %vm1486, %v1475, %v1477
      %v1496 = vsel %vm1486, %v1477, %v1479
      %v1497 = vsel %vm1486, %v1481, %v1483
      %v1498 = vsel %vm1486, %v1483, %v1485
      %v1512 = vsel %vm1286, %v1443, 0
      %1514 = vmatprep.subr.bf16.mxu0 %v1488
      %1515 = vmatpush1.bf16.msra.mxu0 %v1487
      %1516 = vmatprep.subr.bf16.mxu0 %v1490
      %1517 = vmatpush1.bf16.msra.mxu0 %v1489
      %1518 = vmatprep.subr.bf16.mxu0 %v1492
      %1519 = vmatpush1.bf16.msra.mxu0 %v1491
      %1520 = vmatprep.subr.bf16.mxu0 %v1494
      %1521 = vmatpush1.bf16.msra.mxu0 %v1493
      %1522 = vmatprep.subr.bf16.mxu0 %v1496
      %1523 = vmatpush1.bf16.msra.mxu0 %v1495
      %1524 = vmatprep.subr.bf16.mxu0 %v1498
      %1525 = vmatpush1.bf16.msra.mxu0 %v1497
      %1526 = vmatprep.subr.bf16.mxu0 0
      %1527 = vmatpush1.bf16.msra.mxu0 0
      %1528 = vmatprep.subr.bf16.mxu0 0
      %1529 = vmatpush1.bf16.msra.mxu0 0
      %1530 = vmatprep.subr.bf16.mxu0 0
      %1531 = vmatpush1.bf16.msra.mxu0 0
      %1532 = vmatprep.subr.bf16.mxu0 0
      %1533 = vmatpush1.bf16.msra.mxu0 0
      %1534 = vmatprep.subr.bf16.mxu0 0
      %1535 = vmatpush1.bf16.msra.mxu0 0
      %1536 = vmatprep.subr.bf16.mxu0 0
      %1537 = vmatpush1.bf16.msra.mxu0 0
      %1538 = vmatprep.subr.bf16.mxu0 0
      %1539 = vmatpush1.bf16.msra.mxu0 0
      %1540 = vmatprep.subr.bf16.mxu0 0
      %1541 = vmatpush1.bf16.msra.mxu0 0
      %1542 = vmatprep.subr.bf16.mxu0 0
      %1543 = vmatpush1.bf16.msra.mxu0 0
      %1544 = vmatprep.subr.bf16.mxu0 0
      %1545 = vmatpush1.bf16.msra.mxu0 0
      %1546 = vmatprep.mubr.bf16.mxu0 0
      %1547 = vmatmul.mubr.bf16.gmra.mrb[0].mxu0 %v1512
      %v1548 = vpop.f32.mrb[0].mxu0
      %v1549 = vadd.f32 0.0, %v1548
      %v1550 = vpop.f32.mrb[0].mxu0
      %v1551 = vadd.f32 0.0, %v1550
      %v1552 = vpop.f32.mrb[0].mxu0
      %v1553 = vadd.f32 0.0, %v1552
      %v1554 = vpop.f32.mrb[0].mxu0
      %v1555 = vadd.f32 0.0, %v1554
      %1556 = vdwg.mxu0
      %v1557 = vadd.f32 %v1376, %v1549
      %v1558 = vadd.f32 %v1378, %v1551
      %v1559 = vadd.f32 %v1380, %v1553
      %v1560 = vadd.f32 %v1382, %v1555
      %v1561 = vld [vmem:[%s6] sm:$0xff]
      %v1562 = vld [vmem:[%s6 + $0x8] sm:$0xff]
      %1564 = vset.pattern.permute.xlu0 0
      %1565 = vperm.xlu0 %1564, %v1561
      %v1566 = vpop.permute.xlu0 %1565
      %1569 = vset.pattern.permute.xlu0 0
      %1570 = vperm.xlu0 %1569, %v1562
      %v1571 = vpop.permute.xlu0 %1570
      %v1573 = vadd.f32 %v1557, %v1566
      %v1574 = vadd.f32 %v1558, %v1566
      %v1575 = vadd.f32 %v1559, %v1571
      %v1576 = vadd.f32 %v1560, %v1571
      %v1577 = vmax.f32 %v1573, 0.0
      %v1578 = vmax.f32 %v1574, 0.0
      %v1579 = vmax.f32 %v1575, 0.0
      %v1580 = vmax.f32 %v1576, 0.0
      %v1581 = vpack.c.bf16 %v1579, %v1577
      %v1582 = vpack.c.bf16 %v1580, %v1578
      %1585 = vrot.lane.b32.xlu0 %v1581, 17
      %v1586 = vpop.permute.xlu0 %1585
      %1587 = vrot.lane.b32.xlu0 %v1582, 17
      %v1588 = vpop.permute.xlu0 %1587
      %v1589 = vsel %vm1037, %v1586, %v1588
      %v1592 = vsel %vm1042, 0, %v1586
      %v1595 = vsel %vm1042, %v1588, 0
      %v1597 = vsel %vm1070, %v1592, 0
      %v1598 = vsel %vm1071, %v1589, 0
      %v1599 = vsel %vm1096, %v1592, 0
      %v1600 = vsel %vm1097, %v1589, 0
      %v1601 = vsel %vm1098, %v1595, 0
      %1604 = vrot.lane.b32.xlu0 %v1592, 127
      %v1605 = vpop.permute.xlu0 %1604
      %1606 = vrot.lane.b32.xlu0 %v1589, 127
      %v1607 = vpop.permute.xlu0 %1606
      %1608 = vrot.lane.b32.xlu0 %v1595, 127
      %v1609 = vpop.permute.xlu0 %1608
      %v1610 = vsel %vm1121, %v1605, %v1607
      %v1611 = vsel %vm1121, %v1607, %v1609
      %1617 = vrot.lane.b32.xlu0 %v1599, 126
      %v1618 = vpop.permute.xlu0 %1617
      %1619 = vrot.lane.b32.xlu0 %v1600, 126
      %v1620 = vpop.permute.xlu0 %1619
      %1621 = vrot.lane.b32.xlu0 %v1601, 126
      %v1622 = vpop.permute.xlu0 %1621
      %v1623 = vsel %vm1148, %v1618, %v1620
      %v1624 = vsel %vm1148, %v1620, %v1622
      %v1627 = vld [vmem:[%s7] sm:$0xf]
      %v1628 = vld [vmem:[%s7 + $0x4] sm:$0xf]
      %v1629 = vsel %vm1165, %v1592, 0
      %v1630 = vsel %vm1166, %v1589, 0
      %v1631 = vsel %vm1167, %v1595, 0
      %v1632 = vsel %vm1180, %v1592, 0
      %v1633 = vsel %vm1181, %v1589, 0
      %v1634 = vsel %vm1182, %v1595, 0
      %1638 = vrot.lane.b32.xlu0 %v1632, 126
      %v1639 = vpop.permute.xlu0 %1638
      %1640 = vrot.lane.b32.xlu0 %v1633, 126
      %v1641 = vpop.permute.xlu0 %1640
      %1642 = vrot.lane.b32.xlu0 %v1634, 126
      %v1643 = vpop.permute.xlu0 %1642
      %v1644 = vsel %vm1148, %v1639, %v1641
      %v1645 = vsel %vm1148, %v1641, %v1643
      %s1646 = scalar_lea.vmem %s7, 8
      %v1647 = vld [vmem:[%s1646] sm:$0xf]
      %v1648 = vld [vmem:[%s1646 + $0x4] sm:$0xf]
      %v1651 = vunpack.c.l.b16 %v1647
      %v1652 = vunpack.c.l.b16 %v1648
      %v1653 = vpack.c.b16 %v1652, %v1651
      %1657 = vrot.lane.b32.xlu0 %v1629, 112
      %v1658 = vpop.permute.xlu0 %1657
      %1659 = vrot.lane.b32.xlu0 %v1630, 112
      %v1660 = vpop.permute.xlu0 %1659
      %1661 = vrot.lane.b32.xlu0 %v1631, 112
      %v1662 = vpop.permute.xlu0 %1661
      %1663 = vrot.lane.b32.xlu0 %v1610, 112
      %v1664 = vpop.permute.xlu0 %1663
      %1665 = vrot.lane.b32.xlu0 %v1611, 112
      %v1666 = vpop.permute.xlu0 %1665
      %1667 = vrot.lane.b32.xlu0 %v1609, 112
      %v1668 = vpop.permute.xlu0 %1667
      %1669 = vrot.lane.b32.xlu0 %v1644, 112
      %v1670 = vpop.permute.xlu0 %1669
      %1671 = vrot.lane.b32.xlu0 %v1645, 112
      %v1672 = vpop.permute.xlu0 %1671
      %1673 = vrot.lane.b32.xlu0 %v1643, 112
      %v1674 = vpop.permute.xlu0 %1673
      %v1675 = vsel %vm1261, %v1658, %v1660
      %v1676 = vsel %vm1261, %v1660, %v1662
      %v1677 = vsel %vm1261, %v1664, %v1666
      %v1678 = vsel %vm1261, %v1666, %v1668
      %v1679 = vsel %vm1261, %v1670, %v1672
      %v1680 = vsel %vm1261, %v1672, %v1674
      %vm1687 = vcmask 392192
      %v1689 = vsel %vm1687, %v1653, 0
      %1691 = vmatprep.subr.bf16.mxu0 %v1676
      %1692 = vmatpush1.bf16.msra.mxu0 %v1675
      %1693 = vmatprep.subr.bf16.mxu0 %v1678
      %1694 = vmatpush1.bf16.msra.mxu0 %v1677
      %1695 = vmatprep.subr.bf16.mxu0 %v1680
      %1696 = vmatpush1.bf16.msra.mxu0 %v1679
      %1697 = vmatprep.subr.bf16.mxu0 0
      %1698 = vmatpush1.bf16.msra.mxu0 0
      %1699 = vmatprep.subr.bf16.mxu0 0
      %1700 = vmatpush1.bf16.msra.mxu0 0
      %1701 = vmatprep.subr.bf16.mxu0 0
      %1702 = vmatpush1.bf16.msra.mxu0 0
      %1703 = vmatprep.subr.bf16.mxu0 0
      %1704 = vmatpush1.bf16.msra.mxu0 0
      %1705 = vmatprep.subr.bf16.mxu0 0
      %1706 = vmatpush1.bf16.msra.mxu0 0
      %1707 = vmatprep.subr.bf16.mxu0 0
      %1708 = vmatpush1.bf16.msra.mxu0 0
      %1709 = vmatprep.subr.bf16.mxu0 0
      %1710 = vmatpush1.bf16.msra.mxu0 0
      %1711 = vmatprep.subr.bf16.mxu0 0
      %1712 = vmatpush1.bf16.msra.mxu0 0
      %1713 = vmatprep.subr.bf16.mxu0 0
      %1714 = vmatpush1.bf16.msra.mxu0 0
      %1715 = vmatprep.subr.bf16.mxu0 0
      %1716 = vmatpush1.bf16.msra.mxu0 0
      %1717 = vmatprep.subr.bf16.mxu0 0
      %1718 = vmatpush1.bf16.msra.mxu0 0
      %1719 = vmatprep.subr.bf16.mxu0 0
      %1720 = vmatpush1.bf16.msra.mxu0 0
      %1721 = vmatprep.subr.bf16.mxu0 0
      %1722 = vmatpush1.bf16.msra.mxu0 0
      %1723 = vmatprep.mubr.bf16.mxu0 0
      %1724 = vmatmul.mubr.bf16.gmra.mrb[0].mxu0 %v1689
      %v1725 = vpop.f32.mrb[0].mxu0
      %v1726 = vadd.f32 0.0, %v1725
      %v1727 = vpop.f32.mrb[0].mxu0
      %v1728 = vadd.f32 0.0, %v1727
      %v1729 = vpop.f32.mrb[0].mxu0
      %v1730 = vadd.f32 0.0, %v1729
      %v1731 = vpop.f32.mrb[0].mxu0
      %v1732 = vadd.f32 0.0, %v1731
      %1733 = vdwg.mxu0
      %v1736 = vunpack.c.l.b16 %v1627
      %v1737 = vunpack.c.l.b16 %v1628
      %v1738 = vpack.c.b16 %v1737, %v1736
      %v1740 = vsel %vm1687, %v1738, 0
      %1742 = vmatprep.subr.bf16.mxu0 %v1598
      %1743 = vmatpush1.bf16.msra.mxu0 %v1597
      %1744 = vmatprep.subr.bf16.mxu0 %v1611
      %1745 = vmatpush1.bf16.msra.mxu0 %v1610
      %1746 = vmatprep.subr.bf16.mxu0 %v1624
      %1747 = vmatpush1.bf16.msra.mxu0 %v1623
      %1748 = vmatprep.subr.bf16.mxu0 0
      %1749 = vmatpush1.bf16.msra.mxu0 0
      %1750 = vmatprep.subr.bf16.mxu0 0
      %1751 = vmatpush1.bf16.msra.mxu0 0
      %1752 = vmatprep.subr.bf16.mxu0 0
      %1753 = vmatpush1.bf16.msra.mxu0 0
      %1754 = vmatprep.subr.bf16.mxu0 0
      %1755 = vmatpush1.bf16.msra.mxu0 0
      %1756 = vmatprep.subr.bf16.mxu0 0
      %1757 = vmatpush1.bf16.msra.mxu0 0
      %1758 = vmatprep.subr.bf16.mxu0 0
      %1759 = vmatpush1.bf16.msra.mxu0 0
      %1760 = vmatprep.subr.bf16.mxu0 0
      %1761 = vmatpush1.bf16.msra.mxu0 0
      %1762 = vmatprep.subr.bf16.mxu0 0
      %1763 = vmatpush1.bf16.msra.mxu0 0
      %1764 = vmatprep.subr.bf16.mxu0 0
      %1765 = vmatpush1.bf16.msra.mxu0 0
      %1766 = vmatprep.subr.bf16.mxu0 0
      %1767 = vmatpush1.bf16.msra.mxu0 0
      %1768 = vmatprep.subr.bf16.mxu0 0
      %1769 = vmatpush1.bf16.msra.mxu0 0
      %1770 = vmatprep.subr.bf16.mxu0 0
      %1771 = vmatpush1.bf16.msra.mxu0 0
      %1772 = vmatprep.subr.bf16.mxu0 0
      %1773 = vmatpush1.bf16.msra.mxu0 0
      %1774 = vmatprep.mubr.bf16.mxu0 0
      %1775 = vmatmul.mubr.bf16.gmra.mrb[0].mxu0 %v1740
      %v1776 = vpop.f32.mrb[0].mxu0
      %v1777 = vadd.f32 %v1726, %v1776
      %v1778 = vpop.f32.mrb[0].mxu0
      %v1779 = vadd.f32 %v1728, %v1778
      %v1780 = vpop.f32.mrb[0].mxu0
      %v1781 = vadd.f32 %v1730, %v1780
      %v1782 = vpop.f32.mrb[0].mxu0
      %v1783 = vadd.f32 %v1732, %v1782
      %1784 = vdwg.mxu0
      %v1785 = vsel %vm1390, %v1592, 0
      %v1786 = vsel %vm1391, %v1589, 0
      %v1787 = vsel %vm1392, %v1595, 0
      %v1788 = vsel %vm1405, %v1592, 0
      %v1789 = vsel %vm1406, %v1589, 0
      %v1790 = vsel %vm1407, %v1595, 0
      %1794 = vrot.lane.b32.xlu0 %v1788, 126
      %v1795 = vpop.permute.xlu0 %1794
      %1796 = vrot.lane.b32.xlu0 %v1789, 126
      %v1797 = vpop.permute.xlu0 %1796
      %1798 = vrot.lane.b32.xlu0 %v1790, 126
      %v1799 = vpop.permute.xlu0 %1798
      %v1800 = vsel %vm1148, %v1795, %v1797
      %v1801 = vsel %vm1148, %v1797, %v1799
      %s1802 = scalar_lea.vmem %s7, 16
      %v1803 = vld [vmem:[%s1802] sm:$0xf]
      %v1804 = vld [vmem:[%s1802 + $0x4] sm:$0xf]
      %v1807 = vunpack.c.l.b16 %v1803
      %v1808 = vunpack.c.l.b16 %v1804
      %v1809 = vpack.c.b16 %v1808, %v1807
      %1813 = vrot.lane.b32.xlu0 %v1785, 96
      %v1814 = vpop.permute.xlu0 %1813
      %1815 = vrot.lane.b32.xlu0 %v1786, 96
      %v1816 = vpop.permute.xlu0 %1815
      %1817 = vrot.lane.b32.xlu0 %v1787, 96
      %v1818 = vpop.permute.xlu0 %1817
      %1819 = vrot.lane.b32.xlu0 %v1610, 96
      %v1820 = vpop.permute.xlu0 %1819
      %1821 = vrot.lane.b32.xlu0 %v1611, 96
      %v1822 = vpop.permute.xlu0 %1821
      %1823 = vrot.lane.b32.xlu0 %v1609, 96
      %v1824 = vpop.permute.xlu0 %1823
      %1825 = vrot.lane.b32.xlu0 %v1800, 96
      %v1826 = vpop.permute.xlu0 %1825
      %1827 = vrot.lane.b32.xlu0 %v1801, 96
      %v1828 = vpop.permute.xlu0 %1827
      %1829 = vrot.lane.b32.xlu0 %v1799, 96
      %v1830 = vpop.permute.xlu0 %1829
      %v1831 = vsel %vm1486, %v1814, %v1816
      %v1832 = vsel %vm1486, %v1816, %v1818
      %v1833 = vsel %vm1486, %v1820, %v1822
      %v1834 = vsel %vm1486, %v1822, %v1824
      %v1835 = vsel %vm1486, %v1826, %v1828
      %v1836 = vsel %vm1486, %v1828, %v1830
      %v1844 = vsel %vm1687, %v1809, 0
      %1846 = vmatprep.subr.bf16.mxu0 %v1832
      %1847 = vmatpush1.bf16.msra.mxu0 %v1831
      %1848 = vmatprep.subr.bf16.mxu0 %v1834
      %1849 = vmatpush1.bf16.msra.mxu0 %v1833
      %1850 = vmatprep.subr.bf16.mxu0 %v1836
      %1851 = vmatpush1.bf16.msra.mxu0 %v1835
      %1852 = vmatprep.subr.bf16.mxu0 0
      %1853 = vmatpush1.bf16.msra.mxu0 0
      %1854 = vmatprep.subr.bf16.mxu0 0
      %1855 = vmatpush1.bf16.msra.mxu0 0
      %1856 = vmatprep.subr.bf16.mxu0 0
      %1857 = vmatpush1.bf16.msra.mxu0 0
      %1858 = vmatprep.subr.bf16.mxu0 0
      %1859 = vmatpush1.bf16.msra.mxu0 0
      %1860 = vmatprep.subr.bf16.mxu0 0
      %1861 = vmatpush1.bf16.msra.mxu0 0
      %1862 = vmatprep.subr.bf16.mxu0 0
      %1863 = vmatpush1.bf16.msra.mxu0 0
      %1864 = vmatprep.subr.bf16.mxu0 0
      %1865 = vmatpush1.bf16.msra.mxu0 0
      %1866 = vmatprep.subr.bf16.mxu0 0
      %1867 = vmatpush1.bf16.msra.mxu0 0
      %1868 = vmatprep.subr.bf16.mxu0 0
      %1869 = vmatpush1.bf16.msra.mxu0 0
      %1870 = vmatprep.subr.bf16.mxu0 0
      %1871 = vmatpush1.bf16.msra.mxu0 0
      %1872 = vmatprep.subr.bf16.mxu0 0
      %1873 = vmatpush1.bf16.msra.mxu0 0
      %1874 = vmatprep.subr.bf16.mxu0 0
      %1875 = vmatpush1.bf16.msra.mxu0 0
      %1876 = vmatprep.subr.bf16.mxu0 0
      %1877 = vmatpush1.bf16.msra.mxu0 0
      %1878 = vmatprep.mubr.bf16.mxu0 0
      %1879 = vmatmul.mubr.bf16.gmra.mrb[0].mxu0 %v1844
      %v1880 = vpop.f32.mrb[0].mxu0
      %v1881 = vadd.f32 0.0, %v1880
      %v1882 = vpop.f32.mrb[0].mxu0
      %v1883 = vadd.f32 0.0, %v1882
      %v1884 = vpop.f32.mrb[0].mxu0
      %v1885 = vadd.f32 0.0, %v1884
      %v1886 = vpop.f32.mrb[0].mxu0
      %v1887 = vadd.f32 0.0, %v1886
      %1888 = vdwg.mxu0
      %v1889 = vadd.f32 %v1777, %v1881
      %v1890 = vadd.f32 %v1779, %v1883
      %v1891 = vadd.f32 %v1781, %v1885
      %v1892 = vadd.f32 %v1783, %v1887
      %v1893 = vld [vmem:[%s8] sm:$0xff]
      %v1894 = vld [vmem:[%s8 + $0x8] sm:$0xff]
      %1896 = vset.pattern.permute.xlu0 0
      %1897 = vperm.xlu0 %1896, %v1893
      %v1898 = vpop.permute.xlu0 %1897
      %1901 = vset.pattern.permute.xlu0 0
      %1902 = vperm.xlu0 %1901, %v1894
      %v1903 = vpop.permute.xlu0 %1902
      %v1905 = vadd.f32 %v1889, %v1898
      %v1906 = vadd.f32 %v1890, %v1898
      %v1907 = vadd.f32 %v1891, %v1903
      %v1908 = vadd.f32 %v1892, %v1903
      %v1909 = vmax.f32 %v1905, 0.0
      %v1910 = vmax.f32 %v1906, 0.0
      %v1911 = vmax.f32 %v1907, 0.0
      %v1912 = vmax.f32 %v1908, 0.0
      %v1913 = vpack.c.bf16 %v1911, %v1909
      %v1914 = vpack.c.bf16 %v1912, %v1910
      %v1917 = vunpack.c.l.b16 %v1913
      %v1918 = vunpack.c.l.b16 %v1914
      %v1919 = vunpack.c.h.b16 %v1913
      %v1920 = vunpack.c.h.b16 %v1914
      %v1921 = vpack.c.b16 %v1918, %v1917
      %v1922 = vpack.c.b16 %v1920, %v1919
      %1925 = vst [vmem:[%s352] sm:$0xff] %v1921
      %1926 = vst [vmem:[%s352 + $0x8] sm:$0xff] %v1922
      %p1927 = scmp.lt.s32.totalorder %s20, 1
      %s1928 = scalar_select %p1927, %s20, 1
      %s1929 = smul.addr %s1928, 4
      %s1930 = smul.addr %s1929, 4
      %s1931 = scalar_lea.vmem %s9, %s1930
      // Predicated region
      $region57: #{decoder_forward.2} parent=55 // pred_check
        %p1932 = pneg %p237
      $region58: #{decoder_forward.2} parent=55 // pred_check_branch
        %1934 = sbr.rel (%p1932) target = $region60
      $region59: #{decoder_forward.2} parent=55 // pred_region
        _
      $region60: #{decoder_forward.2} parent=55 // pred_fallthru
        _
    $region56: #{decoder_forward.2} parent=5 // pred_fallthru
      _
    %p1935 = scmp.le.s32.totalorder 2, %s15
    // Predicated region
    $region61: #{decoder_forward.2} parent=5 // pred_check
      %p1936 = pneg %p1935
    $region62: #{decoder_forward.2} parent=5 // pred_check_branch
      %1938 = sbr.rel (%p1936) target = $region64
    $region63: #{decoder_forward.2} parent=5 // pred_region
      %s1939 = ssub.s32 %s15, 2
      // Predicated region
      $region65: #{decoder_forward.2} parent=63 // pred_check
        %p1940 = pneg %p243
      $region66: #{decoder_forward.2} parent=63 // pred_check_branch
        %1942 = sbr.rel (%p1940) target = $region68
      $region67: #{decoder_forward.2} parent=63 // pred_region
        %p1943 = scmp.lt.s32.totalorder %s21, 1
        %s1944 = scalar_select %p1943, %s21, 1
        %s1945 = smul.addr %s1944, 4
        %s1946 = smul.addr %s1945, 4
        %s1947 = scalar_lea.vmem %s9, %s1946
      $region68: #{decoder_forward.2} parent=63 // pred_fallthru
        _
    $region64: #{decoder_forward.2} parent=5 // pred_fallthru
      _
  $region6: #{decoder_forward.2} parent=0 // loop_footer
    %s19 = sadd.s32 1, %s15
  $region7: #{decoder_forward.2} parent=0 // loop_footer_branch
    %14 = sbr.rel target = $region3
  $region8: #{decoder_forward.2} parent=0 // loop_exit
    _

// kernel: decoder_forward.3
$region0: #{decoder_forward.3}
  #allocation0 [shape = 'u32[]', space=smem, size = 0x4, offset = 0x4, fixed_abs, tag = 'smem constant byte address 0x4 - core index']
  #allocation1 [shape = 'u32[144,128]{1,0:T(1,128)}', space=vmem, size = 0x12000, scoped, tag = 'internal scratch']
  %s0 = inlined_call_operand.vmem [shape: bf16[2,16,256], index: 0, kind: input, shape index: {}]
  %s1 = inlined_call_operand.vmem [shape: bf16[2,8,1024], index: 1, kind: input, shape index: {}]
  %s2 = inlined_call_operand.vmem [shape: bf16[4,256,1024], index: 2, kind: input, shape index: {}]
  %s3 = inlined_call_operand.vmem [shape: bf16[4,8,16], index: 3, kind: input, shape index: {}]
  %s4 = inlined_call_operand.vmem [shape: f32[8,1], index: 4, kind: input, shape index: {}]
  %s5 = inlined_call_operand.vmem [shape: bf16[3,8,48], index: 5, kind: input, shape index: {}]
  %s6 = inlined_call_operand.vmem [shape: f32[8,1], index: 6, kind: input, shape index: {}]
  %s7 = inlined_call_operand.vmem [shape: bf16[3,8,24], index: 7, kind: input, shape index: {}]
  %s8 = inlined_call_operand.vmem [shape: f32[8,1], index: 8, kind: input, shape index: {}]
  %s9 = inlined_call_operand.vmem [shape: f32[2,8,1024], index: 9, kind: output, shape index: {}]
  %s10 = sld [smem:[#allocation0]]
  $region69: #{decoder_forward.3} parent=0
    _
  %s12 = ssub.s32 1, %s10
  %s13 = scalar_select 0, %s12, %s10
  loop: start=0, step=1, limit=4
  $region2: #{decoder_forward.3} parent=0 // loop_pre_header
    _
  $region3: #{decoder_forward.3} parent=0 // loop_header
    %s15 = sphi 0, %s19
    %p16 = scmp.ge.s32.totalorder %s15, 4
    %s25 = sphi 0, %s27
    %s28 = sphi 0, %s25
    %s29 = sphi 0, %s28
    %s45 = sphi 0, %s29
    %s51 = sphi 0, %s53
    %s54 = sphi 0, %s51
    %s55 = sphi 0, %s54
    %s71 = sphi 0, %s55
    %s75 = sphi 0, %s75
    %s77 = sphi 0, %s75
    %s78 = sphi 0, %s77
    %s92 = sphi 0, %s78
    %s96 = sphi 0, %s96
    %s98 = sphi 0, %s96
    %s99 = sphi 0, %s98
    %s113 = sphi 0, %s99
    %s117 = sphi 0, %s117
    %s119 = sphi 0, %s117
    %s120 = sphi 0, %s119
    %s134 = sphi 0, %s120
    %s138 = sphi 0, %s138
    %s140 = sphi 0, %s138
    %s141 = sphi 0, %s140
    %s155 = sphi 0, %s141
    %s159 = sphi 0, %s159
    %s161 = sphi 0, %s159
    %s162 = sphi 0, %s161
    %s176 = sphi 0, %s162
    %s180 = sphi 0, %s180
    %s182 = sphi 0, %s180
    %s183 = sphi 0, %s182
    %s197 = sphi 0, %s183
    %s201 = sphi 0, %s201
    %s203 = sphi 0, %s201
    %s204 = sphi 0, %s203
    %s218 = sphi 0, %s204
    %s224 = sphi 0, %s226
    %s227 = sphi 0, %s224
    %s228 = sphi 0, %s227
    %s244 = sphi 0, %s228
  $region4: #{decoder_forward.3} parent=0 // loop_header_branch
    %18 = sbr.rel (%p16) target = $region8
  $region5: #{decoder_forward.3} parent=0 // loop_body
    %s20 = ssub.s32 %s15, 1
    %s21 = ssub.s32 %s15, 2
    %s22 = sadd.s32 %s15, 1
    %s23 = ssub.s32 %s15, %s22
    %p24 = scmp.eq.s32.totalorder %s23, 0
    %s26 = sadd.s32 %s25, 1
    %s27 = scalar_select %p24, %s25, %s26
    %p30 = pneg %p24
    %p31 = scmp.eq.s32.totalorder %s15, 1
    %p32 = por %p30, %p31
    %p33 = scmp.ne.s32.totalorder %s25, %s28
    %p34 = scmp.eq.s32.totalorder %s15, 0
    %p35 = por %p33, %p34
    %p36 = scmp.ne.s32.totalorder %s25, %s28
    %p37 = scmp.eq.s32.totalorder %s20, 1
    %p38 = por %p36, %p37
    %p39 = scmp.ne.s32.totalorder %s28, %s29
    %p40 = scmp.eq.s32.totalorder %s20, 0
    %p41 = por %p39, %p40
    %p42 = scmp.ne.s32.totalorder %s28, %s29
    %p43 = scmp.eq.s32.totalorder %s21, 1
    %p44 = por %p42, %p43
    %p46 = scmp.ne.s32.totalorder %s29, %s45
    %p47 = scmp.eq.s32.totalorder %s21, 0
    %p48 = por %p46, %p47
    %s49 = ssub.s32 %s15, %s22
    %p50 = scmp.eq.s32.totalorder %s49, 0
    %s52 = sadd.s32 %s51, 1
    %s53 = scalar_select %p50, %s51, %s52
    %p56 = pneg %p50
    %p57 = scmp.eq.s32.totalorder %s15, 1
    %p58 = por %p56, %p57
    %p59 = scmp.ne.s32.totalorder %s51, %s54
    %p60 = scmp.eq.s32.totalorder %s15, 0
    %p61 = por %p59, %p60
    %p62 = scmp.ne.s32.totalorder %s51, %s54
    %p63 = scmp.eq.s32.totalorder %s20, 1
    %p64 = por %p62, %p63
    %p65 = scmp.ne.s32.totalorder %s54, %s55
    %p66 = scmp.eq.s32.totalorder %s20, 0
    %p67 = por %p65, %p66
    %p68 = scmp.ne.s32.totalorder %s54, %s55
    %p69 = scmp.eq.s32.totalorder %s21, 1
    %p70 = por %p68, %p69
    %p72 = scmp.ne.s32.totalorder %s55, %s71
    %p73 = scmp.eq.s32.totalorder %s21, 0
    %p74 = por %p72, %p73
    %s76 = sadd.s32 %s75, 1
    %p79 = scmp.eq.s32.totalorder %s15, 1
    %p80 = scmp.ne.s32.totalorder %s75, %s77
    %p81 = scmp.eq.s32.totalorder %s15, 0
    %p82 = por %p80, %p81
    %p83 = scmp.ne.s32.totalorder %s75, %s77
    %p84 = scmp.eq.s32.totalorder %s20, 1
    %p85 = por %p83, %p84
    %p86 = scmp.ne.s32.totalorder %s77, %s78
    %p87 = scmp.eq.s32.totalorder %s20, 0
    %p88 = por %p86, %p87
    %p89 = scmp.ne.s32.totalorder %s77, %s78
    %p90 = scmp.eq.s32.totalorder %s21, 1
    %p91 = por %p89, %p90
    %p93 = scmp.ne.s32.totalorder %s78, %s92
    %p94 = scmp.eq.s32.totalorder %s21, 0
    %p95 = por %p93, %p94
    %s97 = sadd.s32 %s96, 1
    %p100 = scmp.eq.s32.totalorder %s15, 1
    %p101 = scmp.ne.s32.totalorder %s96, %s98
    %p102 = scmp.eq.s32.totalorder %s15, 0
    %p103 = por %p101, %p102
    %p104 = scmp.ne.s32.totalorder %s96, %s98
    %p105 = scmp.eq.s32.totalorder %s20, 1
    %p106 = por %p104, %p105
    %p107 = scmp.ne.s32.totalorder %s98, %s99
    %p108 = scmp.eq.s32.totalorder %s20, 0
    %p109 = por %p107, %p108
    %p110 = scmp.ne.s32.totalorder %s98, %s99
    %p111 = scmp.eq.s32.totalorder %s21, 1
    %p112 = por %p110, %p111
    %p114 = scmp.ne.s32.totalorder %s99, %s113
    %p115 = scmp.eq.s32.totalorder %s21, 0
    %p116 = por %p114, %p115
    %s118 = sadd.s32 %s117, 1
    %p121 = scmp.eq.s32.totalorder %s15, 1
    %p122 = scmp.ne.s32.totalorder %s117, %s119
    %p123 = scmp.eq.s32.totalorder %s15, 0
    %p124 = por %p122, %p123
    %p125 = scmp.ne.s32.totalorder %s117, %s119
    %p126 = scmp.eq.s32.totalorder %s20, 1
    %p127 = por %p125, %p126
    %p128 = scmp.ne.s32.totalorder %s119, %s120
    %p129 = scmp.eq.s32.totalorder %s20, 0
    %p130 = por %p128, %p129
    %p131 = scmp.ne.s32.totalorder %s119, %s120
    %p132 = scmp.eq.s32.totalorder %s21, 1
    %p133 = por %p131, %p132
    %p135 = scmp.ne.s32.totalorder %s120, %s134
    %p136 = scmp.eq.s32.totalorder %s21, 0
    %p137 = por %p135, %p136
    %s139 = sadd.s32 %s138, 1
    %p142 = scmp.eq.s32.totalorder %s15, 1
    %p143 = scmp.ne.s32.totalorder %s138, %s140
    %p144 = scmp.eq.s32.totalorder %s15, 0
    %p145 = por %p143, %p144
    %p146 = scmp.ne.s32.totalorder %s138, %s140
    %p147 = scmp.eq.s32.totalorder %s20, 1
    %p148 = por %p146, %p147
    %p149 = scmp.ne.s32.totalorder %s140, %s141
    %p150 = scmp.eq.s32.totalorder %s20, 0
    %p151 = por %p149, %p150
    %p152 = scmp.ne.s32.totalorder %s140, %s141
    %p153 = scmp.eq.s32.totalorder %s21, 1
    %p154 = por %p152, %p153
    %p156 = scmp.ne.s32.totalorder %s141, %s155
    %p157 = scmp.eq.s32.totalorder %s21, 0
    %p158 = por %p156, %p157
    %s160 = sadd.s32 %s159, 1
    %p163 = scmp.eq.s32.totalorder %s15, 1
    %p164 = scmp.ne.s32.totalorder %s159, %s161
    %p165 = scmp.eq.s32.totalorder %s15, 0
    %p166 = por %p164, %p165
    %p167 = scmp.ne.s32.totalorder %s159, %s161
    %p168 = scmp.eq.s32.totalorder %s20, 1
    %p169 = por %p167, %p168
    %p170 = scmp.ne.s32.totalorder %s161, %s162
    %p171 = scmp.eq.s32.totalorder %s20, 0
    %p172 = por %p170, %p171
    %p173 = scmp.ne.s32.totalorder %s161, %s162
    %p174 = scmp.eq.s32.totalorder %s21, 1
    %p175 = por %p173, %p174
    %p177 = scmp.ne.s32.totalorder %s162, %s176
    %p178 = scmp.eq.s32.totalorder %s21, 0
    %p179 = por %p177, %p178
    %s181 = sadd.s32 %s180, 1
    %p184 = scmp.eq.s32.totalorder %s15, 1
    %p185 = scmp.ne.s32.totalorder %s180, %s182
    %p186 = scmp.eq.s32.totalorder %s15, 0
    %p187 = por %p185, %p186
    %p188 = scmp.ne.s32.totalorder %s180, %s182
    %p189 = scmp.eq.s32.totalorder %s20, 1
    %p190 = por %p188, %p189
    %p191 = scmp.ne.s32.totalorder %s182, %s183
    %p192 = scmp.eq.s32.totalorder %s20, 0
    %p193 = por %p191, %p192
    %p194 = scmp.ne.s32.totalorder %s182, %s183
    %p195 = scmp.eq.s32.totalorder %s21, 1
    %p196 = por %p194, %p195
    %p198 = scmp.ne.s32.totalorder %s183, %s197
    %p199 = scmp.eq.s32.totalorder %s21, 0
    %p200 = por %p198, %p199
    %s202 = sadd.s32 %s201, 1
    %p205 = scmp.eq.s32.totalorder %s15, 1
    %p206 = scmp.ne.s32.totalorder %s201, %s203
    %p207 = scmp.eq.s32.totalorder %s15, 0
    %p208 = por %p206, %p207
    %p209 = scmp.ne.s32.totalorder %s201, %s203
    %p210 = scmp.eq.s32.totalorder %s20, 1
    %p211 = por %p209, %p210
    %p212 = scmp.ne.s32.totalorder %s203, %s204
    %p213 = scmp.eq.s32.totalorder %s20, 0
    %p214 = por %p212, %p213
    %p215 = scmp.ne.s32.totalorder %s203, %s204
    %p216 = scmp.eq.s32.totalorder %s21, 1
    %p217 = por %p215, %p216
    %p219 = scmp.ne.s32.totalorder %s204, %s218
    %p220 = scmp.eq.s32.totalorder %s21, 0
    %p221 = por %p219, %p220
    %s222 = ssub.s32 %s15, %s22
    %p223 = scmp.eq.s32.totalorder %s222, 0
    %s225 = sadd.s32 %s224, 1
    %s226 = scalar_select %p223, %s224, %s225
    %p229 = pneg %p223
    %p230 = scmp.eq.s32.totalorder %s15, 1
    %p231 = por %p229, %p230
    %p232 = scmp.ne.s32.totalorder %s224, %s227
    %p233 = scmp.eq.s32.totalorder %s15, 0
    %p234 = por %p232, %p233
    %p235 = scmp.ne.s32.totalorder %s224, %s227
    %p236 = scmp.eq.s32.totalorder %s20, 1
    %p237 = por %p235, %p236
    %p238 = scmp.ne.s32.totalorder %s227, %s228
    %p239 = scmp.eq.s32.totalorder %s20, 0
    %p240 = por %p238, %p239
    %p241 = scmp.ne.s32.totalorder %s227, %s228
    %p242 = scmp.eq.s32.totalorder %s21, 1
    %p243 = por %p241, %p242
    %p245 = scmp.ne.s32.totalorder %s228, %s244
    %p246 = scmp.eq.s32.totalorder %s21, 0
    %p247 = por %p245, %p246
    %p248 = scmp.le.s32.totalorder 1, %s15
    %p249 = scmp.lt.s32.totalorder %s15, 3
    %p250 = pnand %p248, %p249
    %p251 = pneg %p250
    // Predicated region
    $region9: #{decoder_forward.3} parent=5 // pred_check
      _
    $region10: #{decoder_forward.3} parent=5 // pred_check_branch
      %253 = sbr.rel (%p250) target = $region12
    $region11: #{decoder_forward.3} parent=5 // pred_region
      %s254 = ssub.s32 %s15, 1
      // Predicated region
      $region13: #{decoder_forward.3} parent=11 // pred_check
        %p255 = pneg %p88
      $region14: #{decoder_forward.3} parent=11 // pred_check_branch
        %257 = sbr.rel (%p255) target = $region16
      $region15: #{decoder_forward.3} parent=11 // pred_region
        _
      $region16: #{decoder_forward.3} parent=11 // pred_fallthru
        _
      // Predicated region
      $region17: #{decoder_forward.3} parent=11 // pred_check
        %p258 = pneg %p109
      $region18: #{decoder_forward.3} parent=11 // pred_check_branch
        %260 = sbr.rel (%p258) target = $region20
      $region19: #{decoder_forward.3} parent=11 // pred_region
        _
      $region20: #{decoder_forward.3} parent=11 // pred_fallthru
        _
      // Predicated region
      $region21: #{decoder_forward.3} parent=11 // pred_check
        %p261 = pneg %p130
      $region22: #{decoder_forward.3} parent=11 // pred_check_branch
        %263 = sbr.rel (%p261) target = $region24
      $region23: #{decoder_forward.3} parent=11 // pred_region
        _
      $region24: #{decoder_forward.3} parent=11 // pred_fallthru
        _
      // Predicated region
      $region25: #{decoder_forward.3} parent=11 // pred_check
        %p264 = pneg %p151
      $region26: #{decoder_forward.3} parent=11 // pred_check_branch
        %266 = sbr.rel (%p264) target = $region28
      $region27: #{decoder_forward.3} parent=11 // pred_region
        _
      $region28: #{decoder_forward.3} parent=11 // pred_fallthru
        _
      // Predicated region
      $region29: #{decoder_forward.3} parent=11 // pred_check
        %p267 = pneg %p172
      $region30: #{decoder_forward.3} parent=11 // pred_check_branch
        %269 = sbr.rel (%p267) target = $region32
      $region31: #{decoder_forward.3} parent=11 // pred_region
        _
      $region32: #{decoder_forward.3} parent=11 // pred_fallthru
        _
      // Predicated region
      $region33: #{decoder_forward.3} parent=11 // pred_check
        %p270 = pneg %p193
      $region34: #{decoder_forward.3} parent=11 // pred_check_branch
        %272 = sbr.rel (%p270) target = $region36
      $region35: #{decoder_forward.3} parent=11 // pred_region
        _
      $region36: #{decoder_forward.3} parent=11 // pred_fallthru
        _
      // Predicated region
      $region37: #{decoder_forward.3} parent=11 // pred_check
        %p273 = pneg %p214
      $region38: #{decoder_forward.3} parent=11 // pred_check_branch
        %275 = sbr.rel (%p273) target = $region40
      $region39: #{decoder_forward.3} parent=11 // pred_region
        _
      $region40: #{decoder_forward.3} parent=11 // pred_fallthru
        _
    $region12: #{decoder_forward.3} parent=5 // pred_fallthru
      _
    %p276 = scmp.lt.s32.totalorder %s15, 2
    // Predicated region
    $region41: #{decoder_forward.3} parent=5 // pred_check
      %p277 = pneg %p276
    $region42: #{decoder_forward.3} parent=5 // pred_check_branch
      %279 = sbr.rel (%p277) target = $region44
    $region43: #{decoder_forward.3} parent=5 // pred_region
      // Predicated region
      $region45: #{decoder_forward.3} parent=43 // pred_check
        %p280 = pneg %p35
      $region46: #{decoder_forward.3} parent=43 // pred_check_branch
        %282 = sbr.rel (%p280) target = $region48
      $region47: #{decoder_forward.3} parent=43 // pred_region
        %p283 = scmp.lt.s32.totalorder %s15, 1
        %s284 = scalar_select %p283, %s15, 1
        %s285 = smul.addr %s284, 4
        %s286 = smul.addr %s285, 4
        %s287 = scalar_lea.vmem %s0, %s286
      $region48: #{decoder_forward.3} parent=43 // pred_fallthru
        _
      // Predicated region
      $region49: #{decoder_forward.3} parent=43 // pred_check
        %p288 = pneg %p61
      $region50: #{decoder_forward.3} parent=43 // pred_check_branch
        %290 = sbr.rel (%p288) target = $region52
      $region51: #{decoder_forward.3} parent=43 // pred_region
        %p291 = scmp.lt.s32.totalorder %s15, 1
        %s292 = scalar_select %p291, %s15, 1
        %s293 = smul.addr %s292, 8
        %s294 = smul.addr %s293, 4
        %s295 = scalar_lea.vmem %s1, %s294
      $region52: #{decoder_forward.3} parent=43 // pred_fallthru
        _
    $region44: #{decoder_forward.3} parent=5 // pred_fallthru
      _
    %p296 = scmp.le.s32.totalorder 1, %s15
    %p297 = scmp.lt.s32.totalorder %s15, 3
    %p298 = pnand %p296, %p297
    %p299 = pneg %p298
    // Predicated region
    $region53: #{decoder_forward.3} parent=5 // pred_check
      _
    $region54: #{decoder_forward.3} parent=5 // pred_check_branch
      %301 = sbr.rel (%p298) target = $region56
    $region55: #{decoder_forward.3} parent=5 // pred_region
      %s302 = ssub.s32 %s15, 1
      %p303 = scmp.lt.s32.totalorder %s20, 1
      %s304 = scalar_select %p303, %s20, 1
      %s305 = smul.addr %s304, 4
      %s306 = smul.addr %s305, 4
      %s307 = scalar_lea.vmem %s0, %s306
      %p308 = pneg %p41
      %p309 = pneg %p38
      %p310 = scmp.lt.s32.totalorder %s20, 1
      %s311 = scalar_select %p310, %s20, 1
      %s312 = smul.addr %s311, 8
      %s313 = smul.addr %s312, 4
      %s314 = scalar_lea.vmem %s1, %s313
      %p315 = pneg %p67
      %p316 = pneg %p64
      %p317 = pneg %p88
      %p318 = pneg %p85
      %p319 = pneg %p109
      %p320 = pneg %p106
      %p321 = pneg %p130
      %p322 = pneg %p127
      %p323 = pneg %p151
      %p324 = pneg %p148
      %p325 = pneg %p172
      %p326 = pneg %p169
      %p327 = pneg %p193
      %p328 = pneg %p190
      %p329 = pneg %p214
      %p330 = pneg %p211
      %p331 = pneg %p240
      %p332 = pneg %p237
      %p333 = scmp.lt.s32.totalorder %s20, 1
      %s334 = scalar_select %p333, %s20, 1
      %s335 = smul.addr %s334, 8
      %s336 = smul.addr %s335, 8
      %s337 = scalar_lea.vmem %s9, %s336
      %p338 = scmp.lt.s32.totalorder %s20, 1
      %s339 = scalar_select %p338, %s20, 1
      %s340 = smul.addr %s339, 4
      %s341 = smul.addr %s340, 4
      %s342 = scalar_lea.vmem %s0, %s341
      %p343 = scmp.lt.s32.totalorder %s20, 1
      %s344 = scalar_select %p343, %s20, 1
      %s345 = smul.addr %s344, 8
      %s346 = smul.addr %s345, 4
      %s347 = scalar_lea.vmem %s1, %s346
      %p348 = scmp.lt.s32.totalorder %s20, 1
      %s349 = scalar_select %p348, %s20, 1
      %s350 = smul.addr %s349, 8
      %s351 = smul.addr %s350, 8
      %s352 = scalar_lea.vmem %s9, %s351
      %v356 = vld [vmem:[%s3] sm:$0xf]
      %v357 = vld [vmem:[%s342] sm:$0xff]
      %v358 = vld [vmem:[%s342 + $0x8] sm:$0xff]
      %v359 = vld [vmem:[%s4] sm:$0xff]
      %361 = vset.pattern.permute.xlu0 0
      %362 = vperm.xlu0 %361, %v359
      %v363 = vpop.permute.xlu0 %362
      %v367 = vunpack.c.l.b16 %v357
      %v368 = vunpack.c.h.b16 %v357
      %v369 = vunpack.c.l.b16 %v358
      %v370 = vunpack.c.h.b16 %v358
      %v371 = vpack.c.b16 %v369, %v367
      %v372 = vpack.c.b16 %v370, %v368
      %vm375 = vcmask 130048
      %v377 = vsel %vm375, %v356, 0
      %379 = vmatprep.subr.bf16.mxu0 %v372
      %380 = vmatpush1.bf16.msra.mxu0 %v371
      %381 = vmatprep.subr.bf16.mxu0 0
      %382 = vmatpush1.bf16.msra.mxu0 0
      %383 = vmatprep.subr.bf16.mxu0 0
      %384 = vmatpush1.bf16.msra.mxu0 0
      %385 = vmatprep.subr.bf16.mxu0 0
      %386 = vmatpush1.bf16.msra.mxu0 0
      %387 = vmatprep.subr.bf16.mxu0 0
      %388 = vmatpush1.bf16.msra.mxu0 0
      %389 = vmatprep.subr.bf16.mxu0 0
      %390 = vmatpush1.bf16.msra.mxu0 0
      %391 = vmatprep.subr.bf16.mxu0 0
      %392 = vmatpush1.bf16.msra.mxu0 0
      %393 = vmatprep.subr.bf16.mxu0 0
      %394 = vmatpush1.bf16.msra.mxu0 0
      %395 = vmatprep.subr.bf16.mxu0 0
      %396 = vmatpush1.bf16.msra.mxu0 0
      %397 = vmatprep.subr.bf16.mxu0 0
      %398 = vmatpush1.bf16.msra.mxu0 0
      %399 = vmatprep.subr.bf16.mxu0 0
      %400 = vmatpush1.bf16.msra.mxu0 0
      %401 = vmatprep.subr.bf16.mxu0 0
      %402 = vmatpush1.bf16.msra.mxu0 0
      %403 = vmatprep.subr.bf16.mxu0 0
      %404 = vmatpush1.bf16.msra.mxu0 0
      %405 = vmatprep.subr.bf16.mxu0 0
      %406 = vmatpush1.bf16.msra.mxu0 0
      %407 = vmatprep.subr.bf16.mxu0 0
      %408 = vmatpush1.bf16.msra.mxu0 0
      %409 = vmatprep.subr.bf16.mxu0 0
      %410 = vmatpush1.bf16.msra.mxu0 0
      %411 = vmatprep.mubr.bf16.mxu0 0
      %412 = vmatmul.mubr.bf16.gmra.mrb[0].mxu0 %v377
      %v413 = vpop.f32.mrb[0].mxu0
      %v414 = vadd.f32 %v363, %v413
      %v415 = vpop.f32.mrb[0].mxu0
      %v416 = vadd.f32 %v363, %v415
      %v417 = vpop.f32.mrb[0].mxu0
      %v418 = vpop.f32.mrb[0].mxu0
      %419 = vdwg.mxu0
      %v420 = vpack.c.bf16 %v414, %v414
      %v421 = vpack.c.bf16 %v416, %v416
      %v422 = vld [vmem:[%s2] sm:$0xff]
      %v423 = vld [vmem:[%s2 + $0x8] sm:$0xff]
      %v424 = vld [vmem:[%s2 + $0x10] sm:$0xff]
      %v425 = vld [vmem:[%s2 + $0x18] sm:$0xff]
      %v426 = vld [vmem:[%s2 + $0x20] sm:$0xff]
      %v427 = vld [vmem:[%s2 + $0x28] sm:$0xff]
      %v428 = vld [vmem:[%s2 + $0x30] sm:$0xff]
      %v429 = vld [vmem:[%s2 + $0x38] sm:$0xff]
      %v430 = vld [vmem:[%s2 + $0x40] sm:$0xff]
      %v431 = vld [vmem:[%s2 + $0x48] sm:$0xff]
      %v432 = vld [vmem:[%s2 + $0x50] sm:$0xff]
      %v433 = vld [vmem:[%s2 + $0x58] sm:$0xff]
      %v434 = vld [vmem:[%s2 + $0x60] sm:$0xff]
      %v435 = vld [vmem:[%s2 + $0x68] sm:$0xff]
      %v436 = vld [vmem:[%s2 + $0x70] sm:$0xff]
      %v437 = vld [vmem:[%s2 + $0x78] sm:$0xff]
      %v438 = vld [vmem:[%s2 + $0x80] sm:$0xff]
      %v439 = vld [vmem:[%s2 + $0x88] sm:$0xff]
      %v440 = vld [vmem:[%s2 + $0x90] sm:$0xff]
      %v441 = vld [vmem:[%s2 + $0x98] sm:$0xff]
      %v442 = vld [vmem:[%s2 + $0xa0] sm:$0xff]
      %v443 = vld [vmem:[%s2 + $0xa8] sm:$0xff]
      %v444 = vld [vmem:[%s2 + $0xb0] sm:$0xff]
      %v445 = vld [vmem:[%s2 + $0xb8] sm:$0xff]
      %v446 = vld [vmem:[%s2 + $0xc0] sm:$0xff]
      %v447 = vld [vmem:[%s2 + $0xc8] sm:$0xff]
      %v448 = vld [vmem:[%s2 + $0xd0] sm:$0xff]
      %v449 = vld [vmem:[%s2 + $0xd8] sm:$0xff]
      %v450 = vld [vmem:[%s2 + $0xe0] sm:$0xff]
      %v451 = vld [vmem:[%s2 + $0xe8] sm:$0xff]
      %v452 = vld [vmem:[%s2 + $0xf0] sm:$0xff]
      %v453 = vld [vmem:[%s2 + $0xf8] sm:$0xff]
      %v454 = vld [vmem:[%s2 + $0x100] sm:$0xff]
      %v455 = vld [vmem:[%s2 + $0x108] sm:$0xff]
      %v456 = vld [vmem:[%s2 + $0x110] sm:$0xff]
      %v457 = vld [vmem:[%s2 + $0x118] sm:$0xff]
      %v458 = vld [vmem:[%s2 + $0x120] sm:$0xff]
      %v459 = vld [vmem:[%s2 + $0x128] sm:$0xff]
      %v460 = vld [vmem:[%s2 + $0x130] sm:$0xff]
      %v461 = vld [vmem:[%s2 + $0x138] sm:$0xff]
      %v462 = vld [vmem:[%s2 + $0x140] sm:$0xff]
      %v463 = vld [vmem:[%s2 + $0x148] sm:$0xff]
      %v464 = vld [vmem:[%s2 + $0x150] sm:$0xff]
      %v465 = vld [vmem:[%s2 + $0x158] sm:$0xff]
      %v466 = vld [vmem:[%s2 + $0x160] sm:$0xff]
      %v467 = vld [vmem:[%s2 + $0x168] sm:$0xff]
      %v468 = vld [vmem:[%s2 + $0x170] sm:$0xff]
      %v469 = vld [vmem:[%s2 + $0x178] sm:$0xff]
      %v470 = vld [vmem:[%s2 + $0x180] sm:$0xff]
      %v471 = vld [vmem:[%s2 + $0x188] sm:$0xff]
      %v472 = vld [vmem:[%s2 + $0x190] sm:$0xff]
      %v473 = vld [vmem:[%s2 + $0x198] sm:$0xff]
      %v474 = vld [vmem:[%s2 + $0x1a0] sm:$0xff]
      %v475 = vld [vmem:[%s2 + $0x1a8] sm:$0xff]
      %v476 = vld [vmem:[%s2 + $0x1b0] sm:$0xff]
      %v477 = vld [vmem:[%s2 + $0x1b8] sm:$0xff]
      %v478 = vld [vmem:[%s2 + $0x1c0] sm:$0xff]
      %v479 = vld [vmem:[%s2 + $0x1c8] sm:$0xff]
      %v480 = vld [vmem:[%s2 + $0x1d0] sm:$0xff]
      %v481 = vld [vmem:[%s2 + $0x1d8] sm:$0xff]
      %v482 = vld [vmem:[%s2 + $0x1e0] sm:$0xff]
      %v483 = vld [vmem:[%s2 + $0x1e8] sm:$0xff]
      %v484 = vld [vmem:[%s2 + $0x1f0] sm:$0xff]
      %v485 = vld [vmem:[%s2 + $0x1f8] sm:$0xff]
      %v486 = vld [vmem:[%s2 + $0x200] sm:$0xff]
      %v487 = vld [vmem:[%s2 + $0x208] sm:$0xff]
      %v488 = vld [vmem:[%s2 + $0x210] sm:$0xff]
      %v489 = vld [vmem:[%s2 + $0x218] sm:$0xff]
      %v490 = vld [vmem:[%s2 + $0x220] sm:$0xff]
      %v491 = vld [vmem:[%s2 + $0x228] sm:$0xff]
      %v492 = vld [vmem:[%s2 + $0x230] sm:$0xff]
      %v493 = vld [vmem:[%s2 + $0x238] sm:$0xff]
      %v494 = vld [vmem:[%s2 + $0x240] sm:$0xff]
      %v495 = vld [vmem:[%s2 + $0x248] sm:$0xff]
      %v496 = vld [vmem:[%s2 + $0x250] sm:$0xff]
      %v497 = vld [vmem:[%s2 + $0x258] sm:$0xff]
      %v498 = vld [vmem:[%s2 + $0x260] sm:$0xff]
      %v499 = vld [vmem:[%s2 + $0x268] sm:$0xff]
      %v500 = vld [vmem:[%s2 + $0x270] sm:$0xff]
      %v501 = vld [vmem:[%s2 + $0x278] sm:$0xff]
      %v502 = vld [vmem:[%s2 + $0x280] sm:$0xff]
      %v503 = vld [vmem:[%s2 + $0x288] sm:$0xff]
      %v504 = vld [vmem:[%s2 + $0x290] sm:$0xff]
      %v505 = vld [vmem:[%s2 + $0x298] sm:$0xff]
      %v506 = vld [vmem:[%s2 + $0x2a0] sm:$0xff]
      %v507 = vld [vmem:[%s2 + $0x2a8] sm:$0xff]
      %v508 = vld [vmem:[%s2 + $0x2b0] sm:$0xff]
      %v509 = vld [vmem:[%s2 + $0x2b8] sm:$0xff]
      %v510 = vld [vmem:[%s2 + $0x2c0] sm:$0xff]
      %v511 = vld [vmem:[%s2 + $0x2c8] sm:$0xff]
      %v512 = vld [vmem:[%s2 + $0x2d0] sm:$0xff]
      %v513 = vld [vmem:[%s2 + $0x2d8] sm:$0xff]
      %v514 = vld [vmem:[%s2 + $0x2e0] sm:$0xff]
      %v515 = vld [vmem:[%s2 + $0x2e8] sm:$0xff]
      %v516 = vld [vmem:[%s2 + $0x2f0] sm:$0xff]
      %v517 = vld [vmem:[%s2 + $0x2f8] sm:$0xff]
      %v518 = vld [vmem:[%s2 + $0x300] sm:$0xff]
      %v519 = vld [vmem:[%s2 + $0x308] sm:$0xff]
      %v520 = vld [vmem:[%s2 + $0x310] sm:$0xff]
      %v521 = vld [vmem:[%s2 + $0x318] sm:$0xff]
      %v522 = vld [vmem:[%s2 + $0x320] sm:$0xff]
      %v523 = vld [vmem:[%s2 + $0x328] sm:$0xff]
      %v524 = vld [vmem:[%s2 + $0x330] sm:$0xff]
      %v525 = vld [vmem:[%s2 + $0x338] sm:$0xff]
      %v526 = vld [vmem:[%s2 + $0x340] sm:$0xff]
      %v527 = vld [vmem:[%s2 + $0x348] sm:$0xff]
      %v528 = vld [vmem:[%s2 + $0x350] sm:$0xff]
      %v529 = vld [vmem:[%s2 + $0x358] sm:$0xff]
      %v530 = vld [vmem:[%s2 + $0x360] sm:$0xff]
      %v531 = vld [vmem:[%s2 + $0x368] sm:$0xff]
      %v532 = vld [vmem:[%s2 + $0x370] sm:$0xff]
      %v533 = vld [vmem:[%s2 + $0x378] sm:$0xff]
      %v534 = vld [vmem:[%s2 + $0x380] sm:$0xff]
      %v535 = vld [vmem:[%s2 + $0x388] sm:$0xff]
      %v536 = vld [vmem:[%s2 + $0x390] sm:$0xff]
      %v537 = vld [vmem:[%s2 + $0x398] sm:$0xff]
      %v538 = vld [vmem:[%s2 + $0x3a0] sm:$0xff]
      %v539 = vld [vmem:[%s2 + $0x3a8] sm:$0xff]
      %v540 = vld [vmem:[%s2 + $0x3b0] sm:$0xff]
      %v541 = vld [vmem:[%s2 + $0x3b8] sm:$0xff]
      %v542 = vld [vmem:[%s2 + $0x3c0] sm:$0xff]
      %v543 = vld [vmem:[%s2 + $0x3c8] sm:$0xff]
      %v544 = vld [vmem:[%s2 + $0x3d0] sm:$0xff]
      %v545 = vld [vmem:[%s2 + $0x3d8] sm:$0xff]
      %v546 = vld [vmem:[%s2 + $0x3e0] sm:$0xff]
      %v547 = vld [vmem:[%s2 + $0x3e8] sm:$0xff]
      %v548 = vld [vmem:[%s2 + $0x3f0] sm:$0xff]
      %v549 = vld [vmem:[%s2 + $0x3f8] sm:$0xff]
      %s550 = scalar_lea.vmem %s3, 4
      %v551 = vld [vmem:[%s550] sm:$0xf]
      %v553 = vsel %vm375, %v551, 0
      %555 = vmatprep.subr.bf16.mxu0 %v372
      %556 = vmatpush1.bf16.msra.mxu0 %v371
      %557 = vmatprep.subr.bf16.mxu0 0
      %558 = vmatpush1.bf16.msra.mxu0 0
      %559 = vmatprep.subr.bf16.mxu0 0
      %560 = vmatpush1.bf16.msra.mxu0 0
      %561 = vmatprep.subr.bf16.mxu0 0
      %562 = vmatpush1.bf16.msra.mxu0 0
      %563 = vmatprep.subr.bf16.mxu0 0
      %564 = vmatpush1.bf16.msra.mxu0 0
      %565 = vmatprep.subr.bf16.mxu0 0
      %566 = vmatpush1.bf16.msra.mxu0 0
      %567 = vmatprep.subr.bf16.mxu0 0
      %568 = vmatpush1.bf16.msra.mxu0 0
      %569 = vmatprep.subr.bf16.mxu0 0
      %570 = vmatpush1.bf16.msra.mxu0 0
      %571 = vmatprep.subr.bf16.mxu0 0
      %572 = vmatpush1.bf16.msra.mxu0 0
      %573 = vmatprep.subr.bf16.mxu0 0
      %574 = vmatpush1.bf16.msra.mxu0 0
      %575 = vmatprep.subr.bf16.mxu0 0
      %576 = vmatpush1.bf16.msra.mxu0 0
      %577 = vmatprep.subr.bf16.mxu0 0
      %578 = vmatpush1.bf16.msra.mxu0 0
      %579 = vmatprep.subr.bf16.mxu0 0
      %580 = vmatpush1.bf16.msra.mxu0 0
      %581 = vmatprep.subr.bf16.mxu0 0
      %582 = vmatpush1.bf16.msra.mxu0 0
      %583 = vmatprep.subr.bf16.mxu0 0
      %584 = vmatpush1.bf16.msra.mxu0 0
      %585 = vmatprep.subr.bf16.mxu0 0
      %586 = vmatpush1.bf16.msra.mxu0 0
      %587 = vmatprep.mubr.bf16.mxu0 0
      %588 = vmatmul.mubr.bf16.gmra.mrb[0].mxu0 %v553
      %v589 = vpop.f32.mrb[0].mxu0
      %v590 = vadd.f32 %v363, %v589
      %v591 = vpop.f32.mrb[0].mxu0
      %v592 = vadd.f32 %v363, %v591
      %v593 = vpop.f32.mrb[0].mxu0
      %v594 = vpop.f32.mrb[0].mxu0
      %595 = vdwg.mxu0
      %v596 = vpack.c.bf16 %v590, %v590
      %v597 = vpack.c.bf16 %v592, %v592
      %s598 = scalar_lea.vmem %s2, 1024
      %v599 = vld [vmem:[%s598] sm:$0xff]
      %v600 = vld [vmem:[%s598 + $0x8] sm:$0xff]
      %v601 = vld [vmem:[%s598 + $0x10] sm:$0xff]
      %v602 = vld [vmem:[%s598 + $0x18] sm:$0xff]
      %v603 = vld [vmem:[%s598 + $0x20] sm:$0xff]
      %v604 = vld [vmem:[%s598 + $0x28] sm:$0xff]
      %v605 = vld [vmem:[%s598 + $0x30] sm:$0xff]
      %v606 = vld [vmem:[%s598 + $0x38] sm:$0xff]
      %v607 = vld [vmem:[%s598 + $0x40] sm:$0xff]
      %v608 = vld [vmem:[%s598 + $0x48] sm:$0xff]
      %v609 = vld [vmem:[%s598 + $0x50] sm:$0xff]
      %v610 = vld [vmem:[%s598 + $0x58] sm:$0xff]
      %v611 = vld [vmem:[%s598 + $0x60] sm:$0xff]
      %v612 = vld [vmem:[%s598 + $0x68] sm:$0xff]
      %v613 = vld [vmem:[%s598 + $0x70] sm:$0xff]
      %v614 = vld [vmem:[%s598 + $0x78] sm:$0xff]
      %v615 = vld [vmem:[%s598 + $0x80] sm:$0xff]
      %v616 = vld [vmem:[%s598 + $0x88] sm:$0xff]
      %v617 = vld [vmem:[%s598 + $0x90] sm:$0xff]
      %v618 = vld [vmem:[%s598 + $0x98] sm:$0xff]
      %v619 = vld [vmem:[%s598 + $0xa0] sm:$0xff]
      %v620 = vld [vmem:[%s598 + $0xa8] sm:$0xff]
      %v621 = vld [vmem:[%s598 + $0xb0] sm:$0xff]
      %v622 = vld [vmem:[%s598 + $0xb8] sm:$0xff]
      %v623 = vld [vmem:[%s598 + $0xc0] sm:$0xff]
      %v624 = vld [vmem:[%s598 + $0xc8] sm:$0xff]
      %v625 = vld [vmem:[%s598 + $0xd0] sm:$0xff]
      %v626 = vld [vmem:[%s598 + $0xd8] sm:$0xff]
      %v627 = vld [vmem:[%s598 + $0xe0] sm:$0xff]
      %v628 = vld [vmem:[%s598 + $0xe8] sm:$0xff]
      %v629 = vld [vmem:[%s598 + $0xf0] sm:$0xff]
      %v630 = vld [vmem:[%s598 + $0xf8] sm:$0xff]
      %v631 = vld [vmem:[%s598 + $0x100] sm:$0xff]
      %v632 = vld [vmem:[%s598 + $0x108] sm:$0xff]
      %v633 = vld [vmem:[%s598 + $0x110] sm:$0xff]
      %v634 = vld [vmem:[%s598 + $0x118] sm:$0xff]
      %v635 = vld [vmem:[%s598 + $0x120] sm:$0xff]
      %v636 = vld [vmem:[%s598 + $0x128] sm:$0xff]
      %v637 = vld [vmem:[%s598 + $0x130] sm:$0xff]
      %v638 = vld [vmem:[%s598 + $0x138] sm:$0xff]
      %v639 = vld [vmem:[%s598 + $0x140] sm:$0xff]
      %v640 = vld [vmem:[%s598 + $0x148] sm:$0xff]
      %v641 = vld [vmem:[%s598 + $0x150] sm:$0xff]
      %v642 = vld [vmem:[%s598 + $0x158] sm:$0xff]
      %v643 = vld [vmem:[%s598 + $0x160] sm:$0xff]
      %v644 = vld [vmem:[%s598 + $0x168] sm:$0xff]
      %v645 = vld [vmem:[%s598 + $0x170] sm:$0xff]
      %v646 = vld [vmem:[%s598 + $0x178] sm:$0xff]
      %v647 = vld [vmem:[%s598 + $0x180] sm:$0xff]
      %v648 = vld [vmem:[%s598 + $0x188] sm:$0xff]
      %v649 = vld [vmem:[%s598 + $0x190] sm:$0xff]
      %v650 = vld [vmem:[%s598 + $0x198] sm:$0xff]
      %v651 = vld [vmem:[%s598 + $0x1a0] sm:$0xff]
      %v652 = vld [vmem:[%s598 + $0x1a8] sm:$0xff]
      %v653 = vld [vmem:[%s598 + $0x1b0] sm:$0xff]
      %v654 = vld [vmem:[%s598 + $0x1b8] sm:$0xff]
      %v655 = vld [vmem:[%s598 + $0x1c0] sm:$0xff]
      %v656 = vld [vmem:[%s598 + $0x1c8] sm:$0xff]
      %v657 = vld [vmem:[%s598 + $0x1d0] sm:$0xff]
      %v658 = vld [vmem:[%s598 + $0x1d8] sm:$0xff]
      %v659 = vld [vmem:[%s598 + $0x1e0] sm:$0xff]
      %v660 = vld [vmem:[%s598 + $0x1e8] sm:$0xff]
      %v661 = vld [vmem:[%s598 + $0x1f0] sm:$0xff]
      %v662 = vld [vmem:[%s598 + $0x1f8] sm:$0xff]
      %v663 = vld [vmem:[%s598 + $0x200] sm:$0xff]
      %v664 = vld [vmem:[%s598 + $0x208] sm:$0xff]
      %v665 = vld [vmem:[%s598 + $0x210] sm:$0xff]
      %v666 = vld [vmem:[%s598 + $0x218] sm:$0xff]
      %v667 = vld [vmem:[%s598 + $0x220] sm:$0xff]
      %v668 = vld [vmem:[%s598 + $0x228] sm:$0xff]
      %v669 = vld [vmem:[%s598 + $0x230] sm:$0xff]
      %v670 = vld [vmem:[%s598 + $0x238] sm:$0xff]
      %v671 = vld [vmem:[%s598 + $0x240] sm:$0xff]
      %v672 = vld [vmem:[%s598 + $0x248] sm:$0xff]
      %v673 = vld [vmem:[%s598 + $0x250] sm:$0xff]
      %v674 = vld [vmem:[%s598 + $0x258] sm:$0xff]
      %v675 = vld [vmem:[%s598 + $0x260] sm:$0xff]
      %v676 = vld [vmem:[%s598 + $0x268] sm:$0xff]
      %v677 = vld [vmem:[%s598 + $0x270] sm:$0xff]
      %v678 = vld [vmem:[%s598 + $0x278] sm:$0xff]
      %v679 = vld [vmem:[%s598 + $0x280] sm:$0xff]
      %v680 = vld [vmem:[%s598 + $0x288] sm:$0xff]
      %v681 = vld [vmem:[%s598 + $0x290] sm:$0xff]
      %v682 = vld [vmem:[%s598 + $0x298] sm:$0xff]
      %v683 = vld [vmem:[%s598 + $0x2a0] sm:$0xff]
      %v684 = vld [vmem:[%s598 + $0x2a8] sm:$0xff]
      %v685 = vld [vmem:[%s598 + $0x2b0] sm:$0xff]
      %v686 = vld [vmem:[%s598 + $0x2b8] sm:$0xff]
      %v687 = vld [vmem:[%s598 + $0x2c0] sm:$0xff]
      %v688 = vld [vmem:[%s598 + $0x2c8] sm:$0xff]
      %v689 = vld [vmem:[%s598 + $0x2d0] sm:$0xff]
      %v690 = vld [vmem:[%s598 + $0x2d8] sm:$0xff]
      %v691 = vld [vmem:[%s598 + $0x2e0] sm:$0xff]
      %v692 = vld [vmem:[%s598 + $0x2e8] sm:$0xff]
      %v693 = vld [vmem:[%s598 + $0x2f0] sm:$0xff]
      %v694 = vld [vmem:[%s598 + $0x2f8] sm:$0xff]
      %v695 = vld [vmem:[%s598 + $0x300] sm:$0xff]
      %v696 = vld [vmem:[%s598 + $0x308] sm:$0xff]
      %v697 = vld [vmem:[%s598 + $0x310] sm:$0xff]
      %v698 = vld [vmem:[%s598 + $0x318] sm:$0xff]
      %v699 = vld [vmem:[%s598 + $0x320] sm:$0xff]
      %v700 = vld [vmem:[%s598 + $0x328] sm:$0xff]
      %v701 = vld [vmem:[%s598 + $0x330] sm:$0xff]
      %v702 = vld [vmem:[%s598 + $0x338] sm:$0xff]
      %v703 = vld [vmem:[%s598 + $0x340] sm:$0xff]
      %v704 = vld [vmem:[%s598 + $0x348] sm:$0xff]
      %v705 = vld [vmem:[%s598 + $0x350] sm:$0xff]
      %v706 = vld [vmem:[%s598 + $0x358] sm:$0xff]
      %v707 = vld [vmem:[%s598 + $0x360] sm:$0xff]
      %v708 = vld [vmem:[%s598 + $0x368] sm:$0xff]
      %v709 = vld [vmem:[%s598 + $0x370] sm:$0xff]
      %v710 = vld [vmem:[%s598 + $0x378] sm:$0xff]
      %v711 = vld [vmem:[%s598 + $0x380] sm:$0xff]
      %v712 = vld [vmem:[%s598 + $0x388] sm:$0xff]
      %v713 = vld [vmem:[%s598 + $0x390] sm:$0xff]
      %v714 = vld [vmem:[%s598 + $0x398] sm:$0xff]
      %v715 = vld [vmem:[%s598 + $0x3a0] sm:$0xff]
      %v716 = vld [vmem:[%s598 + $0x3a8] sm:$0xff]
      %v717 = vld [vmem:[%s598 + $0x3b0] sm:$0xff]
      %v718 = vld [vmem:[%s598 + $0x3b8] sm:$0xff]
      %v719 = vld [vmem:[%s598 + $0x3c0] sm:$0xff]
      %v720 = vld [vmem:[%s598 + $0x3c8] sm:$0xff]
      %v721 = vld [vmem:[%s598 + $0x3d0] sm:$0xff]
      %v722 = vld [vmem:[%s598 + $0x3d8] sm:$0xff]
      %v723 = vld [vmem:[%s598 + $0x3e0] sm:$0xff]
      %v724 = vld [vmem:[%s598 + $0x3e8] sm:$0xff]
      %v725 = vld [vmem:[%s598 + $0x3f0] sm:$0xff]
      %v726 = vld [vmem:[%s598 + $0x3f8] sm:$0xff]
      %v855 = vunpack.c.l.b16 %v599
      %v856 = vunpack.c.h.b16 %v599
      %v857 = vunpack.c.l.b16 %v600
      %v858 = vunpack.c.h.b16 %v600
      %v859 = vunpack.c.l.b16 %v601
      %v860 = vunpack.c.h.b16 %v601
      %v861 = vunpack.c.l.b16 %v602
      %v862 = vunpack.c.h.b16 %v602
      %v863 = vunpack.c.l.b16 %v603
      %v864 = vunpack.c.h.b16 %v603
      %v865 = vunpack.c.l.b16 %v604
      %v866 = vunpack.c.h.b16 %v604
      %v867 = vunpack.c.l.b16 %v605
      %v868 = vunpack.c.h.b16 %v605
      %v869 = vunpack.c.l.b16 %v606
      %v870 = vunpack.c.h.b16 %v606
      %v871 = vunpack.c.l.b16 %v607
      %v872 = vunpack.c.h.b16 %v607
      %v873 = vunpack.c.l.b16 %v608
      %v874 = vunpack.c.h.b16 %v608
      %v875 = vunpack.c.l.b16 %v609
      %v876 = vunpack.c.h.b16 %v609
      %v877 = vunpack.c.l.b16 %v610
      %v878 = vunpack.c.h.b16 %v610
      %v879 = vunpack.c.l.b16 %v611
      %v880 = vunpack.c.h.b16 %v611
      %v881 = vunpack.c.l.b16 %v612
      %v882 = vunpack.c.h.b16 %v612
      %v883 = vunpack.c.l.b16 %v613
      %v884 = vunpack.c.h.b16 %v613
      %v885 = vunpack.c.l.b16 %v614
      %v886 = vunpack.c.h.b16 %v614
      %v887 = vunpack.c.l.b16 %v615
      %v888 = vunpack.c.h.b16 %v615
      %v889 = vunpack.c.l.b16 %v616
      %v890 = vunpack.c.h.b16 %v616
      %v891 = vunpack.c.l.b16 %v617
      %v892 = vunpack.c.h.b16 %v617
      %v893 = vunpack.c.l.b16 %v618
      %v894 = vunpack.c.h.b16 %v618
      %v895 = vunpack.c.l.b16 %v619
      %v896 = vunpack.c.h.b16 %v619
      %v897 = vunpack.c.l.b16 %v620
      %v898 = vunpack.c.h.b16 %v620
      %v899 = vunpack.c.l.b16 %v621
      %v900 = vunpack.c.h.b16 %v621
      %v901 = vunpack.c.l.b16 %v622
      %v902 = vunpack.c.h.b16 %v622
      %v903 = vunpack.c.l.b16 %v623
      %v904 = vunpack.c.h.b16 %v623
      %v905 = vunpack.c.l.b16 %v624
      %v906 = vunpack.c.h.b16 %v624
      %v907 = vunpack.c.l.b16 %v625
      %v908 = vunpack.c.h.b16 %v625
      %v909 = vunpack.c.l.b16 %v626
      %v910 = vunpack.c.h.b16 %v626
      %v911 = vunpack.c.l.b16 %v627
      %v912 = vunpack.c.h.b16 %v627
      %v913 = vunpack.c.l.b16 %v628
      %v914 = vunpack.c.h.b16 %v628
      %v915 = vunpack.c.l.b16 %v629
      %v916 = vunpack.c.h.b16 %v629
      %v917 = vunpack.c.l.b16 %v630
      %v918 = vunpack.c.h.b16 %v630
      %v919 = vunpack.c.l.b16 %v631
      %v920 = vunpack.c.h.b16 %v631
      %v921 = vunpack.c.l.b16 %v632
      %v922 = vunpack.c.h.b16 %v632
      %v923 = vunpack.c.l.b16 %v633
      %v924 = vunpack.c.h.b16 %v633
      %v925 = vunpack.c.l.b16 %v634
      %v926 = vunpack.c.h.b16 %v634
      %v927 = vunpack.c.l.b16 %v635
      %v928 = vunpack.c.h.b16 %v635
      %v929 = vunpack.c.l.b16 %v636
      %v930 = vunpack.c.h.b16 %v636
      %v931 = vunpack.c.l.b16 %v637
      %v932 = vunpack.c.h.b16 %v637
      %v933 = vunpack.c.l.b16 %v638
      %v934 = vunpack.c.h.b16 %v638
      %v935 = vunpack.c.l.b16 %v639
      %v936 = vunpack.c.h.b16 %v639
      %v937 = vunpack.c.l.b16 %v640
      %v938 = vunpack.c.h.b16 %v640
      %v939 = vunpack.c.l.b16 %v641
      %v940 = vunpack.c.h.b16 %v641
      %v941 = vunpack.c.l.b16 %v642
      %v942 = vunpack.c.h.b16 %v642
      %v943 = vunpack.c.l.b16 %v643
      %v944 = vunpack.c.h.b16 %v643
      %v945 = vunpack.c.l.b16 %v644
      %v946 = vunpack.c.h.b16 %v644
      %v947 = vunpack.c.l.b16 %v645
      %v948 = vunpack.c.h.b16 %v645
      %v949 = vunpack.c.l.b16 %v646
      %v950 = vunpack.c.h.b16 %v646
      %v951 = vunpack.c.l.b16 %v647
      %v952 = vunpack.c.h.b16 %v647
      %v953 = vunpack.c.l.b16 %v648
      %v954 = vunpack.c.h.b16 %v648
      %v955 = vunpack.c.l.b16 %v649
      %v956 = vunpack.c.h.b16 %v649
      %v957 = vunpack.c.l.b16 %v650
      %v958 = vunpack.c.h.b16 %v650
      %v959 = vunpack.c.l.b16 %v651
      %v960 = vunpack.c.h.b16 %v651
      %v961 = vunpack.c.l.b16 %v652
      %v962 = vunpack.c.h.b16 %v652
      %v963 = vunpack.c.l.b16 %v653
      %v964 = vunpack.c.h.b16 %v653
      %v965 = vunpack.c.l.b16 %v654
      %v966 = vunpack.c.h.b16 %v654
      %v967 = vunpack.c.l.b16 %v655
      %v968 = vunpack.c.h.b16 %v655
      %v969 = vunpack.c.l.b16 %v656
      %v970 = vunpack.c.h.b16 %v656
      %v971 = vunpack.c.l.b16 %v657
      %v972 = vunpack.c.h.b16 %v657
      %v973 = vunpack.c.l.b16 %v658
      %v974 = vunpack.c.h.b16 %v658
      %v975 = vunpack.c.l.b16 %v659
      %v976 = vunpack.c.h.b16 %v659
      %v977 = vunpack.c.l.b16 %v660
      %v978 = vunpack.c.h.b16 %v660
      %v979 = vunpack.c.l.b16 %v661
      %v980 = vunpack.c.h.b16 %v661
      %v981 = vunpack.c.l.b16 %v662
      %v982 = vunpack.c.h.b16 %v662
      %v983 = vunpack.c.l.b16 %v663
      %v984 = vunpack.c.h.b16 %v663
      %v985 = vunpack.c.l.b16 %v664
      %v986 = vunpack.c.h.b16 %v664
      %v987 = vunpack.c.l.b16 %v665
      %v988 = vunpack.c.h.b16 %v665
      %v989 = vunpack.c.l.b16 %v666
      %v990 = vunpack.c.h.b16 %v666
      %v991 = vunpack.c.l.b16 %v667
      %v992 = vunpack.c.h.b16 %v667
      %v993 = vunpack.c.l.b16 %v668
      %v994 = vunpack.c.h.b16 %v668
      %v995 = vunpack.c.l.b16 %v669
      %v996 = vunpack.c.h.b16 %v669
      %v997 = vunpack.c.l.b16 %v670
      %v998 = vunpack.c.h.b16 %v670
      %v999 = vunpack.c.l.b16 %v671
      %v1000 = vunpack.c.h.b16 %v671
      %v1001 = vunpack.c.l.b16 %v672
      %v1002 = vunpack.c.h.b16 %v672
      %v1003 = vunpack.c.l.b16 %v673
      %v1004 = vunpack.c.h.b16 %v673
      %v1005 = vunpack.c.l.b16 %v674
      %v1006 = vunpack.c.h.b16 %v674
      %v1007 = vunpack.c.l.b16 %v675
      %v1008 = vunpack.c.h.b16 %v675
      %v1009 = vunpack.c.l.b16 %v676
      %v1010 = vunpack.c.h.b16 %v676
      %v1011 = vunpack.c.l.b16 %v677
      %v1012 = vunpack.c.h.b16 %v677
      %v1013 = vunpack.c.l.b16 %v678
      %v1014 = vunpack.c.h.b16 %v678
      %v1015 = vunpack.c.l.b16 %v679
      %v1016 = vunpack.c.h.b16 %v679
      %v1017 = vunpack.c.l.b16 %v680
      %v1018 = vunpack.c.h.b16 %v680
      %v1019 = vunpack.c.l.b16 %v681
      %v1020 = vunpack.c.h.b16 %v681
      %v1021 = vunpack.c.l.b16 %v682
      %v1022 = vunpack.c.h.b16 %v682
      %v1023 = vunpack.c.l.b16 %v683
      %v1024 = vunpack.c.h.b16 %v683
      %v1025 = vunpack.c.l.b16 %v684
      %v1026 = vunpack.c.h.b16 %v684
      %v1027 = vunpack.c.l.b16 %v685
      %v1028 = vunpack.c.h.b16 %v685
      %v1029 = vunpack.c.l.b16 %v686
      %v1030 = vunpack.c.h.b16 %v686
      %v1031 = vunpack.c.l.b16 %v687
      %v1032 = vunpack.c.h.b16 %v687
      %v1033 = vunpack.c.l.b16 %v688
      %v1034 = vunpack.c.h.b16 %v688
      %v1035 = vunpack.c.l.b16 %v689
      %v1036 = vunpack.c.h.b16 %v689
      %v1037 = vunpack.c.l.b16 %v690
      %v1038 = vunpack.c.h.b16 %v690
      %v1039 = vunpack.c.l.b16 %v691
      %v1040 = vunpack.c.h.b16 %v691
      %v1041 = vunpack.c.l.b16 %v692
      %v1042 = vunpack.c.h.b16 %v692
      %v1043 = vunpack.c.l.b16 %v693
      %v1044 = vunpack.c.h.b16 %v693
      %v1045 = vunpack.c.l.b16 %v694
      %v1046 = vunpack.c.h.b16 %v694
      %v1047 = vunpack.c.l.b16 %v695
      %v1048 = vunpack.c.h.b16 %v695
      %v1049 = vunpack.c.l.b16 %v696
      %v1050 = vunpack.c.h.b16 %v696
      %v1051 = vunpack.c.l.b16 %v697
      %v1052 = vunpack.c.h.b16 %v697
      %v1053 = vunpack.c.l.b16 %v698
      %v1054 = vunpack.c.h.b16 %v698
      %v1055 = vunpack.c.l.b16 %v699
      %v1056 = vunpack.c.h.b16 %v699
      %v1057 = vunpack.c.l.b16 %v700
      %v1058 = vunpack.c.h.b16 %v700
      %v1059 = vunpack.c.l.b16 %v701
      %v1060 = vunpack.c.h.b16 %v701
      %v1061 = vunpack.c.l.b16 %v702
      %v1062 = vunpack.c.h.b16 %v702
      %v1063 = vunpack.c.l.b16 %v703
      %v1064 = vunpack.c.h.b16 %v703
      %v1065 = vunpack.c.l.b16 %v704
      %v1066 = vunpack.c.h.b16 %v704
      %v1067 = vunpack.c.l.b16 %v705
      %v1068 = vunpack.c.h.b16 %v705
      %v1069 = vunpack.c.l.b16 %v706
      %v1070 = vunpack.c.h.b16 %v706
      %v1071 = vunpack.c.l.b16 %v707
      %v1072 = vunpack.c.h.b16 %v707
      %v1073 = vunpack.c.l.b16 %v708
      %v1074 = vunpack.c.h.b16 %v708
      %v1075 = vunpack.c.l.b16 %v709
      %v1076 = vunpack.c.h.b16 %v709
      %v1077 = vunpack.c.l.b16 %v710
      %v1078 = vunpack.c.h.b16 %v710
      %v1079 = vunpack.c.l.b16 %v711
      %v1080 = vunpack.c.h.b16 %v711
      %v1081 = vunpack.c.l.b16 %v712
      %v1082 = vunpack.c.h.b16 %v712
      %v1083 = vunpack.c.l.b16 %v713
      %v1084 = vunpack.c.h.b16 %v713
      %v1085 = vunpack.c.l.b16 %v714
      %v1086 = vunpack.c.h.b16 %v714
      %v1087 = vunpack.c.l.b16 %v715
      %v1088 = vunpack.c.h.b16 %v715
      %v1089 = vunpack.c.l.b16 %v716
      %v1090 = vunpack.c.h.b16 %v716
      %v1091 = vunpack.c.l.b16 %v717
      %v1092 = vunpack.c.h.b16 %v717
      %v1093 = vunpack.c.l.b16 %v718
      %v1094 = vunpack.c.h.b16 %v718
      %v1095 = vunpack.c.l.b16 %v719
      %v1096 = vunpack.c.h.b16 %v719
      %v1097 = vunpack.c.l.b16 %v720
      %v1098 = vunpack.c.h.b16 %v720
      %v1099 = vunpack.c.l.b16 %v721
      %v1100 = vunpack.c.h.b16 %v721
      %v1101 = vunpack.c.l.b16 %v722
      %v1102 = vunpack.c.h.b16 %v722
      %v1103 = vunpack.c.l.b16 %v723
      %v1104 = vunpack.c.h.b16 %v723
      %v1105 = vunpack.c.l.b16 %v724
      %v1106 = vunpack.c.h.b16 %v724
      %v1107 = vunpack.c.l.b16 %v725
      %v1108 = vunpack.c.h.b16 %v725
      %v1109 = vunpack.c.l.b16 %v726
      %v1110 = vunpack.c.h.b16 %v726
      %v1111 = vpack.c.b16 %v863, %v855
      %v1112 = vpack.c.b16 %v864, %v856
      %v1113 = vpack.c.b16 %v865, %v857
      %v1114 = vpack.c.b16 %v866, %v858
      %v1115 = vpack.c.b16 %v867, %v859
      %v1116 = vpack.c.b16 %v868, %v860
      %v1117 = vpack.c.b16 %v869, %v861
      %v1118 = vpack.c.b16 %v870, %v862
      %v1119 = vpack.c.b16 %v879, %v871
      %v1120 = vpack.c.b16 %v880, %v872
      %v1121 = vpack.c.b16 %v881, %v873
      %v1122 = vpack.c.b16 %v882, %v874
      %v1123 = vpack.c.b16 %v883, %v875
      %v1124 = vpack.c.b16 %v884, %v876
      %v1125 = vpack.c.b16 %v885, %v877
      %v1126 = vpack.c.b16 %v886, %v878
      %v1127 = vpack.c.b16 %v895, %v887
      %v1128 = vpack.c.b16 %v896, %v888
      %v1129 = vpack.c.b16 %v897, %v889
      %v1130 = vpack.c.b16 %v898, %v890
      %v1131 = vpack.c.b16 %v899, %v891
      %v1132 = vpack.c.b16 %v900, %v892
      %v1133 = vpack.c.b16 %v901, %v893
      %v1134 = vpack.c.b16 %v902, %v894
      %v1135 = vpack.c.b16 %v911, %v903
      %v1136 = vpack.c.b16 %v912, %v904
      %v1137 = vpack.c.b16 %v913, %v905
      %v1138 = vpack.c.b16 %v914, %v906
      %v1139 = vpack.c.b16 %v915, %v907
      %v1140 = vpack.c.b16 %v916, %v908
      %v1141 = vpack.c.b16 %v917, %v909
      %v1142 = vpack.c.b16 %v918, %v910
      %v1143 = vpack.c.b16 %v927, %v919
      %v1144 = vpack.c.b16 %v928, %v920
      %v1145 = vpack.c.b16 %v929, %v921
      %v1146 = vpack.c.b16 %v930, %v922
      %v1147 = vpack.c.b16 %v931, %v923
      %v1148 = vpack.c.b16 %v932, %v924
      %v1149 = vpack.c.b16 %v933, %v925
      %v1150 = vpack.c.b16 %v934, %v926
      %v1151 = vpack.c.b16 %v943, %v935
      %v1152 = vpack.c.b16 %v944, %v936
      %v1153 = vpack.c.b16 %v945, %v937
      %v1154 = vpack.c.b16 %v946, %v938
      %v1155 = vpack.c.b16 %v947, %v939
      %v1156 = vpack.c.b16 %v948, %v940
      %v1157 = vpack.c.b16 %v949, %v941
      %v1158 = vpack.c.b16 %v950, %v942
      %v1159 = vpack.c.b16 %v959, %v951
      %v1160 = vpack.c.b16 %v960, %v952
      %v1161 = vpack.c.b16 %v961, %v953
      %v1162 = vpack.c.b16 %v962, %v954
      %v1163 = vpack.c.b16 %v963, %v955
      %v1164 = vpack.c.b16 %v964, %v956
      %v1165 = vpack.c.b16 %v965, %v957
      %v1166 = vpack.c.b16 %v966, %v958
      %v1167 = vpack.c.b16 %v975, %v967
      %v1168 = vpack.c.b16 %v976, %v968
      %v1169 = vpack.c.b16 %v977, %v969
      %v1170 = vpack.c.b16 %v978, %v970
      %v1171 = vpack.c.b16 %v979, %v971
      %v1172 = vpack.c.b16 %v980, %v972
      %v1173 = vpack.c.b16 %v981, %v973
      %v1174 = vpack.c.b16 %v982, %v974
      %v1175 = vpack.c.b16 %v991, %v983
      %v1176 = vpack.c.b16 %v992, %v984
      %v1177 = vpack.c.b16 %v993, %v985
      %v1178 = vpack.c.b16 %v994, %v986
      %v1179 = vpack.c.b16 %v995, %v987
      %v1180 = vpack.c.b16 %v996, %v988
      %v1181 = vpack.c.b16 %v997, %v989
      %v1182 = vpack.c.b16 %v998, %v990
      %v1183 = vpack.c.b16 %v1007, %v999
      %v1184 = vpack.c.b16 %v1008, %v1000
      %v1185 = vpack.c.b16 %v1009, %v1001
      %v1186 = vpack.c.b16 %v1010, %v1002
      %v1187 = vpack.c.b16 %v1011, %v1003
      %v1188 = vpack.c.b16 %v1012, %v1004
      %v1189 = vpack.c.b16 %v1013, %v1005
      %v1190 = vpack.c.b16 %v1014, %v1006
      %v1191 = vpack.c.b16 %v1023, %v1015
      %v1192 = vpack.c.b16 %v1024, %v1016
      %v1193 = vpack.c.b16 %v1025, %v1017
      %v1194 = vpack.c.b16 %v1026, %v1018
      %v1195 = vpack.c.b16 %v1027, %v1019
      %v1196 = vpack.c.b16 %v1028, %v1020
      %v1197 = vpack.c.b16 %v1029, %v1021
      %v1198 = vpack.c.b16 %v1030, %v1022
      %v1199 = vpack.c.b16 %v1039, %v1031
      %v1200 = vpack.c.b16 %v1040, %v1032
      %v1201 = vpack.c.b16 %v1041, %v1033
      %v1202 = vpack.c.b16 %v1042, %v1034
      %v1203 = vpack.c.b16 %v1043, %v1035
      %v1204 = vpack.c.b16 %v1044, %v1036
      %v1205 = vpack.c.b16 %v1045, %v1037
      %v1206 = vpack.c.b16 %v1046, %v1038
      %v1207 = vpack.c.b16 %v1055, %v1047
      %v1208 = vpack.c.b16 %v1056, %v1048
      %v1209 = vpack.c.b16 %v1057, %v1049
      %v1210 = vpack.c.b16 %v1058, %v1050
      %v1211 = vpack.c.b16 %v1059, %v1051
      %v1212 = vpack.c.b16 %v1060, %v1052
      %v1213 = vpack.c.b16 %v1061, %v1053
      %v1214 = vpack.c.b16 %v1062, %v1054
      %v1215 = vpack.c.b16 %v1071, %v1063
      %v1216 = vpack.c.b16 %v1072, %v1064
      %v1217 = vpack.c.b16 %v1073, %v1065
      %v1218 = vpack.c.b16 %v1074, %v1066
      %v1219 = vpack.c.b16 %v1075, %v1067
      %v1220 = vpack.c.b16 %v1076, %v1068
      %v1221 = vpack.c.b16 %v1077, %v1069
      %v1222 = vpack.c.b16 %v1078, %v1070
      %v1223 = vpack.c.b16 %v1087, %v1079
      %v1224 = vpack.c.b16 %v1088, %v1080
      %v1225 = vpack.c.b16 %v1089, %v1081
      %v1226 = vpack.c.b16 %v1090, %v1082
      %v1227 = vpack.c.b16 %v1091, %v1083
      %v1228 = vpack.c.b16 %v1092, %v1084
      %v1229 = vpack.c.b16 %v1093, %v1085
      %v1230 = vpack.c.b16 %v1094, %v1086
      %v1231 = vpack.c.b16 %v1103, %v1095
      %v1232 = vpack.c.b16 %v1104, %v1096
      %v1233 = vpack.c.b16 %v1105, %v1097
      %v1234 = vpack.c.b16 %v1106, %v1098
      %v1235 = vpack.c.b16 %v1107, %v1099
      %v1236 = vpack.c.b16 %v1108, %v1100
      %v1237 = vpack.c.b16 %v1109, %v1101
      %v1238 = vpack.c.b16 %v1110, %v1102
      %1367 = vmatprep.subr.bf16.mxu0 %v1112
      %1368 = vmatpush1.bf16.msra.mxu0 %v1111
      %1369 = vmatprep.subr.bf16.mxu0 %v1120
      %1370 = vmatpush1.bf16.msra.mxu0 %v1119
      %1371 = vmatprep.subr.bf16.mxu0 %v1128
      %1372 = vmatpush1.bf16.msra.mxu0 %v1127
      %1373 = vmatprep.subr.bf16.mxu0 %v1136
      %1374 = vmatpush1.bf16.msra.mxu0 %v1135
      %1375 = vmatprep.subr.bf16.mxu0 %v1144
      %1376 = vmatpush1.bf16.msra.mxu0 %v1143
      %1377 = vmatprep.subr.bf16.mxu0 %v1152
      %1378 = vmatpush1.bf16.msra.mxu0 %v1151
      %1379 = vmatprep.subr.bf16.mxu0 %v1160
      %1380 = vmatpush1.bf16.msra.mxu0 %v1159
      %1381 = vmatprep.subr.bf16.mxu0 %v1168
      %1382 = vmatpush1.bf16.msra.mxu0 %v1167
      %1383 = vmatprep.subr.bf16.mxu0 %v1176
      %1384 = vmatpush1.bf16.msra.mxu0 %v1175
      %1385 = vmatprep.subr.bf16.mxu0 %v1184
      %1386 = vmatpush1.bf16.msra.mxu0 %v1183
      %1387 = vmatprep.subr.bf16.mxu0 %v1192
      %1388 = vmatpush1.bf16.msra.mxu0 %v1191
      %1389 = vmatprep.subr.bf16.mxu0 %v1200
      %1390 = vmatpush1.bf16.msra.mxu0 %v1199
      %1391 = vmatprep.subr.bf16.mxu0 %v1208
      %1392 = vmatpush1.bf16.msra.mxu0 %v1207
      %1393 = vmatprep.subr.bf16.mxu0 %v1216
      %1394 = vmatpush1.bf16.msra.mxu0 %v1215
      %1395 = vmatprep.subr.bf16.mxu0 %v1224
      %1396 = vmatpush1.bf16.msra.mxu0 %v1223
      %1397 = vmatprep.subr.bf16.mxu0 %v1232
      %1398 = vmatpush1.bf16.msra.mxu0 %v1231
      %1399 = vmatprep.mubr.bf16.mxu0 %v597
      %1400 = vmatmul.mubr.bf16.gmra.mrb[0].mxu0 %v596
      %v1401 = vpop.f32.mrb[0].mxu0
      %v1402 = vadd.f32 0.0, %v1401
      %v1403 = vpop.f32.mrb[0].mxu0
      %v1404 = vadd.f32 0.0, %v1403
      %v1405 = vpop.f32.mrb[0].mxu0
      %v1406 = vpop.f32.mrb[0].mxu0
      %1407 = vdwg.mxu0
      %1408 = vmatprep.subr.bf16.mxu0 %v1114
      %1409 = vmatpush1.bf16.msra.mxu0 %v1113
      %1410 = vmatprep.subr.bf16.mxu0 %v1122
      %1411 = vmatpush1.bf16.msra.mxu0 %v1121
      %1412 = vmatprep.subr.bf16.mxu0 %v1130
      %1413 = vmatpush1.bf16.msra.mxu0 %v1129
      %1414 = vmatprep.subr.bf16.mxu0 %v1138
      %1415 = vmatpush1.bf16.msra.mxu0 %v1137
      %1416 = vmatprep.subr.bf16.mxu0 %v1146
      %1417 = vmatpush1.bf16.msra.mxu0 %v1145
      %1418 = vmatprep.subr.bf16.mxu0 %v1154
      %1419 = vmatpush1.bf16.msra.mxu0 %v1153
      %1420 = vmatprep.subr.bf16.mxu0 %v1162
      %1421 = vmatpush1.bf16.msra.mxu0 %v1161
      %1422 = vmatprep.subr.bf16.mxu0 %v1170
      %1423 = vmatpush1.bf16.msra.mxu0 %v1169
      %1424 = vmatprep.subr.bf16.mxu0 %v1178
      %1425 = vmatpush1.bf16.msra.mxu0 %v1177
      %1426 = vmatprep.subr.bf16.mxu0 %v1186
      %1427 = vmatpush1.bf16.msra.mxu0 %v1185
      %1428 = vmatprep.subr.bf16.mxu0 %v1194
      %1429 = vmatpush1.bf16.msra.mxu0 %v1193
      %1430 = vmatprep.subr.bf16.mxu0 %v1202
      %1431 = vmatpush1.bf16.msra.mxu0 %v1201
      %1432 = vmatprep.subr.bf16.mxu0 %v1210
      %1433 = vmatpush1.bf16.msra.mxu0 %v1209
      %1434 = vmatprep.subr.bf16.mxu0 %v1218
      %1435 = vmatpush1.bf16.msra.mxu0 %v1217
      %1436 = vmatprep.subr.bf16.mxu0 %v1226
      %1437 = vmatpush1.bf16.msra.mxu0 %v1225
      %1438 = vmatprep.subr.bf16.mxu0 %v1234
      %1439 = vmatpush1.bf16.msra.mxu0 %v1233
      %1440 = vmatprep.mubr.bf16.mxu0 %v597
      %1441 = vmatmul.mubr.bf16.gmra.mrb[0].mxu0 %v596
      %v1442 = vpop.f32.mrb[0].mxu0
      %v1443 = vadd.f32 0.0, %v1442
      %v1444 = vpop.f32.mrb[0].mxu0
      %v1445 = vadd.f32 0.0, %v1444
      %v1446 = vpop.f32.mrb[0].mxu0
      %v1447 = vpop.f32.mrb[0].mxu0
      %1448 = vdwg.mxu0
      %1449 = vmatprep.subr.bf16.mxu0 %v1116
      %1450 = vmatpush1.bf16.msra.mxu0 %v1115
      %1451 = vmatprep.subr.bf16.mxu0 %v1124
      %1452 = vmatpush1.bf16.msra.mxu0 %v1123
      %1453 = vmatprep.subr.bf16.mxu0 %v1132
      %1454 = vmatpush1.bf16.msra.mxu0 %v1131
      %1455 = vmatprep.subr.bf16.mxu0 %v1140
      %1456 = vmatpush1.bf16.msra.mxu0 %v1139
      %1457 = vmatprep.subr.bf16.mxu0 %v1148
      %1458 = vmatpush1.bf16.msra.mxu0 %v1147
      %1459 = vmatprep.subr.bf16.mxu0 %v1156
      %1460 = vmatpush1.bf16.msra.mxu0 %v1155
      %1461 = vmatprep.subr.bf16.mxu0 %v1164
      %1462 = vmatpush1.bf16.msra.mxu0 %v1163
      %1463 = vmatprep.subr.bf16.mxu0 %v1172
      %1464 = vmatpush1.bf16.msra.mxu0 %v1171
      %1465 = vmatprep.subr.bf16.mxu0 %v1180
      %1466 = vmatpush1.bf16.msra.mxu0 %v1179
      %1467 = vmatprep.subr.bf16.mxu0 %v1188
      %1468 = vmatpush1.bf16.msra.mxu0 %v1187
      %1469 = vmatprep.subr.bf16.mxu0 %v1196
      %1470 = vmatpush1.bf16.msra.mxu0 %v1195
      %1471 = vmatprep.subr.bf16.mxu0 %v1204
      %1472 = vmatpush1.bf16.msra.mxu0 %v1203
      %1473 = vmatprep.subr.bf16.mxu0 %v1212
      %1474 = vmatpush1.bf16.msra.mxu0 %v1211
      %1475 = vmatprep.subr.bf16.mxu0 %v1220
      %1476 = vmatpush1.bf16.msra.mxu0 %v1219
      %1477 = vmatprep.subr.bf16.mxu0 %v1228
      %1478 = vmatpush1.bf16.msra.mxu0 %v1227
      %1479 = vmatprep.subr.bf16.mxu0 %v1236
      %1480 = vmatpush1.bf16.msra.mxu0 %v1235
      %1481 = vmatprep.mubr.bf16.mxu0 %v597
      %1482 = vmatmul.mubr.bf16.gmra.mrb[0].mxu0 %v596
      %v1483 = vpop.f32.mrb[0].mxu0
      %v1484 = vadd.f32 0.0, %v1483
      %v1485 = vpop.f32.mrb[0].mxu0
      %v1486 = vadd.f32 0.0, %v1485
      %v1487 = vpop.f32.mrb[0].mxu0
      %v1488 = vpop.f32.mrb[0].mxu0
      %1489 = vdwg.mxu0
      %1490 = vmatprep.subr.bf16.mxu0 %v1118
      %1491 = vmatpush1.bf16.msra.mxu0 %v1117
      %1492 = vmatprep.subr.bf16.mxu0 %v1126
      %1493 = vmatpush1.bf16.msra.mxu0 %v1125
      %1494 = vmatprep.subr.bf16.mxu0 %v1134
      %1495 = vmatpush1.bf16.msra.mxu0 %v1133
      %1496 = vmatprep.subr.bf16.mxu0 %v1142
      %1497 = vmatpush1.bf16.msra.mxu0 %v1141
      %1498 = vmatprep.subr.bf16.mxu0 %v1150
      %1499 = vmatpush1.bf16.msra.mxu0 %v1149
      %1500 = vmatprep.subr.bf16.mxu0 %v1158
      %1501 = vmatpush1.bf16.msra.mxu0 %v1157
      %1502 = vmatprep.subr.bf16.mxu0 %v1166
      %1503 = vmatpush1.bf16.msra.mxu0 %v1165
      %1504 = vmatprep.subr.bf16.mxu0 %v1174
      %1505 = vmatpush1.bf16.msra.mxu0 %v1173
      %1506 = vmatprep.subr.bf16.mxu0 %v1182
      %1507 = vmatpush1.bf16.msra.mxu0 %v1181
      %1508 = vmatprep.subr.bf16.mxu0 %v1190
      %1509 = vmatpush1.bf16.msra.mxu0 %v1189
      %1510 = vmatprep.subr.bf16.mxu0 %v1198
      %1511 = vmatpush1.bf16.msra.mxu0 %v1197
      %1512 = vmatprep.subr.bf16.mxu0 %v1206
      %1513 = vmatpush1.bf16.msra.mxu0 %v1205
      %1514 = vmatprep.subr.bf16.mxu0 %v1214
      %1515 = vmatpush1.bf16.msra.mxu0 %v1213
      %1516 = vmatprep.subr.bf16.mxu0 %v1222
      %1517 = vmatpush1.bf16.msra.mxu0 %v1221
      %1518 = vmatprep.subr.bf16.mxu0 %v1230
      %1519 = vmatpush1.bf16.msra.mxu0 %v1229
      %1520 = vmatprep.subr.bf16.mxu0 %v1238
      %1521 = vmatpush1.bf16.msra.mxu0 %v1237
      %1522 = vmatprep.mubr.bf16.mxu0 %v597
      %1523 = vmatmul.mubr.bf16.gmra.mrb[0].mxu0 %v596
      %v1524 = vpop.f32.mrb[0].mxu0
      %v1525 = vadd.f32 0.0, %v1524
      %v1526 = vpop.f32.mrb[0].mxu0
      %v1527 = vadd.f32 0.0, %v1526
      %v1528 = vpop.f32.mrb[0].mxu0
      %v1529 = vpop.f32.mrb[0].mxu0
      %1530 = vdwg.mxu0
      %v1659 = vunpack.c.l.b16 %v422
      %v1660 = vunpack.c.h.b16 %v422
      %v1661 = vunpack.c.l.b16 %v423
      %v1662 = vunpack.c.h.b16 %v423
      %v1663 = vunpack.c.l.b16 %v424
      %v1664 = vunpack.c.h.b16 %v424
      %v1665 = vunpack.c.l.b16 %v425
      %v1666 = vunpack.c.h.b16 %v425
      %v1667 = vunpack.c.l.b16 %v426
      %v1668 = vunpack.c.h.b16 %v426
      %v1669 = vunpack.c.l.b16 %v427
      %v1670 = vunpack.c.h.b16 %v427
      %v1671 = vunpack.c.l.b16 %v428
      %v1672 = vunpack.c.h.b16 %v428
      %v1673 = vunpack.c.l.b16 %v429
      %v1674 = vunpack.c.h.b16 %v429
      %v1675 = vunpack.c.l.b16 %v430
      %v1676 = vunpack.c.h.b16 %v430
      %v1677 = vunpack.c.l.b16 %v431
      %v1678 = vunpack.c.h.b16 %v431
      %v1679 = vunpack.c.l.b16 %v432
      %v1680 = vunpack.c.h.b16 %v432
      %v1681 = vunpack.c.l.b16 %v433
      %v1682 = vunpack.c.h.b16 %v433
      %v1683 = vunpack.c.l.b16 %v434
      %v1684 = vunpack.c.h.b16 %v434
      %v1685 = vunpack.c.l.b16 %v435
      %v1686 = vunpack.c.h.b16 %v435
      %v1687 = vunpack.c.l.b16 %v436
      %v1688 = vunpack.c.h.b16 %v436
      %v1689 = vunpack.c.l.b16 %v437
      %v1690 = vunpack.c.h.b16 %v437
      %v1691 = vunpack.c.l.b16 %v438
      %v1692 = vunpack.c.h.b16 %v438
      %v1693 = vunpack.c.l.b16 %v439
      %v1694 = vunpack.c.h.b16 %v439
      %v1695 = vunpack.c.l.b16 %v440
      %v1696 = vunpack.c.h.b16 %v440
      %v1697 = vunpack.c.l.b16 %v441
      %v1698 = vunpack.c.h.b16 %v441
      %v1699 = vunpack.c.l.b16 %v442
      %v1700 = vunpack.c.h.b16 %v442
      %v1701 = vunpack.c.l.b16 %v443
      %v1702 = vunpack.c.h.b16 %v443
      %v1703 = vunpack.c.l.b16 %v444
      %v1704 = vunpack.c.h.b16 %v444
      %v1705 = vunpack.c.l.b16 %v445
      %v1706 = vunpack.c.h.b16 %v445
      %v1707 = vunpack.c.l.b16 %v446
      %v1708 = vunpack.c.h.b16 %v446
      %v1709 = vunpack.c.l.b16 %v447
      %v1710 = vunpack.c.h.b16 %v447
      %v1711 = vunpack.c.l.b16 %v448
      %v1712 = vunpack.c.h.b16 %v448
      %v1713 = vunpack.c.l.b16 %v449
      %v1714 = vunpack.c.h.b16 %v449
      %v1715 = vunpack.c.l.b16 %v450
      %v1716 = vunpack.c.h.b16 %v450
      %v1717 = vunpack.c.l.b16 %v451
      %v1718 = vunpack.c.h.b16 %v451
      %v1719 = vunpack.c.l.b16 %v452
      %v1720 = vunpack.c.h.b16 %v452
      %v1721 = vunpack.c.l.b16 %v453
      %v1722 = vunpack.c.h.b16 %v453
      %v1723 = vunpack.c.l.b16 %v454
      %v1724 = vunpack.c.h.b16 %v454
      %v1725 = vunpack.c.l.b16 %v455
      %v1726 = vunpack.c.h.b16 %v455
      %v1727 = vunpack.c.l.b16 %v456
      %v1728 = vunpack.c.h.b16 %v456
      %v1729 = vunpack.c.l.b16 %v457
      %v1730 = vunpack.c.h.b16 %v457
      %v1731 = vunpack.c.l.b16 %v458
      %v1732 = vunpack.c.h.b16 %v458
      %v1733 = vunpack.c.l.b16 %v459
      %v1734 = vunpack.c.h.b16 %v459
      %v1735 = vunpack.c.l.b16 %v460
      %v1736 = vunpack.c.h.b16 %v460
      %v1737 = vunpack.c.l.b16 %v461
      %v1738 = vunpack.c.h.b16 %v461
      %v1739 = vunpack.c.l.b16 %v462
      %v1740 = vunpack.c.h.b16 %v462
      %v1741 = vunpack.c.l.b16 %v463
      %v1742 = vunpack.c.h.b16 %v463
      %v1743 = vunpack.c.l.b16 %v464
      %v1744 = vunpack.c.h.b16 %v464
      %v1745 = vunpack.c.l.b16 %v465
      %v1746 = vunpack.c.h.b16 %v465
      %v1747 = vunpack.c.l.b16 %v466
      %v1748 = vunpack.c.h.b16 %v466
      %v1749 = vunpack.c.l.b16 %v467
      %v1750 = vunpack.c.h.b16 %v467
      %v1751 = vunpack.c.l.b16 %v468
      %v1752 = vunpack.c.h.b16 %v468
      %v1753 = vunpack.c.l.b16 %v469
      %v1754 = vunpack.c.h.b16 %v469
      %v1755 = vunpack.c.l.b16 %v470
      %v1756 = vunpack.c.h.b16 %v470
      %v1757 = vunpack.c.l.b16 %v471
      %v1758 = vunpack.c.h.b16 %v471
      %v1759 = vunpack.c.l.b16 %v472
      %v1760 = vunpack.c.h.b16 %v472
      %v1761 = vunpack.c.l.b16 %v473
      %v1762 = vunpack.c.h.b16 %v473
      %v1763 = vunpack.c.l.b16 %v474
      %v1764 = vunpack.c.h.b16 %v474
      %v1765 = vunpack.c.l.b16 %v475
      %v1766 = vunpack.c.h.b16 %v475
      %v1767 = vunpack.c.l.b16 %v476
      %v1768 = vunpack.c.h.b16 %v476
      %v1769 = vunpack.c.l.b16 %v477
      %v1770 = vunpack.c.h.b16 %v477
      %v1771 = vunpack.c.l.b16 %v478
      %v1772 = vunpack.c.h.b16 %v478
      %v1773 = vunpack.c.l.b16 %v479
      %v1774 = vunpack.c.h.b16 %v479
      %v1775 = vunpack.c.l.b16 %v480
      %v1776 = vunpack.c.h.b16 %v480
      %v1777 = vunpack.c.l.b16 %v481
      %v1778 = vunpack.c.h.b16 %v481
      %v1779 = vunpack.c.l.b16 %v482
      %v1780 = vunpack.c.h.b16 %v482
      %v1781 = vunpack.c.l.b16 %v483
      %v1782 = vunpack.c.h.b16 %v483
      %v1783 = vunpack.c.l.b16 %v484
      %v1784 = vunpack.c.h.b16 %v484
      %v1785 = vunpack.c.l.b16 %v485
      %v1786 = vunpack.c.h.b16 %v485
      %v1787 = vunpack.c.l.b16 %v486
      %v1788 = vunpack.c.h.b16 %v486
      %v1789 = vunpack.c.l.b16 %v487
      %v1790 = vunpack.c.h.b16 %v487
      %v1791 = vunpack.c.l.b16 %v488
      %v1792 = vunpack.c.h.b16 %v488
      %v1793 = vunpack.c.l.b16 %v489
      %v1794 = vunpack.c.h.b16 %v489
      %v1795 = vunpack.c.l.b16 %v490
      %v1796 = vunpack.c.h.b16 %v490
      %v1797 = vunpack.c.l.b16 %v491
      %v1798 = vunpack.c.h.b16 %v491
      %v1799 = vunpack.c.l.b16 %v492
      %v1800 = vunpack.c.h.b16 %v492
      %v1801 = vunpack.c.l.b16 %v493
      %v1802 = vunpack.c.h.b16 %v493
      %v1803 = vunpack.c.l.b16 %v494
      %v1804 = vunpack.c.h.b16 %v494
      %v1805 = vunpack.c.l.b16 %v495
      %v1806 = vunpack.c.h.b16 %v495
      %v1807 = vunpack.c.l.b16 %v496
      %v1808 = vunpack.c.h.b16 %v496
      %v1809 = vunpack.c.l.b16 %v497
      %v1810 = vunpack.c.h.b16 %v497
      %v1811 = vunpack.c.l.b16 %v498
      %v1812 = vunpack.c.h.b16 %v498
      %v1813 = vunpack.c.l.b16 %v499
      %v1814 = vunpack.c.h.b16 %v499
      %v1815 = vunpack.c.l.b16 %v500
      %v1816 = vunpack.c.h.b16 %v500
      %v1817 = vunpack.c.l.b16 %v501
      %v1818 = vunpack.c.h.b16 %v501
      %v1819 = vunpack.c.l.b16 %v502
      %v1820 = vunpack.c.h.b16 %v502
      %v1821 = vunpack.c.l.b16 %v503
      %v1822 = vunpack.c.h.b16 %v503
      %v1823 = vunpack.c.l.b16 %v504
      %v1824 = vunpack.c.h.b16 %v504
      %v1825 = vunpack.c.l.b16 %v505
      %v1826 = vunpack.c.h.b16 %v505
      %v1827 = vunpack.c.l.b16 %v506
      %v1828 = vunpack.c.h.b16 %v506
      %v1829 = vunpack.c.l.b16 %v507
      %v1830 = vunpack.c.h.b16 %v507
      %v1831 = vunpack.c.l.b16 %v508
      %v1832 = vunpack.c.h.b16 %v508
      %v1833 = vunpack.c.l.b16 %v509
      %v1834 = vunpack.c.h.b16 %v509
      %v1835 = vunpack.c.l.b16 %v510
      %v1836 = vunpack.c.h.b16 %v510
      %v1837 = vunpack.c.l.b16 %v511
      %v1838 = vunpack.c.h.b16 %v511
      %v1839 = vunpack.c.l.b16 %v512
      %v1840 = vunpack.c.h.b16 %v512
      %v1841 = vunpack.c.l.b16 %v513
      %v1842 = vunpack.c.h.b16 %v513
      %v1843 = vunpack.c.l.b16 %v514
      %v1844 = vunpack.c.h.b16 %v514
      %v1845 = vunpack.c.l.b16 %v515
      %v1846 = vunpack.c.h.b16 %v515
      %v1847 = vunpack.c.l.b16 %v516
      %v1848 = vunpack.c.h.b16 %v516
      %v1849 = vunpack.c.l.b16 %v517
      %v1850 = vunpack.c.h.b16 %v517
      %v1851 = vunpack.c.l.b16 %v518
      %v1852 = vunpack.c.h.b16 %v518
      %v1853 = vunpack.c.l.b16 %v519
      %v1854 = vunpack.c.h.b16 %v519
      %v1855 = vunpack.c.l.b16 %v520
      %v1856 = vunpack.c.h.b16 %v520
      %v1857 = vunpack.c.l.b16 %v521
      %v1858 = vunpack.c.h.b16 %v521
      %v1859 = vunpack.c.l.b16 %v522
      %v1860 = vunpack.c.h.b16 %v522
      %v1861 = vunpack.c.l.b16 %v523
      %v1862 = vunpack.c.h.b16 %v523
      %v1863 = vunpack.c.l.b16 %v524
      %v1864 = vunpack.c.h.b16 %v524
      %v1865 = vunpack.c.l.b16 %v525
      %v1866 = vunpack.c.h.b16 %v525
      %v1867 = vunpack.c.l.b16 %v526
      %v1868 = vunpack.c.h.b16 %v526
      %v1869 = vunpack.c.l.b16 %v527
      %v1870 = vunpack.c.h.b16 %v527
      %v1871 = vunpack.c.l.b16 %v528
      %v1872 = vunpack.c.h.b16 %v528
      %v1873 = vunpack.c.l.b16 %v529
      %v1874 = vunpack.c.h.b16 %v529
      %v1875 = vunpack.c.l.b16 %v530
      %v1876 = vunpack.c.h.b16 %v530
      %v1877 = vunpack.c.l.b16 %v531
      %v1878 = vunpack.c.h.b16 %v531
      %v1879 = vunpack.c.l.b16 %v532
      %v1880 = vunpack.c.h.b16 %v532
      %v1881 = vunpack.c.l.b16 %v533
      %v1882 = vunpack.c.h.b16 %v533
      %v1883 = vunpack.c.l.b16 %v534
      %v1884 = vunpack.c.h.b16 %v534
      %v1885 = vunpack.c.l.b16 %v535
      %v1886 = vunpack.c.h.b16 %v535
      %v1887 = vunpack.c.l.b16 %v536
      %v1888 = vunpack.c.h.b16 %v536
      %v1889 = vunpack.c.l.b16 %v537
      %v1890 = vunpack.c.h.b16 %v537
      %v1891 = vunpack.c.l.b16 %v538
      %v1892 = vunpack.c.h.b16 %v538
      %v1893 = vunpack.c.l.b16 %v539
      %v1894 = vunpack.c.h.b16 %v539
      %v1895 = vunpack.c.l.b16 %v540
      %v1896 = vunpack.c.h.b16 %v540
      %v1897 = vunpack.c.l.b16 %v541
      %v1898 = vunpack.c.h.b16 %v541
      %v1899 = vunpack.c.l.b16 %v542
      %v1900 = vunpack.c.h.b16 %v542
      %v1901 = vunpack.c.l.b16 %v543
      %v1902 = vunpack.c.h.b16 %v543
      %v1903 = vunpack.c.l.b16 %v544
      %v1904 = vunpack.c.h.b16 %v544
      %v1905 = vunpack.c.l.b16 %v545
      %v1906 = vunpack.c.h.b16 %v545
      %v1907 = vunpack.c.l.b16 %v546
      %v1908 = vunpack.c.h.b16 %v546
      %v1909 = vunpack.c.l.b16 %v547
      %v1910 = vunpack.c.h.b16 %v547
      %v1911 = vunpack.c.l.b16 %v548
      %v1912 = vunpack.c.h.b16 %v548
      %v1913 = vunpack.c.l.b16 %v549
      %v1914 = vunpack.c.h.b16 %v549
      %v1915 = vpack.c.b16 %v1667, %v1659
      %v1916 = vpack.c.b16 %v1668, %v1660
      %v1917 = vpack.c.b16 %v1669, %v1661
      %v1918 = vpack.c.b16 %v1670, %v1662
      %v1919 = vpack.c.b16 %v1671, %v1663
      %v1920 = vpack.c.b16 %v1672, %v1664
      %v1921 = vpack.c.b16 %v1673, %v1665
      %v1922 = vpack.c.b16 %v1674, %v1666
      %v1923 = vpack.c.b16 %v1683, %v1675
      %v1924 = vpack.c.b16 %v1684, %v1676
      %v1925 = vpack.c.b16 %v1685, %v1677
      %v1926 = vpack.c.b16 %v1686, %v1678
      %v1927 = vpack.c.b16 %v1687, %v1679
      %v1928 = vpack.c.b16 %v1688, %v1680
      %v1929 = vpack.c.b16 %v1689, %v1681
      %v1930 = vpack.c.b16 %v1690, %v1682
      %v1931 = vpack.c.b16 %v1699, %v1691
      %v1932 = vpack.c.b16 %v1700, %v1692
      %v1933 = vpack.c.b16 %v1701, %v1693
      %v1934 = vpack.c.b16 %v1702, %v1694
      %v1935 = vpack.c.b16 %v1703, %v1695
      %v1936 = vpack.c.b16 %v1704, %v1696
      %v1937 = vpack.c.b16 %v1705, %v1697
      %v1938 = vpack.c.b16 %v1706, %v1698
      %v1939 = vpack.c.b16 %v1715, %v1707
      %v1940 = vpack.c.b16 %v1716, %v1708
      %v1941 = vpack.c.b16 %v1717, %v1709
      %v1942 = vpack.c.b16 %v1718, %v1710
      %v1943 = vpack.c.b16 %v1719, %v1711
      %v1944 = vpack.c.b16 %v1720, %v1712
      %v1945 = vpack.c.b16 %v1721, %v1713
      %v1946 = vpack.c.b16 %v1722, %v1714
      %v1947 = vpack.c.b16 %v1731, %v1723
      %v1948 = vpack.c.b16 %v1732, %v1724
      %v1949 = vpack.c.b16 %v1733, %v1725
      %v1950 = vpack.c.b16 %v1734, %v1726
      %v1951 = vpack.c.b16 %v1735, %v1727
      %v1952 = vpack.c.b16 %v1736, %v1728
      %v1953 = vpack.c.b16 %v1737, %v1729
      %v1954 = vpack.c.b16 %v1738, %v1730
      %v1955 = vpack.c.b16 %v1747, %v1739
      %v1956 = vpack.c.b16 %v1748, %v1740
      %v1957 = vpack.c.b16 %v1749, %v1741
      %v1958 = vpack.c.b16 %v1750, %v1742
      %v1959 = vpack.c.b16 %v1751, %v1743
      %v1960 = vpack.c.b16 %v1752, %v1744
      %v1961 = vpack.c.b16 %v1753, %v1745
      %v1962 = vpack.c.b16 %v1754, %v1746
      %v1963 = vpack.c.b16 %v1763, %v1755
      %v1964 = vpack.c.b16 %v1764, %v1756
      %v1965 = vpack.c.b16 %v1765, %v1757
      %v1966 = vpack.c.b16 %v1766, %v1758
      %v1967 = vpack.c.b16 %v1767, %v1759
      %v1968 = vpack.c.b16 %v1768, %v1760
      %v1969 = vpack.c.b16 %v1769, %v1761
      %v1970 = vpack.c.b16 %v1770, %v1762
      %v1971 = vpack.c.b16 %v1779, %v1771
      %v1972 = vpack.c.b16 %v1780, %v1772
      %v1973 = vpack.c.b16 %v1781, %v1773
      %v1974 = vpack.c.b16 %v1782, %v1774
      %v1975 = vpack.c.b16 %v1783, %v1775
      %v1976 = vpack.c.b16 %v1784, %v1776
      %v1977 = vpack.c.b16 %v1785, %v1777
      %v1978 = vpack.c.b16 %v1786, %v1778
      %v1979 = vpack.c.b16 %v1795, %v1787
      %v1980 = vpack.c.b16 %v1796, %v1788
      %v1981 = vpack.c.b16 %v1797, %v1789
      %v1982 = vpack.c.b16 %v1798, %v1790
      %v1983 = vpack.c.b16 %v1799, %v1791
      %v1984 = vpack.c.b16 %v1800, %v1792
      %v1985 = vpack.c.b16 %v1801, %v1793
      %v1986 = vpack.c.b16 %v1802, %v1794
      %v1987 = vpack.c.b16 %v1811, %v1803
      %v1988 = vpack.c.b16 %v1812, %v1804
      %v1989 = vpack.c.b16 %v1813, %v1805
      %v1990 = vpack.c.b16 %v1814, %v1806
      %v1991 = vpack.c.b16 %v1815, %v1807
      %v1992 = vpack.c.b16 %v1816, %v1808
      %v1993 = vpack.c.b16 %v1817, %v1809
      %v1994 = vpack.c.b16 %v1818, %v1810
      %v1995 = vpack.c.b16 %v1827, %v1819
      %v1996 = vpack.c.b16 %v1828, %v1820
      %v1997 = vpack.c.b16 %v1829, %v1821
      %v1998 = vpack.c.b16 %v1830, %v1822
      %v1999 = vpack.c.b16 %v1831, %v1823
      %v2000 = vpack.c.b16 %v1832, %v1824
      %v2001 = vpack.c.b16 %v1833, %v1825
      %v2002 = vpack.c.b16 %v1834, %v1826
      %v2003 = vpack.c.b16 %v1843, %v1835
      %v2004 = vpack.c.b16 %v1844, %v1836
      %v2005 = vpack.c.b16 %v1845, %v1837
      %v2006 = vpack.c.b16 %v1846, %v1838
      %v2007 = vpack.c.b16 %v1847, %v1839
      %v2008 = vpack.c.b16 %v1848, %v1840
      %v2009 = vpack.c.b16 %v1849, %v1841
      %v2010 = vpack.c.b16 %v1850, %v1842
      %v2011 = vpack.c.b16 %v1859, %v1851
      %v2012 = vpack.c.b16 %v1860, %v1852
      %v2013 = vpack.c.b16 %v1861, %v1853
      %v2014 = vpack.c.b16 %v1862, %v1854
      %v2015 = vpack.c.b16 %v1863, %v1855
      %v2016 = vpack.c.b16 %v1864, %v1856
      %v2017 = vpack.c.b16 %v1865, %v1857
      %v2018 = vpack.c.b16 %v1866, %v1858
      %v2019 = vpack.c.b16 %v1875, %v1867
      %v2020 = vpack.c.b16 %v1876, %v1868
      %v2021 = vpack.c.b16 %v1877, %v1869
      %v2022 = vpack.c.b16 %v1878, %v1870
      %v2023 = vpack.c.b16 %v1879, %v1871
      %v2024 = vpack.c.b16 %v1880, %v1872
      %v2025 = vpack.c.b16 %v1881, %v1873
      %v2026 = vpack.c.b16 %v1882, %v1874
      %v2027 = vpack.c.b16 %v1891, %v1883
      %v2028 = vpack.c.b16 %v1892, %v1884
      %v2029 = vpack.c.b16 %v1893, %v1885
      %v2030 = vpack.c.b16 %v1894, %v1886
      %v2031 = vpack.c.b16 %v1895, %v1887
      %v2032 = vpack.c.b16 %v1896, %v1888
      %v2033 = vpack.c.b16 %v1897, %v1889
      %v2034 = vpack.c.b16 %v1898, %v1890
      %v2035 = vpack.c.b16 %v1907, %v1899
      %v2036 = vpack.c.b16 %v1908, %v1900
      %v2037 = vpack.c.b16 %v1909, %v1901
      %v2038 = vpack.c.b16 %v1910, %v1902
      %v2039 = vpack.c.b16 %v1911, %v1903
      %v2040 = vpack.c.b16 %v1912, %v1904
      %v2041 = vpack.c.b16 %v1913, %v1905
      %v2042 = vpack.c.b16 %v1914, %v1906
      %2171 = vmatprep.subr.bf16.mxu0 %v1916
      %2172 = vmatpush1.bf16.msra.mxu0 %v1915
      %2173 = vmatprep.subr.bf16.mxu0 %v1924
      %2174 = vmatpush1.bf16.msra.mxu0 %v1923
      %2175 = vmatprep.subr.bf16.mxu0 %v1932
      %2176 = vmatpush1.bf16.msra.mxu0 %v1931
      %2177 = vmatprep.subr.bf16.mxu0 %v1940
      %2178 = vmatpush1.bf16.msra.mxu0 %v1939
      %2179 = vmatprep.subr.bf16.mxu0 %v1948
      %2180 = vmatpush1.bf16.msra.mxu0 %v1947
      %2181 = vmatprep.subr.bf16.mxu0 %v1956
      %2182 = vmatpush1.bf16.msra.mxu0 %v1955
      %2183 = vmatprep.subr.bf16.mxu0 %v1964
      %2184 = vmatpush1.bf16.msra.mxu0 %v1963
      %2185 = vmatprep.subr.bf16.mxu0 %v1972
      %2186 = vmatpush1.bf16.msra.mxu0 %v1971
      %2187 = vmatprep.subr.bf16.mxu0 %v1980
      %2188 = vmatpush1.bf16.msra.mxu0 %v1979
      %2189 = vmatprep.subr.bf16.mxu0 %v1988
      %2190 = vmatpush1.bf16.msra.mxu0 %v1987
      %2191 = vmatprep.subr.bf16.mxu0 %v1996
      %2192 = vmatpush1.bf16.msra.mxu0 %v1995
      %2193 = vmatprep.subr.bf16.mxu0 %v2004
      %2194 = vmatpush1.bf16.msra.mxu0 %v2003
      %2195 = vmatprep.subr.bf16.mxu0 %v2012
      %2196 = vmatpush1.bf16.msra.mxu0 %v2011
      %2197 = vmatprep.subr.bf16.mxu0 %v2020
      %2198 = vmatpush1.bf16.msra.mxu0 %v2019
      %2199 = vmatprep.subr.bf16.mxu0 %v2028
      %2200 = vmatpush1.bf16.msra.mxu0 %v2027
      %2201 = vmatprep.subr.bf16.mxu0 %v2036
      %2202 = vmatpush1.bf16.msra.mxu0 %v2035
      %2203 = vmatprep.mubr.bf16.mxu0 %v421
      %2204 = vmatmul.mubr.bf16.gmra.mrb[0].mxu0 %v420
      %v2205 = vpop.f32.mrb[0].mxu0
      %v2206 = vadd.f32 %v1402, %v2205
      %v2207 = vpop.f32.mrb[0].mxu0
      %v2208 = vadd.f32 %v1404, %v2207
      %v2209 = vpop.f32.mrb[0].mxu0
      %v2210 = vpop.f32.mrb[0].mxu0
      %2211 = vdwg.mxu0
      %2212 = vmatprep.subr.bf16.mxu0 %v1918
      %2213 = vmatpush1.bf16.msra.mxu0 %v1917
      %2214 = vmatprep.subr.bf16.mxu0 %v1926
      %2215 = vmatpush1.bf16.msra.mxu0 %v1925
      %2216 = vmatprep.subr.bf16.mxu0 %v1934
      %2217 = vmatpush1.bf16.msra.mxu0 %v1933
      %2218 = vmatprep.subr.bf16.mxu0 %v1942
      %2219 = vmatpush1.bf16.msra.mxu0 %v1941
      %2220 = vmatprep.subr.bf16.mxu0 %v1950
      %2221 = vmatpush1.bf16.msra.mxu0 %v1949
      %2222 = vmatprep.subr.bf16.mxu0 %v1958
      %2223 = vmatpush1.bf16.msra.mxu0 %v1957
      %2224 = vmatprep.subr.bf16.mxu0 %v1966
      %2225 = vmatpush1.bf16.msra.mxu0 %v1965
      %2226 = vmatprep.subr.bf16.mxu0 %v1974
      %2227 = vmatpush1.bf16.msra.mxu0 %v1973
      %2228 = vmatprep.subr.bf16.mxu0 %v1982
      %2229 = vmatpush1.bf16.msra.mxu0 %v1981
      %2230 = vmatprep.subr.bf16.mxu0 %v1990
      %2231 = vmatpush1.bf16.msra.mxu0 %v1989
      %2232 = vmatprep.subr.bf16.mxu0 %v1998
      %2233 = vmatpush1.bf16.msra.mxu0 %v1997
      %2234 = vmatprep.subr.bf16.mxu0 %v2006
      %2235 = vmatpush1.bf16.msra.mxu0 %v2005
      %2236 = vmatprep.subr.bf16.mxu0 %v2014
      %2237 = vmatpush1.bf16.msra.mxu0 %v2013
      %2238 = vmatprep.subr.bf16.mxu0 %v2022
      %2239 = vmatpush1.bf16.msra.mxu0 %v2021
      %2240 = vmatprep.subr.bf16.mxu0 %v2030
      %2241 = vmatpush1.bf16.msra.mxu0 %v2029
      %2242 = vmatprep.subr.bf16.mxu0 %v2038
      %2243 = vmatpush1.bf16.msra.mxu0 %v2037
      %2244 = vmatprep.mubr.bf16.mxu0 %v421
      %2245 = vmatmul.mubr.bf16.gmra.mrb[0].mxu0 %v420
      %v2246 = vpop.f32.mrb[0].mxu0
      %v2247 = vadd.f32 %v1443, %v2246
      %v2248 = vpop.f32.mrb[0].mxu0
      %v2249 = vadd.f32 %v1445, %v2248
      %v2250 = vpop.f32.mrb[0].mxu0
      %v2251 = vpop.f32.mrb[0].mxu0
      %2252 = vdwg.mxu0
      %2253 = vmatprep.subr.bf16.mxu0 %v1920
      %2254 = vmatpush1.bf16.msra.mxu0 %v1919
      %2255 = vmatprep.subr.bf16.mxu0 %v1928
      %2256 = vmatpush1.bf16.msra.mxu0 %v1927
      %2257 = vmatprep.subr.bf16.mxu0 %v1936
      %2258 = vmatpush1.bf16.msra.mxu0 %v1935
      %2259 = vmatprep.subr.bf16.mxu0 %v1944
      %2260 = vmatpush1.bf16.msra.mxu0 %v1943
      %2261 = vmatprep.subr.bf16.mxu0 %v1952
      %2262 = vmatpush1.bf16.msra.mxu0 %v1951
      %2263 = vmatprep.subr.bf16.mxu0 %v1960
      %2264 = vmatpush1.bf16.msra.mxu0 %v1959
      %2265 = vmatprep.subr.bf16.mxu0 %v1968
      %2266 = vmatpush1.bf16.msra.mxu0 %v1967
      %2267 = vmatprep.subr.bf16.mxu0 %v1976
      %2268 = vmatpush1.bf16.msra.mxu0 %v1975
      %2269 = vmatprep.subr.bf16.mxu0 %v1984
      %2270 = vmatpush1.bf16.msra.mxu0 %v1983
      %2271 = vmatprep.subr.bf16.mxu0 %v1992
      %2272 = vmatpush1.bf16.msra.mxu0 %v1991
      %2273 = vmatprep.subr.bf16.mxu0 %v2000
      %2274 = vmatpush1.bf16.msra.mxu0 %v1999
      %2275 = vmatprep.subr.bf16.mxu0 %v2008
      %2276 = vmatpush1.bf16.msra.mxu0 %v2007
      %2277 = vmatprep.subr.bf16.mxu0 %v2016
      %2278 = vmatpush1.bf16.msra.mxu0 %v2015
      %2279 = vmatprep.subr.bf16.mxu0 %v2024
      %2280 = vmatpush1.bf16.msra.mxu0 %v2023
      %2281 = vmatprep.subr.bf16.mxu0 %v2032
      %2282 = vmatpush1.bf16.msra.mxu0 %v2031
      %2283 = vmatprep.subr.bf16.mxu0 %v2040
      %2284 = vmatpush1.bf16.msra.mxu0 %v2039
      %2285 = vmatprep.mubr.bf16.mxu0 %v421
      %2286 = vmatmul.mubr.bf16.gmra.mrb[0].mxu0 %v420
      %v2287 = vpop.f32.mrb[0].mxu0
      %v2288 = vadd.f32 %v1484, %v2287
      %v2289 = vpop.f32.mrb[0].mxu0
      %v2290 = vadd.f32 %v1486, %v2289
      %v2291 = vpop.f32.mrb[0].mxu0
      %v2292 = vpop.f32.mrb[0].mxu0
      %2293 = vdwg.mxu0
      %2294 = vmatprep.subr.bf16.mxu0 %v1922
      %2295 = vmatpush1.bf16.msra.mxu0 %v1921
      %2296 = vmatprep.subr.bf16.mxu0 %v1930
      %2297 = vmatpush1.bf16.msra.mxu0 %v1929
      %2298 = vmatprep.subr.bf16.mxu0 %v1938
      %2299 = vmatpush1.bf16.msra.mxu0 %v1937
      %2300 = vmatprep.subr.bf16.mxu0 %v1946
      %2301 = vmatpush1.bf16.msra.mxu0 %v1945
      %2302 = vmatprep.subr.bf16.mxu0 %v1954
      %2303 = vmatpush1.bf16.msra.mxu0 %v1953
      %2304 = vmatprep.subr.bf16.mxu0 %v1962
      %2305 = vmatpush1.bf16.msra.mxu0 %v1961
      %2306 = vmatprep.subr.bf16.mxu0 %v1970
      %2307 = vmatpush1.bf16.msra.mxu0 %v1969
      %2308 = vmatprep.subr.bf16.mxu0 %v1978
      %2309 = vmatpush1.bf16.msra.mxu0 %v1977
      %2310 = vmatprep.subr.bf16.mxu0 %v1986
      %2311 = vmatpush1.bf16.msra.mxu0 %v1985
      %2312 = vmatprep.subr.bf16.mxu0 %v1994
      %2313 = vmatpush1.bf16.msra.mxu0 %v1993
      %2314 = vmatprep.subr.bf16.mxu0 %v2002
      %2315 = vmatpush1.bf16.msra.mxu0 %v2001
      %2316 = vmatprep.subr.bf16.mxu0 %v2010
      %2317 = vmatpush1.bf16.msra.mxu0 %v2009
      %2318 = vmatprep.subr.bf16.mxu0 %v2018
      %2319 = vmatpush1.bf16.msra.mxu0 %v2017
      %2320 = vmatprep.subr.bf16.mxu0 %v2026
      %2321 = vmatpush1.bf16.msra.mxu0 %v2025
      %2322 = vmatprep.subr.bf16.mxu0 %v2034
      %2323 = vmatpush1.bf16.msra.mxu0 %v2033
      %2324 = vmatprep.subr.bf16.mxu0 %v2042
      %2325 = vmatpush1.bf16.msra.mxu0 %v2041
      %2326 = vmatprep.mubr.bf16.mxu0 %v421
      %2327 = vmatmul.mubr.bf16.gmra.mrb[0].mxu0 %v420
      %v2328 = vpop.f32.mrb[0].mxu0
      %v2329 = vadd.f32 %v1525, %v2328
      %v2330 = vpop.f32.mrb[0].mxu0
      %v2331 = vadd.f32 %v1527, %v2330
      %v2332 = vpop.f32.mrb[0].mxu0
      %v2333 = vpop.f32.mrb[0].mxu0
      %2334 = vdwg.mxu0
      %s2335 = scalar_lea.vmem %s3, 8
      %v2336 = vld [vmem:[%s2335] sm:$0xf]
      %v2338 = vsel %vm375, %v2336, 0
      %2340 = vmatprep.subr.bf16.mxu0 %v372
      %2341 = vmatpush1.bf16.msra.mxu0 %v371
      %2342 = vmatprep.subr.bf16.mxu0 0
      %2343 = vmatpush1.bf16.msra.mxu0 0
      %2344 = vmatprep.subr.bf16.mxu0 0
      %2345 = vmatpush1.bf16.msra.mxu0 0
      %2346 = vmatprep.subr.bf16.mxu0 0
      %2347 = vmatpush1.bf16.msra.mxu0 0
      %2348 = vmatprep.subr.bf16.mxu0 0
      %2349 = vmatpush1.bf16.msra.mxu0 0
      %2350 = vmatprep.subr.bf16.mxu0 0
      %2351 = vmatpush1.bf16.msra.mxu0 0
      %2352 = vmatprep.subr.bf16.mxu0 0
      %2353 = vmatpush1.bf16.msra.mxu0 0
      %2354 = vmatprep.subr.bf16.mxu0 0
      %2355 = vmatpush1.bf16.msra.mxu0 0
      %2356 = vmatprep.subr.bf16.mxu0 0
      %2357 = vmatpush1.bf16.msra.mxu0 0
      %2358 = vmatprep.subr.bf16.mxu0 0
      %2359 = vmatpush1.bf16.msra.mxu0 0
      %2360 = vmatprep.subr.bf16.mxu0 0
      %2361 = vmatpush1.bf16.msra.mxu0 0
      %2362 = vmatprep.subr.bf16.mxu0 0
      %2363 = vmatpush1.bf16.msra.mxu0 0
      %2364 = vmatprep.subr.bf16.mxu0 0
      %2365 = vmatpush1.bf16.msra.mxu0 0
      %2366 = vmatprep.subr.bf16.mxu0 0
      %2367 = vmatpush1.bf16.msra.mxu0 0
      %2368 = vmatprep.subr.bf16.mxu0 0
      %2369 = vmatpush1.bf16.msra.mxu0 0
      %2370 = vmatprep.subr.bf16.mxu0 0
      %2371 = vmatpush1.bf16.msra.mxu0 0
      %2372 = vmatprep.mubr.bf16.mxu0 0
      %2373 = vmatmul.mubr.bf16.gmra.mrb[0].mxu0 %v2338
      %v2374 = vpop.f32.mrb[0].mxu0
      %v2375 = vadd.f32 %v363, %v2374
      %v2376 = vpop.f32.mrb[0].mxu0
      %v2377 = vadd.f32 %v363, %v2376
      %v2378 = vpop.f32.mrb[0].mxu0
      %v2379 = vpop.f32.mrb[0].mxu0
      %2380 = vdwg.mxu0
      %v2381 = vpack.c.bf16 %v2375, %v2375
      %v2382 = vpack.c.bf16 %v2377, %v2377
      %s2383 = scalar_lea.vmem %s2, 2048
      %v2384 = vld [vmem:[%s2383] sm:$0xff]
      %v2385 = vld [vmem:[%s2383 + $0x8] sm:$0xff]
      %v2386 = vld [vmem:[%s2383 + $0x10] sm:$0xff]
      %v2387 = vld [vmem:[%s2383 + $0x18] sm:$0xff]
      %v2388 = vld [vmem:[%s2383 + $0x20] sm:$0xff]
      %v2389 = vld [vmem:[%s2383 + $0x28] sm:$0xff]
      %v2390 = vld [vmem:[%s2383 + $0x30] sm:$0xff]
      %v2391 = vld [vmem:[%s2383 + $0x38] sm:$0xff]
      %v2392 = vld [vmem:[%s2383 + $0x40] sm:$0xff]
      %v2393 = vld [vmem:[%s2383 + $0x48] sm:$0xff]
      %v2394 = vld [vmem:[%s2383 + $0x50] sm:$0xff]
      %v2395 = vld [vmem:[%s2383 + $0x58] sm:$0xff]
      %v2396 = vld [vmem:[%s2383 + $0x60] sm:$0xff]
      %v2397 = vld [vmem:[%s2383 + $0x68] sm:$0xff]
      %v2398 = vld [vmem:[%s2383 + $0x70] sm:$0xff]
      %v2399 = vld [vmem:[%s2383 + $0x78] sm:$0xff]
      %v2400 = vld [vmem:[%s2383 + $0x80] sm:$0xff]
      %v2401 = vld [vmem:[%s2383 + $0x88] sm:$0xff]
      %v2402 = vld [vmem:[%s2383 + $0x90] sm:$0xff]
      %v2403 = vld [vmem:[%s2383 + $0x98] sm:$0xff]
      %v2404 = vld [vmem:[%s2383 + $0xa0] sm:$0xff]
      %v2405 = vld [vmem:[%s2383 + $0xa8] sm:$0xff]
      %v2406 = vld [vmem:[%s2383 + $0xb0] sm:$0xff]
      %v2407 = vld [vmem:[%s2383 + $0xb8] sm:$0xff]
      %v2408 = vld [vmem:[%s2383 + $0xc0] sm:$0xff]
      %v2409 = vld [vmem:[%s2383 + $0xc8] sm:$0xff]
      %v2410 = vld [vmem:[%s2383 + $0xd0] sm:$0xff]
      %v2411 = vld [vmem:[%s2383 + $0xd8] sm:$0xff]
      %v2412 = vld [vmem:[%s2383 + $0xe0] sm:$0xff]
      %v2413 = vld [vmem:[%s2383 + $0xe8] sm:$0xff]
      %v2414 = vld [vmem:[%s2383 + $0xf0] sm:$0xff]
      %v2415 = vld [vmem:[%s2383 + $0xf8] sm:$0xff]
      %v2416 = vld [vmem:[%s2383 + $0x100] sm:$0xff]
      %v2417 = vld [vmem:[%s2383 + $0x108] sm:$0xff]
      %v2418 = vld [vmem:[%s2383 + $0x110] sm:$0xff]
      %v2419 = vld [vmem:[%s2383 + $0x118] sm:$0xff]
      %v2420 = vld [vmem:[%s2383 + $0x120] sm:$0xff]
      %v2421 = vld [vmem:[%s2383 + $0x128] sm:$0xff]
      %v2422 = vld [vmem:[%s2383 + $0x130] sm:$0xff]
      %v2423 = vld [vmem:[%s2383 + $0x138] sm:$0xff]
      %v2424 = vld [vmem:[%s2383 + $0x140] sm:$0xff]
      %v2425 = vld [vmem:[%s2383 + $0x148] sm:$0xff]
      %v2426 = vld [vmem:[%s2383 + $0x150] sm:$0xff]
      %v2427 = vld [vmem:[%s2383 + $0x158] sm:$0xff]
      %v2428 = vld [vmem:[%s2383 + $0x160] sm:$0xff]
      %v2429 = vld [vmem:[%s2383 + $0x168] sm:$0xff]
      %v2430 = vld [vmem:[%s2383 + $0x170] sm:$0xff]
      %v2431 = vld [vmem:[%s2383 + $0x178] sm:$0xff]
      %v2432 = vld [vmem:[%s2383 + $0x180] sm:$0xff]
      %v2433 = vld [vmem:[%s2383 + $0x188] sm:$0xff]
      %v2434 = vld [vmem:[%s2383 + $0x190] sm:$0xff]
      %v2435 = vld [vmem:[%s2383 + $0x198] sm:$0xff]
      %v2436 = vld [vmem:[%s2383 + $0x1a0] sm:$0xff]
      %v2437 = vld [vmem:[%s2383 + $0x1a8] sm:$0xff]
      %v2438 = vld [vmem:[%s2383 + $0x1b0] sm:$0xff]
      %v2439 = vld [vmem:[%s2383 + $0x1b8] sm:$0xff]
      %v2440 = vld [vmem:[%s2383 + $0x1c0] sm:$0xff]
      %v2441 = vld [vmem:[%s2383 + $0x1c8] sm:$0xff]
      %v2442 = vld [vmem:[%s2383 + $0x1d0] sm:$0xff]
      %v2443 = vld [vmem:[%s2383 + $0x1d8] sm:$0xff]
      %v2444 = vld [vmem:[%s2383 + $0x1e0] sm:$0xff]
      %v2445 = vld [vmem:[%s2383 + $0x1e8] sm:$0xff]
      %v2446 = vld [vmem:[%s2383 + $0x1f0] sm:$0xff]
      %v2447 = vld [vmem:[%s2383 + $0x1f8] sm:$0xff]
      %v2448 = vld [vmem:[%s2383 + $0x200] sm:$0xff]
      %v2449 = vld [vmem:[%s2383 + $0x208] sm:$0xff]
      %v2450 = vld [vmem:[%s2383 + $0x210] sm:$0xff]
      %v2451 = vld [vmem:[%s2383 + $0x218] sm:$0xff]
      %v2452 = vld [vmem:[%s2383 + $0x220] sm:$0xff]
      %v2453 = vld [vmem:[%s2383 + $0x228] sm:$0xff]
      %v2454 = vld [vmem:[%s2383 + $0x230] sm:$0xff]
      %v2455 = vld [vmem:[%s2383 + $0x238] sm:$0xff]
      %v2456 = vld [vmem:[%s2383 + $0x240] sm:$0xff]
      %v2457 = vld [vmem:[%s2383 + $0x248] sm:$0xff]
      %v2458 = vld [vmem:[%s2383 + $0x250] sm:$0xff]
      %v2459 = vld [vmem:[%s2383 + $0x258] sm:$0xff]
      %v2460 = vld [vmem:[%s2383 + $0x260] sm:$0xff]
      %v2461 = vld [vmem:[%s2383 + $0x268] sm:$0xff]
      %v2462 = vld [vmem:[%s2383 + $0x270] sm:$0xff]
      %v2463 = vld [vmem:[%s2383 + $0x278] sm:$0xff]
      %v2464 = vld [vmem:[%s2383 + $0x280] sm:$0xff]
      %v2465 = vld [vmem:[%s2383 + $0x288] sm:$0xff]
      %v2466 = vld [vmem:[%s2383 + $0x290] sm:$0xff]
      %v2467 = vld [vmem:[%s2383 + $0x298] sm:$0xff]
      %v2468 = vld [vmem:[%s2383 + $0x2a0] sm:$0xff]
      %v2469 = vld [vmem:[%s2383 + $0x2a8] sm:$0xff]
      %v2470 = vld [vmem:[%s2383 + $0x2b0] sm:$0xff]
      %v2471 = vld [vmem:[%s2383 + $0x2b8] sm:$0xff]
      %v2472 = vld [vmem:[%s2383 + $0x2c0] sm:$0xff]
      %v2473 = vld [vmem:[%s2383 + $0x2c8] sm:$0xff]
      %v2474 = vld [vmem:[%s2383 + $0x2d0] sm:$0xff]
      %v2475 = vld [vmem:[%s2383 + $0x2d8] sm:$0xff]
      %v2476 = vld [vmem:[%s2383 + $0x2e0] sm:$0xff]
      %v2477 = vld [vmem:[%s2383 + $0x2e8] sm:$0xff]
      %v2478 = vld [vmem:[%s2383 + $0x2f0] sm:$0xff]
      %v2479 = vld [vmem:[%s2383 + $0x2f8] sm:$0xff]
      %v2480 = vld [vmem:[%s2383 + $0x300] sm:$0xff]
      %v2481 = vld [vmem:[%s2383 + $0x308] sm:$0xff]
      %v2482 = vld [vmem:[%s2383 + $0x310] sm:$0xff]
      %v2483 = vld [vmem:[%s2383 + $0x318] sm:$0xff]
      %v2484 = vld [vmem:[%s2383 + $0x320] sm:$0xff]
      %v2485 = vld [vmem:[%s2383 + $0x328] sm:$0xff]
      %v2486 = vld [vmem:[%s2383 + $0x330] sm:$0xff]
      %v2487 = vld [vmem:[%s2383 + $0x338] sm:$0xff]
      %v2488 = vld [vmem:[%s2383 + $0x340] sm:$0xff]
      %v2489 = vld [vmem:[%s2383 + $0x348] sm:$0xff]
      %v2490 = vld [vmem:[%s2383 + $0x350] sm:$0xff]
      %v2491 = vld [vmem:[%s2383 + $0x358] sm:$0xff]
      %v2492 = vld [vmem:[%s2383 + $0x360] sm:$0xff]
      %v2493 = vld [vmem:[%s2383 + $0x368] sm:$0xff]
      %v2494 = vld [vmem:[%s2383 + $0x370] sm:$0xff]
      %v2495 = vld [vmem:[%s2383 + $0x378] sm:$0xff]
      %v2496 = vld [vmem:[%s2383 + $0x380] sm:$0xff]
      %v2497 = vld [vmem:[%s2383 + $0x388] sm:$0xff]
      %v2498 = vld [vmem:[%s2383 + $0x390] sm:$0xff]
      %v2499 = vld [vmem:[%s2383 + $0x398] sm:$0xff]
      %v2500 = vld [vmem:[%s2383 + $0x3a0] sm:$0xff]
      %v2501 = vld [vmem:[%s2383 + $0x3a8] sm:$0xff]
      %v2502 = vld [vmem:[%s2383 + $0x3b0] sm:$0xff]
      %v2503 = vld [vmem:[%s2383 + $0x3b8] sm:$0xff]
      %v2504 = vld [vmem:[%s2383 + $0x3c0] sm:$0xff]
      %v2505 = vld [vmem:[%s2383 + $0x3c8] sm:$0xff]
      %v2506 = vld [vmem:[%s2383 + $0x3d0] sm:$0xff]
      %v2507 = vld [vmem:[%s2383 + $0x3d8] sm:$0xff]
      %v2508 = vld [vmem:[%s2383 + $0x3e0] sm:$0xff]
      %v2509 = vld [vmem:[%s2383 + $0x3e8] sm:$0xff]
      %v2510 = vld [vmem:[%s2383 + $0x3f0] sm:$0xff]
      %v2511 = vld [vmem:[%s2383 + $0x3f8] sm:$0xff]
      %v2640 = vunpack.c.l.b16 %v2384
      %v2641 = vunpack.c.h.b16 %v2384
      %v2642 = vunpack.c.l.b16 %v2385
      %v2643 = vunpack.c.h.b16 %v2385
      %v2644 = vunpack.c.l.b16 %v2386
      %v2645 = vunpack.c.h.b16 %v2386
      %v2646 = vunpack.c.l.b16 %v2387
      %v2647 = vunpack.c.h.b16 %v2387
      %v2648 = vunpack.c.l.b16 %v2388
      %v2649 = vunpack.c.h.b16 %v2388
      %v2650 = vunpack.c.l.b16 %v2389
      %v2651 = vunpack.c.h.b16 %v2389
      %v2652 = vunpack.c.l.b16 %v2390
      %v2653 = vunpack.c.h.b16 %v2390
      %v2654 = vunpack.c.l.b16 %v2391
      %v2655 = vunpack.c.h.b16 %v2391
      %v2656 = vunpack.c.l.b16 %v2392
      %v2657 = vunpack.c.h.b16 %v2392
      %v2658 = vunpack.c.l.b16 %v2393
      %v2659 = vunpack.c.h.b16 %v2393
      %v2660 = vunpack.c.l.b16 %v2394
      %v2661 = vunpack.c.h.b16 %v2394
      %v2662 = vunpack.c.l.b16 %v2395
      %v2663 = vunpack.c.h.b16 %v2395
      %v2664 = vunpack.c.l.b16 %v2396
      %v2665 = vunpack.c.h.b16 %v2396
      %v2666 = vunpack.c.l.b16 %v2397
      %v2667 = vunpack.c.h.b16 %v2397
      %v2668 = vunpack.c.l.b16 %v2398
      %v2669 = vunpack.c.h.b16 %v2398
      %v2670 = vunpack.c.l.b16 %v2399
      %v2671 = vunpack.c.h.b16 %v2399
      %v2672 = vunpack.c.l.b16 %v2400
      %v2673 = vunpack.c.h.b16 %v2400
      %v2674 = vunpack.c.l.b16 %v2401
      %v2675 = vunpack.c.h.b16 %v2401
      %v2676 = vunpack.c.l.b16 %v2402
      %v2677 = vunpack.c.h.b16 %v2402
      %v2678 = vunpack.c.l.b16 %v2403
      %v2679 = vunpack.c.h.b16 %v2403
      %v2680 = vunpack.c.l.b16 %v2404
      %v2681 = vunpack.c.h.b16 %v2404
      %v2682 = vunpack.c.l.b16 %v2405
      %v2683 = vunpack.c.h.b16 %v2405
      %v2684 = vunpack.c.l.b16 %v2406
      %v2685 = vunpack.c.h.b16 %v2406
      %v2686 = vunpack.c.l.b16 %v2407
      %v2687 = vunpack.c.h.b16 %v2407
      %v2688 = vunpack.c.l.b16 %v2408
      %v2689 = vunpack.c.h.b16 %v2408
      %v2690 = vunpack.c.l.b16 %v2409
      %v2691 = vunpack.c.h.b16 %v2409
      %v2692 = vunpack.c.l.b16 %v2410
      %v2693 = vunpack.c.h.b16 %v2410
      %v2694 = vunpack.c.l.b16 %v2411
      %v2695 = vunpack.c.h.b16 %v2411
      %v2696 = vunpack.c.l.b16 %v2412
      %v2697 = vunpack.c.h.b16 %v2412
      %v2698 = vunpack.c.l.b16 %v2413
      %v2699 = vunpack.c.h.b16 %v2413
      %v2700 = vunpack.c.l.b16 %v2414
      %v2701 = vunpack.c.h.b16 %v2414
      %v2702 = vunpack.c.l.b16 %v2415
      %v2703 = vunpack.c.h.b16 %v2415
      %v2704 = vunpack.c.l.b16 %v2416
      %v2705 = vunpack.c.h.b16 %v2416
      %v2706 = vunpack.c.l.b16 %v2417
      %v2707 = vunpack.c.h.b16 %v2417
      %v2708 = vunpack.c.l.b16 %v2418
      %v2709 = vunpack.c.h.b16 %v2418
      %v2710 = vunpack.c.l.b16 %v2419
      %v2711 = vunpack.c.h.b16 %v2419
      %v2712 = vunpack.c.l.b16 %v2420
      %v2713 = vunpack.c.h.b16 %v2420
      %v2714 = vunpack.c.l.b16 %v2421
      %v2715 = vunpack.c.h.b16 %v2421
      %v2716 = vunpack.c.l.b16 %v2422
      %v2717 = vunpack.c.h.b16 %v2422
      %v2718 = vunpack.c.l.b16 %v2423
      %v2719 = vunpack.c.h.b16 %v2423
      %v2720 = vunpack.c.l.b16 %v2424
      %v2721 = vunpack.c.h.b16 %v2424
      %v2722 = vunpack.c.l.b16 %v2425
      %v2723 = vunpack.c.h.b16 %v2425
      %v2724 = vunpack.c.l.b16 %v2426
      %v2725 = vunpack.c.h.b16 %v2426
      %v2726 = vunpack.c.l.b16 %v2427
      %v2727 = vunpack.c.h.b16 %v2427
      %v2728 = vunpack.c.l.b16 %v2428
      %v2729 = vunpack.c.h.b16 %v2428
      %v2730 = vunpack.c.l.b16 %v2429
      %v2731 = vunpack.c.h.b16 %v2429
      %v2732 = vunpack.c.l.b16 %v2430
      %v2733 = vunpack.c.h.b16 %v2430
      %v2734 = vunpack.c.l.b16 %v2431
      %v2735 = vunpack.c.h.b16 %v2431
      %v2736 = vunpack.c.l.b16 %v2432
      %v2737 = vunpack.c.h.b16 %v2432
      %v2738 = vunpack.c.l.b16 %v2433
      %v2739 = vunpack.c.h.b16 %v2433
      %v2740 = vunpack.c.l.b16 %v2434
      %v2741 = vunpack.c.h.b16 %v2434
      %v2742 = vunpack.c.l.b16 %v2435
      %v2743 = vunpack.c.h.b16 %v2435
      %v2744 = vunpack.c.l.b16 %v2436
      %v2745 = vunpack.c.h.b16 %v2436
      %v2746 = vunpack.c.l.b16 %v2437
      %v2747 = vunpack.c.h.b16 %v2437
      %v2748 = vunpack.c.l.b16 %v2438
      %v2749 = vunpack.c.h.b16 %v2438
      %v2750 = vunpack.c.l.b16 %v2439
      %v2751 = vunpack.c.h.b16 %v2439
      %v2752 = vunpack.c.l.b16 %v2440
      %v2753 = vunpack.c.h.b16 %v2440
      %v2754 = vunpack.c.l.b16 %v2441
      %v2755 = vunpack.c.h.b16 %v2441
      %v2756 = vunpack.c.l.b16 %v2442
      %v2757 = vunpack.c.h.b16 %v2442
      %v2758 = vunpack.c.l.b16 %v2443
      %v2759 = vunpack.c.h.b16 %v2443
      %v2760 = vunpack.c.l.b16 %v2444
      %v2761 = vunpack.c.h.b16 %v2444
      %v2762 = vunpack.c.l.b16 %v2445
      %v2763 = vunpack.c.h.b16 %v2445
      %v2764 = vunpack.c.l.b16 %v2446
      %v2765 = vunpack.c.h.b16 %v2446
      %v2766 = vunpack.c.l.b16 %v2447
      %v2767 = vunpack.c.h.b16 %v2447
      %v2768 = vunpack.c.l.b16 %v2448
      %v2769 = vunpack.c.h.b16 %v2448
      %v2770 = vunpack.c.l.b16 %v2449
      %v2771 = vunpack.c.h.b16 %v2449
      %v2772 = vunpack.c.l.b16 %v2450
      %v2773 = vunpack.c.h.b16 %v2450
      %v2774 = vunpack.c.l.b16 %v2451
      %v2775 = vunpack.c.h.b16 %v2451
      %v2776 = vunpack.c.l.b16 %v2452
      %v2777 = vunpack.c.h.b16 %v2452
      %v2778 = vunpack.c.l.b16 %v2453
      %v2779 = vunpack.c.h.b16 %v2453
      %v2780 = vunpack.c.l.b16 %v2454
      %v2781 = vunpack.c.h.b16 %v2454
      %v2782 = vunpack.c.l.b16 %v2455
      %v2783 = vunpack.c.h.b16 %v2455
      %v2784 = vunpack.c.l.b16 %v2456
      %v2785 = vunpack.c.h.b16 %v2456
      %v2786 = vunpack.c.l.b16 %v2457
      %v2787 = vunpack.c.h.b16 %v2457
      %v2788 = vunpack.c.l.b16 %v2458
      %v2789 = vunpack.c.h.b16 %v2458
      %v2790 = vunpack.c.l.b16 %v2459
      %v2791 = vunpack.c.h.b16 %v2459
      %v2792 = vunpack.c.l.b16 %v2460
      %v2793 = vunpack.c.h.b16 %v2460
      %v2794 = vunpack.c.l.b16 %v2461
      %v2795 = vunpack.c.h.b16 %v2461
      %v2796 = vunpack.c.l.b16 %v2462
      %v2797 = vunpack.c.h.b16 %v2462
      %v2798 = vunpack.c.l.b16 %v2463
      %v2799 = vunpack.c.h.b16 %v2463
      %v2800 = vunpack.c.l.b16 %v2464
      %v2801 = vunpack.c.h.b16 %v2464
      %v2802 = vunpack.c.l.b16 %v2465
      %v2803 = vunpack.c.h.b16 %v2465
      %v2804 = vunpack.c.l.b16 %v2466
      %v2805 = vunpack.c.h.b16 %v2466
      %v2806 = vunpack.c.l.b16 %v2467
      %v2807 = vunpack.c.h.b16 %v2467
      %v2808 = vunpack.c.l.b16 %v2468
      %v2809 = vunpack.c.h.b16 %v2468
      %v2810 = vunpack.c.l.b16 %v2469
      %v2811 = vunpack.c.h.b16 %v2469
      %v2812 = vunpack.c.l.b16 %v2470
      %v2813 = vunpack.c.h.b16 %v2470
      %v2814 = vunpack.c.l.b16 %v2471
      %v2815 = vunpack.c.h.b16 %v2471
      %v2816 = vunpack.c.l.b16 %v2472
      %v2817 = vunpack.c.h.b16 %v2472
      %v2818 = vunpack.c.l.b16 %v2473
      %v2819 = vunpack.c.h.b16 %v2473
      %v2820 = vunpack.c.l.b16 %v2474
      %v2821 = vunpack.c.h.b16 %v2474
      %v2822 = vunpack.c.l.b16 %v2475
      %v2823 = vunpack.c.h.b16 %v2475
      %v2824 = vunpack.c.l.b16 %v2476
      %v2825 = vunpack.c.h.b16 %v2476
      %v2826 = vunpack.c.l.b16 %v2477
      %v2827 = vunpack.c.h.b16 %v2477
      %v2828 = vunpack.c.l.b16 %v2478
      %v2829 = vunpack.c.h.b16 %v2478
      %v2830 = vunpack.c.l.b16 %v2479
      %v2831 = vunpack.c.h.b16 %v2479
      %v2832 = vunpack.c.l.b16 %v2480
      %v2833 = vunpack.c.h.b16 %v2480
      %v2834 = vunpack.c.l.b16 %v2481
      %v2835 = vunpack.c.h.b16 %v2481
      %v2836 = vunpack.c.l.b16 %v2482
      %v2837 = vunpack.c.h.b16 %v2482
      %v2838 = vunpack.c.l.b16 %v2483
      %v2839 = vunpack.c.h.b16 %v2483
      %v2840 = vunpack.c.l.b16 %v2484
      %v2841 = vunpack.c.h.b16 %v2484
      %v2842 = vunpack.c.l.b16 %v2485
      %v2843 = vunpack.c.h.b16 %v2485
      %v2844 = vunpack.c.l.b16 %v2486
      %v2845 = vunpack.c.h.b16 %v2486
      %v2846 = vunpack.c.l.b16 %v2487
      %v2847 = vunpack.c.h.b16 %v2487
      %v2848 = vunpack.c.l.b16 %v2488
      %v2849 = vunpack.c.h.b16 %v2488
      %v2850 = vunpack.c.l.b16 %v2489
      %v2851 = vunpack.c.h.b16 %v2489
      %v2852 = vunpack.c.l.b16 %v2490
      %v2853 = vunpack.c.h.b16 %v2490
      %v2854 = vunpack.c.l.b16 %v2491
      %v2855 = vunpack.c.h.b16 %v2491
      %v2856 = vunpack.c.l.b16 %v2492
      %v2857 = vunpack.c.h.b16 %v2492
      %v2858 = vunpack.c.l.b16 %v2493
      %v2859 = vunpack.c.h.b16 %v2493
      %v2860 = vunpack.c.l.b16 %v2494
      %v2861 = vunpack.c.h.b16 %v2494
      %v2862 = vunpack.c.l.b16 %v2495
      %v2863 = vunpack.c.h.b16 %v2495
      %v2864 = vunpack.c.l.b16 %v2496
      %v2865 = vunpack.c.h.b16 %v2496
      %v2866 = vunpack.c.l.b16 %v2497
      %v2867 = vunpack.c.h.b16 %v2497
      %v2868 = vunpack.c.l.b16 %v2498
      %v2869 = vunpack.c.h.b16 %v2498
      %v2870 = vunpack.c.l.b16 %v2499
      %v2871 = vunpack.c.h.b16 %v2499
      %v2872 = vunpack.c.l.b16 %v2500
      %v2873 = vunpack.c.h.b16 %v2500
      %v2874 = vunpack.c.l.b16 %v2501
      %v2875 = vunpack.c.h.b16 %v2501
      %v2876 = vunpack.c.l.b16 %v2502
      %v2877 = vunpack.c.h.b16 %v2502
      %v2878 = vunpack.c.l.b16 %v2503
      %v2879 = vunpack.c.h.b16 %v2503
      %v2880 = vunpack.c.l.b16 %v2504
      %v2881 = vunpack.c.h.b16 %v2504
      %v2882 = vunpack.c.l.b16 %v2505
      %v2883 = vunpack.c.h.b16 %v2505
      %v2884 = vunpack.c.l.b16 %v2506
      %v2885 = vunpack.c.h.b16 %v2506
      %v2886 = vunpack.c.l.b16 %v2507
      %v2887 = vunpack.c.h.b16 %v2507
      %v2888 = vunpack.c.l.b16 %v2508
      %v2889 = vunpack.c.h.b16 %v2508
      %v2890 = vunpack.c.l.b16 %v2509
      %v2891 = vunpack.c.h.b16 %v2509
      %v2892 = vunpack.c.l.b16 %v2510
      %v2893 = vunpack.c.h.b16 %v2510
      %v2894 = vunpack.c.l.b16 %v2511
      %v2895 = vunpack.c.h.b16 %v2511
      %v2896 = vpack.c.b16 %v2648, %v2640
      %v2897 = vpack.c.b16 %v2649, %v2641
      %v2898 = vpack.c.b16 %v2650, %v2642
      %v2899 = vpack.c.b16 %v2651, %v2643
      %v2900 = vpack.c.b16 %v2652, %v2644
      %v2901 = vpack.c.b16 %v2653, %v2645
      %v2902 = vpack.c.b16 %v2654, %v2646
      %v2903 = vpack.c.b16 %v2655, %v2647
      %v2904 = vpack.c.b16 %v2664, %v2656
      %v2905 = vpack.c.b16 %v2665, %v2657
      %v2906 = vpack.c.b16 %v2666, %v2658
      %v2907 = vpack.c.b16 %v2667, %v2659
      %v2908 = vpack.c.b16 %v2668, %v2660
      %v2909 = vpack.c.b16 %v2669, %v2661
      %v2910 = vpack.c.b16 %v2670, %v2662
      %v2911 = vpack.c.b16 %v2671, %v2663
      %v2912 = vpack.c.b16 %v2680, %v2672
      %v2913 = vpack.c.b16 %v2681, %v2673
      %v2914 = vpack.c.b16 %v2682, %v2674
      %v2915 = vpack.c.b16 %v2683, %v2675
      %v2916 = vpack.c.b16 %v2684, %v2676
      %v2917 = vpack.c.b16 %v2685, %v2677
      %v2918 = vpack.c.b16 %v2686, %v2678
      %v2919 = vpack.c.b16 %v2687, %v2679
      %v2920 = vpack.c.b16 %v2696, %v2688
      %v2921 = vpack.c.b16 %v2697, %v2689
      %v2922 = vpack.c.b16 %v2698, %v2690
      %v2923 = vpack.c.b16 %v2699, %v2691
      %v2924 = vpack.c.b16 %v2700, %v2692
      %v2925 = vpack.c.b16 %v2701, %v2693
      %v2926 = vpack.c.b16 %v2702, %v2694
      %v2927 = vpack.c.b16 %v2703, %v2695
      %v2928 = vpack.c.b16 %v2712, %v2704
      %v2929 = vpack.c.b16 %v2713, %v2705
      %v2930 = vpack.c.b16 %v2714, %v2706
      %v2931 = vpack.c.b16 %v2715, %v2707
      %v2932 = vpack.c.b16 %v2716, %v2708
      %v2933 = vpack.c.b16 %v2717, %v2709
      %v2934 = vpack.c.b16 %v2718, %v2710
      %v2935 = vpack.c.b16 %v2719, %v2711
      %v2936 = vpack.c.b16 %v2728, %v2720
      %v2937 = vpack.c.b16 %v2729, %v2721
      %v2938 = vpack.c.b16 %v2730, %v2722
      %v2939 = vpack.c.b16 %v2731, %v2723
      %v2940 = vpack.c.b16 %v2732, %v2724
      %v2941 = vpack.c.b16 %v2733, %v2725
      %v2942 = vpack.c.b16 %v2734, %v2726
      %v2943 = vpack.c.b16 %v2735, %v2727
      %v2944 = vpack.c.b16 %v2744, %v2736
      %v2945 = vpack.c.b16 %v2745, %v2737
      %v2946 = vpack.c.b16 %v2746, %v2738
      %v2947 = vpack.c.b16 %v2747, %v2739
      %v2948 = vpack.c.b16 %v2748, %v2740
      %v2949 = vpack.c.b16 %v2749, %v2741
      %v2950 = vpack.c.b16 %v2750, %v2742
      %v2951 = vpack.c.b16 %v2751, %v2743
      %v2952 = vpack.c.b16 %v2760, %v2752
      %v2953 = vpack.c.b16 %v2761, %v2753
      %v2954 = vpack.c.b16 %v2762, %v2754
      %v2955 = vpack.c.b16 %v2763, %v2755
      %v2956 = vpack.c.b16 %v2764, %v2756
      %v2957 = vpack.c.b16 %v2765, %v2757
      %v2958 = vpack.c.b16 %v2766, %v2758
      %v2959 = vpack.c.b16 %v2767, %v2759
      %v2960 = vpack.c.b16 %v2776, %v2768
      %v2961 = vpack.c.b16 %v2777, %v2769
      %v2962 = vpack.c.b16 %v2778, %v2770
      %v2963 = vpack.c.b16 %v2779, %v2771
      %v2964 = vpack.c.b16 %v2780, %v2772
      %v2965 = vpack.c.b16 %v2781, %v2773
      %v2966 = vpack.c.b16 %v2782, %v2774
      %v2967 = vpack.c.b16 %v2783, %v2775
      %v2968 = vpack.c.b16 %v2792, %v2784
      %v2969 = vpack.c.b16 %v2793, %v2785
      %v2970 = vpack.c.b16 %v2794, %v2786
      %v2971 = vpack.c.b16 %v2795, %v2787
      %v2972 = vpack.c.b16 %v2796, %v2788
      %v2973 = vpack.c.b16 %v2797, %v2789
      %v2974 = vpack.c.b16 %v2798, %v2790
      %v2975 = vpack.c.b16 %v2799, %v2791
      %v2976 = vpack.c.b16 %v2808, %v2800
      %v2977 = vpack.c.b16 %v2809, %v2801
      %v2978 = vpack.c.b16 %v2810, %v2802
      %v2979 = vpack.c.b16 %v2811, %v2803
      %v2980 = vpack.c.b16 %v2812, %v2804
      %v2981 = vpack.c.b16 %v2813, %v2805
      %v2982 = vpack.c.b16 %v2814, %v2806
      %v2983 = vpack.c.b16 %v2815, %v2807
      %v2984 = vpack.c.b16 %v2824, %v2816
      %v2985 = vpack.c.b16 %v2825, %v2817
      %v2986 = vpack.c.b16 %v2826, %v2818
      %v2987 = vpack.c.b16 %v2827, %v2819
      %v2988 = vpack.c.b16 %v2828, %v2820
      %v2989 = vpack.c.b16 %v2829, %v2821
      %v2990 = vpack.c.b16 %v2830, %v2822
      %v2991 = vpack.c.b16 %v2831, %v2823
      %v2992 = vpack.c.b16 %v2840, %v2832
      %v2993 = vpack.c.b16 %v2841, %v2833
      %v2994 = vpack.c.b16 %v2842, %v2834
      %v2995 = vpack.c.b16 %v2843, %v2835
      %v2996 = vpack.c.b16 %v2844, %v2836
      %v2997 = vpack.c.b16 %v2845, %v2837
      %v2998 = vpack.c.b16 %v2846, %v2838
      %v2999 = vpack.c.b16 %v2847, %v2839
      %v3000 = vpack.c.b16 %v2856, %v2848
      %v3001 = vpack.c.b16 %v2857, %v2849
      %v3002 = vpack.c.b16 %v2858, %v2850
      %v3003 = vpack.c.b16 %v2859, %v2851
      %v3004 = vpack.c.b16 %v2860, %v2852
      %v3005 = vpack.c.b16 %v2861, %v2853
      %v3006 = vpack.c.b16 %v2862, %v2854
      %v3007 = vpack.c.b16 %v2863, %v2855
      %v3008 = vpack.c.b16 %v2872, %v2864
      %v3009 = vpack.c.b16 %v2873, %v2865
      %v3010 = vpack.c.b16 %v2874, %v2866
      %v3011 = vpack.c.b16 %v2875, %v2867
      %v3012 = vpack.c.b16 %v2876, %v2868
      %v3013 = vpack.c.b16 %v2877, %v2869
      %v3014 = vpack.c.b16 %v2878, %v2870
      %v3015 = vpack.c.b16 %v2879, %v2871
      %v3016 = vpack.c.b16 %v2888, %v2880
      %v3017 = vpack.c.b16 %v2889, %v2881
      %v3018 = vpack.c.b16 %v2890, %v2882
      %v3019 = vpack.c.b16 %v2891, %v2883
      %v3020 = vpack.c.b16 %v2892, %v2884
      %v3021 = vpack.c.b16 %v2893, %v2885
      %v3022 = vpack.c.b16 %v2894, %v2886
      %v3023 = vpack.c.b16 %v2895, %v2887
      %3152 = vmatprep.subr.bf16.mxu0 %v2897
      %3153 = vmatpush1.bf16.msra.mxu0 %v2896
      %3154 = vmatprep.subr.bf16.mxu0 %v2905
      %3155 = vmatpush1.bf16.msra.mxu0 %v2904
      %3156 = vmatprep.subr.bf16.mxu0 %v2913
      %3157 = vmatpush1.bf16.msra.mxu0 %v2912
      %3158 = vmatprep.subr.bf16.mxu0 %v2921
      %3159 = vmatpush1.bf16.msra.mxu0 %v2920
      %3160 = vmatprep.subr.bf16.mxu0 %v2929
      %3161 = vmatpush1.bf16.msra.mxu0 %v2928
      %3162 = vmatprep.subr.bf16.mxu0 %v2937
      %3163 = vmatpush1.bf16.msra.mxu0 %v2936
      %3164 = vmatprep.subr.bf16.mxu0 %v2945
      %3165 = vmatpush1.bf16.msra.mxu0 %v2944
      %3166 = vmatprep.subr.bf16.mxu0 %v2953
      %3167 = vmatpush1.bf16.msra.mxu0 %v2952
      %3168 = vmatprep.subr.bf16.mxu0 %v2961
      %3169 = vmatpush1.bf16.msra.mxu0 %v2960
      %3170 = vmatprep.subr.bf16.mxu0 %v2969
      %3171 = vmatpush1.bf16.msra.mxu0 %v2968
      %3172 = vmatprep.subr.bf16.mxu0 %v2977
      %3173 = vmatpush1.bf16.msra.mxu0 %v2976
      %3174 = vmatprep.subr.bf16.mxu0 %v2985
      %3175 = vmatpush1.bf16.msra.mxu0 %v2984
      %3176 = vmatprep.subr.bf16.mxu0 %v2993
      %3177 = vmatpush1.bf16.msra.mxu0 %v2992
      %3178 = vmatprep.subr.bf16.mxu0 %v3001
      %3179 = vmatpush1.bf16.msra.mxu0 %v3000
      %3180 = vmatprep.subr.bf16.mxu0 %v3009
      %3181 = vmatpush1.bf16.msra.mxu0 %v3008
      %3182 = vmatprep.subr.bf16.mxu0 %v3017
      %3183 = vmatpush1.bf16.msra.mxu0 %v3016
      %3184 = vmatprep.mubr.bf16.mxu0 %v2382
      %3185 = vmatmul.mubr.bf16.gmra.mrb[0].mxu0 %v2381
      %v3186 = vpop.f32.mrb[0].mxu0
      %v3187 = vadd.f32 0.0, %v3186
      %v3188 = vpop.f32.mrb[0].mxu0
      %v3189 = vadd.f32 0.0, %v3188
      %v3190 = vpop.f32.mrb[0].mxu0
      %v3191 = vpop.f32.mrb[0].mxu0
      %3192 = vdwg.mxu0
      %3193 = vmatprep.subr.bf16.mxu0 %v2899
      %3194 = vmatpush1.bf16.msra.mxu0 %v2898
      %3195 = vmatprep.subr.bf16.mxu0 %v2907
      %3196 = vmatpush1.bf16.msra.mxu0 %v2906
      %3197 = vmatprep.subr.bf16.mxu0 %v2915
      %3198 = vmatpush1.bf16.msra.mxu0 %v2914
      %3199 = vmatprep.subr.bf16.mxu0 %v2923
      %3200 = vmatpush1.bf16.msra.mxu0 %v2922
      %3201 = vmatprep.subr.bf16.mxu0 %v2931
      %3202 = vmatpush1.bf16.msra.mxu0 %v2930
      %3203 = vmatprep.subr.bf16.mxu0 %v2939
      %3204 = vmatpush1.bf16.msra.mxu0 %v2938
      %3205 = vmatprep.subr.bf16.mxu0 %v2947
      %3206 = vmatpush1.bf16.msra.mxu0 %v2946
      %3207 = vmatprep.subr.bf16.mxu0 %v2955
      %3208 = vmatpush1.bf16.msra.mxu0 %v2954
      %3209 = vmatprep.subr.bf16.mxu0 %v2963
      %3210 = vmatpush1.bf16.msra.mxu0 %v2962
      %3211 = vmatprep.subr.bf16.mxu0 %v2971
      %3212 = vmatpush1.bf16.msra.mxu0 %v2970
      %3213 = vmatprep.subr.bf16.mxu0 %v2979
      %3214 = vmatpush1.bf16.msra.mxu0 %v2978
      %3215 = vmatprep.subr.bf16.mxu0 %v2987
      %3216 = vmatpush1.bf16.msra.mxu0 %v2986
      %3217 = vmatprep.subr.bf16.mxu0 %v2995
      %3218 = vmatpush1.bf16.msra.mxu0 %v2994
      %3219 = vmatprep.subr.bf16.mxu0 %v3003
      %3220 = vmatpush1.bf16.msra.mxu0 %v3002
      %3221 = vmatprep.subr.bf16.mxu0 %v3011
      %3222 = vmatpush1.bf16.msra.mxu0 %v3010
      %3223 = vmatprep.subr.bf16.mxu0 %v3019
      %3224 = vmatpush1.bf16.msra.mxu0 %v3018
      %3225 = vmatprep.mubr.bf16.mxu0 %v2382
      %3226 = vmatmul.mubr.bf16.gmra.mrb[0].mxu0 %v2381
      %v3227 = vpop.f32.mrb[0].mxu0
      %v3228 = vadd.f32 0.0, %v3227
      %v3229 = vpop.f32.mrb[0].mxu0
      %v3230 = vadd.f32 0.0, %v3229
      %v3231 = vpop.f32.mrb[0].mxu0
      %v3232 = vpop.f32.mrb[0].mxu0
      %3233 = vdwg.mxu0
      %3234 = vmatprep.subr.bf16.mxu0 %v2901
      %3235 = vmatpush1.bf16.msra.mxu0 %v2900
      %3236 = vmatprep.subr.bf16.mxu0 %v2909
      %3237 = vmatpush1.bf16.msra.mxu0 %v2908
      %3238 = vmatprep.subr.bf16.mxu0 %v2917
      %3239 = vmatpush1.bf16.msra.mxu0 %v2916
      %3240 = vmatprep.subr.bf16.mxu0 %v2925
      %3241 = vmatpush1.bf16.msra.mxu0 %v2924
      %3242 = vmatprep.subr.bf16.mxu0 %v2933
      %3243 = vmatpush1.bf16.msra.mxu0 %v2932
      %3244 = vmatprep.subr.bf16.mxu0 %v2941
      %3245 = vmatpush1.bf16.msra.mxu0 %v2940
      %3246 = vmatprep.subr.bf16.mxu0 %v2949
      %3247 = vmatpush1.bf16.msra.mxu0 %v2948
      %3248 = vmatprep.subr.bf16.mxu0 %v2957
      %3249 = vmatpush1.bf16.msra.mxu0 %v2956
      %3250 = vmatprep.subr.bf16.mxu0 %v2965
      %3251 = vmatpush1.bf16.msra.mxu0 %v2964
      %3252 = vmatprep.subr.bf16.mxu0 %v2973
      %3253 = vmatpush1.bf16.msra.mxu0 %v2972
      %3254 = vmatprep.subr.bf16.mxu0 %v2981
      %3255 = vmatpush1.bf16.msra.mxu0 %v2980
      %3256 = vmatprep.subr.bf16.mxu0 %v2989
      %3257 = vmatpush1.bf16.msra.mxu0 %v2988
      %3258 = vmatprep.subr.bf16.mxu0 %v2997
      %3259 = vmatpush1.bf16.msra.mxu0 %v2996
      %3260 = vmatprep.subr.bf16.mxu0 %v3005
      %3261 = vmatpush1.bf16.msra.mxu0 %v3004
      %3262 = vmatprep.subr.bf16.mxu0 %v3013
      %3263 = vmatpush1.bf16.msra.mxu0 %v3012
      %3264 = vmatprep.subr.bf16.mxu0 %v3021
      %3265 = vmatpush1.bf16.msra.mxu0 %v3020
      %3266 = vmatprep.mubr.bf16.mxu0 %v2382
      %3267 = vmatmul.mubr.bf16.gmra.mrb[0].mxu0 %v2381
      %v3268 = vpop.f32.mrb[0].mxu0
      %v3269 = vadd.f32 0.0, %v3268
      %v3270 = vpop.f32.mrb[0].mxu0
      %v3271 = vadd.f32 0.0, %v3270
      %v3272 = vpop.f32.mrb[0].mxu0
      %v3273 = vpop.f32.mrb[0].mxu0
      %3274 = vdwg.mxu0
      %3275 = vmatprep.subr.bf16.mxu0 %v2903
      %3276 = vmatpush1.bf16.msra.mxu0 %v2902
      %3277 = vmatprep.subr.bf16.mxu0 %v2911
      %3278 = vmatpush1.bf16.msra.mxu0 %v2910
      %3279 = vmatprep.subr.bf16.mxu0 %v2919
      %3280 = vmatpush1.bf16.msra.mxu0 %v2918
      %3281 = vmatprep.subr.bf16.mxu0 %v2927
      %3282 = vmatpush1.bf16.msra.mxu0 %v2926
      %3283 = vmatprep.subr.bf16.mxu0 %v2935
      %3284 = vmatpush1.bf16.msra.mxu0 %v2934
      %3285 = vmatprep.subr.bf16.mxu0 %v2943
      %3286 = vmatpush1.bf16.msra.mxu0 %v2942
      %3287 = vmatprep.subr.bf16.mxu0 %v2951
      %3288 = vmatpush1.bf16.msra.mxu0 %v2950
      %3289 = vmatprep.subr.bf16.mxu0 %v2959
      %3290 = vmatpush1.bf16.msra.mxu0 %v2958
      %3291 = vmatprep.subr.bf16.mxu0 %v2967
      %3292 = vmatpush1.bf16.msra.mxu0 %v2966
      %3293 = vmatprep.subr.bf16.mxu0 %v2975
      %3294 = vmatpush1.bf16.msra.mxu0 %v2974
      %3295 = vmatprep.subr.bf16.mxu0 %v2983
      %3296 = vmatpush1.bf16.msra.mxu0 %v2982
      %3297 = vmatprep.subr.bf16.mxu0 %v2991
      %3298 = vmatpush1.bf16.msra.mxu0 %v2990
      %3299 = vmatprep.subr.bf16.mxu0 %v2999
      %3300 = vmatpush1.bf16.msra.mxu0 %v2998
      %3301 = vmatprep.subr.bf16.mxu0 %v3007
      %3302 = vmatpush1.bf16.msra.mxu0 %v3006
      %3303 = vmatprep.subr.bf16.mxu0 %v3015
      %3304 = vmatpush1.bf16.msra.mxu0 %v3014
      %3305 = vmatprep.subr.bf16.mxu0 %v3023
      %3306 = vmatpush1.bf16.msra.mxu0 %v3022
      %3307 = vmatprep.mubr.bf16.mxu0 %v2382
      %3308 = vmatmul.mubr.bf16.gmra.mrb[0].mxu0 %v2381
      %v3309 = vpop.f32.mrb[0].mxu0
      %v3310 = vadd.f32 0.0, %v3309
      %v3311 = vpop.f32.mrb[0].mxu0
      %v3312 = vadd.f32 0.0, %v3311
      %v3313 = vpop.f32.mrb[0].mxu0
      %v3314 = vpop.f32.mrb[0].mxu0
      %3315 = vdwg.mxu0
      %v3316 = vadd.f32 %v2206, %v3187
      %v3317 = vadd.f32 %v2208, %v3189
      %v3318 = vadd.f32 %v2247, %v3228
      %v3319 = vadd.f32 %v2249, %v3230
      %v3320 = vadd.f32 %v2288, %v3269
      %v3321 = vadd.f32 %v2290, %v3271
      %v3322 = vadd.f32 %v2329, %v3310
      %v3323 = vadd.f32 %v2331, %v3312
      %s3324 = scalar_lea.vmem %s3, 12
      %v3325 = vld [vmem:[%s3324] sm:$0xf]
      %v3327 = vsel %vm375, %v3325, 0
      %3329 = vmatprep.subr.bf16.mxu0 %v372
      %3330 = vmatpush1.bf16.msra.mxu0 %v371
      %3331 = vmatprep.subr.bf16.mxu0 0
      %3332 = vmatpush1.bf16.msra.mxu0 0
      %3333 = vmatprep.subr.bf16.mxu0 0
      %3334 = vmatpush1.bf16.msra.mxu0 0
      %3335 = vmatprep.subr.bf16.mxu0 0
      %3336 = vmatpush1.bf16.msra.mxu0 0
      %3337 = vmatprep.subr.bf16.mxu0 0
      %3338 = vmatpush1.bf16.msra.mxu0 0
      %3339 = vmatprep.subr.bf16.mxu0 0
      %3340 = vmatpush1.bf16.msra.mxu0 0
      %3341 = vmatprep.subr.bf16.mxu0 0
      %3342 = vmatpush1.bf16.msra.mxu0 0
      %3343 = vmatprep.subr.bf16.mxu0 0
      %3344 = vmatpush1.bf16.msra.mxu0 0
      %3345 = vmatprep.subr.bf16.mxu0 0
      %3346 = vmatpush1.bf16.msra.mxu0 0
      %3347 = vmatprep.subr.bf16.mxu0 0
      %3348 = vmatpush1.bf16.msra.mxu0 0
      %3349 = vmatprep.subr.bf16.mxu0 0
      %3350 = vmatpush1.bf16.msra.mxu0 0
      %3351 = vmatprep.subr.bf16.mxu0 0
      %3352 = vmatpush1.bf16.msra.mxu0 0
      %3353 = vmatprep.subr.bf16.mxu0 0
      %3354 = vmatpush1.bf16.msra.mxu0 0
      %3355 = vmatprep.subr.bf16.mxu0 0
      %3356 = vmatpush1.bf16.msra.mxu0 0
      %3357 = vmatprep.subr.bf16.mxu0 0
      %3358 = vmatpush1.bf16.msra.mxu0 0
      %3359 = vmatprep.subr.bf16.mxu0 0
      %3360 = vmatpush1.bf16.msra.mxu0 0
      %3361 = vmatprep.mubr.bf16.mxu0 0
      %3362 = vmatmul.mubr.bf16.gmra.mrb[0].mxu0 %v3327
      %v3363 = vpop.f32.mrb[0].mxu0
      %v3364 = vadd.f32 %v363, %v3363
      %v3365 = vpop.f32.mrb[0].mxu0
      %v3366 = vadd.f32 %v363, %v3365
      %v3367 = vpop.f32.mrb[0].mxu0
      %v3368 = vpop.f32.mrb[0].mxu0
      %3369 = vdwg.mxu0
      %v3370 = vpack.c.bf16 %v3364, %v3364
      %v3371 = vpack.c.bf16 %v3366, %v3366
      %s3372 = scalar_lea.vmem %s2, 3072
      %v3373 = vld [vmem:[%s3372] sm:$0xff]
      %v3374 = vld [vmem:[%s3372 + $0x8] sm:$0xff]
      %v3375 = vld [vmem:[%s3372 + $0x10] sm:$0xff]
      %v3376 = vld [vmem:[%s3372 + $0x18] sm:$0xff]
      %v3377 = vld [vmem:[%s3372 + $0x20] sm:$0xff]
      %v3378 = vld [vmem:[%s3372 + $0x28] sm:$0xff]
      %v3379 = vld [vmem:[%s3372 + $0x30] sm:$0xff]
      %v3380 = vld [vmem:[%s3372 + $0x38] sm:$0xff]
      %v3381 = vld [vmem:[%s3372 + $0x40] sm:$0xff]
      %v3382 = vld [vmem:[%s3372 + $0x48] sm:$0xff]
      %v3383 = vld [vmem:[%s3372 + $0x50] sm:$0xff]
      %v3384 = vld [vmem:[%s3372 + $0x58] sm:$0xff]
      %v3385 = vld [vmem:[%s3372 + $0x60] sm:$0xff]
      %v3386 = vld [vmem:[%s3372 + $0x68] sm:$0xff]
      %v3387 = vld [vmem:[%s3372 + $0x70] sm:$0xff]
      %v3388 = vld [vmem:[%s3372 + $0x78] sm:$0xff]
      %v3389 = vld [vmem:[%s3372 + $0x80] sm:$0xff]
      %v3390 = vld [vmem:[%s3372 + $0x88] sm:$0xff]
      %v3391 = vld [vmem:[%s3372 + $0x90] sm:$0xff]
      %v3392 = vld [vmem:[%s3372 + $0x98] sm:$0xff]
      %v3393 = vld [vmem:[%s3372 + $0xa0] sm:$0xff]
      %v3394 = vld [vmem:[%s3372 + $0xa8] sm:$0xff]
      %v3395 = vld [vmem:[%s3372 + $0xb0] sm:$0xff]
      %v3396 = vld [vmem:[%s3372 + $0xb8] sm:$0xff]
      %v3397 = vld [vmem:[%s3372 + $0xc0] sm:$0xff]
      %v3398 = vld [vmem:[%s3372 + $0xc8] sm:$0xff]
      %v3399 = vld [vmem:[%s3372 + $0xd0] sm:$0xff]
      %v3400 = vld [vmem:[%s3372 + $0xd8] sm:$0xff]
      %v3401 = vld [vmem:[%s3372 + $0xe0] sm:$0xff]
      %v3402 = vld [vmem:[%s3372 + $0xe8] sm:$0xff]
      %v3403 = vld [vmem:[%s3372 + $0xf0] sm:$0xff]
      %v3404 = vld [vmem:[%s3372 + $0xf8] sm:$0xff]
      %v3405 = vld [vmem:[%s3372 + $0x100] sm:$0xff]
      %v3406 = vld [vmem:[%s3372 + $0x108] sm:$0xff]
      %v3407 = vld [vmem:[%s3372 + $0x110] sm:$0xff]
      %v3408 = vld [vmem:[%s3372 + $0x118] sm:$0xff]
      %v3409 = vld [vmem:[%s3372 + $0x120] sm:$0xff]
      %v3410 = vld [vmem:[%s3372 + $0x128] sm:$0xff]
      %v3411 = vld [vmem:[%s3372 + $0x130] sm:$0xff]
      %v3412 = vld [vmem:[%s3372 + $0x138] sm:$0xff]
      %v3413 = vld [vmem:[%s3372 + $0x140] sm:$0xff]
      %v3414 = vld [vmem:[%s3372 + $0x148] sm:$0xff]
      %v3415 = vld [vmem:[%s3372 + $0x150] sm:$0xff]
      %v3416 = vld [vmem:[%s3372 + $0x158] sm:$0xff]
      %v3417 = vld [vmem:[%s3372 + $0x160] sm:$0xff]
      %v3418 = vld [vmem:[%s3372 + $0x168] sm:$0xff]
      %v3419 = vld [vmem:[%s3372 + $0x170] sm:$0xff]
      %v3420 = vld [vmem:[%s3372 + $0x178] sm:$0xff]
      %v3421 = vld [vmem:[%s3372 + $0x180] sm:$0xff]
      %v3422 = vld [vmem:[%s3372 + $0x188] sm:$0xff]
      %v3423 = vld [vmem:[%s3372 + $0x190] sm:$0xff]
      %v3424 = vld [vmem:[%s3372 + $0x198] sm:$0xff]
      %v3425 = vld [vmem:[%s3372 + $0x1a0] sm:$0xff]
      %v3426 = vld [vmem:[%s3372 + $0x1a8] sm:$0xff]
      %v3427 = vld [vmem:[%s3372 + $0x1b0] sm:$0xff]
      %v3428 = vld [vmem:[%s3372 + $0x1b8] sm:$0xff]
      %v3429 = vld [vmem:[%s3372 + $0x1c0] sm:$0xff]
      %v3430 = vld [vmem:[%s3372 + $0x1c8] sm:$0xff]
      %v3431 = vld [vmem:[%s3372 + $0x1d0] sm:$0xff]
      %v3432 = vld [vmem:[%s3372 + $0x1d8] sm:$0xff]
      %v3433 = vld [vmem:[%s3372 + $0x1e0] sm:$0xff]
      %v3434 = vld [vmem:[%s3372 + $0x1e8] sm:$0xff]
      %v3435 = vld [vmem:[%s3372 + $0x1f0] sm:$0xff]
      %v3436 = vld [vmem:[%s3372 + $0x1f8] sm:$0xff]
      %v3437 = vld [vmem:[%s3372 + $0x200] sm:$0xff]
      %v3438 = vld [vmem:[%s3372 + $0x208] sm:$0xff]
      %v3439 = vld [vmem:[%s3372 + $0x210] sm:$0xff]
      %v3440 = vld [vmem:[%s3372 + $0x218] sm:$0xff]
      %v3441 = vld [vmem:[%s3372 + $0x220] sm:$0xff]
      %v3442 = vld [vmem:[%s3372 + $0x228] sm:$0xff]
      %v3443 = vld [vmem:[%s3372 + $0x230] sm:$0xff]
      %v3444 = vld [vmem:[%s3372 + $0x238] sm:$0xff]
      %v3445 = vld [vmem:[%s3372 + $0x240] sm:$0xff]
      %v3446 = vld [vmem:[%s3372 + $0x248] sm:$0xff]
      %v3447 = vld [vmem:[%s3372 + $0x250] sm:$0xff]
      %v3448 = vld [vmem:[%s3372 + $0x258] sm:$0xff]
      %v3449 = vld [vmem:[%s3372 + $0x260] sm:$0xff]
      %v3450 = vld [vmem:[%s3372 + $0x268] sm:$0xff]
      %v3451 = vld [vmem:[%s3372 + $0x270] sm:$0xff]
      %v3452 = vld [vmem:[%s3372 + $0x278] sm:$0xff]
      %v3453 = vld [vmem:[%s3372 + $0x280] sm:$0xff]
      %v3454 = vld [vmem:[%s3372 + $0x288] sm:$0xff]
      %v3455 = vld [vmem:[%s3372 + $0x290] sm:$0xff]
      %v3456 = vld [vmem:[%s3372 + $0x298] sm:$0xff]
      %v3457 = vld [vmem:[%s3372 + $0x2a0] sm:$0xff]
      %v3458 = vld [vmem:[%s3372 + $0x2a8] sm:$0xff]
      %v3459 = vld [vmem:[%s3372 + $0x2b0] sm:$0xff]
      %v3460 = vld [vmem:[%s3372 + $0x2b8] sm:$0xff]
      %v3461 = vld [vmem:[%s3372 + $0x2c0] sm:$0xff]
      %v3462 = vld [vmem:[%s3372 + $0x2c8] sm:$0xff]
      %v3463 = vld [vmem:[%s3372 + $0x2d0] sm:$0xff]
      %v3464 = vld [vmem:[%s3372 + $0x2d8] sm:$0xff]
      %v3465 = vld [vmem:[%s3372 + $0x2e0] sm:$0xff]
      %v3466 = vld [vmem:[%s3372 + $0x2e8] sm:$0xff]
      %v3467 = vld [vmem:[%s3372 + $0x2f0] sm:$0xff]
      %v3468 = vld [vmem:[%s3372 + $0x2f8] sm:$0xff]
      %v3469 = vld [vmem:[%s3372 + $0x300] sm:$0xff]
      %v3470 = vld [vmem:[%s3372 + $0x308] sm:$0xff]
      %v3471 = vld [vmem:[%s3372 + $0x310] sm:$0xff]
      %v3472 = vld [vmem:[%s3372 + $0x318] sm:$0xff]
      %v3473 = vld [vmem:[%s3372 + $0x320] sm:$0xff]
      %v3474 = vld [vmem:[%s3372 + $0x328] sm:$0xff]
      %v3475 = vld [vmem:[%s3372 + $0x330] sm:$0xff]
      %v3476 = vld [vmem:[%s3372 + $0x338] sm:$0xff]
      %v3477 = vld [vmem:[%s3372 + $0x340] sm:$0xff]
      %v3478 = vld [vmem:[%s3372 + $0x348] sm:$0xff]
      %v3479 = vld [vmem:[%s3372 + $0x350] sm:$0xff]
      %v3480 = vld [vmem:[%s3372 + $0x358] sm:$0xff]
      %v3481 = vld [vmem:[%s3372 + $0x360] sm:$0xff]
      %v3482 = vld [vmem:[%s3372 + $0x368] sm:$0xff]
      %v3483 = vld [vmem:[%s3372 + $0x370] sm:$0xff]
      %v3484 = vld [vmem:[%s3372 + $0x378] sm:$0xff]
      %v3485 = vld [vmem:[%s3372 + $0x380] sm:$0xff]
      %v3486 = vld [vmem:[%s3372 + $0x388] sm:$0xff]
      %v3487 = vld [vmem:[%s3372 + $0x390] sm:$0xff]
      %v3488 = vld [vmem:[%s3372 + $0x398] sm:$0xff]
      %v3489 = vld [vmem:[%s3372 + $0x3a0] sm:$0xff]
      %v3490 = vld [vmem:[%s3372 + $0x3a8] sm:$0xff]
      %v3491 = vld [vmem:[%s3372 + $0x3b0] sm:$0xff]
      %v3492 = vld [vmem:[%s3372 + $0x3b8] sm:$0xff]
      %v3493 = vld [vmem:[%s3372 + $0x3c0] sm:$0xff]
      %v3494 = vld [vmem:[%s3372 + $0x3c8] sm:$0xff]
      %v3495 = vld [vmem:[%s3372 + $0x3d0] sm:$0xff]
      %v3496 = vld [vmem:[%s3372 + $0x3d8] sm:$0xff]
      %v3497 = vld [vmem:[%s3372 + $0x3e0] sm:$0xff]
      %v3498 = vld [vmem:[%s3372 + $0x3e8] sm:$0xff]
      %v3499 = vld [vmem:[%s3372 + $0x3f0] sm:$0xff]
      %v3500 = vld [vmem:[%s3372 + $0x3f8] sm:$0xff]
      %v3629 = vunpack.c.l.b16 %v3373
      %v3630 = vunpack.c.h.b16 %v3373
      %v3631 = vunpack.c.l.b16 %v3374
      %v3632 = vunpack.c.h.b16 %v3374
      %v3633 = vunpack.c.l.b16 %v3375
      %v3634 = vunpack.c.h.b16 %v3375
      %v3635 = vunpack.c.l.b16 %v3376
      %v3636 = vunpack.c.h.b16 %v3376
      %v3637 = vunpack.c.l.b16 %v3377
      %v3638 = vunpack.c.h.b16 %v3377
      %v3639 = vunpack.c.l.b16 %v3378
      %v3640 = vunpack.c.h.b16 %v3378
      %v3641 = vunpack.c.l.b16 %v3379
      %v3642 = vunpack.c.h.b16 %v3379
      %v3643 = vunpack.c.l.b16 %v3380
      %v3644 = vunpack.c.h.b16 %v3380
      %v3645 = vunpack.c.l.b16 %v3381
      %v3646 = vunpack.c.h.b16 %v3381
      %v3647 = vunpack.c.l.b16 %v3382
      %v3648 = vunpack.c.h.b16 %v3382
      %v3649 = vunpack.c.l.b16 %v3383
      %v3650 = vunpack.c.h.b16 %v3383
      %v3651 = vunpack.c.l.b16 %v3384
      %v3652 = vunpack.c.h.b16 %v3384
      %v3653 = vunpack.c.l.b16 %v3385
      %v3654 = vunpack.c.h.b16 %v3385
      %v3655 = vunpack.c.l.b16 %v3386
      %v3656 = vunpack.c.h.b16 %v3386
      %v3657 = vunpack.c.l.b16 %v3387
      %v3658 = vunpack.c.h.b16 %v3387
      %v3659 = vunpack.c.l.b16 %v3388
      %v3660 = vunpack.c.h.b16 %v3388
      %v3661 = vunpack.c.l.b16 %v3389
      %v3662 = vunpack.c.h.b16 %v3389
      %v3663 = vunpack.c.l.b16 %v3390
      %v3664 = vunpack.c.h.b16 %v3390
      %v3665 = vunpack.c.l.b16 %v3391
      %v3666 = vunpack.c.h.b16 %v3391
      %v3667 = vunpack.c.l.b16 %v3392
      %v3668 = vunpack.c.h.b16 %v3392
      %v3669 = vunpack.c.l.b16 %v3393
      %v3670 = vunpack.c.h.b16 %v3393
      %v3671 = vunpack.c.l.b16 %v3394
      %v3672 = vunpack.c.h.b16 %v3394
      %v3673 = vunpack.c.l.b16 %v3395
      %v3674 = vunpack.c.h.b16 %v3395
      %v3675 = vunpack.c.l.b16 %v3396
      %v3676 = vunpack.c.h.b16 %v3396
      %v3677 = vunpack.c.l.b16 %v3397
      %v3678 = vunpack.c.h.b16 %v3397
      %v3679 = vunpack.c.l.b16 %v3398
      %v3680 = vunpack.c.h.b16 %v3398
      %v3681 = vunpack.c.l.b16 %v3399
      %v3682 = vunpack.c.h.b16 %v3399
      %v3683 = vunpack.c.l.b16 %v3400
      %v3684 = vunpack.c.h.b16 %v3400
      %v3685 = vunpack.c.l.b16 %v3401
      %v3686 = vunpack.c.h.b16 %v3401
      %v3687 = vunpack.c.l.b16 %v3402
      %v3688 = vunpack.c.h.b16 %v3402
      %v3689 = vunpack.c.l.b16 %v3403
      %v3690 = vunpack.c.h.b16 %v3403
      %v3691 = vunpack.c.l.b16 %v3404
      %v3692 = vunpack.c.h.b16 %v3404
      %v3693 = vunpack.c.l.b16 %v3405
      %v3694 = vunpack.c.h.b16 %v3405
      %v3695 = vunpack.c.l.b16 %v3406
      %v3696 = vunpack.c.h.b16 %v3406
      %v3697 = vunpack.c.l.b16 %v3407
      %v3698 = vunpack.c.h.b16 %v3407
      %v3699 = vunpack.c.l.b16 %v3408
      %v3700 = vunpack.c.h.b16 %v3408
      %v3701 = vunpack.c.l.b16 %v3409
      %v3702 = vunpack.c.h.b16 %v3409
      %v3703 = vunpack.c.l.b16 %v3410
      %v3704 = vunpack.c.h.b16 %v3410
      %v3705 = vunpack.c.l.b16 %v3411
      %v3706 = vunpack.c.h.b16 %v3411
      %v3707 = vunpack.c.l.b16 %v3412
      %v3708 = vunpack.c.h.b16 %v3412
      %v3709 = vunpack.c.l.b16 %v3413
      %v3710 = vunpack.c.h.b16 %v3413
      %v3711 = vunpack.c.l.b16 %v3414
      %v3712 = vunpack.c.h.b16 %v3414
      %v3713 = vunpack.c.l.b16 %v3415
      %v3714 = vunpack.c.h.b16 %v3415
      %v3715 = vunpack.c.l.b16 %v3416
      %v3716 = vunpack.c.h.b16 %v3416
      %v3717 = vunpack.c.l.b16 %v3417
      %v3718 = vunpack.c.h.b16 %v3417
      %v3719 = vunpack.c.l.b16 %v3418
      %v3720 = vunpack.c.h.b16 %v3418
      %v3721 = vunpack.c.l.b16 %v3419
      %v3722 = vunpack.c.h.b16 %v3419
      %v3723 = vunpack.c.l.b16 %v3420
      %v3724 = vunpack.c.h.b16 %v3420
      %v3725 = vunpack.c.l.b16 %v3421
      %v3726 = vunpack.c.h.b16 %v3421
      %v3727 = vunpack.c.l.b16 %v3422
      %v3728 = vunpack.c.h.b16 %v3422
      %v3729 = vunpack.c.l.b16 %v3423
      %v3730 = vunpack.c.h.b16 %v3423
      %v3731 = vunpack.c.l.b16 %v3424
      %v3732 = vunpack.c.h.b16 %v3424
      %v3733 = vunpack.c.l.b16 %v3425
      %v3734 = vunpack.c.h.b16 %v3425
      %v3735 = vunpack.c.l.b16 %v3426
      %v3736 = vunpack.c.h.b16 %v3426
      %v3737 = vunpack.c.l.b16 %v3427
      %v3738 = vunpack.c.h.b16 %v3427
      %v3739 = vunpack.c.l.b16 %v3428
      %v3740 = vunpack.c.h.b16 %v3428
      %v3741 = vunpack.c.l.b16 %v3429
      %v3742 = vunpack.c.h.b16 %v3429
      %v3743 = vunpack.c.l.b16 %v3430
      %v3744 = vunpack.c.h.b16 %v3430
      %v3745 = vunpack.c.l.b16 %v3431
      %v3746 = vunpack.c.h.b16 %v3431
      %v3747 = vunpack.c.l.b16 %v3432
      %v3748 = vunpack.c.h.b16 %v3432
      %v3749 = vunpack.c.l.b16 %v3433
      %v3750 = vunpack.c.h.b16 %v3433
      %v3751 = vunpack.c.l.b16 %v3434
      %v3752 = vunpack.c.h.b16 %v3434
      %v3753 = vunpack.c.l.b16 %v3435
      %v3754 = vunpack.c.h.b16 %v3435
      %v3755 = vunpack.c.l.b16 %v3436
      %v3756 = vunpack.c.h.b16 %v3436
      %v3757 = vunpack.c.l.b16 %v3437
      %v3758 = vunpack.c.h.b16 %v3437
      %v3759 = vunpack.c.l.b16 %v3438
      %v3760 = vunpack.c.h.b16 %v3438
      %v3761 = vunpack.c.l.b16 %v3439
      %v3762 = vunpack.c.h.b16 %v3439
      %v3763 = vunpack.c.l.b16 %v3440
      %v3764 = vunpack.c.h.b16 %v3440
      %v3765 = vunpack.c.l.b16 %v3441
      %v3766 = vunpack.c.h.b16 %v3441
      %v3767 = vunpack.c.l.b16 %v3442
      %v3768 = vunpack.c.h.b16 %v3442
      %v3769 = vunpack.c.l.b16 %v3443
      %v3770 = vunpack.c.h.b16 %v3443
      %v3771 = vunpack.c.l.b16 %v3444
      %v3772 = vunpack.c.h.b16 %v3444
      %v3773 = vunpack.c.l.b16 %v3445
      %v3774 = vunpack.c.h.b16 %v3445
      %v3775 = vunpack.c.l.b16 %v3446
      %v3776 = vunpack.c.h.b16 %v3446
      %v3777 = vunpack.c.l.b16 %v3447
      %v3778 = vunpack.c.h.b16 %v3447
      %v3779 = vunpack.c.l.b16 %v3448
      %v3780 = vunpack.c.h.b16 %v3448
      %v3781 = vunpack.c.l.b16 %v3449
      %v3782 = vunpack.c.h.b16 %v3449
      %v3783 = vunpack.c.l.b16 %v3450
      %v3784 = vunpack.c.h.b16 %v3450
      %v3785 = vunpack.c.l.b16 %v3451
      %v3786 = vunpack.c.h.b16 %v3451
      %v3787 = vunpack.c.l.b16 %v3452
      %v3788 = vunpack.c.h.b16 %v3452
      %v3789 = vunpack.c.l.b16 %v3453
      %v3790 = vunpack.c.h.b16 %v3453
      %v3791 = vunpack.c.l.b16 %v3454
      %v3792 = vunpack.c.h.b16 %v3454
      %v3793 = vunpack.c.l.b16 %v3455
      %v3794 = vunpack.c.h.b16 %v3455
      %v3795 = vunpack.c.l.b16 %v3456
      %v3796 = vunpack.c.h.b16 %v3456
      %v3797 = vunpack.c.l.b16 %v3457
      %v3798 = vunpack.c.h.b16 %v3457
      %v3799 = vunpack.c.l.b16 %v3458
      %v3800 = vunpack.c.h.b16 %v3458
      %v3801 = vunpack.c.l.b16 %v3459
      %v3802 = vunpack.c.h.b16 %v3459
      %v3803 = vunpack.c.l.b16 %v3460
      %v3804 = vunpack.c.h.b16 %v3460
      %v3805 = vunpack.c.l.b16 %v3461
      %v3806 = vunpack.c.h.b16 %v3461
      %v3807 = vunpack.c.l.b16 %v3462
      %v3808 = vunpack.c.h.b16 %v3462
      %v3809 = vunpack.c.l.b16 %v3463
      %v3810 = vunpack.c.h.b16 %v3463
      %v3811 = vunpack.c.l.b16 %v3464
      %v3812 = vunpack.c.h.b16 %v3464
      %v3813 = vunpack.c.l.b16 %v3465
      %v3814 = vunpack.c.h.b16 %v3465
      %v3815 = vunpack.c.l.b16 %v3466
      %v3816 = vunpack.c.h.b16 %v3466
      %v3817 = vunpack.c.l.b16 %v3467
      %v3818 = vunpack.c.h.b16 %v3467
      %v3819 = vunpack.c.l.b16 %v3468
      %v3820 = vunpack.c.h.b16 %v3468
      %v3821 = vunpack.c.l.b16 %v3469
      %v3822 = vunpack.c.h.b16 %v3469
      %v3823 = vunpack.c.l.b16 %v3470
      %v3824 = vunpack.c.h.b16 %v3470
      %v3825 = vunpack.c.l.b16 %v3471
      %v3826 = vunpack.c.h.b16 %v3471
      %v3827 = vunpack.c.l.b16 %v3472
      %v3828 = vunpack.c.h.b16 %v3472
      %v3829 = vunpack.c.l.b16 %v3473
      %v3830 = vunpack.c.h.b16 %v3473
      %v3831 = vunpack.c.l.b16 %v3474
      %v3832 = vunpack.c.h.b16 %v3474
      %v3833 = vunpack.c.l.b16 %v3475
      %v3834 = vunpack.c.h.b16 %v3475
      %v3835 = vunpack.c.l.b16 %v3476
      %v3836 = vunpack.c.h.b16 %v3476
      %v3837 = vunpack.c.l.b16 %v3477
      %v3838 = vunpack.c.h.b16 %v3477
      %v3839 = vunpack.c.l.b16 %v3478
      %v3840 = vunpack.c.h.b16 %v3478
      %v3841 = vunpack.c.l.b16 %v3479
      %v3842 = vunpack.c.h.b16 %v3479
      %v3843 = vunpack.c.l.b16 %v3480
      %v3844 = vunpack.c.h.b16 %v3480
      %v3845 = vunpack.c.l.b16 %v3481
      %v3846 = vunpack.c.h.b16 %v3481
      %v3847 = vunpack.c.l.b16 %v3482
      %v3848 = vunpack.c.h.b16 %v3482
      %v3849 = vunpack.c.l.b16 %v3483
      %v3850 = vunpack.c.h.b16 %v3483
      %v3851 = vunpack.c.l.b16 %v3484
      %v3852 = vunpack.c.h.b16 %v3484
      %v3853 = vunpack.c.l.b16 %v3485
      %v3854 = vunpack.c.h.b16 %v3485
      %v3855 = vunpack.c.l.b16 %v3486
      %v3856 = vunpack.c.h.b16 %v3486
      %v3857 = vunpack.c.l.b16 %v3487
      %v3858 = vunpack.c.h.b16 %v3487
      %v3859 = vunpack.c.l.b16 %v3488
      %v3860 = vunpack.c.h.b16 %v3488
      %v3861 = vunpack.c.l.b16 %v3489
      %v3862 = vunpack.c.h.b16 %v3489
      %v3863 = vunpack.c.l.b16 %v3490
      %v3864 = vunpack.c.h.b16 %v3490
      %v3865 = vunpack.c.l.b16 %v3491
      %v3866 = vunpack.c.h.b16 %v3491
      %v3867 = vunpack.c.l.b16 %v3492
      %v3868 = vunpack.c.h.b16 %v3492
      %v3869 = vunpack.c.l.b16 %v3493
      %v3870 = vunpack.c.h.b16 %v3493
      %v3871 = vunpack.c.l.b16 %v3494
      %v3872 = vunpack.c.h.b16 %v3494
      %v3873 = vunpack.c.l.b16 %v3495
      %v3874 = vunpack.c.h.b16 %v3495
      %v3875 = vunpack.c.l.b16 %v3496
      %v3876 = vunpack.c.h.b16 %v3496
      %v3877 = vunpack.c.l.b16 %v3497
      %v3878 = vunpack.c.h.b16 %v3497
      %v3879 = vunpack.c.l.b16 %v3498
      %v3880 = vunpack.c.h.b16 %v3498
      %v3881 = vunpack.c.l.b16 %v3499
      %v3882 = vunpack.c.h.b16 %v3499
      %v3883 = vunpack.c.l.b16 %v3500
      %v3884 = vunpack.c.h.b16 %v3500
      %v3885 = vpack.c.b16 %v3637, %v3629
      %v3886 = vpack.c.b16 %v3638, %v3630
      %v3887 = vpack.c.b16 %v3639, %v3631
      %v3888 = vpack.c.b16 %v3640, %v3632
      %v3889 = vpack.c.b16 %v3641, %v3633
      %v3890 = vpack.c.b16 %v3642, %v3634
      %v3891 = vpack.c.b16 %v3643, %v3635
      %v3892 = vpack.c.b16 %v3644, %v3636
      %v3893 = vpack.c.b16 %v3653, %v3645
      %v3894 = vpack.c.b16 %v3654, %v3646
      %v3895 = vpack.c.b16 %v3655, %v3647
      %v3896 = vpack.c.b16 %v3656, %v3648
      %v3897 = vpack.c.b16 %v3657, %v3649
      %v3898 = vpack.c.b16 %v3658, %v3650
      %v3899 = vpack.c.b16 %v3659, %v3651
      %v3900 = vpack.c.b16 %v3660, %v3652
      %v3901 = vpack.c.b16 %v3669, %v3661
      %v3902 = vpack.c.b16 %v3670, %v3662
      %v3903 = vpack.c.b16 %v3671, %v3663
      %v3904 = vpack.c.b16 %v3672, %v3664
      %v3905 = vpack.c.b16 %v3673, %v3665
      %v3906 = vpack.c.b16 %v3674, %v3666
      %v3907 = vpack.c.b16 %v3675, %v3667
      %v3908 = vpack.c.b16 %v3676, %v3668
      %v3909 = vpack.c.b16 %v3685, %v3677
      %v3910 = vpack.c.b16 %v3686, %v3678
      %v3911 = vpack.c.b16 %v3687, %v3679
      %v3912 = vpack.c.b16 %v3688, %v3680
      %v3913 = vpack.c.b16 %v3689, %v3681
      %v3914 = vpack.c.b16 %v3690, %v3682
      %v3915 = vpack.c.b16 %v3691, %v3683
      %v3916 = vpack.c.b16 %v3692, %v3684
      %v3917 = vpack.c.b16 %v3701, %v3693
      %v3918 = vpack.c.b16 %v3702, %v3694
      %v3919 = vpack.c.b16 %v3703, %v3695
      %v3920 = vpack.c.b16 %v3704, %v3696
      %v3921 = vpack.c.b16 %v3705, %v3697
      %v3922 = vpack.c.b16 %v3706, %v3698
      %v3923 = vpack.c.b16 %v3707, %v3699
      %v3924 = vpack.c.b16 %v3708, %v3700
      %v3925 = vpack.c.b16 %v3717, %v3709
      %v3926 = vpack.c.b16 %v3718, %v3710
      %v3927 = vpack.c.b16 %v3719, %v3711
      %v3928 = vpack.c.b16 %v3720, %v3712
      %v3929 = vpack.c.b16 %v3721, %v3713
      %v3930 = vpack.c.b16 %v3722, %v3714
      %v3931 = vpack.c.b16 %v3723, %v3715
      %v3932 = vpack.c.b16 %v3724, %v3716
      %v3933 = vpack.c.b16 %v3733, %v3725
      %v3934 = vpack.c.b16 %v3734, %v3726
      %v3935 = vpack.c.b16 %v3735, %v3727
      %v3936 = vpack.c.b16 %v3736, %v3728
      %v3937 = vpack.c.b16 %v3737, %v3729
      %v3938 = vpack.c.b16 %v3738, %v3730
      %v3939 = vpack.c.b16 %v3739, %v3731
      %v3940 = vpack.c.b16 %v3740, %v3732
      %v3941 = vpack.c.b16 %v3749, %v3741
      %v3942 = vpack.c.b16 %v3750, %v3742
      %v3943 = vpack.c.b16 %v3751, %v3743
      %v3944 = vpack.c.b16 %v3752, %v3744
      %v3945 = vpack.c.b16 %v3753, %v3745
      %v3946 = vpack.c.b16 %v3754, %v3746
      %v3947 = vpack.c.b16 %v3755, %v3747
      %v3948 = vpack.c.b16 %v3756, %v3748
      %v3949 = vpack.c.b16 %v3765, %v3757
      %v3950 = vpack.c.b16 %v3766, %v3758
      %v3951 = vpack.c.b16 %v3767, %v3759
      %v3952 = vpack.c.b16 %v3768, %v3760
      %v3953 = vpack.c.b16 %v3769, %v3761
      %v3954 = vpack.c.b16 %v3770, %v3762
      %v3955 = vpack.c.b16 %v3771, %v3763
      %v3956 = vpack.c.b16 %v3772, %v3764
      %v3957 = vpack.c.b16 %v3781, %v3773
      %v3958 = vpack.c.b16 %v3782, %v3774
      %v3959 = vpack.c.b16 %v3783, %v3775
      %v3960 = vpack.c.b16 %v3784, %v3776
      %v3961 = vpack.c.b16 %v3785, %v3777
      %v3962 = vpack.c.b16 %v3786, %v3778
      %v3963 = vpack.c.b16 %v3787, %v3779
      %v3964 = vpack.c.b16 %v3788, %v3780
      %v3965 = vpack.c.b16 %v3797, %v3789
      %v3966 = vpack.c.b16 %v3798, %v3790
      %v3967 = vpack.c.b16 %v3799, %v3791
      %v3968 = vpack.c.b16 %v3800, %v3792
      %v3969 = vpack.c.b16 %v3801, %v3793
      %v3970 = vpack.c.b16 %v3802, %v3794
      %v3971 = vpack.c.b16 %v3803, %v3795
      %v3972 = vpack.c.b16 %v3804, %v3796
      %v3973 = vpack.c.b16 %v3813, %v3805
      %v3974 = vpack.c.b16 %v3814, %v3806
      %v3975 = vpack.c.b16 %v3815, %v3807
      %v3976 = vpack.c.b16 %v3816, %v3808
      %v3977 = vpack.c.b16 %v3817, %v3809
      %v3978 = vpack.c.b16 %v3818, %v3810
      %v3979 = vpack.c.b16 %v3819, %v3811
      %v3980 = vpack.c.b16 %v3820, %v3812
      %v3981 = vpack.c.b16 %v3829, %v3821
      %v3982 = vpack.c.b16 %v3830, %v3822
      %v3983 = vpack.c.b16 %v3831, %v3823
      %v3984 = vpack.c.b16 %v3832, %v3824
      %v3985 = vpack.c.b16 %v3833, %v3825
      %v3986 = vpack.c.b16 %v3834, %v3826
      %v3987 = vpack.c.b16 %v3835, %v3827
      %v3988 = vpack.c.b16 %v3836, %v3828
      %v3989 = vpack.c.b16 %v3845, %v3837
      %v3990 = vpack.c.b16 %v3846, %v3838
      %v3991 = vpack.c.b16 %v3847, %v3839
      %v3992 = vpack.c.b16 %v3848, %v3840
      %v3993 = vpack.c.b16 %v3849, %v3841
      %v3994 = vpack.c.b16 %v3850, %v3842
      %v3995 = vpack.c.b16 %v3851, %v3843
      %v3996 = vpack.c.b16 %v3852, %v3844
      %v3997 = vpack.c.b16 %v3861, %v3853
      %v3998 = vpack.c.b16 %v3862, %v3854
      %v3999 = vpack.c.b16 %v3863, %v3855
      %v4000 = vpack.c.b16 %v3864, %v3856
      %v4001 = vpack.c.b16 %v3865, %v3857
      %v4002 = vpack.c.b16 %v3866, %v3858
      %v4003 = vpack.c.b16 %v3867, %v3859
      %v4004 = vpack.c.b16 %v3868, %v3860
      %v4005 = vpack.c.b16 %v3877, %v3869
      %v4006 = vpack.c.b16 %v3878, %v3870
      %v4007 = vpack.c.b16 %v3879, %v3871
      %v4008 = vpack.c.b16 %v3880, %v3872
      %v4009 = vpack.c.b16 %v3881, %v3873
      %v4010 = vpack.c.b16 %v3882, %v3874
      %v4011 = vpack.c.b16 %v3883, %v3875
      %v4012 = vpack.c.b16 %v3884, %v3876
      %4141 = vmatprep.subr.bf16.mxu0 %v3886
      %4142 = vmatpush1.bf16.msra.mxu0 %v3885
      %4143 = vmatprep.subr.bf16.mxu0 %v3894
      %4144 = vmatpush1.bf16.msra.mxu0 %v3893
      %4145 = vmatprep.subr.bf16.mxu0 %v3902
      %4146 = vmatpush1.bf16.msra.mxu0 %v3901
      %4147 = vmatprep.subr.bf16.mxu0 %v3910
      %4148 = vmatpush1.bf16.msra.mxu0 %v3909
      %4149 = vmatprep.subr.bf16.mxu0 %v3918
      %4150 = vmatpush1.bf16.msra.mxu0 %v3917
      %4151 = vmatprep.subr.bf16.mxu0 %v3926
      %4152 = vmatpush1.bf16.msra.mxu0 %v3925
      %4153 = vmatprep.subr.bf16.mxu0 %v3934
      %4154 = vmatpush1.bf16.msra.mxu0 %v3933
      %4155 = vmatprep.subr.bf16.mxu0 %v3942
      %4156 = vmatpush1.bf16.msra.mxu0 %v3941
      %4157 = vmatprep.subr.bf16.mxu0 %v3950
      %4158 = vmatpush1.bf16.msra.mxu0 %v3949
      %4159 = vmatprep.subr.bf16.mxu0 %v3958
      %4160 = vmatpush1.bf16.msra.mxu0 %v3957
      %4161 = vmatprep.subr.bf16.mxu0 %v3966
      %4162 = vmatpush1.bf16.msra.mxu0 %v3965
      %4163 = vmatprep.subr.bf16.mxu0 %v3974
      %4164 = vmatpush1.bf16.msra.mxu0 %v3973
      %4165 = vmatprep.subr.bf16.mxu0 %v3982
      %4166 = vmatpush1.bf16.msra.mxu0 %v3981
      %4167 = vmatprep.subr.bf16.mxu0 %v3990
      %4168 = vmatpush1.bf16.msra.mxu0 %v3989
      %4169 = vmatprep.subr.bf16.mxu0 %v3998
      %4170 = vmatpush1.bf16.msra.mxu0 %v3997
      %4171 = vmatprep.subr.bf16.mxu0 %v4006
      %4172 = vmatpush1.bf16.msra.mxu0 %v4005
      %4173 = vmatprep.mubr.bf16.mxu0 %v3371
      %4174 = vmatmul.mubr.bf16.gmra.mrb[0].mxu0 %v3370
      %v4175 = vpop.f32.mrb[0].mxu0
      %v4176 = vadd.f32 0.0, %v4175
      %v4177 = vpop.f32.mrb[0].mxu0
      %v4178 = vadd.f32 0.0, %v4177
      %v4179 = vpop.f32.mrb[0].mxu0
      %v4180 = vpop.f32.mrb[0].mxu0
      %4181 = vdwg.mxu0
      %4182 = vmatprep.subr.bf16.mxu0 %v3888
      %4183 = vmatpush1.bf16.msra.mxu0 %v3887
      %4184 = vmatprep.subr.bf16.mxu0 %v3896
      %4185 = vmatpush1.bf16.msra.mxu0 %v3895
      %4186 = vmatprep.subr.bf16.mxu0 %v3904
      %4187 = vmatpush1.bf16.msra.mxu0 %v3903
      %4188 = vmatprep.subr.bf16.mxu0 %v3912
      %4189 = vmatpush1.bf16.msra.mxu0 %v3911
      %4190 = vmatprep.subr.bf16.mxu0 %v3920
      %4191 = vmatpush1.bf16.msra.mxu0 %v3919
      %4192 = vmatprep.subr.bf16.mxu0 %v3928
      %4193 = vmatpush1.bf16.msra.mxu0 %v3927
      %4194 = vmatprep.subr.bf16.mxu0 %v3936
      %4195 = vmatpush1.bf16.msra.mxu0 %v3935
      %4196 = vmatprep.subr.bf16.mxu0 %v3944
      %4197 = vmatpush1.bf16.msra.mxu0 %v3943
      %4198 = vmatprep.subr.bf16.mxu0 %v3952
      %4199 = vmatpush1.bf16.msra.mxu0 %v3951
      %4200 = vmatprep.subr.bf16.mxu0 %v3960
      %4201 = vmatpush1.bf16.msra.mxu0 %v3959
      %4202 = vmatprep.subr.bf16.mxu0 %v3968
      %4203 = vmatpush1.bf16.msra.mxu0 %v3967
      %4204 = vmatprep.subr.bf16.mxu0 %v3976
      %4205 = vmatpush1.bf16.msra.mxu0 %v3975
      %4206 = vmatprep.subr.bf16.mxu0 %v3984
      %4207 = vmatpush1.bf16.msra.mxu0 %v3983
      %4208 = vmatprep.subr.bf16.mxu0 %v3992
      %4209 = vmatpush1.bf16.msra.mxu0 %v3991
      %4210 = vmatprep.subr.bf16.mxu0 %v4000
      %4211 = vmatpush1.bf16.msra.mxu0 %v3999
      %4212 = vmatprep.subr.bf16.mxu0 %v4008
      %4213 = vmatpush1.bf16.msra.mxu0 %v4007
      %4214 = vmatprep.mubr.bf16.mxu0 %v3371
      %4215 = vmatmul.mubr.bf16.gmra.mrb[0].mxu0 %v3370
      %v4216 = vpop.f32.mrb[0].mxu0
      %v4217 = vadd.f32 0.0, %v4216
      %v4218 = vpop.f32.mrb[0].mxu0
      %v4219 = vadd.f32 0.0, %v4218
      %v4220 = vpop.f32.mrb[0].mxu0
      %v4221 = vpop.f32.mrb[0].mxu0
      %4222 = vdwg.mxu0
      %4223 = vmatprep.subr.bf16.mxu0 %v3890
      %4224 = vmatpush1.bf16.msra.mxu0 %v3889
      %4225 = vmatprep.subr.bf16.mxu0 %v3898
      %4226 = vmatpush1.bf16.msra.mxu0 %v3897
      %4227 = vmatprep.subr.bf16.mxu0 %v3906
      %4228 = vmatpush1.bf16.msra.mxu0 %v3905
      %4229 = vmatprep.subr.bf16.mxu0 %v3914
      %4230 = vmatpush1.bf16.msra.mxu0 %v3913
      %4231 = vmatprep.subr.bf16.mxu0 %v3922
      %4232 = vmatpush1.bf16.msra.mxu0 %v3921
      %4233 = vmatprep.subr.bf16.mxu0 %v3930
      %4234 = vmatpush1.bf16.msra.mxu0 %v3929
      %4235 = vmatprep.subr.bf16.mxu0 %v3938
      %4236 = vmatpush1.bf16.msra.mxu0 %v3937
      %4237 = vmatprep.subr.bf16.mxu0 %v3946
      %4238 = vmatpush1.bf16.msra.mxu0 %v3945
      %4239 = vmatprep.subr.bf16.mxu0 %v3954
      %4240 = vmatpush1.bf16.msra.mxu0 %v3953
      %4241 = vmatprep.subr.bf16.mxu0 %v3962
      %4242 = vmatpush1.bf16.msra.mxu0 %v3961
      %4243 = vmatprep.subr.bf16.mxu0 %v3970
      %4244 = vmatpush1.bf16.msra.mxu0 %v3969
      %4245 = vmatprep.subr.bf16.mxu0 %v3978
      %4246 = vmatpush1.bf16.msra.mxu0 %v3977
      %4247 = vmatprep.subr.bf16.mxu0 %v3986
      %4248 = vmatpush1.bf16.msra.mxu0 %v3985
      %4249 = vmatprep.subr.bf16.mxu0 %v3994
      %4250 = vmatpush1.bf16.msra.mxu0 %v3993
      %4251 = vmatprep.subr.bf16.mxu0 %v4002
      %4252 = vmatpush1.bf16.msra.mxu0 %v4001
      %4253 = vmatprep.subr.bf16.mxu0 %v4010
      %4254 = vmatpush1.bf16.msra.mxu0 %v4009
      %4255 = vmatprep.mubr.bf16.mxu0 %v3371
      %4256 = vmatmul.mubr.bf16.gmra.mrb[0].mxu0 %v3370
      %v4257 = vpop.f32.mrb[0].mxu0
      %v4258 = vadd.f32 0.0, %v4257
      %v4259 = vpop.f32.mrb[0].mxu0
      %v4260 = vadd.f32 0.0, %v4259
      %v4261 = vpop.f32.mrb[0].mxu0
      %v4262 = vpop.f32.mrb[0].mxu0
      %4263 = vdwg.mxu0
      %4264 = vmatprep.subr.bf16.mxu0 %v3892
      %4265 = vmatpush1.bf16.msra.mxu0 %v3891
      %4266 = vmatprep.subr.bf16.mxu0 %v3900
      %4267 = vmatpush1.bf16.msra.mxu0 %v3899
      %4268 = vmatprep.subr.bf16.mxu0 %v3908
      %4269 = vmatpush1.bf16.msra.mxu0 %v3907
      %4270 = vmatprep.subr.bf16.mxu0 %v3916
      %4271 = vmatpush1.bf16.msra.mxu0 %v3915
      %4272 = vmatprep.subr.bf16.mxu0 %v3924
      %4273 = vmatpush1.bf16.msra.mxu0 %v3923
      %4274 = vmatprep.subr.bf16.mxu0 %v3932
      %4275 = vmatpush1.bf16.msra.mxu0 %v3931
      %4276 = vmatprep.subr.bf16.mxu0 %v3940
      %4277 = vmatpush1.bf16.msra.mxu0 %v3939
      %4278 = vmatprep.subr.bf16.mxu0 %v3948
      %4279 = vmatpush1.bf16.msra.mxu0 %v3947
      %4280 = vmatprep.subr.bf16.mxu0 %v3956
      %4281 = vmatpush1.bf16.msra.mxu0 %v3955
      %4282 = vmatprep.subr.bf16.mxu0 %v3964
      %4283 = vmatpush1.bf16.msra.mxu0 %v3963
      %4284 = vmatprep.subr.bf16.mxu0 %v3972
      %4285 = vmatpush1.bf16.msra.mxu0 %v3971
      %4286 = vmatprep.subr.bf16.mxu0 %v3980
      %4287 = vmatpush1.bf16.msra.mxu0 %v3979
      %4288 = vmatprep.subr.bf16.mxu0 %v3988
      %4289 = vmatpush1.bf16.msra.mxu0 %v3987
      %4290 = vmatprep.subr.bf16.mxu0 %v3996
      %4291 = vmatpush1.bf16.msra.mxu0 %v3995
      %4292 = vmatprep.subr.bf16.mxu0 %v4004
      %4293 = vmatpush1.bf16.msra.mxu0 %v4003
      %4294 = vmatprep.subr.bf16.mxu0 %v4012
      %4295 = vmatpush1.bf16.msra.mxu0 %v4011
      %4296 = vmatprep.mubr.bf16.mxu0 %v3371
      %4297 = vmatmul.mubr.bf16.gmra.mrb[0].mxu0 %v3370
      %v4298 = vpop.f32.mrb[0].mxu0
      %v4299 = vadd.f32 0.0, %v4298
      %v4300 = vpop.f32.mrb[0].mxu0
      %v4301 = vadd.f32 0.0, %v4300
      %v4302 = vpop.f32.mrb[0].mxu0
      %v4303 = vpop.f32.mrb[0].mxu0
      %4304 = vdwg.mxu0
      %v4305 = vadd.f32 %v3316, %v4176
      %v4306 = vadd.f32 %v3317, %v4178
      %v4307 = vadd.f32 %v3318, %v4217
      %v4308 = vadd.f32 %v3319, %v4219
      %v4309 = vadd.f32 %v3320, %v4258
      %v4310 = vadd.f32 %v3321, %v4260
      %v4311 = vadd.f32 %v3322, %v4299
      %v4312 = vadd.f32 %v3323, %v4301
      %v4313 = vpack.c.bf16 %v4305, %v4305
      %v4314 = vpack.c.bf16 %v4306, %v4306
      %v4315 = vpack.c.bf16 %v4307, %v4307
      %v4316 = vpack.c.bf16 %v4308, %v4308
      %v4317 = vpack.c.bf16 %v4309, %v4309
      %v4318 = vpack.c.bf16 %v4310, %v4310
      %v4319 = vpack.c.bf16 %v4311, %v4311
      %v4320 = vpack.c.bf16 %v4312, %v4312
      %v4321 = vld [vmem:[%s347] sm:$0xff]
      %v4322 = vld [vmem:[%s347 + $0x8] sm:$0xff]
      %v4323 = vld [vmem:[%s347 + $0x10] sm:$0xff]
      %v4324 = vld [vmem:[%s347 + $0x18] sm:$0xff]
      %v4329 = vunpack.c.l.b16 %v4321
      %v4330 = vunpack.c.h.b16 %v4321
      %v4331 = vunpack.c.l.b16 %v4322
      %v4332 = vunpack.c.h.b16 %v4322
      %v4333 = vunpack.c.l.b16 %v4323
      %v4334 = vunpack.c.h.b16 %v4323
      %v4335 = vunpack.c.l.b16 %v4324
      %v4336 = vunpack.c.h.b16 %v4324
      %v4337 = vpack.c.b16 %v4329, %v4329
      %v4338 = vpack.c.b16 %v4330, %v4330
      %v4339 = vpack.c.b16 %v4331, %v4331
      %v4340 = vpack.c.b16 %v4332, %v4332
      %v4341 = vpack.c.b16 %v4333, %v4333
      %v4342 = vpack.c.b16 %v4334, %v4334
      %v4343 = vpack.c.b16 %v4335, %v4335
      %v4344 = vpack.c.b16 %v4336, %v4336
      %vm4345 = vcmask 1043456
      %v4348 = vsel %vm4345, %v4313, %v4337
      %v4351 = vsel %vm4345, %v4314, %v4338
      %v4354 = vsel %vm4345, %v4315, %v4339
      %v4357 = vsel %vm4345, %v4316, %v4340
      %v4360 = vsel %vm4345, %v4317, %v4341
      %v4363 = vsel %vm4345, %v4318, %v4342
      %v4366 = vsel %vm4345, %v4319, %v4343
      %v4369 = vsel %vm4345, %v4320, %v4344
      %v4370 = vlaneseq
      %v4371 = vand.u32 %v4370, 127
      %v4372 = vadd.s32 %v4371, 128
      %v4373 = vadd.s32 %v4371, 256
      %v4374 = vadd.s32 %v4371, 384
      %v4375 = vadd.s32 %v4371, 512
      %v4376 = vadd.s32 %v4371, 640
      %v4377 = vadd.s32 %v4371, 768
      %v4378 = vadd.s32 %v4371, 896
      %vm4379 = vcmp.lt.s32.totalorder %v4371, 0
      %v4380 = vsub.s32 0, %v4371
      %v4381 = vsel %vm4379, %v4380, %v4371
      %v4382 = vshrl.u32 %v4381, 5
      %v4383 = vand.u32 %v4381, 31
      %v4384 = vsub.s32 0, %v4383
      %v4385 = vsel %vm4379, %v4384, %v4383
      %vm4386 = vcmp.lt.s32.totalorder %v4372, 0
      %v4387 = vsub.s32 0, %v4372
      %v4388 = vsel %vm4386, %v4387, %v4372
      %v4389 = vshrl.u32 %v4388, 5
      %v4390 = vand.u32 %v4388, 31
      %v4391 = vsub.s32 0, %v4390
      %v4392 = vsel %vm4386, %v4391, %v4390
      %vm4393 = vcmp.lt.s32.totalorder %v4373, 0
      %v4394 = vsub.s32 0, %v4373
      %v4395 = vsel %vm4393, %v4394, %v4373
      %v4396 = vshrl.u32 %v4395, 5
      %v4397 = vand.u32 %v4395, 31
      %v4398 = vsub.s32 0, %v4397
      %v4399 = vsel %vm4393, %v4398, %v4397
      %vm4400 = vcmp.lt.s32.totalorder %v4374, 0
      %v4401 = vsub.s32 0, %v4374
      %v4402 = vsel %vm4400, %v4401, %v4374
      %v4403 = vshrl.u32 %v4402, 5
      %v4404 = vand.u32 %v4402, 31
      %v4405 = vsub.s32 0, %v4404
      %v4406 = vsel %vm4400, %v4405, %v4404
      %vm4407 = vcmp.lt.s32.totalorder %v4375, 0
      %v4408 = vsub.s32 0, %v4375
      %v4409 = vsel %vm4407, %v4408, %v4375
      %v4410 = vshrl.u32 %v4409, 5
      %v4411 = vand.u32 %v4409, 31
      %v4412 = vsub.s32 0, %v4411
      %v4413 = vsel %vm4407, %v4412, %v4411
      %vm4414 = vcmp.lt.s32.totalorder %v4376, 0
      %v4415 = vsub.s32 0, %v4376
      %v4416 = vsel %vm4414, %v4415, %v4376
      %v4417 = vshrl.u32 %v4416, 5
      %v4418 = vand.u32 %v4416, 31
      %v4419 = vsub.s32 0, %v4418
      %v4420 = vsel %vm4414, %v4419, %v4418
      %vm4421 = vcmp.lt.s32.totalorder %v4377, 0
      %v4422 = vsub.s32 0, %v4377
      %v4423 = vsel %vm4421, %v4422, %v4377
      %v4424 = vshrl.u32 %v4423, 5
      %v4425 = vand.u32 %v4423, 31
      %v4426 = vsub.s32 0, %v4425
      %v4427 = vsel %vm4421, %v4426, %v4425
      %vm4428 = vcmp.lt.s32.totalorder %v4378, 0
      %v4429 = vsub.s32 0, %v4378
      %v4430 = vsel %vm4428, %v4429, %v4378
      %v4431 = vshrl.u32 %v4430, 5
      %v4432 = vand.u32 %v4430, 31
      %v4433 = vsub.s32 0, %v4432
      %v4434 = vsel %vm4428, %v4433, %v4432
      %vm4435 = vcmp.ne.s32.totalorder %v4385, 0
      %vm4436 = vcmp.ne.s32.totalorder %v4392, 0
      %vm4437 = vcmp.ne.s32.totalorder %v4399, 0
      %vm4438 = vcmp.ne.s32.totalorder %v4406, 0
      %vm4439 = vcmp.ne.s32.totalorder %v4413, 0
      %vm4440 = vcmp.ne.s32.totalorder %v4420, 0
      %vm4441 = vcmp.ne.s32.totalorder %v4427, 0
      %vm4442 = vcmp.ne.s32.totalorder %v4434, 0
      %vm4443 = vcmp.lt.s32.totalorder %v4385, 0
      %vm4444 = vcmp.lt.s32.totalorder %v4392, 0
      %vm4445 = vcmp.lt.s32.totalorder %v4399, 0
      %vm4446 = vcmp.lt.s32.totalorder %v4406, 0
      %vm4447 = vcmp.lt.s32.totalorder %v4413, 0
      %vm4448 = vcmp.lt.s32.totalorder %v4420, 0
      %vm4449 = vcmp.lt.s32.totalorder %v4427, 0
      %vm4450 = vcmp.lt.s32.totalorder %v4434, 0
      %vm4451 = vmand %vm4443, %vm4435
      %vm4452 = vmand %vm4444, %vm4436
      %vm4453 = vmand %vm4445, %vm4437
      %vm4454 = vmand %vm4446, %vm4438
      %vm4455 = vmand %vm4447, %vm4439
      %vm4456 = vmand %vm4448, %vm4440
      %vm4457 = vmand %vm4449, %vm4441
      %vm4458 = vmand %vm4450, %vm4442
      %v4459 = vadd.s32 %v4385, 32
      %v4460 = vadd.s32 %v4392, 32
      %v4461 = vadd.s32 %v4399, 32
      %v4462 = vadd.s32 %v4406, 32
      %v4463 = vadd.s32 %v4413, 32
      %v4464 = vadd.s32 %v4420, 32
      %v4465 = vadd.s32 %v4427, 32
      %v4466 = vadd.s32 %v4434, 32
      %v4467 = vsel %vm4451, %v4459, %v4385
      %v4468 = vsel %vm4452, %v4460, %v4392
      %v4469 = vsel %vm4453, %v4461, %v4399
      %v4470 = vsel %vm4454, %v4462, %v4406
      %v4471 = vsel %vm4455, %v4463, %v4413
      %v4472 = vsel %vm4456, %v4464, %v4420
      %v4473 = vsel %vm4457, %v4465, %v4427
      %v4474 = vsel %vm4458, %v4466, %v4434
      %vm4475 = vcmp.ne.s32.totalorder %v4467, 0
      %vm4476 = vcmp.ne.s32.totalorder %v4468, 0
      %vm4477 = vcmp.ne.s32.totalorder %v4469, 0
      %vm4478 = vcmp.ne.s32.totalorder %v4470, 0
      %vm4479 = vcmp.ne.s32.totalorder %v4471, 0
      %vm4480 = vcmp.ne.s32.totalorder %v4472, 0
      %vm4481 = vcmp.ne.s32.totalorder %v4473, 0
      %vm4482 = vcmp.ne.s32.totalorder %v4474, 0
      %vm4483 = vcmp.ne.s32.totalorder %v4467, 31
      %vm4484 = vcmp.ne.s32.totalorder %v4468, 31
      %vm4485 = vcmp.ne.s32.totalorder %v4469, 31
      %vm4486 = vcmp.ne.s32.totalorder %v4470, 31
      %vm4487 = vcmp.ne.s32.totalorder %v4471, 31
      %vm4488 = vcmp.ne.s32.totalorder %v4472, 31
      %vm4489 = vcmp.ne.s32.totalorder %v4473, 31
      %vm4490 = vcmp.ne.s32.totalorder %v4474, 31
      %4499 = vrot.lane.b32.xlu0 %v4348, 33
      %v4500 = vpop.permute.xlu0 %4499
      %4501 = vrot.lane.b32.xlu0 %v4351, 33
      %v4502 = vpop.permute.xlu0 %4501
      %4503 = vrot.lane.b32.xlu0 %v4354, 33
      %v4504 = vpop.permute.xlu0 %4503
      %4505 = vrot.lane.b32.xlu0 %v4357, 33
      %v4506 = vpop.permute.xlu0 %4505
      %4507 = vrot.lane.b32.xlu0 %v4360, 33
      %v4508 = vpop.permute.xlu0 %4507
      %4509 = vrot.lane.b32.xlu0 %v4363, 33
      %v4510 = vpop.permute.xlu0 %4509
      %4511 = vrot.lane.b32.xlu0 %v4366, 33
      %v4512 = vpop.permute.xlu0 %4511
      %4513 = vrot.lane.b32.xlu0 %v4369, 33
      %v4514 = vpop.permute.xlu0 %4513
      %vm4515 = vcmask 269312
      %v4516 = vsel %vm4515, %v4500, %v4502
      %v4517 = vsel %vm4515, %v4502, %v4504
      %v4518 = vsel %vm4515, %v4504, %v4506
      %v4519 = vsel %vm4515, %v4506, %v4508
      %v4520 = vsel %vm4515, %v4508, %v4510
      %v4521 = vsel %vm4515, %v4510, %v4512
      %v4522 = vsel %vm4515, %v4512, %v4514
      %vm4530 = vcmask 269312
      %v4533 = vsel %vm4530, 0, %v4500
      %v4536 = vsel %vm4530, %v4514, 0
      %v4538 = vsel %vm4475, 1, 0
      %v4539 = vsel %vm4476, 1, 0
      %v4540 = vsel %vm4477, 1, 0
      %v4541 = vsel %vm4478, 1, 0
      %v4542 = vsel %vm4479, 1, 0
      %v4543 = vsel %vm4480, 1, 0
      %v4544 = vsel %vm4481, 1, 0
      %v4545 = vsel %vm4482, 1, 0
      %vm4546 = vcmp.eq.s32.totalorder %v4538, 1
      %vm4547 = vcmp.eq.s32.totalorder %v4539, 1
      %vm4548 = vcmp.eq.s32.totalorder %v4540, 1
      %vm4549 = vcmp.eq.s32.totalorder %v4541, 1
      %vm4550 = vcmp.eq.s32.totalorder %v4542, 1
      %vm4551 = vcmp.eq.s32.totalorder %v4543, 1
      %vm4552 = vcmp.eq.s32.totalorder %v4544, 1
      %vm4553 = vcmp.eq.s32.totalorder %v4545, 1
      %vm4554 = vmpackc.low %vm4547, %vm4546
      %vm4555 = vmpackc.low %vm4549, %vm4548
      %vm4556 = vmpackc.low %vm4551, %vm4550
      %vm4557 = vmpackc.low %vm4553, %vm4552
      %v4558 = vsel %vm4554, 65537, 0
      %v4559 = vsel %vm4555, 65537, 0
      %v4560 = vsel %vm4556, 65537, 0
      %v4561 = vsel %vm4557, 65537, 0
      %v4562 = vlaneseq
      %v4563 = vshrl.u32 %v4562, 7
      %v4564 = vsub.s32 0, %v4563
      %v4565 = vrot.slane %v4558, %v4564
      %v4566 = vlaneseq
      %v4567 = vshrl.u32 %v4566, 7
      %v4568 = vsub.s32 4, %v4567
      %v4569 = vrot.slane %v4558, %v4568
      %v4570 = vlaneseq
      %v4571 = vshrl.u32 %v4570, 7
      %v4572 = vsub.s32 0, %v4571
      %v4573 = vrot.slane %v4559, %v4572
      %v4574 = vlaneseq
      %v4575 = vshrl.u32 %v4574, 7
      %v4576 = vsub.s32 4, %v4575
      %v4577 = vrot.slane %v4559, %v4576
      %v4578 = vlaneseq
      %v4579 = vshrl.u32 %v4578, 7
      %v4580 = vsub.s32 0, %v4579
      %v4581 = vrot.slane %v4560, %v4580
      %v4582 = vlaneseq
      %v4583 = vshrl.u32 %v4582, 7
      %v4584 = vsub.s32 4, %v4583
      %v4585 = vrot.slane %v4560, %v4584
      %v4586 = vlaneseq
      %v4587 = vshrl.u32 %v4586, 7
      %v4588 = vsub.s32 0, %v4587
      %v4589 = vrot.slane %v4561, %v4588
      %v4590 = vlaneseq
      %v4591 = vshrl.u32 %v4590, 7
      %v4592 = vsub.s32 4, %v4591
      %v4593 = vrot.slane %v4561, %v4592
      %vm4594 = vcmp.ne.s16.totalorder %v4565, 0
      %vm4595 = vcmp.ne.s16.totalorder %v4569, 0
      %vm4596 = vcmp.ne.s16.totalorder %v4573, 0
      %vm4597 = vcmp.ne.s16.totalorder %v4577, 0
      %vm4598 = vcmp.ne.s16.totalorder %v4581, 0
      %vm4599 = vcmp.ne.s16.totalorder %v4585, 0
      %vm4600 = vcmp.ne.s16.totalorder %v4589, 0
      %vm4601 = vcmp.ne.s16.totalorder %v4593, 0
      %v4602 = vsel %vm4594, %v4533, 0
      %v4603 = vsel %vm4595, %v4516, 0
      %v4604 = vsel %vm4596, %v4517, 0
      %v4605 = vsel %vm4597, %v4518, 0
      %v4606 = vsel %vm4598, %v4519, 0
      %v4607 = vsel %vm4599, %v4520, 0
      %v4608 = vsel %vm4600, %v4521, 0
      %v4609 = vsel %vm4601, %v4522, 0
      %v4610 = vsel %vm4483, 1, 0
      %v4611 = vsel %vm4484, 1, 0
      %v4612 = vsel %vm4485, 1, 0
      %v4613 = vsel %vm4486, 1, 0
      %v4614 = vsel %vm4487, 1, 0
      %v4615 = vsel %vm4488, 1, 0
      %v4616 = vsel %vm4489, 1, 0
      %v4617 = vsel %vm4490, 1, 0
      %vm4618 = vcmp.eq.s32.totalorder %v4610, 1
      %vm4619 = vcmp.eq.s32.totalorder %v4611, 1
      %vm4620 = vcmp.eq.s32.totalorder %v4612, 1
      %vm4621 = vcmp.eq.s32.totalorder %v4613, 1
      %vm4622 = vcmp.eq.s32.totalorder %v4614, 1
      %vm4623 = vcmp.eq.s32.totalorder %v4615, 1
      %vm4624 = vcmp.eq.s32.totalorder %v4616, 1
      %vm4625 = vcmp.eq.s32.totalorder %v4617, 1
      %vm4626 = vmpackc.low %vm4619, %vm4618
      %vm4627 = vmpackc.low %vm4621, %vm4620
      %vm4628 = vmpackc.low %vm4623, %vm4622
      %vm4629 = vmpackc.low %vm4625, %vm4624
      %v4630 = vsel %vm4626, 65537, 0
      %v4631 = vsel %vm4627, 65537, 0
      %v4632 = vsel %vm4628, 65537, 0
      %v4633 = vsel %vm4629, 65537, 0
      %v4634 = vlaneseq
      %v4635 = vshrl.u32 %v4634, 7
      %v4636 = vsub.s32 0, %v4635
      %v4637 = vrot.slane %v4630, %v4636
      %v4638 = vlaneseq
      %v4639 = vshrl.u32 %v4638, 7
      %v4640 = vsub.s32 4, %v4639
      %v4641 = vrot.slane %v4630, %v4640
      %v4642 = vlaneseq
      %v4643 = vshrl.u32 %v4642, 7
      %v4644 = vsub.s32 0, %v4643
      %v4645 = vrot.slane %v4631, %v4644
      %v4646 = vlaneseq
      %v4647 = vshrl.u32 %v4646, 7
      %v4648 = vsub.s32 4, %v4647
      %v4649 = vrot.slane %v4631, %v4648
      %v4650 = vlaneseq
      %v4651 = vshrl.u32 %v4650, 7
      %v4652 = vsub.s32 0, %v4651
      %v4653 = vrot.slane %v4632, %v4652
      %v4654 = vlaneseq
      %v4655 = vshrl.u32 %v4654, 7
      %v4656 = vsub.s32 4, %v4655
      %v4657 = vrot.slane %v4632, %v4656
      %v4658 = vlaneseq
      %v4659 = vshrl.u32 %v4658, 7
      %v4660 = vsub.s32 0, %v4659
      %v4661 = vrot.slane %v4633, %v4660
      %v4662 = vlaneseq
      %v4663 = vshrl.u32 %v4662, 7
      %v4664 = vsub.s32 4, %v4663
      %v4665 = vrot.slane %v4633, %v4664
      %4666 = vrot.lane.b32.xlu0 %v4637, 2
      %v4667 = vpop.permute.xlu0 %4666
      %4668 = vrot.lane.b32.xlu0 %v4641, 2
      %v4669 = vpop.permute.xlu0 %4668
      %4670 = vrot.lane.b32.xlu0 %v4645, 2
      %v4671 = vpop.permute.xlu0 %4670
      %4672 = vrot.lane.b32.xlu0 %v4649, 2
      %v4673 = vpop.permute.xlu0 %4672
      %4674 = vrot.lane.b32.xlu0 %v4653, 2
      %v4675 = vpop.permute.xlu0 %4674
      %4676 = vrot.lane.b32.xlu0 %v4657, 2
      %v4677 = vpop.permute.xlu0 %4676
      %4678 = vrot.lane.b32.xlu0 %v4661, 2
      %v4679 = vpop.permute.xlu0 %4678
      %4680 = vrot.lane.b32.xlu0 %v4665, 2
      %v4681 = vpop.permute.xlu0 %4680
      %vm4682 = vcmask 15360
      %v4683 = vsel %vm4682, %v4667, %v4669
      %v4684 = vsel %vm4682, %v4669, %v4671
      %v4685 = vsel %vm4682, %v4671, %v4673
      %v4686 = vsel %vm4682, %v4673, %v4675
      %v4687 = vsel %vm4682, %v4675, %v4677
      %v4688 = vsel %vm4682, %v4677, %v4679
      %v4689 = vsel %vm4682, %v4679, %v4681
      %vm4690 = vcmp.ne.s16.totalorder %v4667, 0
      %vm4691 = vcmp.ne.s16.totalorder %v4683, 0
      %vm4692 = vcmp.ne.s16.totalorder %v4684, 0
      %vm4693 = vcmp.ne.s16.totalorder %v4685, 0
      %vm4694 = vcmp.ne.s16.totalorder %v4686, 0
      %vm4695 = vcmp.ne.s16.totalorder %v4687, 0
      %vm4696 = vcmp.ne.s16.totalorder %v4688, 0
      %vm4697 = vcmp.ne.s16.totalorder %v4689, 0
      %vm4698 = vcmp.ne.s16.totalorder %v4681, 0
      %v4699 = vsel %vm4690, %v4533, 0
      %v4700 = vsel %vm4691, %v4516, 0
      %v4701 = vsel %vm4692, %v4517, 0
      %v4702 = vsel %vm4693, %v4518, 0
      %v4703 = vsel %vm4694, %v4519, 0
      %v4704 = vsel %vm4695, %v4520, 0
      %v4705 = vsel %vm4696, %v4521, 0
      %v4706 = vsel %vm4697, %v4522, 0
      %v4707 = vsel %vm4698, %v4536, 0
      %4710 = vrot.lane.b32.xlu0 %v4533, 127
      %v4711 = vpop.permute.xlu0 %4710
      %4712 = vrot.lane.b32.xlu0 %v4516, 127
      %v4713 = vpop.permute.xlu0 %4712
      %4714 = vrot.lane.b32.xlu0 %v4517, 127
      %v4715 = vpop.permute.xlu0 %4714
      %4716 = vrot.lane.b32.xlu0 %v4518, 127
      %v4717 = vpop.permute.xlu0 %4716
      %4718 = vrot.lane.b32.xlu0 %v4519, 127
      %v4719 = vpop.permute.xlu0 %4718
      %4720 = vrot.lane.b32.xlu0 %v4520, 127
      %v4721 = vpop.permute.xlu0 %4720
      %4722 = vrot.lane.b32.xlu0 %v4521, 127
      %v4723 = vpop.permute.xlu0 %4722
      %4724 = vrot.lane.b32.xlu0 %v4522, 127
      %v4725 = vpop.permute.xlu0 %4724
      %4726 = vrot.lane.b32.xlu0 %v4536, 127
      %v4727 = vpop.permute.xlu0 %4726
      %vm4728 = vcmask 1039360
      %v4729 = vsel %vm4728, %v4711, %v4713
      %v4730 = vsel %vm4728, %v4713, %v4715
      %v4731 = vsel %vm4728, %v4715, %v4717
      %v4732 = vsel %vm4728, %v4717, %v4719
      %v4733 = vsel %vm4728, %v4719, %v4721
      %v4734 = vsel %vm4728, %v4721, %v4723
      %v4735 = vsel %vm4728, %v4723, %v4725
      %v4736 = vsel %vm4728, %v4725, %v4727
      %4754 = vrot.lane.b32.xlu0 %v4699, 126
      %v4755 = vpop.permute.xlu0 %4754
      %4756 = vrot.lane.b32.xlu0 %v4700, 126
      %v4757 = vpop.permute.xlu0 %4756
      %4758 = vrot.lane.b32.xlu0 %v4701, 126
      %v4759 = vpop.permute.xlu0 %4758
      %4760 = vrot.lane.b32.xlu0 %v4702, 126
      %v4761 = vpop.permute.xlu0 %4760
      %4762 = vrot.lane.b32.xlu0 %v4703, 126
      %v4763 = vpop.permute.xlu0 %4762
      %4764 = vrot.lane.b32.xlu0 %v4704, 126
      %v4765 = vpop.permute.xlu0 %4764
      %4766 = vrot.lane.b32.xlu0 %v4705, 126
      %v4767 = vpop.permute.xlu0 %4766
      %4768 = vrot.lane.b32.xlu0 %v4706, 126
      %v4769 = vpop.permute.xlu0 %4768
      %4770 = vrot.lane.b32.xlu0 %v4707, 126
      %v4771 = vpop.permute.xlu0 %4770
      %vm4772 = vcmask 1031168
      %v4773 = vsel %vm4772, %v4755, %v4757
      %v4774 = vsel %vm4772, %v4757, %v4759
      %v4775 = vsel %vm4772, %v4759, %v4761
      %v4776 = vsel %vm4772, %v4761, %v4763
      %v4777 = vsel %vm4772, %v4763, %v4765
      %v4778 = vsel %vm4772, %v4765, %v4767
      %v4779 = vsel %vm4772, %v4767, %v4769
      %v4780 = vsel %vm4772, %v4769, %v4771
      %v4789 = vld [vmem:[%s5] sm:$0xf]
      %4790 = vrot.lane.b32.xlu0 %v4565, 32
      %v4791 = vpop.permute.xlu0 %4790
      %4792 = vrot.lane.b32.xlu0 %v4569, 32
      %v4793 = vpop.permute.xlu0 %4792
      %4794 = vrot.lane.b32.xlu0 %v4573, 32
      %v4795 = vpop.permute.xlu0 %4794
      %4796 = vrot.lane.b32.xlu0 %v4577, 32
      %v4797 = vpop.permute.xlu0 %4796
      %4798 = vrot.lane.b32.xlu0 %v4581, 32
      %v4799 = vpop.permute.xlu0 %4798
      %4800 = vrot.lane.b32.xlu0 %v4585, 32
      %v4801 = vpop.permute.xlu0 %4800
      %4802 = vrot.lane.b32.xlu0 %v4589, 32
      %v4803 = vpop.permute.xlu0 %4802
      %4804 = vrot.lane.b32.xlu0 %v4593, 32
      %v4805 = vpop.permute.xlu0 %4804
      %vm4806 = vcmask 261120
      %v4807 = vsel %vm4806, %v4791, %v4793
      %v4808 = vsel %vm4806, %v4793, %v4795
      %v4809 = vsel %vm4806, %v4795, %v4797
      %v4810 = vsel %vm4806, %v4797, %v4799
      %v4811 = vsel %vm4806, %v4799, %v4801
      %v4812 = vsel %vm4806, %v4801, %v4803
      %v4813 = vsel %vm4806, %v4803, %v4805
      %vm4814 = vcmp.ne.s16.totalorder %v4791, 0
      %vm4815 = vcmp.ne.s16.totalorder %v4807, 0
      %vm4816 = vcmp.ne.s16.totalorder %v4808, 0
      %vm4817 = vcmp.ne.s16.totalorder %v4809, 0
      %vm4818 = vcmp.ne.s16.totalorder %v4810, 0
      %vm4819 = vcmp.ne.s16.totalorder %v4811, 0
      %vm4820 = vcmp.ne.s16.totalorder %v4812, 0
      %vm4821 = vcmp.ne.s16.totalorder %v4813, 0
      %vm4822 = vcmp.ne.s16.totalorder %v4805, 0
      %v4823 = vsel %vm4814, %v4533, 0
      %v4824 = vsel %vm4815, %v4516, 0
      %v4825 = vsel %vm4816, %v4517, 0
      %v4826 = vsel %vm4817, %v4518, 0
      %v4827 = vsel %vm4818, %v4519, 0
      %v4828 = vsel %vm4819, %v4520, 0
      %v4829 = vsel %vm4820, %v4521, 0
      %v4830 = vsel %vm4821, %v4522, 0
      %v4831 = vsel %vm4822, %v4536, 0
      %4832 = vrot.lane.b32.xlu0 %v4637, 34
      %v4833 = vpop.permute.xlu0 %4832
      %4834 = vrot.lane.b32.xlu0 %v4641, 34
      %v4835 = vpop.permute.xlu0 %4834
      %4836 = vrot.lane.b32.xlu0 %v4645, 34
      %v4837 = vpop.permute.xlu0 %4836
      %4838 = vrot.lane.b32.xlu0 %v4649, 34
      %v4839 = vpop.permute.xlu0 %4838
      %4840 = vrot.lane.b32.xlu0 %v4653, 34
      %v4841 = vpop.permute.xlu0 %4840
      %4842 = vrot.lane.b32.xlu0 %v4657, 34
      %v4843 = vpop.permute.xlu0 %4842
      %4844 = vrot.lane.b32.xlu0 %v4661, 34
      %v4845 = vpop.permute.xlu0 %4844
      %4846 = vrot.lane.b32.xlu0 %v4665, 34
      %v4847 = vpop.permute.xlu0 %4846
      %vm4848 = vcmask 277504
      %v4849 = vsel %vm4848, %v4833, %v4835
      %v4850 = vsel %vm4848, %v4835, %v4837
      %v4851 = vsel %vm4848, %v4837, %v4839
      %v4852 = vsel %vm4848, %v4839, %v4841
      %v4853 = vsel %vm4848, %v4841, %v4843
      %v4854 = vsel %vm4848, %v4843, %v4845
      %v4855 = vsel %vm4848, %v4845, %v4847
      %vm4856 = vcmp.ne.s16.totalorder %v4833, 0
      %vm4857 = vcmp.ne.s16.totalorder %v4849, 0
      %vm4858 = vcmp.ne.s16.totalorder %v4850, 0
      %vm4859 = vcmp.ne.s16.totalorder %v4851, 0
      %vm4860 = vcmp.ne.s16.totalorder %v4852, 0
      %vm4861 = vcmp.ne.s16.totalorder %v4853, 0
      %vm4862 = vcmp.ne.s16.totalorder %v4854, 0
      %vm4863 = vcmp.ne.s16.totalorder %v4855, 0
      %vm4864 = vcmp.ne.s16.totalorder %v4847, 0
      %v4865 = vsel %vm4856, %v4533, 0
      %v4866 = vsel %vm4857, %v4516, 0
      %v4867 = vsel %vm4858, %v4517, 0
      %v4868 = vsel %vm4859, %v4518, 0
      %v4869 = vsel %vm4860, %v4519, 0
      %v4870 = vsel %vm4861, %v4520, 0
      %v4871 = vsel %vm4862, %v4521, 0
      %v4872 = vsel %vm4863, %v4522, 0
      %v4873 = vsel %vm4864, %v4536, 0
      %4883 = vrot.lane.b32.xlu0 %v4865, 126
      %v4884 = vpop.permute.xlu0 %4883
      %4885 = vrot.lane.b32.xlu0 %v4866, 126
      %v4886 = vpop.permute.xlu0 %4885
      %4887 = vrot.lane.b32.xlu0 %v4867, 126
      %v4888 = vpop.permute.xlu0 %4887
      %4889 = vrot.lane.b32.xlu0 %v4868, 126
      %v4890 = vpop.permute.xlu0 %4889
      %4891 = vrot.lane.b32.xlu0 %v4869, 126
      %v4892 = vpop.permute.xlu0 %4891
      %4893 = vrot.lane.b32.xlu0 %v4870, 126
      %v4894 = vpop.permute.xlu0 %4893
      %4895 = vrot.lane.b32.xlu0 %v4871, 126
      %v4896 = vpop.permute.xlu0 %4895
      %4897 = vrot.lane.b32.xlu0 %v4872, 126
      %v4898 = vpop.permute.xlu0 %4897
      %4899 = vrot.lane.b32.xlu0 %v4873, 126
      %v4900 = vpop.permute.xlu0 %4899
      %v4901 = vsel %vm4772, %v4884, %v4886
      %v4902 = vsel %vm4772, %v4886, %v4888
      %v4903 = vsel %vm4772, %v4888, %v4890
      %v4904 = vsel %vm4772, %v4890, %v4892
      %v4905 = vsel %vm4772, %v4892, %v4894
      %v4906 = vsel %vm4772, %v4894, %v4896
      %v4907 = vsel %vm4772, %v4896, %v4898
      %v4908 = vsel %vm4772, %v4898, %v4900
      %s4909 = scalar_lea.vmem %s5, 4
      %v4910 = vld [vmem:[%s4909] sm:$0xf]
      %4920 = vrot.lane.b32.xlu0 %v4823, 96
      %v4921 = vpop.permute.xlu0 %4920
      %4922 = vrot.lane.b32.xlu0 %v4824, 96
      %v4923 = vpop.permute.xlu0 %4922
      %4924 = vrot.lane.b32.xlu0 %v4825, 96
      %v4925 = vpop.permute.xlu0 %4924
      %4926 = vrot.lane.b32.xlu0 %v4826, 96
      %v4927 = vpop.permute.xlu0 %4926
      %4928 = vrot.lane.b32.xlu0 %v4827, 96
      %v4929 = vpop.permute.xlu0 %4928
      %4930 = vrot.lane.b32.xlu0 %v4828, 96
      %v4931 = vpop.permute.xlu0 %4930
      %4932 = vrot.lane.b32.xlu0 %v4829, 96
      %v4933 = vpop.permute.xlu0 %4932
      %4934 = vrot.lane.b32.xlu0 %v4830, 96
      %v4935 = vpop.permute.xlu0 %4934
      %4936 = vrot.lane.b32.xlu0 %v4831, 96
      %v4937 = vpop.permute.xlu0 %4936
      %4938 = vrot.lane.b32.xlu0 %v4729, 96
      %v4939 = vpop.permute.xlu0 %4938
      %4940 = vrot.lane.b32.xlu0 %v4730, 96
      %v4941 = vpop.permute.xlu0 %4940
      %4942 = vrot.lane.b32.xlu0 %v4731, 96
      %v4943 = vpop.permute.xlu0 %4942
      %4944 = vrot.lane.b32.xlu0 %v4732, 96
      %v4945 = vpop.permute.xlu0 %4944
      %4946 = vrot.lane.b32.xlu0 %v4733, 96
      %v4947 = vpop.permute.xlu0 %4946
      %4948 = vrot.lane.b32.xlu0 %v4734, 96
      %v4949 = vpop.permute.xlu0 %4948
      %4950 = vrot.lane.b32.xlu0 %v4735, 96
      %v4951 = vpop.permute.xlu0 %4950
      %4952 = vrot.lane.b32.xlu0 %v4736, 96
      %v4953 = vpop.permute.xlu0 %4952
      %4954 = vrot.lane.b32.xlu0 %v4727, 96
      %v4955 = vpop.permute.xlu0 %4954
      %4956 = vrot.lane.b32.xlu0 %v4901, 96
      %v4957 = vpop.permute.xlu0 %4956
      %4958 = vrot.lane.b32.xlu0 %v4902, 96
      %v4959 = vpop.permute.xlu0 %4958
      %4960 = vrot.lane.b32.xlu0 %v4903, 96
      %v4961 = vpop.permute.xlu0 %4960
      %4962 = vrot.lane.b32.xlu0 %v4904, 96
      %v4963 = vpop.permute.xlu0 %4962
      %4964 = vrot.lane.b32.xlu0 %v4905, 96
      %v4965 = vpop.permute.xlu0 %4964
      %4966 = vrot.lane.b32.xlu0 %v4906, 96
      %v4967 = vpop.permute.xlu0 %4966
      %4968 = vrot.lane.b32.xlu0 %v4907, 96
      %v4969 = vpop.permute.xlu0 %4968
      %4970 = vrot.lane.b32.xlu0 %v4908, 96
      %v4971 = vpop.permute.xlu0 %4970
      %4972 = vrot.lane.b32.xlu0 %v4900, 96
      %v4973 = vpop.permute.xlu0 %4972
      %vm4974 = vcmask 785408
      %v4975 = vsel %vm4974, %v4921, %v4923
      %v4976 = vsel %vm4974, %v4923, %v4925
      %v4977 = vsel %vm4974, %v4925, %v4927
      %v4978 = vsel %vm4974, %v4927, %v4929
      %v4979 = vsel %vm4974, %v4929, %v4931
      %v4980 = vsel %vm4974, %v4931, %v4933
      %v4981 = vsel %vm4974, %v4933, %v4935
      %v4982 = vsel %vm4974, %v4935, %v4937
      %v4983 = vsel %vm4974, %v4939, %v4941
      %v4984 = vsel %vm4974, %v4941, %v4943
      %v4985 = vsel %vm4974, %v4943, %v4945
      %v4986 = vsel %vm4974, %v4945, %v4947
      %v4987 = vsel %vm4974, %v4947, %v4949
      %v4988 = vsel %vm4974, %v4949, %v4951
      %v4989 = vsel %vm4974, %v4951, %v4953
      %v4990 = vsel %vm4974, %v4953, %v4955
      %v4991 = vsel %vm4974, %v4957, %v4959
      %v4992 = vsel %vm4974, %v4959, %v4961
      %v4993 = vsel %vm4974, %v4961, %v4963
      %v4994 = vsel %vm4974, %v4963, %v4965
      %v4995 = vsel %vm4974, %v4965, %v4967
      %v4996 = vsel %vm4974, %v4967, %v4969
      %v4997 = vsel %vm4974, %v4969, %v4971
      %v4998 = vsel %vm4974, %v4971, %v4973
      %vm5023 = vcmask 392192
      %v5025 = vsel %vm5023, %v4910, 0
      %5027 = vmatprep.subr.bf16.mxu0 %v4976
      %5028 = vmatpush1.bf16.msra.mxu0 %v4975
      %5029 = vmatprep.subr.bf16.mxu0 %v4984
      %5030 = vmatpush1.bf16.msra.mxu0 %v4983
      %5031 = vmatprep.subr.bf16.mxu0 %v4992
      %5032 = vmatpush1.bf16.msra.mxu0 %v4991
      %5033 = vmatprep.subr.bf16.mxu0 0
      %5034 = vmatpush1.bf16.msra.mxu0 0
      %5035 = vmatprep.subr.bf16.mxu0 0
      %5036 = vmatpush1.bf16.msra.mxu0 0
      %5037 = vmatprep.subr.bf16.mxu0 0
      %5038 = vmatpush1.bf16.msra.mxu0 0
      %5039 = vmatprep.subr.bf16.mxu0 0
      %5040 = vmatpush1.bf16.msra.mxu0 0
      %5041 = vmatprep.subr.bf16.mxu0 0
      %5042 = vmatpush1.bf16.msra.mxu0 0
      %5043 = vmatprep.subr.bf16.mxu0 0
      %5044 = vmatpush1.bf16.msra.mxu0 0
      %5045 = vmatprep.subr.bf16.mxu0 0
      %5046 = vmatpush1.bf16.msra.mxu0 0
      %5047 = vmatprep.subr.bf16.mxu0 0
      %5048 = vmatpush1.bf16.msra.mxu0 0
      %5049 = vmatprep.subr.bf16.mxu0 0
      %5050 = vmatpush1.bf16.msra.mxu0 0
      %5051 = vmatprep.subr.bf16.mxu0 0
      %5052 = vmatpush1.bf16.msra.mxu0 0
      %5053 = vmatprep.subr.bf16.mxu0 0
      %5054 = vmatpush1.bf16.msra.mxu0 0
      %5055 = vmatprep.subr.bf16.mxu0 0
      %5056 = vmatpush1.bf16.msra.mxu0 0
      %5057 = vmatprep.subr.bf16.mxu0 0
      %5058 = vmatpush1.bf16.msra.mxu0 0
      %5059 = vmatprep.mubr.bf16.mxu0 0
      %5060 = vmatmul.mubr.bf16.gmra.mrb[0].mxu0 %v5025
      %v5061 = vpop.f32.mrb[0].mxu0
      %v5062 = vadd.f32 0.0, %v5061
      %v5063 = vpop.f32.mrb[0].mxu0
      %v5064 = vadd.f32 0.0, %v5063
      %v5065 = vpop.f32.mrb[0].mxu0
      %v5066 = vpop.f32.mrb[0].mxu0
      %5067 = vdwg.mxu0
      %5068 = vmatprep.subr.bf16.mxu0 %v4978
      %5069 = vmatpush1.bf16.msra.mxu0 %v4977
      %5070 = vmatprep.subr.bf16.mxu0 %v4986
      %5071 = vmatpush1.bf16.msra.mxu0 %v4985
      %5072 = vmatprep.subr.bf16.mxu0 %v4994
      %5073 = vmatpush1.bf16.msra.mxu0 %v4993
      %5074 = vmatprep.subr.bf16.mxu0 0
      %5075 = vmatpush1.bf16.msra.mxu0 0
      %5076 = vmatprep.subr.bf16.mxu0 0
      %5077 = vmatpush1.bf16.msra.mxu0 0
      %5078 = vmatprep.subr.bf16.mxu0 0
      %5079 = vmatpush1.bf16.msra.mxu0 0
      %5080 = vmatprep.subr.bf16.mxu0 0
      %5081 = vmatpush1.bf16.msra.mxu0 0
      %5082 = vmatprep.subr.bf16.mxu0 0
      %5083 = vmatpush1.bf16.msra.mxu0 0
      %5084 = vmatprep.subr.bf16.mxu0 0
      %5085 = vmatpush1.bf16.msra.mxu0 0
      %5086 = vmatprep.subr.bf16.mxu0 0
      %5087 = vmatpush1.bf16.msra.mxu0 0
      %5088 = vmatprep.subr.bf16.mxu0 0
      %5089 = vmatpush1.bf16.msra.mxu0 0
      %5090 = vmatprep.subr.bf16.mxu0 0
      %5091 = vmatpush1.bf16.msra.mxu0 0
      %5092 = vmatprep.subr.bf16.mxu0 0
      %5093 = vmatpush1.bf16.msra.mxu0 0
      %5094 = vmatprep.subr.bf16.mxu0 0
      %5095 = vmatpush1.bf16.msra.mxu0 0
      %5096 = vmatprep.subr.bf16.mxu0 0
      %5097 = vmatpush1.bf16.msra.mxu0 0
      %5098 = vmatprep.subr.bf16.mxu0 0
      %5099 = vmatpush1.bf16.msra.mxu0 0
      %5100 = vmatprep.mubr.bf16.mxu0 0
      %5101 = vmatmul.mubr.bf16.gmra.mrb[0].mxu0 %v5025
      %v5102 = vpop.f32.mrb[0].mxu0
      %v5103 = vadd.f32 0.0, %v5102
      %v5104 = vpop.f32.mrb[0].mxu0
      %v5105 = vadd.f32 0.0, %v5104
      %v5106 = vpop.f32.mrb[0].mxu0
      %v5107 = vpop.f32.mrb[0].mxu0
      %5108 = vdwg.mxu0
      %5109 = vmatprep.subr.bf16.mxu0 %v4980
      %5110 = vmatpush1.bf16.msra.mxu0 %v4979
      %5111 = vmatprep.subr.bf16.mxu0 %v4988
      %5112 = vmatpush1.bf16.msra.mxu0 %v4987
      %5113 = vmatprep.subr.bf16.mxu0 %v4996
      %5114 = vmatpush1.bf16.msra.mxu0 %v4995
      %5115 = vmatprep.subr.bf16.mxu0 0
      %5116 = vmatpush1.bf16.msra.mxu0 0
      %5117 = vmatprep.subr.bf16.mxu0 0
      %5118 = vmatpush1.bf16.msra.mxu0 0
      %5119 = vmatprep.subr.bf16.mxu0 0
      %5120 = vmatpush1.bf16.msra.mxu0 0
      %5121 = vmatprep.subr.bf16.mxu0 0
      %5122 = vmatpush1.bf16.msra.mxu0 0
      %5123 = vmatprep.subr.bf16.mxu0 0
      %5124 = vmatpush1.bf16.msra.mxu0 0
      %5125 = vmatprep.subr.bf16.mxu0 0
      %5126 = vmatpush1.bf16.msra.mxu0 0
      %5127 = vmatprep.subr.bf16.mxu0 0
      %5128 = vmatpush1.bf16.msra.mxu0 0
      %5129 = vmatprep.subr.bf16.mxu0 0
      %5130 = vmatpush1.bf16.msra.mxu0 0
      %5131 = vmatprep.subr.bf16.mxu0 0
      %5132 = vmatpush1.bf16.msra.mxu0 0
      %5133 = vmatprep.subr.bf16.mxu0 0
      %5134 = vmatpush1.bf16.msra.mxu0 0
      %5135 = vmatprep.subr.bf16.mxu0 0
      %5136 = vmatpush1.bf16.msra.mxu0 0
      %5137 = vmatprep.subr.bf16.mxu0 0
      %5138 = vmatpush1.bf16.msra.mxu0 0
      %5139 = vmatprep.subr.bf16.mxu0 0
      %5140 = vmatpush1.bf16.msra.mxu0 0
      %5141 = vmatprep.mubr.bf16.mxu0 0
      %5142 = vmatmul.mubr.bf16.gmra.mrb[0].mxu0 %v5025
      %v5143 = vpop.f32.mrb[0].mxu0
      %v5144 = vadd.f32 0.0, %v5143
      %v5145 = vpop.f32.mrb[0].mxu0
      %v5146 = vadd.f32 0.0, %v5145
      %v5147 = vpop.f32.mrb[0].mxu0
      %v5148 = vpop.f32.mrb[0].mxu0
      %5149 = vdwg.mxu0
      %5150 = vmatprep.subr.bf16.mxu0 %v4982
      %5151 = vmatpush1.bf16.msra.mxu0 %v4981
      %5152 = vmatprep.subr.bf16.mxu0 %v4990
      %5153 = vmatpush1.bf16.msra.mxu0 %v4989
      %5154 = vmatprep.subr.bf16.mxu0 %v4998
      %5155 = vmatpush1.bf16.msra.mxu0 %v4997
      %5156 = vmatprep.subr.bf16.mxu0 0
      %5157 = vmatpush1.bf16.msra.mxu0 0
      %5158 = vmatprep.subr.bf16.mxu0 0
      %5159 = vmatpush1.bf16.msra.mxu0 0
      %5160 = vmatprep.subr.bf16.mxu0 0
      %5161 = vmatpush1.bf16.msra.mxu0 0
      %5162 = vmatprep.subr.bf16.mxu0 0
      %5163 = vmatpush1.bf16.msra.mxu0 0
      %5164 = vmatprep.subr.bf16.mxu0 0
      %5165 = vmatpush1.bf16.msra.mxu0 0
      %5166 = vmatprep.subr.bf16.mxu0 0
      %5167 = vmatpush1.bf16.msra.mxu0 0
      %5168 = vmatprep.subr.bf16.mxu0 0
      %5169 = vmatpush1.bf16.msra.mxu0 0
      %5170 = vmatprep.subr.bf16.mxu0 0
      %5171 = vmatpush1.bf16.msra.mxu0 0
      %5172 = vmatprep.subr.bf16.mxu0 0
      %5173 = vmatpush1.bf16.msra.mxu0 0
      %5174 = vmatprep.subr.bf16.mxu0 0
      %5175 = vmatpush1.bf16.msra.mxu0 0
      %5176 = vmatprep.subr.bf16.mxu0 0
      %5177 = vmatpush1.bf16.msra.mxu0 0
      %5178 = vmatprep.subr.bf16.mxu0 0
      %5179 = vmatpush1.bf16.msra.mxu0 0
      %5180 = vmatprep.subr.bf16.mxu0 0
      %5181 = vmatpush1.bf16.msra.mxu0 0
      %5182 = vmatprep.mubr.bf16.mxu0 0
      %5183 = vmatmul.mubr.bf16.gmra.mrb[0].mxu0 %v5025
      %v5184 = vpop.f32.mrb[0].mxu0
      %v5185 = vadd.f32 0.0, %v5184
      %v5186 = vpop.f32.mrb[0].mxu0
      %v5187 = vadd.f32 0.0, %v5186
      %v5188 = vpop.f32.mrb[0].mxu0
      %v5189 = vpop.f32.mrb[0].mxu0
      %5190 = vdwg.mxu0
      %v5192 = vsel %vm5023, %v4789, 0
      %5194 = vmatprep.subr.bf16.mxu0 %v4603
      %5195 = vmatpush1.bf16.msra.mxu0 %v4602
      %5196 = vmatprep.subr.bf16.mxu0 %v4730
      %5197 = vmatpush1.bf16.msra.mxu0 %v4729
      %5198 = vmatprep.subr.bf16.mxu0 %v4774
      %5199 = vmatpush1.bf16.msra.mxu0 %v4773
      %5200 = vmatprep.subr.bf16.mxu0 0
      %5201 = vmatpush1.bf16.msra.mxu0 0
      %5202 = vmatprep.subr.bf16.mxu0 0
      %5203 = vmatpush1.bf16.msra.mxu0 0
      %5204 = vmatprep.subr.bf16.mxu0 0
      %5205 = vmatpush1.bf16.msra.mxu0 0
      %5206 = vmatprep.subr.bf16.mxu0 0
      %5207 = vmatpush1.bf16.msra.mxu0 0
      %5208 = vmatprep.subr.bf16.mxu0 0
      %5209 = vmatpush1.bf16.msra.mxu0 0
      %5210 = vmatprep.subr.bf16.mxu0 0
      %5211 = vmatpush1.bf16.msra.mxu0 0
      %5212 = vmatprep.subr.bf16.mxu0 0
      %5213 = vmatpush1.bf16.msra.mxu0 0
      %5214 = vmatprep.subr.bf16.mxu0 0
      %5215 = vmatpush1.bf16.msra.mxu0 0
      %5216 = vmatprep.subr.bf16.mxu0 0
      %5217 = vmatpush1.bf16.msra.mxu0 0
      %5218 = vmatprep.subr.bf16.mxu0 0
      %5219 = vmatpush1.bf16.msra.mxu0 0
      %5220 = vmatprep.subr.bf16.mxu0 0
      %5221 = vmatpush1.bf16.msra.mxu0 0
      %5222 = vmatprep.subr.bf16.mxu0 0
      %5223 = vmatpush1.bf16.msra.mxu0 0
      %5224 = vmatprep.subr.bf16.mxu0 0
      %5225 = vmatpush1.bf16.msra.mxu0 0
      %5226 = vmatprep.mubr.bf16.mxu0 0
      %5227 = vmatmul.mubr.bf16.gmra.mrb[0].mxu0 %v5192
      %v5228 = vpop.f32.mrb[0].mxu0
      %v5229 = vadd.f32 %v5062, %v5228
      %v5230 = vpop.f32.mrb[0].mxu0
      %v5231 = vadd.f32 %v5064, %v5230
      %v5232 = vpop.f32.mrb[0].mxu0
      %v5233 = vpop.f32.mrb[0].mxu0
      %5234 = vdwg.mxu0
      %5235 = vmatprep.subr.bf16.mxu0 %v4605
      %5236 = vmatpush1.bf16.msra.mxu0 %v4604
      %5237 = vmatprep.subr.bf16.mxu0 %v4732
      %5238 = vmatpush1.bf16.msra.mxu0 %v4731
      %5239 = vmatprep.subr.bf16.mxu0 %v4776
      %5240 = vmatpush1.bf16.msra.mxu0 %v4775
      %5241 = vmatprep.subr.bf16.mxu0 0
      %5242 = vmatpush1.bf16.msra.mxu0 0
      %5243 = vmatprep.subr.bf16.mxu0 0
      %5244 = vmatpush1.bf16.msra.mxu0 0
      %5245 = vmatprep.subr.bf16.mxu0 0
      %5246 = vmatpush1.bf16.msra.mxu0 0
      %5247 = vmatprep.subr.bf16.mxu0 0
      %5248 = vmatpush1.bf16.msra.mxu0 0
      %5249 = vmatprep.subr.bf16.mxu0 0
      %5250 = vmatpush1.bf16.msra.mxu0 0
      %5251 = vmatprep.subr.bf16.mxu0 0
      %5252 = vmatpush1.bf16.msra.mxu0 0
      %5253 = vmatprep.subr.bf16.mxu0 0
      %5254 = vmatpush1.bf16.msra.mxu0 0
      %5255 = vmatprep.subr.bf16.mxu0 0
      %5256 = vmatpush1.bf16.msra.mxu0 0
      %5257 = vmatprep.subr.bf16.mxu0 0
      %5258 = vmatpush1.bf16.msra.mxu0 0
      %5259 = vmatprep.subr.bf16.mxu0 0
      %5260 = vmatpush1.bf16.msra.mxu0 0
      %5261 = vmatprep.subr.bf16.mxu0 0
      %5262 = vmatpush1.bf16.msra.mxu0 0
      %5263 = vmatprep.subr.bf16.mxu0 0
      %5264 = vmatpush1.bf16.msra.mxu0 0
      %5265 = vmatprep.subr.bf16.mxu0 0
      %5266 = vmatpush1.bf16.msra.mxu0 0
      %5267 = vmatprep.mubr.bf16.mxu0 0
      %5268 = vmatmul.mubr.bf16.gmra.mrb[0].mxu0 %v5192
      %v5269 = vpop.f32.mrb[0].mxu0
      %v5270 = vadd.f32 %v5103, %v5269
      %v5271 = vpop.f32.mrb[0].mxu0
      %v5272 = vadd.f32 %v5105, %v5271
      %v5273 = vpop.f32.mrb[0].mxu0
      %v5274 = vpop.f32.mrb[0].mxu0
      %5275 = vdwg.mxu0
      %5276 = vmatprep.subr.bf16.mxu0 %v4607
      %5277 = vmatpush1.bf16.msra.mxu0 %v4606
      %5278 = vmatprep.subr.bf16.mxu0 %v4734
      %5279 = vmatpush1.bf16.msra.mxu0 %v4733
      %5280 = vmatprep.subr.bf16.mxu0 %v4778
      %5281 = vmatpush1.bf16.msra.mxu0 %v4777
      %5282 = vmatprep.subr.bf16.mxu0 0
      %5283 = vmatpush1.bf16.msra.mxu0 0
      %5284 = vmatprep.subr.bf16.mxu0 0
      %5285 = vmatpush1.bf16.msra.mxu0 0
      %5286 = vmatprep.subr.bf16.mxu0 0
      %5287 = vmatpush1.bf16.msra.mxu0 0
      %5288 = vmatprep.subr.bf16.mxu0 0
      %5289 = vmatpush1.bf16.msra.mxu0 0
      %5290 = vmatprep.subr.bf16.mxu0 0
      %5291 = vmatpush1.bf16.msra.mxu0 0
      %5292 = vmatprep.subr.bf16.mxu0 0
      %5293 = vmatpush1.bf16.msra.mxu0 0
      %5294 = vmatprep.subr.bf16.mxu0 0
      %5295 = vmatpush1.bf16.msra.mxu0 0
      %5296 = vmatprep.subr.bf16.mxu0 0
      %5297 = vmatpush1.bf16.msra.mxu0 0
      %5298 = vmatprep.subr.bf16.mxu0 0
      %5299 = vmatpush1.bf16.msra.mxu0 0
      %5300 = vmatprep.subr.bf16.mxu0 0
      %5301 = vmatpush1.bf16.msra.mxu0 0
      %5302 = vmatprep.subr.bf16.mxu0 0
      %5303 = vmatpush1.bf16.msra.mxu0 0
      %5304 = vmatprep.subr.bf16.mxu0 0
      %5305 = vmatpush1.bf16.msra.mxu0 0
      %5306 = vmatprep.subr.bf16.mxu0 0
      %5307 = vmatpush1.bf16.msra.mxu0 0
      %5308 = vmatprep.mubr.bf16.mxu0 0
      %5309 = vmatmul.mubr.bf16.gmra.mrb[0].mxu0 %v5192
      %v5310 = vpop.f32.mrb[0].mxu0
      %v5311 = vadd.f32 %v5144, %v5310
      %v5312 = vpop.f32.mrb[0].mxu0
      %v5313 = vadd.f32 %v5146, %v5312
      %v5314 = vpop.f32.mrb[0].mxu0
      %v5315 = vpop.f32.mrb[0].mxu0
      %5316 = vdwg.mxu0
      %5317 = vmatprep.subr.bf16.mxu0 %v4609
      %5318 = vmatpush1.bf16.msra.mxu0 %v4608
      %5319 = vmatprep.subr.bf16.mxu0 %v4736
      %5320 = vmatpush1.bf16.msra.mxu0 %v4735
      %5321 = vmatprep.subr.bf16.mxu0 %v4780
      %5322 = vmatpush1.bf16.msra.mxu0 %v4779
      %5323 = vmatprep.subr.bf16.mxu0 0
      %5324 = vmatpush1.bf16.msra.mxu0 0
      %5325 = vmatprep.subr.bf16.mxu0 0
      %5326 = vmatpush1.bf16.msra.mxu0 0
      %5327 = vmatprep.subr.bf16.mxu0 0
      %5328 = vmatpush1.bf16.msra.mxu0 0
      %5329 = vmatprep.subr.bf16.mxu0 0
      %5330 = vmatpush1.bf16.msra.mxu0 0
      %5331 = vmatprep.subr.bf16.mxu0 0
      %5332 = vmatpush1.bf16.msra.mxu0 0
      %5333 = vmatprep.subr.bf16.mxu0 0
      %5334 = vmatpush1.bf16.msra.mxu0 0
      %5335 = vmatprep.subr.bf16.mxu0 0
      %5336 = vmatpush1.bf16.msra.mxu0 0
      %5337 = vmatprep.subr.bf16.mxu0 0
      %5338 = vmatpush1.bf16.msra.mxu0 0
      %5339 = vmatprep.subr.bf16.mxu0 0
      %5340 = vmatpush1.bf16.msra.mxu0 0
      %5341 = vmatprep.subr.bf16.mxu0 0
      %5342 = vmatpush1.bf16.msra.mxu0 0
      %5343 = vmatprep.subr.bf16.mxu0 0
      %5344 = vmatpush1.bf16.msra.mxu0 0
      %5345 = vmatprep.subr.bf16.mxu0 0
      %5346 = vmatpush1.bf16.msra.mxu0 0
      %5347 = vmatprep.subr.bf16.mxu0 0
      %5348 = vmatpush1.bf16.msra.mxu0 0
      %5349 = vmatprep.mubr.bf16.mxu0 0
      %5350 = vmatmul.mubr.bf16.gmra.mrb[0].mxu0 %v5192
      %v5351 = vpop.f32.mrb[0].mxu0
      %v5352 = vadd.f32 %v5185, %v5351
      %v5353 = vpop.f32.mrb[0].mxu0
      %v5354 = vadd.f32 %v5187, %v5353
      %v5355 = vpop.f32.mrb[0].mxu0
      %v5356 = vpop.f32.mrb[0].mxu0
      %5357 = vdwg.mxu0
      %5358 = vrot.lane.b32.xlu0 %v4565, 64
      %v5359 = vpop.permute.xlu0 %5358
      %5360 = vrot.lane.b32.xlu0 %v4569, 64
      %v5361 = vpop.permute.xlu0 %5360
      %5362 = vrot.lane.b32.xlu0 %v4573, 64
      %v5363 = vpop.permute.xlu0 %5362
      %5364 = vrot.lane.b32.xlu0 %v4577, 64
      %v5365 = vpop.permute.xlu0 %5364
      %5366 = vrot.lane.b32.xlu0 %v4581, 64
      %v5367 = vpop.permute.xlu0 %5366
      %5368 = vrot.lane.b32.xlu0 %v4585, 64
      %v5369 = vpop.permute.xlu0 %5368
      %5370 = vrot.lane.b32.xlu0 %v4589, 64
      %v5371 = vpop.permute.xlu0 %5370
      %5372 = vrot.lane.b32.xlu0 %v4593, 64
      %v5373 = vpop.permute.xlu0 %5372
      %vm5374 = vcmask 523264
      %v5375 = vsel %vm5374, %v5359, %v5361
      %v5376 = vsel %vm5374, %v5361, %v5363
      %v5377 = vsel %vm5374, %v5363, %v5365
      %v5378 = vsel %vm5374, %v5365, %v5367
      %v5379 = vsel %vm5374, %v5367, %v5369
      %v5380 = vsel %vm5374, %v5369, %v5371
      %v5381 = vsel %vm5374, %v5371, %v5373
      %vm5382 = vcmp.ne.s16.totalorder %v5359, 0
      %vm5383 = vcmp.ne.s16.totalorder %v5375, 0
      %vm5384 = vcmp.ne.s16.totalorder %v5376, 0
      %vm5385 = vcmp.ne.s16.totalorder %v5377, 0
      %vm5386 = vcmp.ne.s16.totalorder %v5378, 0
      %vm5387 = vcmp.ne.s16.totalorder %v5379, 0
      %vm5388 = vcmp.ne.s16.totalorder %v5380, 0
      %vm5389 = vcmp.ne.s16.totalorder %v5381, 0
      %vm5390 = vcmp.ne.s16.totalorder %v5373, 0
      %v5391 = vsel %vm5382, %v4533, 0
      %v5392 = vsel %vm5383, %v4516, 0
      %v5393 = vsel %vm5384, %v4517, 0
      %v5394 = vsel %vm5385, %v4518, 0
      %v5395 = vsel %vm5386, %v4519, 0
      %v5396 = vsel %vm5387, %v4520, 0
      %v5397 = vsel %vm5388, %v4521, 0
      %v5398 = vsel %vm5389, %v4522, 0
      %v5399 = vsel %vm5390, %v4536, 0
      %5400 = vrot.lane.b32.xlu0 %v4637, 66
      %v5401 = vpop.permute.xlu0 %5400
      %5402 = vrot.lane.b32.xlu0 %v4641, 66
      %v5403 = vpop.permute.xlu0 %5402
      %5404 = vrot.lane.b32.xlu0 %v4645, 66
      %v5405 = vpop.permute.xlu0 %5404
      %5406 = vrot.lane.b32.xlu0 %v4649, 66
      %v5407 = vpop.permute.xlu0 %5406
      %5408 = vrot.lane.b32.xlu0 %v4653, 66
      %v5409 = vpop.permute.xlu0 %5408
      %5410 = vrot.lane.b32.xlu0 %v4657, 66
      %v5411 = vpop.permute.xlu0 %5410
      %5412 = vrot.lane.b32.xlu0 %v4661, 66
      %v5413 = vpop.permute.xlu0 %5412
      %5414 = vrot.lane.b32.xlu0 %v4665, 66
      %v5415 = vpop.permute.xlu0 %5414
      %vm5416 = vcmask 539648
      %v5417 = vsel %vm5416, %v5401, %v5403
      %v5418 = vsel %vm5416, %v5403, %v5405
      %v5419 = vsel %vm5416, %v5405, %v5407
      %v5420 = vsel %vm5416, %v5407, %v5409
      %v5421 = vsel %vm5416, %v5409, %v5411
      %v5422 = vsel %vm5416, %v5411, %v5413
      %v5423 = vsel %vm5416, %v5413, %v5415
      %vm5424 = vcmp.ne.s16.totalorder %v5401, 0
      %vm5425 = vcmp.ne.s16.totalorder %v5417, 0
      %vm5426 = vcmp.ne.s16.totalorder %v5418, 0
      %vm5427 = vcmp.ne.s16.totalorder %v5419, 0
      %vm5428 = vcmp.ne.s16.totalorder %v5420, 0
      %vm5429 = vcmp.ne.s16.totalorder %v5421, 0
      %vm5430 = vcmp.ne.s16.totalorder %v5422, 0
      %vm5431 = vcmp.ne.s16.totalorder %v5423, 0
      %vm5432 = vcmp.ne.s16.totalorder %v5415, 0
      %v5433 = vsel %vm5424, %v4533, 0
      %v5434 = vsel %vm5425, %v4516, 0
      %v5435 = vsel %vm5426, %v4517, 0
      %v5436 = vsel %vm5427, %v4518, 0
      %v5437 = vsel %vm5428, %v4519, 0
      %v5438 = vsel %vm5429, %v4520, 0
      %v5439 = vsel %vm5430, %v4521, 0
      %v5440 = vsel %vm5431, %v4522, 0
      %v5441 = vsel %vm5432, %v4536, 0
      %5451 = vrot.lane.b32.xlu0 %v5433, 126
      %v5452 = vpop.permute.xlu0 %5451
      %5453 = vrot.lane.b32.xlu0 %v5434, 126
      %v5454 = vpop.permute.xlu0 %5453
      %5455 = vrot.lane.b32.xlu0 %v5435, 126
      %v5456 = vpop.permute.xlu0 %5455
      %5457 = vrot.lane.b32.xlu0 %v5436, 126
      %v5458 = vpop.permute.xlu0 %5457
      %5459 = vrot.lane.b32.xlu0 %v5437, 126
      %v5460 = vpop.permute.xlu0 %5459
      %5461 = vrot.lane.b32.xlu0 %v5438, 126
      %v5462 = vpop.permute.xlu0 %5461
      %5463 = vrot.lane.b32.xlu0 %v5439, 126
      %v5464 = vpop.permute.xlu0 %5463
      %5465 = vrot.lane.b32.xlu0 %v5440, 126
      %v5466 = vpop.permute.xlu0 %5465
      %5467 = vrot.lane.b32.xlu0 %v5441, 126
      %v5468 = vpop.permute.xlu0 %5467
      %v5469 = vsel %vm4772, %v5452, %v5454
      %v5470 = vsel %vm4772, %v5454, %v5456
      %v5471 = vsel %vm4772, %v5456, %v5458
      %v5472 = vsel %vm4772, %v5458, %v5460
      %v5473 = vsel %vm4772, %v5460, %v5462
      %v5474 = vsel %vm4772, %v5462, %v5464
      %v5475 = vsel %vm4772, %v5464, %v5466
      %v5476 = vsel %vm4772, %v5466, %v5468
      %s5477 = scalar_lea.vmem %s5, 8
      %v5478 = vld [vmem:[%s5477] sm:$0xf]
      %5488 = vrot.lane.b32.xlu0 %v5391, 64
      %v5489 = vpop.permute.xlu0 %5488
      %5490 = vrot.lane.b32.xlu0 %v5392, 64
      %v5491 = vpop.permute.xlu0 %5490
      %5492 = vrot.lane.b32.xlu0 %v5393, 64
      %v5493 = vpop.permute.xlu0 %5492
      %5494 = vrot.lane.b32.xlu0 %v5394, 64
      %v5495 = vpop.permute.xlu0 %5494
      %5496 = vrot.lane.b32.xlu0 %v5395, 64
      %v5497 = vpop.permute.xlu0 %5496
      %5498 = vrot.lane.b32.xlu0 %v5396, 64
      %v5499 = vpop.permute.xlu0 %5498
      %5500 = vrot.lane.b32.xlu0 %v5397, 64
      %v5501 = vpop.permute.xlu0 %5500
      %5502 = vrot.lane.b32.xlu0 %v5398, 64
      %v5503 = vpop.permute.xlu0 %5502
      %5504 = vrot.lane.b32.xlu0 %v5399, 64
      %v5505 = vpop.permute.xlu0 %5504
      %5506 = vrot.lane.b32.xlu0 %v4729, 64
      %v5507 = vpop.permute.xlu0 %5506
      %5508 = vrot.lane.b32.xlu0 %v4730, 64
      %v5509 = vpop.permute.xlu0 %5508
      %5510 = vrot.lane.b32.xlu0 %v4731, 64
      %v5511 = vpop.permute.xlu0 %5510
      %5512 = vrot.lane.b32.xlu0 %v4732, 64
      %v5513 = vpop.permute.xlu0 %5512
      %5514 = vrot.lane.b32.xlu0 %v4733, 64
      %v5515 = vpop.permute.xlu0 %5514
      %5516 = vrot.lane.b32.xlu0 %v4734, 64
      %v5517 = vpop.permute.xlu0 %5516
      %5518 = vrot.lane.b32.xlu0 %v4735, 64
      %v5519 = vpop.permute.xlu0 %5518
      %5520 = vrot.lane.b32.xlu0 %v4736, 64
      %v5521 = vpop.permute.xlu0 %5520
      %5522 = vrot.lane.b32.xlu0 %v4727, 64
      %v5523 = vpop.permute.xlu0 %5522
      %5524 = vrot.lane.b32.xlu0 %v5469, 64
      %v5525 = vpop.permute.xlu0 %5524
      %5526 = vrot.lane.b32.xlu0 %v5470, 64
      %v5527 = vpop.permute.xlu0 %5526
      %5528 = vrot.lane.b32.xlu0 %v5471, 64
      %v5529 = vpop.permute.xlu0 %5528
      %5530 = vrot.lane.b32.xlu0 %v5472, 64
      %v5531 = vpop.permute.xlu0 %5530
      %5532 = vrot.lane.b32.xlu0 %v5473, 64
      %v5533 = vpop.permute.xlu0 %5532
      %5534 = vrot.lane.b32.xlu0 %v5474, 64
      %v5535 = vpop.permute.xlu0 %5534
      %5536 = vrot.lane.b32.xlu0 %v5475, 64
      %v5537 = vpop.permute.xlu0 %5536
      %5538 = vrot.lane.b32.xlu0 %v5476, 64
      %v5539 = vpop.permute.xlu0 %5538
      %5540 = vrot.lane.b32.xlu0 %v5468, 64
      %v5541 = vpop.permute.xlu0 %5540
      %v5542 = vsel %vm5374, %v5489, %v5491
      %v5543 = vsel %vm5374, %v5491, %v5493
      %v5544 = vsel %vm5374, %v5493, %v5495
      %v5545 = vsel %vm5374, %v5495, %v5497
      %v5546 = vsel %vm5374, %v5497, %v5499
      %v5547 = vsel %vm5374, %v5499, %v5501
      %v5548 = vsel %vm5374, %v5501, %v5503
      %v5549 = vsel %vm5374, %v5503, %v5505
      %v5550 = vsel %vm5374, %v5507, %v5509
      %v5551 = vsel %vm5374, %v5509, %v5511
      %v5552 = vsel %vm5374, %v5511, %v5513
      %v5553 = vsel %vm5374, %v5513, %v5515
      %v5554 = vsel %vm5374, %v5515, %v5517
      %v5555 = vsel %vm5374, %v5517, %v5519
      %v5556 = vsel %vm5374, %v5519, %v5521
      %v5557 = vsel %vm5374, %v5521, %v5523
      %v5558 = vsel %vm5374, %v5525, %v5527
      %v5559 = vsel %vm5374, %v5527, %v5529
      %v5560 = vsel %vm5374, %v5529, %v5531
      %v5561 = vsel %vm5374, %v5531, %v5533
      %v5562 = vsel %vm5374, %v5533, %v5535
      %v5563 = vsel %vm5374, %v5535, %v5537
      %v5564 = vsel %vm5374, %v5537, %v5539
      %v5565 = vsel %vm5374, %v5539, %v5541
      %v5591 = vsel %vm5023, %v5478, 0
      %5593 = vmatprep.subr.bf16.mxu0 %v5543
      %5594 = vmatpush1.bf16.msra.mxu0 %v5542
      %5595 = vmatprep.subr.bf16.mxu0 %v5551
      %5596 = vmatpush1.bf16.msra.mxu0 %v5550
      %5597 = vmatprep.subr.bf16.mxu0 %v5559
      %5598 = vmatpush1.bf16.msra.mxu0 %v5558
      %5599 = vmatprep.subr.bf16.mxu0 0
      %5600 = vmatpush1.bf16.msra.mxu0 0
      %5601 = vmatprep.subr.bf16.mxu0 0
      %5602 = vmatpush1.bf16.msra.mxu0 0
      %5603 = vmatprep.subr.bf16.mxu0 0
      %5604 = vmatpush1.bf16.msra.mxu0 0
      %5605 = vmatprep.subr.bf16.mxu0 0
      %5606 = vmatpush1.bf16.msra.mxu0 0
      %5607 = vmatprep.subr.bf16.mxu0 0
      %5608 = vmatpush1.bf16.msra.mxu0 0
      %5609 = vmatprep.subr.bf16.mxu0 0
      %5610 = vmatpush1.bf16.msra.mxu0 0
      %5611 = vmatprep.subr.bf16.mxu0 0
      %5612 = vmatpush1.bf16.msra.mxu0 0
      %5613 = vmatprep.subr.bf16.mxu0 0
      %5614 = vmatpush1.bf16.msra.mxu0 0
      %5615 = vmatprep.subr.bf16.mxu0 0
      %5616 = vmatpush1.bf16.msra.mxu0 0
      %5617 = vmatprep.subr.bf16.mxu0 0
      %5618 = vmatpush1.bf16.msra.mxu0 0
      %5619 = vmatprep.subr.bf16.mxu0 0
      %5620 = vmatpush1.bf16.msra.mxu0 0
      %5621 = vmatprep.subr.bf16.mxu0 0
      %5622 = vmatpush1.bf16.msra.mxu0 0
      %5623 = vmatprep.subr.bf16.mxu0 0
      %5624 = vmatpush1.bf16.msra.mxu0 0
      %5625 = vmatprep.mubr.bf16.mxu0 0
      %5626 = vmatmul.mubr.bf16.gmra.mrb[0].mxu0 %v5591
      %v5627 = vpop.f32.mrb[0].mxu0
      %v5628 = vadd.f32 0.0, %v5627
      %v5629 = vpop.f32.mrb[0].mxu0
      %v5630 = vadd.f32 0.0, %v5629
      %v5631 = vpop.f32.mrb[0].mxu0
      %v5632 = vpop.f32.mrb[0].mxu0
      %5633 = vdwg.mxu0
      %5634 = vmatprep.subr.bf16.mxu0 %v5545
      %5635 = vmatpush1.bf16.msra.mxu0 %v5544
      %5636 = vmatprep.subr.bf16.mxu0 %v5553
      %5637 = vmatpush1.bf16.msra.mxu0 %v5552
      %5638 = vmatprep.subr.bf16.mxu0 %v5561
      %5639 = vmatpush1.bf16.msra.mxu0 %v5560
      %5640 = vmatprep.subr.bf16.mxu0 0
      %5641 = vmatpush1.bf16.msra.mxu0 0
      %5642 = vmatprep.subr.bf16.mxu0 0
      %5643 = vmatpush1.bf16.msra.mxu0 0
      %5644 = vmatprep.subr.bf16.mxu0 0
      %5645 = vmatpush1.bf16.msra.mxu0 0
      %5646 = vmatprep.subr.bf16.mxu0 0
      %5647 = vmatpush1.bf16.msra.mxu0 0
      %5648 = vmatprep.subr.bf16.mxu0 0
      %5649 = vmatpush1.bf16.msra.mxu0 0
      %5650 = vmatprep.subr.bf16.mxu0 0
      %5651 = vmatpush1.bf16.msra.mxu0 0
      %5652 = vmatprep.subr.bf16.mxu0 0
      %5653 = vmatpush1.bf16.msra.mxu0 0
      %5654 = vmatprep.subr.bf16.mxu0 0
      %5655 = vmatpush1.bf16.msra.mxu0 0
      %5656 = vmatprep.subr.bf16.mxu0 0
      %5657 = vmatpush1.bf16.msra.mxu0 0
      %5658 = vmatprep.subr.bf16.mxu0 0
      %5659 = vmatpush1.bf16.msra.mxu0 0
      %5660 = vmatprep.subr.bf16.mxu0 0
      %5661 = vmatpush1.bf16.msra.mxu0 0
      %5662 = vmatprep.subr.bf16.mxu0 0
      %5663 = vmatpush1.bf16.msra.mxu0 0
      %5664 = vmatprep.subr.bf16.mxu0 0
      %5665 = vmatpush1.bf16.msra.mxu0 0
      %5666 = vmatprep.mubr.bf16.mxu0 0
      %5667 = vmatmul.mubr.bf16.gmra.mrb[0].mxu0 %v5591
      %v5668 = vpop.f32.mrb[0].mxu0
      %v5669 = vadd.f32 0.0, %v5668
      %v5670 = vpop.f32.mrb[0].mxu0
      %v5671 = vadd.f32 0.0, %v5670
      %v5672 = vpop.f32.mrb[0].mxu0
      %v5673 = vpop.f32.mrb[0].mxu0
      %5674 = vdwg.mxu0
      %5675 = vmatprep.subr.bf16.mxu0 %v5547
      %5676 = vmatpush1.bf16.msra.mxu0 %v5546
      %5677 = vmatprep.subr.bf16.mxu0 %v5555
      %5678 = vmatpush1.bf16.msra.mxu0 %v5554
      %5679 = vmatprep.subr.bf16.mxu0 %v5563
      %5680 = vmatpush1.bf16.msra.mxu0 %v5562
      %5681 = vmatprep.subr.bf16.mxu0 0
      %5682 = vmatpush1.bf16.msra.mxu0 0
      %5683 = vmatprep.subr.bf16.mxu0 0
      %5684 = vmatpush1.bf16.msra.mxu0 0
      %5685 = vmatprep.subr.bf16.mxu0 0
      %5686 = vmatpush1.bf16.msra.mxu0 0
      %5687 = vmatprep.subr.bf16.mxu0 0
      %5688 = vmatpush1.bf16.msra.mxu0 0
      %5689 = vmatprep.subr.bf16.mxu0 0
      %5690 = vmatpush1.bf16.msra.mxu0 0
      %5691 = vmatprep.subr.bf16.mxu0 0
      %5692 = vmatpush1.bf16.msra.mxu0 0
      %5693 = vmatprep.subr.bf16.mxu0 0
      %5694 = vmatpush1.bf16.msra.mxu0 0
      %5695 = vmatprep.subr.bf16.mxu0 0
      %5696 = vmatpush1.bf16.msra.mxu0 0
      %5697 = vmatprep.subr.bf16.mxu0 0
      %5698 = vmatpush1.bf16.msra.mxu0 0
      %5699 = vmatprep.subr.bf16.mxu0 0
      %5700 = vmatpush1.bf16.msra.mxu0 0
      %5701 = vmatprep.subr.bf16.mxu0 0
      %5702 = vmatpush1.bf16.msra.mxu0 0
      %5703 = vmatprep.subr.bf16.mxu0 0
      %5704 = vmatpush1.bf16.msra.mxu0 0
      %5705 = vmatprep.subr.bf16.mxu0 0
      %5706 = vmatpush1.bf16.msra.mxu0 0
      %5707 = vmatprep.mubr.bf16.mxu0 0
      %5708 = vmatmul.mubr.bf16.gmra.mrb[0].mxu0 %v5591
      %v5709 = vpop.f32.mrb[0].mxu0
      %v5710 = vadd.f32 0.0, %v5709
      %v5711 = vpop.f32.mrb[0].mxu0
      %v5712 = vadd.f32 0.0, %v5711
      %v5713 = vpop.f32.mrb[0].mxu0
      %v5714 = vpop.f32.mrb[0].mxu0
      %5715 = vdwg.mxu0
      %5716 = vmatprep.subr.bf16.mxu0 %v5549
      %5717 = vmatpush1.bf16.msra.mxu0 %v5548
      %5718 = vmatprep.subr.bf16.mxu0 %v5557
      %5719 = vmatpush1.bf16.msra.mxu0 %v5556
      %5720 = vmatprep.subr.bf16.mxu0 %v5565
      %5721 = vmatpush1.bf16.msra.mxu0 %v5564
      %5722 = vmatprep.subr.bf16.mxu0 0
      %5723 = vmatpush1.bf16.msra.mxu0 0
      %5724 = vmatprep.subr.bf16.mxu0 0
      %5725 = vmatpush1.bf16.msra.mxu0 0
      %5726 = vmatprep.subr.bf16.mxu0 0
      %5727 = vmatpush1.bf16.msra.mxu0 0
      %5728 = vmatprep.subr.bf16.mxu0 0
      %5729 = vmatpush1.bf16.msra.mxu0 0
      %5730 = vmatprep.subr.bf16.mxu0 0
      %5731 = vmatpush1.bf16.msra.mxu0 0
      %5732 = vmatprep.subr.bf16.mxu0 0
      %5733 = vmatpush1.bf16.msra.mxu0 0
      %5734 = vmatprep.subr.bf16.mxu0 0
      %5735 = vmatpush1.bf16.msra.mxu0 0
      %5736 = vmatprep.subr.bf16.mxu0 0
      %5737 = vmatpush1.bf16.msra.mxu0 0
      %5738 = vmatprep.subr.bf16.mxu0 0
      %5739 = vmatpush1.bf16.msra.mxu0 0
      %5740 = vmatprep.subr.bf16.mxu0 0
      %5741 = vmatpush1.bf16.msra.mxu0 0
      %5742 = vmatprep.subr.bf16.mxu0 0
      %5743 = vmatpush1.bf16.msra.mxu0 0
      %5744 = vmatprep.subr.bf16.mxu0 0
      %5745 = vmatpush1.bf16.msra.mxu0 0
      %5746 = vmatprep.subr.bf16.mxu0 0
      %5747 = vmatpush1.bf16.msra.mxu0 0
      %5748 = vmatprep.mubr.bf16.mxu0 0
      %5749 = vmatmul.mubr.bf16.gmra.mrb[0].mxu0 %v5591
      %v5750 = vpop.f32.mrb[0].mxu0
      %v5751 = vadd.f32 0.0, %v5750
      %v5752 = vpop.f32.mrb[0].mxu0
      %v5753 = vadd.f32 0.0, %v5752
      %v5754 = vpop.f32.mrb[0].mxu0
      %v5755 = vpop.f32.mrb[0].mxu0
      %5756 = vdwg.mxu0
      %v5757 = vadd.f32 %v5229, %v5628
      %v5758 = vadd.f32 %v5231, %v5630
      %v5759 = vadd.f32 %v5270, %v5669
      %v5760 = vadd.f32 %v5272, %v5671
      %v5761 = vadd.f32 %v5311, %v5710
      %v5762 = vadd.f32 %v5313, %v5712
      %v5763 = vadd.f32 %v5352, %v5751
      %v5764 = vadd.f32 %v5354, %v5753
      %v5765 = vld [vmem:[%s6] sm:$0xff]
      %5767 = vset.pattern.permute.xlu0 0
      %5768 = vperm.xlu0 %5767, %v5765
      %v5769 = vpop.permute.xlu0 %5768
      %v5771 = vadd.f32 %v5757, %v5769
      %v5772 = vadd.f32 %v5758, %v5769
      %v5773 = vadd.f32 %v5759, %v5769
      %v5774 = vadd.f32 %v5760, %v5769
      %v5775 = vadd.f32 %v5761, %v5769
      %v5776 = vadd.f32 %v5762, %v5769
      %v5777 = vadd.f32 %v5763, %v5769
      %v5778 = vadd.f32 %v5764, %v5769
      %v5779 = vmax.f32 %v5771, 0.0
      %v5780 = vmax.f32 %v5772, 0.0
      %v5781 = vmax.f32 %v5773, 0.0
      %v5782 = vmax.f32 %v5774, 0.0
      %v5783 = vmax.f32 %v5775, 0.0
      %v5784 = vmax.f32 %v5776, 0.0
      %v5785 = vmax.f32 %v5777, 0.0
      %v5786 = vmax.f32 %v5778, 0.0
      %v5787 = vpack.c.bf16 %v5779, %v5779
      %v5788 = vpack.c.bf16 %v5780, %v5780
      %v5789 = vpack.c.bf16 %v5781, %v5781
      %v5790 = vpack.c.bf16 %v5782, %v5782
      %v5791 = vpack.c.bf16 %v5783, %v5783
      %v5792 = vpack.c.bf16 %v5784, %v5784
      %v5793 = vpack.c.bf16 %v5785, %v5785
      %v5794 = vpack.c.bf16 %v5786, %v5786
      %5803 = vrot.lane.b32.xlu0 %v5787, 33
      %v5804 = vpop.permute.xlu0 %5803
      %5805 = vrot.lane.b32.xlu0 %v5788, 33
      %v5806 = vpop.permute.xlu0 %5805
      %5807 = vrot.lane.b32.xlu0 %v5789, 33
      %v5808 = vpop.permute.xlu0 %5807
      %5809 = vrot.lane.b32.xlu0 %v5790, 33
      %v5810 = vpop.permute.xlu0 %5809
      %5811 = vrot.lane.b32.xlu0 %v5791, 33
      %v5812 = vpop.permute.xlu0 %5811
      %5813 = vrot.lane.b32.xlu0 %v5792, 33
      %v5814 = vpop.permute.xlu0 %5813
      %5815 = vrot.lane.b32.xlu0 %v5793, 33
      %v5816 = vpop.permute.xlu0 %5815
      %5817 = vrot.lane.b32.xlu0 %v5794, 33
      %v5818 = vpop.permute.xlu0 %5817
      %v5819 = vsel %vm4515, %v5804, %v5806
      %v5820 = vsel %vm4515, %v5806, %v5808
      %v5821 = vsel %vm4515, %v5808, %v5810
      %v5822 = vsel %vm4515, %v5810, %v5812
      %v5823 = vsel %vm4515, %v5812, %v5814
      %v5824 = vsel %vm4515, %v5814, %v5816
      %v5825 = vsel %vm4515, %v5816, %v5818
      %v5834 = vsel %vm4530, 0, %v5804
      %v5837 = vsel %vm4530, %v5818, 0
      %v5839 = vsel %vm4594, %v5834, 0
      %v5840 = vsel %vm4595, %v5819, 0
      %v5841 = vsel %vm4596, %v5820, 0
      %v5842 = vsel %vm4597, %v5821, 0
      %v5843 = vsel %vm4598, %v5822, 0
      %v5844 = vsel %vm4599, %v5823, 0
      %v5845 = vsel %vm4600, %v5824, 0
      %v5846 = vsel %vm4601, %v5825, 0
      %v5847 = vsel %vm4690, %v5834, 0
      %v5848 = vsel %vm4691, %v5819, 0
      %v5849 = vsel %vm4692, %v5820, 0
      %v5850 = vsel %vm4693, %v5821, 0
      %v5851 = vsel %vm4694, %v5822, 0
      %v5852 = vsel %vm4695, %v5823, 0
      %v5853 = vsel %vm4696, %v5824, 0
      %v5854 = vsel %vm4697, %v5825, 0
      %v5855 = vsel %vm4698, %v5837, 0
      %v5858 = vrot.slane %v5834, 4
      %v5859 = vrot.slane %v5819, 4
      %v5860 = vrot.slane %v5820, 4
      %v5861 = vrot.slane %v5821, 4
      %v5862 = vrot.slane %v5822, 4
      %v5863 = vrot.slane %v5823, 4
      %v5864 = vrot.slane %v5824, 4
      %v5865 = vrot.slane %v5825, 4
      %v5866 = vrot.slane %v5837, 4
      %5867 = vrot.lane.b32.xlu0 %v5858, 127
      %v5868 = vpop.permute.xlu0 %5867
      %5869 = vrot.lane.b32.xlu0 %v5859, 127
      %v5870 = vpop.permute.xlu0 %5869
      %5871 = vrot.lane.b32.xlu0 %v5860, 127
      %v5872 = vpop.permute.xlu0 %5871
      %5873 = vrot.lane.b32.xlu0 %v5861, 127
      %v5874 = vpop.permute.xlu0 %5873
      %5875 = vrot.lane.b32.xlu0 %v5862, 127
      %v5876 = vpop.permute.xlu0 %5875
      %5877 = vrot.lane.b32.xlu0 %v5863, 127
      %v5878 = vpop.permute.xlu0 %5877
      %5879 = vrot.lane.b32.xlu0 %v5864, 127
      %v5880 = vpop.permute.xlu0 %5879
      %5881 = vrot.lane.b32.xlu0 %v5865, 127
      %v5882 = vpop.permute.xlu0 %5881
      %5883 = vrot.lane.b32.xlu0 %v5866, 127
      %v5884 = vpop.permute.xlu0 %5883
      %v5885 = vsel %vm4728, %v5868, %v5870
      %v5886 = vsel %vm4728, %v5870, %v5872
      %v5887 = vsel %vm4728, %v5872, %v5874
      %v5888 = vsel %vm4728, %v5874, %v5876
      %v5889 = vsel %vm4728, %v5876, %v5878
      %v5890 = vsel %vm4728, %v5878, %v5880
      %v5891 = vsel %vm4728, %v5880, %v5882
      %v5892 = vsel %vm4728, %v5882, %v5884
      %5902 = vrot.lane.b32.xlu0 %v5847, 126
      %v5903 = vpop.permute.xlu0 %5902
      %5904 = vrot.lane.b32.xlu0 %v5848, 126
      %v5905 = vpop.permute.xlu0 %5904
      %5906 = vrot.lane.b32.xlu0 %v5849, 126
      %v5907 = vpop.permute.xlu0 %5906
      %5908 = vrot.lane.b32.xlu0 %v5850, 126
      %v5909 = vpop.permute.xlu0 %5908
      %5910 = vrot.lane.b32.xlu0 %v5851, 126
      %v5911 = vpop.permute.xlu0 %5910
      %5912 = vrot.lane.b32.xlu0 %v5852, 126
      %v5913 = vpop.permute.xlu0 %5912
      %5914 = vrot.lane.b32.xlu0 %v5853, 126
      %v5915 = vpop.permute.xlu0 %5914
      %5916 = vrot.lane.b32.xlu0 %v5854, 126
      %v5917 = vpop.permute.xlu0 %5916
      %5918 = vrot.lane.b32.xlu0 %v5855, 126
      %v5919 = vpop.permute.xlu0 %5918
      %v5920 = vsel %vm4772, %v5903, %v5905
      %v5921 = vsel %vm4772, %v5905, %v5907
      %v5922 = vsel %vm4772, %v5907, %v5909
      %v5923 = vsel %vm4772, %v5909, %v5911
      %v5924 = vsel %vm4772, %v5911, %v5913
      %v5925 = vsel %vm4772, %v5913, %v5915
      %v5926 = vsel %vm4772, %v5915, %v5917
      %v5927 = vsel %vm4772, %v5917, %v5919
      %v5930 = vsel %vm4345, %v5839, %v5885
      %v5934 = vsel %vm4345, %v5840, %v5886
      %v5938 = vsel %vm4345, %v5841, %v5887
      %v5942 = vsel %vm4345, %v5842, %v5888
      %v5946 = vsel %vm4345, %v5843, %v5889
      %v5950 = vsel %vm4345, %v5844, %v5890
      %v5954 = vsel %vm4345, %v5845, %v5891
      %v5958 = vsel %vm4345, %v5846, %v5892
      %v5960 = vld [vmem:[%s7] sm:$0xf]
      %v5961 = vsel %vm4814, %v5834, 0
      %v5962 = vsel %vm4815, %v5819, 0
      %v5963 = vsel %vm4816, %v5820, 0
      %v5964 = vsel %vm4817, %v5821, 0
      %v5965 = vsel %vm4818, %v5822, 0
      %v5966 = vsel %vm4819, %v5823, 0
      %v5967 = vsel %vm4820, %v5824, 0
      %v5968 = vsel %vm4821, %v5825, 0
      %v5969 = vsel %vm4822, %v5837, 0
      %v5970 = vsel %vm4856, %v5834, 0
      %v5971 = vsel %vm4857, %v5819, 0
      %v5972 = vsel %vm4858, %v5820, 0
      %v5973 = vsel %vm4859, %v5821, 0
      %v5974 = vsel %vm4860, %v5822, 0
      %v5975 = vsel %vm4861, %v5823, 0
      %v5976 = vsel %vm4862, %v5824, 0
      %v5977 = vsel %vm4863, %v5825, 0
      %v5978 = vsel %vm4864, %v5837, 0
      %5988 = vrot.lane.b32.xlu0 %v5970, 126
      %v5989 = vpop.permute.xlu0 %5988
      %5990 = vrot.lane.b32.xlu0 %v5971, 126
      %v5991 = vpop.permute.xlu0 %5990
      %5992 = vrot.lane.b32.xlu0 %v5972, 126
      %v5993 = vpop.permute.xlu0 %5992
      %5994 = vrot.lane.b32.xlu0 %v5973, 126
      %v5995 = vpop.permute.xlu0 %5994
      %5996 = vrot.lane.b32.xlu0 %v5974, 126
      %v5997 = vpop.permute.xlu0 %5996
      %5998 = vrot.lane.b32.xlu0 %v5975, 126
      %v5999 = vpop.permute.xlu0 %5998
      %6000 = vrot.lane.b32.xlu0 %v5976, 126
      %v6001 = vpop.permute.xlu0 %6000
      %6002 = vrot.lane.b32.xlu0 %v5977, 126
      %v6003 = vpop.permute.xlu0 %6002
      %6004 = vrot.lane.b32.xlu0 %v5978, 126
      %v6005 = vpop.permute.xlu0 %6004
      %v6006 = vsel %vm4772, %v5989, %v5991
      %v6007 = vsel %vm4772, %v5991, %v5993
      %v6008 = vsel %vm4772, %v5993, %v5995
      %v6009 = vsel %vm4772, %v5995, %v5997
      %v6010 = vsel %vm4772, %v5997, %v5999
      %v6011 = vsel %vm4772, %v5999, %v6001
      %v6012 = vsel %vm4772, %v6001, %v6003
      %v6013 = vsel %vm4772, %v6003, %v6005
      %v6015 = vsel %vm4345, %v5961, %v5885
      %v6017 = vsel %vm4345, %v5962, %v5886
      %v6019 = vsel %vm4345, %v5963, %v5887
      %v6021 = vsel %vm4345, %v5964, %v5888
      %v6023 = vsel %vm4345, %v5965, %v5889
      %v6025 = vsel %vm4345, %v5966, %v5890
      %v6027 = vsel %vm4345, %v5967, %v5891
      %v6029 = vsel %vm4345, %v5968, %v5892
      %v6032 = vsel %vm4345, %v5969, %v5884
      %s6033 = scalar_lea.vmem %s7, 4
      %v6034 = vld [vmem:[%s6033] sm:$0xf]
      %6044 = vrot.lane.b32.xlu0 %v6015, 96
      %v6045 = vpop.permute.xlu0 %6044
      %6046 = vrot.lane.b32.xlu0 %v6017, 96
      %v6047 = vpop.permute.xlu0 %6046
      %6048 = vrot.lane.b32.xlu0 %v6019, 96
      %v6049 = vpop.permute.xlu0 %6048
      %6050 = vrot.lane.b32.xlu0 %v6021, 96
      %v6051 = vpop.permute.xlu0 %6050
      %6052 = vrot.lane.b32.xlu0 %v6023, 96
      %v6053 = vpop.permute.xlu0 %6052
      %6054 = vrot.lane.b32.xlu0 %v6025, 96
      %v6055 = vpop.permute.xlu0 %6054
      %6056 = vrot.lane.b32.xlu0 %v6027, 96
      %v6057 = vpop.permute.xlu0 %6056
      %6058 = vrot.lane.b32.xlu0 %v6029, 96
      %v6059 = vpop.permute.xlu0 %6058
      %6060 = vrot.lane.b32.xlu0 %v6032, 96
      %v6061 = vpop.permute.xlu0 %6060
      %6062 = vrot.lane.b32.xlu0 %v6006, 96
      %v6063 = vpop.permute.xlu0 %6062
      %6064 = vrot.lane.b32.xlu0 %v6007, 96
      %v6065 = vpop.permute.xlu0 %6064
      %6066 = vrot.lane.b32.xlu0 %v6008, 96
      %v6067 = vpop.permute.xlu0 %6066
      %6068 = vrot.lane.b32.xlu0 %v6009, 96
      %v6069 = vpop.permute.xlu0 %6068
      %6070 = vrot.lane.b32.xlu0 %v6010, 96
      %v6071 = vpop.permute.xlu0 %6070
      %6072 = vrot.lane.b32.xlu0 %v6011, 96
      %v6073 = vpop.permute.xlu0 %6072
      %6074 = vrot.lane.b32.xlu0 %v6012, 96
      %v6075 = vpop.permute.xlu0 %6074
      %6076 = vrot.lane.b32.xlu0 %v6013, 96
      %v6077 = vpop.permute.xlu0 %6076
      %6078 = vrot.lane.b32.xlu0 %v6005, 96
      %v6079 = vpop.permute.xlu0 %6078
      %v6080 = vsel %vm4974, %v6045, %v6047
      %v6081 = vsel %vm4974, %v6047, %v6049
      %v6082 = vsel %vm4974, %v6049, %v6051
      %v6083 = vsel %vm4974, %v6051, %v6053
      %v6084 = vsel %vm4974, %v6053, %v6055
      %v6085 = vsel %vm4974, %v6055, %v6057
      %v6086 = vsel %vm4974, %v6057, %v6059
      %v6087 = vsel %vm4974, %v6059, %v6061
      %v6088 = vsel %vm4974, %v6063, %v6065
      %v6089 = vsel %vm4974, %v6065, %v6067
      %v6090 = vsel %vm4974, %v6067, %v6069
      %v6091 = vsel %vm4974, %v6069, %v6071
      %v6092 = vsel %vm4974, %v6071, %v6073
      %v6093 = vsel %vm4974, %v6073, %v6075
      %v6094 = vsel %vm4974, %v6075, %v6077
      %v6095 = vsel %vm4974, %v6077, %v6079
      %vm6104 = vcmask 195584
      %v6106 = vsel %vm6104, %v6034, 0
      %v6109 = vsel %vm4345, %v6088, 0
      %v6112 = vsel %vm4345, %v6089, 0
      %v6115 = vsel %vm4345, %v6090, 0
      %v6118 = vsel %vm4345, %v6091, 0
      %v6121 = vsel %vm4345, %v6092, 0
      %v6124 = vsel %vm4345, %v6093, 0
      %v6127 = vsel %vm4345, %v6094, 0
      %v6130 = vsel %vm4345, %v6095, 0
      %6132 = vmatprep.subr.bf16.mxu0 %v6081
      %6133 = vmatpush1.bf16.msra.mxu0 %v6080
      %6134 = vmatprep.subr.bf16.mxu0 %v6112
      %6135 = vmatpush1.bf16.msra.mxu0 %v6109
      %6136 = vmatprep.subr.bf16.mxu0 0
      %6137 = vmatpush1.bf16.msra.mxu0 0
      %6138 = vmatprep.subr.bf16.mxu0 0
      %6139 = vmatpush1.bf16.msra.mxu0 0
      %6140 = vmatprep.subr.bf16.mxu0 0
      %6141 = vmatpush1.bf16.msra.mxu0 0
      %6142 = vmatprep.subr.bf16.mxu0 0
      %6143 = vmatpush1.bf16.msra.mxu0 0
      %6144 = vmatprep.subr.bf16.mxu0 0
      %6145 = vmatpush1.bf16.msra.mxu0 0
      %6146 = vmatprep.subr.bf16.mxu0 0
      %6147 = vmatpush1.bf16.msra.mxu0 0
      %6148 = vmatprep.subr.bf16.mxu0 0
      %6149 = vmatpush1.bf16.msra.mxu0 0
      %6150 = vmatprep.subr.bf16.mxu0 0
      %6151 = vmatpush1.bf16.msra.mxu0 0
      %6152 = vmatprep.subr.bf16.mxu0 0
      %6153 = vmatpush1.bf16.msra.mxu0 0
      %6154 = vmatprep.subr.bf16.mxu0 0
      %6155 = vmatpush1.bf16.msra.mxu0 0
      %6156 = vmatprep.subr.bf16.mxu0 0
      %6157 = vmatpush1.bf16.msra.mxu0 0
      %6158 = vmatprep.subr.bf16.mxu0 0
      %6159 = vmatpush1.bf16.msra.mxu0 0
      %6160 = vmatprep.subr.bf16.mxu0 0
      %6161 = vmatpush1.bf16.msra.mxu0 0
      %6162 = vmatprep.subr.bf16.mxu0 0
      %6163 = vmatpush1.bf16.msra.mxu0 0
      %6164 = vmatprep.mubr.bf16.mxu0 0
      %6165 = vmatmul.mubr.bf16.gmra.mrb[0].mxu0 %v6106
      %v6166 = vpop.f32.mrb[0].mxu0
      %v6167 = vadd.f32 0.0, %v6166
      %v6168 = vpop.f32.mrb[0].mxu0
      %v6169 = vadd.f32 0.0, %v6168
      %v6170 = vpop.f32.mrb[0].mxu0
      %v6171 = vpop.f32.mrb[0].mxu0
      %6172 = vdwg.mxu0
      %6173 = vmatprep.subr.bf16.mxu0 %v6083
      %6174 = vmatpush1.bf16.msra.mxu0 %v6082
      %6175 = vmatprep.subr.bf16.mxu0 %v6118
      %6176 = vmatpush1.bf16.msra.mxu0 %v6115
      %6177 = vmatprep.subr.bf16.mxu0 0
      %6178 = vmatpush1.bf16.msra.mxu0 0
      %6179 = vmatprep.subr.bf16.mxu0 0
      %6180 = vmatpush1.bf16.msra.mxu0 0
      %6181 = vmatprep.subr.bf16.mxu0 0
      %6182 = vmatpush1.bf16.msra.mxu0 0
      %6183 = vmatprep.subr.bf16.mxu0 0
      %6184 = vmatpush1.bf16.msra.mxu0 0
      %6185 = vmatprep.subr.bf16.mxu0 0
      %6186 = vmatpush1.bf16.msra.mxu0 0
      %6187 = vmatprep.subr.bf16.mxu0 0
      %6188 = vmatpush1.bf16.msra.mxu0 0
      %6189 = vmatprep.subr.bf16.mxu0 0
      %6190 = vmatpush1.bf16.msra.mxu0 0
      %6191 = vmatprep.subr.bf16.mxu0 0
      %6192 = vmatpush1.bf16.msra.mxu0 0
      %6193 = vmatprep.subr.bf16.mxu0 0
      %6194 = vmatpush1.bf16.msra.mxu0 0
      %6195 = vmatprep.subr.bf16.mxu0 0
      %6196 = vmatpush1.bf16.msra.mxu0 0
      %6197 = vmatprep.subr.bf16.mxu0 0
      %6198 = vmatpush1.bf16.msra.mxu0 0
      %6199 = vmatprep.subr.bf16.mxu0 0
      %6200 = vmatpush1.bf16.msra.mxu0 0
      %6201 = vmatprep.subr.bf16.mxu0 0
      %6202 = vmatpush1.bf16.msra.mxu0 0
      %6203 = vmatprep.subr.bf16.mxu0 0
      %6204 = vmatpush1.bf16.msra.mxu0 0
      %6205 = vmatprep.mubr.bf16.mxu0 0
      %6206 = vmatmul.mubr.bf16.gmra.mrb[0].mxu0 %v6106
      %v6207 = vpop.f32.mrb[0].mxu0
      %v6208 = vadd.f32 0.0, %v6207
      %v6209 = vpop.f32.mrb[0].mxu0
      %v6210 = vadd.f32 0.0, %v6209
      %v6211 = vpop.f32.mrb[0].mxu0
      %v6212 = vpop.f32.mrb[0].mxu0
      %6213 = vdwg.mxu0
      %6214 = vmatprep.subr.bf16.mxu0 %v6085
      %6215 = vmatpush1.bf16.msra.mxu0 %v6084
      %6216 = vmatprep.subr.bf16.mxu0 %v6124
      %6217 = vmatpush1.bf16.msra.mxu0 %v6121
      %6218 = vmatprep.subr.bf16.mxu0 0
      %6219 = vmatpush1.bf16.msra.mxu0 0
      %6220 = vmatprep.subr.bf16.mxu0 0
      %6221 = vmatpush1.bf16.msra.mxu0 0
      %6222 = vmatprep.subr.bf16.mxu0 0
      %6223 = vmatpush1.bf16.msra.mxu0 0
      %6224 = vmatprep.subr.bf16.mxu0 0
      %6225 = vmatpush1.bf16.msra.mxu0 0
      %6226 = vmatprep.subr.bf16.mxu0 0
      %6227 = vmatpush1.bf16.msra.mxu0 0
      %6228 = vmatprep.subr.bf16.mxu0 0
      %6229 = vmatpush1.bf16.msra.mxu0 0
      %6230 = vmatprep.subr.bf16.mxu0 0
      %6231 = vmatpush1.bf16.msra.mxu0 0
      %6232 = vmatprep.subr.bf16.mxu0 0
      %6233 = vmatpush1.bf16.msra.mxu0 0
      %6234 = vmatprep.subr.bf16.mxu0 0
      %6235 = vmatpush1.bf16.msra.mxu0 0
      %6236 = vmatprep.subr.bf16.mxu0 0
      %6237 = vmatpush1.bf16.msra.mxu0 0
      %6238 = vmatprep.subr.bf16.mxu0 0
      %6239 = vmatpush1.bf16.msra.mxu0 0
      %6240 = vmatprep.subr.bf16.mxu0 0
      %6241 = vmatpush1.bf16.msra.mxu0 0
      %6242 = vmatprep.subr.bf16.mxu0 0
      %6243 = vmatpush1.bf16.msra.mxu0 0
      %6244 = vmatprep.subr.bf16.mxu0 0
      %6245 = vmatpush1.bf16.msra.mxu0 0
      %6246 = vmatprep.mubr.bf16.mxu0 0
      %6247 = vmatmul.mubr.bf16.gmra.mrb[0].mxu0 %v6106
      %v6248 = vpop.f32.mrb[0].mxu0
      %v6249 = vadd.f32 0.0, %v6248
      %v6250 = vpop.f32.mrb[0].mxu0
      %v6251 = vadd.f32 0.0, %v6250
      %v6252 = vpop.f32.mrb[0].mxu0
      %v6253 = vpop.f32.mrb[0].mxu0
      %6254 = vdwg.mxu0
      %6255 = vmatprep.subr.bf16.mxu0 %v6087
      %6256 = vmatpush1.bf16.msra.mxu0 %v6086
      %6257 = vmatprep.subr.bf16.mxu0 %v6130
      %6258 = vmatpush1.bf16.msra.mxu0 %v6127
      %6259 = vmatprep.subr.bf16.mxu0 0
      %6260 = vmatpush1.bf16.msra.mxu0 0
      %6261 = vmatprep.subr.bf16.mxu0 0
      %6262 = vmatpush1.bf16.msra.mxu0 0
      %6263 = vmatprep.subr.bf16.mxu0 0
      %6264 = vmatpush1.bf16.msra.mxu0 0
      %6265 = vmatprep.subr.bf16.mxu0 0
      %6266 = vmatpush1.bf16.msra.mxu0 0
      %6267 = vmatprep.subr.bf16.mxu0 0
      %6268 = vmatpush1.bf16.msra.mxu0 0
      %6269 = vmatprep.subr.bf16.mxu0 0
      %6270 = vmatpush1.bf16.msra.mxu0 0
      %6271 = vmatprep.subr.bf16.mxu0 0
      %6272 = vmatpush1.bf16.msra.mxu0 0
      %6273 = vmatprep.subr.bf16.mxu0 0
      %6274 = vmatpush1.bf16.msra.mxu0 0
      %6275 = vmatprep.subr.bf16.mxu0 0
      %6276 = vmatpush1.bf16.msra.mxu0 0
      %6277 = vmatprep.subr.bf16.mxu0 0
      %6278 = vmatpush1.bf16.msra.mxu0 0
      %6279 = vmatprep.subr.bf16.mxu0 0
      %6280 = vmatpush1.bf16.msra.mxu0 0
      %6281 = vmatprep.subr.bf16.mxu0 0
      %6282 = vmatpush1.bf16.msra.mxu0 0
      %6283 = vmatprep.subr.bf16.mxu0 0
      %6284 = vmatpush1.bf16.msra.mxu0 0
      %6285 = vmatprep.subr.bf16.mxu0 0
      %6286 = vmatpush1.bf16.msra.mxu0 0
      %6287 = vmatprep.mubr.bf16.mxu0 0
      %6288 = vmatmul.mubr.bf16.gmra.mrb[0].mxu0 %v6106
      %v6289 = vpop.f32.mrb[0].mxu0
      %v6290 = vadd.f32 0.0, %v6289
      %v6291 = vpop.f32.mrb[0].mxu0
      %v6292 = vadd.f32 0.0, %v6291
      %v6293 = vpop.f32.mrb[0].mxu0
      %v6294 = vpop.f32.mrb[0].mxu0
      %6295 = vdwg.mxu0
      %v6297 = vsel %vm6104, %v5960, 0
      %v6300 = vsel %vm4345, %v5920, 0
      %v6303 = vsel %vm4345, %v5921, 0
      %v6306 = vsel %vm4345, %v5922, 0
      %v6309 = vsel %vm4345, %v5923, 0
      %v6312 = vsel %vm4345, %v5924, 0
      %v6315 = vsel %vm4345, %v5925, 0
      %v6318 = vsel %vm4345, %v5926, 0
      %v6321 = vsel %vm4345, %v5927, 0
      %6323 = vmatprep.subr.bf16.mxu0 %v5934
      %6324 = vmatpush1.bf16.msra.mxu0 %v5930
      %6325 = vmatprep.subr.bf16.mxu0 %v6303
      %6326 = vmatpush1.bf16.msra.mxu0 %v6300
      %6327 = vmatprep.subr.bf16.mxu0 0
      %6328 = vmatpush1.bf16.msra.mxu0 0
      %6329 = vmatprep.subr.bf16.mxu0 0
      %6330 = vmatpush1.bf16.msra.mxu0 0
      %6331 = vmatprep.subr.bf16.mxu0 0
      %6332 = vmatpush1.bf16.msra.mxu0 0
      %6333 = vmatprep.subr.bf16.mxu0 0
      %6334 = vmatpush1.bf16.msra.mxu0 0
      %6335 = vmatprep.subr.bf16.mxu0 0
      %6336 = vmatpush1.bf16.msra.mxu0 0
      %6337 = vmatprep.subr.bf16.mxu0 0
      %6338 = vmatpush1.bf16.msra.mxu0 0
      %6339 = vmatprep.subr.bf16.mxu0 0
      %6340 = vmatpush1.bf16.msra.mxu0 0
      %6341 = vmatprep.subr.bf16.mxu0 0
      %6342 = vmatpush1.bf16.msra.mxu0 0
      %6343 = vmatprep.subr.bf16.mxu0 0
      %6344 = vmatpush1.bf16.msra.mxu0 0
      %6345 = vmatprep.subr.bf16.mxu0 0
      %6346 = vmatpush1.bf16.msra.mxu0 0
      %6347 = vmatprep.subr.bf16.mxu0 0
      %6348 = vmatpush1.bf16.msra.mxu0 0
      %6349 = vmatprep.subr.bf16.mxu0 0
      %6350 = vmatpush1.bf16.msra.mxu0 0
      %6351 = vmatprep.subr.bf16.mxu0 0
      %6352 = vmatpush1.bf16.msra.mxu0 0
      %6353 = vmatprep.subr.bf16.mxu0 0
      %6354 = vmatpush1.bf16.msra.mxu0 0
      %6355 = vmatprep.mubr.bf16.mxu0 0
      %6356 = vmatmul.mubr.bf16.gmra.mrb[0].mxu0 %v6297
      %v6357 = vpop.f32.mrb[0].mxu0
      %v6358 = vadd.f32 %v6167, %v6357
      %v6359 = vpop.f32.mrb[0].mxu0
      %v6360 = vadd.f32 %v6169, %v6359
      %v6361 = vpop.f32.mrb[0].mxu0
      %v6362 = vpop.f32.mrb[0].mxu0
      %6363 = vdwg.mxu0
      %6364 = vmatprep.subr.bf16.mxu0 %v5942
      %6365 = vmatpush1.bf16.msra.mxu0 %v5938
      %6366 = vmatprep.subr.bf16.mxu0 %v6309
      %6367 = vmatpush1.bf16.msra.mxu0 %v6306
      %6368 = vmatprep.subr.bf16.mxu0 0
      %6369 = vmatpush1.bf16.msra.mxu0 0
      %6370 = vmatprep.subr.bf16.mxu0 0
      %6371 = vmatpush1.bf16.msra.mxu0 0
      %6372 = vmatprep.subr.bf16.mxu0 0
      %6373 = vmatpush1.bf16.msra.mxu0 0
      %6374 = vmatprep.subr.bf16.mxu0 0
      %6375 = vmatpush1.bf16.msra.mxu0 0
      %6376 = vmatprep.subr.bf16.mxu0 0
      %6377 = vmatpush1.bf16.msra.mxu0 0
      %6378 = vmatprep.subr.bf16.mxu0 0
      %6379 = vmatpush1.bf16.msra.mxu0 0
      %6380 = vmatprep.subr.bf16.mxu0 0
      %6381 = vmatpush1.bf16.msra.mxu0 0
      %6382 = vmatprep.subr.bf16.mxu0 0
      %6383 = vmatpush1.bf16.msra.mxu0 0
      %6384 = vmatprep.subr.bf16.mxu0 0
      %6385 = vmatpush1.bf16.msra.mxu0 0
      %6386 = vmatprep.subr.bf16.mxu0 0
      %6387 = vmatpush1.bf16.msra.mxu0 0
      %6388 = vmatprep.subr.bf16.mxu0 0
      %6389 = vmatpush1.bf16.msra.mxu0 0
      %6390 = vmatprep.subr.bf16.mxu0 0
      %6391 = vmatpush1.bf16.msra.mxu0 0
      %6392 = vmatprep.subr.bf16.mxu0 0
      %6393 = vmatpush1.bf16.msra.mxu0 0
      %6394 = vmatprep.subr.bf16.mxu0 0
      %6395 = vmatpush1.bf16.msra.mxu0 0
      %6396 = vmatprep.mubr.bf16.mxu0 0
      %6397 = vmatmul.mubr.bf16.gmra.mrb[0].mxu0 %v6297
      %v6398 = vpop.f32.mrb[0].mxu0
      %v6399 = vadd.f32 %v6208, %v6398
      %v6400 = vpop.f32.mrb[0].mxu0
      %v6401 = vadd.f32 %v6210, %v6400
      %v6402 = vpop.f32.mrb[0].mxu0
      %v6403 = vpop.f32.mrb[0].mxu0
      %6404 = vdwg.mxu0
      %6405 = vmatprep.subr.bf16.mxu0 %v5950
      %6406 = vmatpush1.bf16.msra.mxu0 %v5946
      %6407 = vmatprep.subr.bf16.mxu0 %v6315
      %6408 = vmatpush1.bf16.msra.mxu0 %v6312
      %6409 = vmatprep.subr.bf16.mxu0 0
      %6410 = vmatpush1.bf16.msra.mxu0 0
      %6411 = vmatprep.subr.bf16.mxu0 0
      %6412 = vmatpush1.bf16.msra.mxu0 0
      %6413 = vmatprep.subr.bf16.mxu0 0
      %6414 = vmatpush1.bf16.msra.mxu0 0
      %6415 = vmatprep.subr.bf16.mxu0 0
      %6416 = vmatpush1.bf16.msra.mxu0 0
      %6417 = vmatprep.subr.bf16.mxu0 0
      %6418 = vmatpush1.bf16.msra.mxu0 0
      %6419 = vmatprep.subr.bf16.mxu0 0
      %6420 = vmatpush1.bf16.msra.mxu0 0
      %6421 = vmatprep.subr.bf16.mxu0 0
      %6422 = vmatpush1.bf16.msra.mxu0 0
      %6423 = vmatprep.subr.bf16.mxu0 0
      %6424 = vmatpush1.bf16.msra.mxu0 0
      %6425 = vmatprep.subr.bf16.mxu0 0
      %6426 = vmatpush1.bf16.msra.mxu0 0
      %6427 = vmatprep.subr.bf16.mxu0 0
      %6428 = vmatpush1.bf16.msra.mxu0 0
      %6429 = vmatprep.subr.bf16.mxu0 0
      %6430 = vmatpush1.bf16.msra.mxu0 0
      %6431 = vmatprep.subr.bf16.mxu0 0
      %6432 = vmatpush1.bf16.msra.mxu0 0
      %6433 = vmatprep.subr.bf16.mxu0 0
      %6434 = vmatpush1.bf16.msra.mxu0 0
      %6435 = vmatprep.subr.bf16.mxu0 0
      %6436 = vmatpush1.bf16.msra.mxu0 0
      %6437 = vmatprep.mubr.bf16.mxu0 0
      %6438 = vmatmul.mubr.bf16.gmra.mrb[0].mxu0 %v6297
      %v6439 = vpop.f32.mrb[0].mxu0
      %v6440 = vadd.f32 %v6249, %v6439
      %v6441 = vpop.f32.mrb[0].mxu0
      %v6442 = vadd.f32 %v6251, %v6441
      %v6443 = vpop.f32.mrb[0].mxu0
      %v6444 = vpop.f32.mrb[0].mxu0
      %6445 = vdwg.mxu0
      %6446 = vmatprep.subr.bf16.mxu0 %v5958
      %6447 = vmatpush1.bf16.msra.mxu0 %v5954
      %6448 = vmatprep.subr.bf16.mxu0 %v6321
      %6449 = vmatpush1.bf16.msra.mxu0 %v6318
      %6450 = vmatprep.subr.bf16.mxu0 0
      %6451 = vmatpush1.bf16.msra.mxu0 0
      %6452 = vmatprep.subr.bf16.mxu0 0
      %6453 = vmatpush1.bf16.msra.mxu0 0
      %6454 = vmatprep.subr.bf16.mxu0 0
      %6455 = vmatpush1.bf16.msra.mxu0 0
      %6456 = vmatprep.subr.bf16.mxu0 0
      %6457 = vmatpush1.bf16.msra.mxu0 0
      %6458 = vmatprep.subr.bf16.mxu0 0
      %6459 = vmatpush1.bf16.msra.mxu0 0
      %6460 = vmatprep.subr.bf16.mxu0 0
      %6461 = vmatpush1.bf16.msra.mxu0 0
      %6462 = vmatprep.subr.bf16.mxu0 0
      %6463 = vmatpush1.bf16.msra.mxu0 0
      %6464 = vmatprep.subr.bf16.mxu0 0
      %6465 = vmatpush1.bf16.msra.mxu0 0
      %6466 = vmatprep.subr.bf16.mxu0 0
      %6467 = vmatpush1.bf16.msra.mxu0 0
      %6468 = vmatprep.subr.bf16.mxu0 0
      %6469 = vmatpush1.bf16.msra.mxu0 0
      %6470 = vmatprep.subr.bf16.mxu0 0
      %6471 = vmatpush1.bf16.msra.mxu0 0
      %6472 = vmatprep.subr.bf16.mxu0 0
      %6473 = vmatpush1.bf16.msra.mxu0 0
      %6474 = vmatprep.subr.bf16.mxu0 0
      %6475 = vmatpush1.bf16.msra.mxu0 0
      %6476 = vmatprep.subr.bf16.mxu0 0
      %6477 = vmatpush1.bf16.msra.mxu0 0
      %6478 = vmatprep.mubr.bf16.mxu0 0
      %6479 = vmatmul.mubr.bf16.gmra.mrb[0].mxu0 %v6297
      %v6480 = vpop.f32.mrb[0].mxu0
      %v6481 = vadd.f32 %v6290, %v6480
      %v6482 = vpop.f32.mrb[0].mxu0
      %v6483 = vadd.f32 %v6292, %v6482
      %v6484 = vpop.f32.mrb[0].mxu0
      %v6485 = vpop.f32.mrb[0].mxu0
      %6486 = vdwg.mxu0
      %v6487 = vsel %vm5382, %v5834, 0
      %v6488 = vsel %vm5383, %v5819, 0
      %v6489 = vsel %vm5384, %v5820, 0
      %v6490 = vsel %vm5385, %v5821, 0
      %v6491 = vsel %vm5386, %v5822, 0
      %v6492 = vsel %vm5387, %v5823, 0
      %v6493 = vsel %vm5388, %v5824, 0
      %v6494 = vsel %vm5389, %v5825, 0
      %v6495 = vsel %vm5390, %v5837, 0
      %v6496 = vsel %vm5424, %v5834, 0
      %v6497 = vsel %vm5425, %v5819, 0
      %v6498 = vsel %vm5426, %v5820, 0
      %v6499 = vsel %vm5427, %v5821, 0
      %v6500 = vsel %vm5428, %v5822, 0
      %v6501 = vsel %vm5429, %v5823, 0
      %v6502 = vsel %vm5430, %v5824, 0
      %v6503 = vsel %vm5431, %v5825, 0
      %v6504 = vsel %vm5432, %v5837, 0
      %6514 = vrot.lane.b32.xlu0 %v6496, 126
      %v6515 = vpop.permute.xlu0 %6514
      %6516 = vrot.lane.b32.xlu0 %v6497, 126
      %v6517 = vpop.permute.xlu0 %6516
      %6518 = vrot.lane.b32.xlu0 %v6498, 126
      %v6519 = vpop.permute.xlu0 %6518
      %6520 = vrot.lane.b32.xlu0 %v6499, 126
      %v6521 = vpop.permute.xlu0 %6520
      %6522 = vrot.lane.b32.xlu0 %v6500, 126
      %v6523 = vpop.permute.xlu0 %6522
      %6524 = vrot.lane.b32.xlu0 %v6501, 126
      %v6525 = vpop.permute.xlu0 %6524
      %6526 = vrot.lane.b32.xlu0 %v6502, 126
      %v6527 = vpop.permute.xlu0 %6526
      %6528 = vrot.lane.b32.xlu0 %v6503, 126
      %v6529 = vpop.permute.xlu0 %6528
      %6530 = vrot.lane.b32.xlu0 %v6504, 126
      %v6531 = vpop.permute.xlu0 %6530
      %v6532 = vsel %vm4772, %v6515, %v6517
      %v6533 = vsel %vm4772, %v6517, %v6519
      %v6534 = vsel %vm4772, %v6519, %v6521
      %v6535 = vsel %vm4772, %v6521, %v6523
      %v6536 = vsel %vm4772, %v6523, %v6525
      %v6537 = vsel %vm4772, %v6525, %v6527
      %v6538 = vsel %vm4772, %v6527, %v6529
      %v6539 = vsel %vm4772, %v6529, %v6531
      %v6541 = vsel %vm4345, %v6487, %v5885
      %v6543 = vsel %vm4345, %v6488, %v5886
      %v6545 = vsel %vm4345, %v6489, %v5887
      %v6547 = vsel %vm4345, %v6490, %v5888
      %v6549 = vsel %vm4345, %v6491, %v5889
      %v6551 = vsel %vm4345, %v6492, %v5890
      %v6553 = vsel %vm4345, %v6493, %v5891
      %v6555 = vsel %vm4345, %v6494, %v5892
      %v6557 = vsel %vm4345, %v6495, %v5884
      %s6558 = scalar_lea.vmem %s7, 8
      %v6559 = vld [vmem:[%s6558] sm:$0xf]
      %6569 = vrot.lane.b32.xlu0 %v6541, 64
      %v6570 = vpop.permute.xlu0 %6569
      %6571 = vrot.lane.b32.xlu0 %v6543, 64
      %v6572 = vpop.permute.xlu0 %6571
      %6573 = vrot.lane.b32.xlu0 %v6545, 64
      %v6574 = vpop.permute.xlu0 %6573
      %6575 = vrot.lane.b32.xlu0 %v6547, 64
      %v6576 = vpop.permute.xlu0 %6575
      %6577 = vrot.lane.b32.xlu0 %v6549, 64
      %v6578 = vpop.permute.xlu0 %6577
      %6579 = vrot.lane.b32.xlu0 %v6551, 64
      %v6580 = vpop.permute.xlu0 %6579
      %6581 = vrot.lane.b32.xlu0 %v6553, 64
      %v6582 = vpop.permute.xlu0 %6581
      %6583 = vrot.lane.b32.xlu0 %v6555, 64
      %v6584 = vpop.permute.xlu0 %6583
      %6585 = vrot.lane.b32.xlu0 %v6557, 64
      %v6586 = vpop.permute.xlu0 %6585
      %6587 = vrot.lane.b32.xlu0 %v6532, 64
      %v6588 = vpop.permute.xlu0 %6587
      %6589 = vrot.lane.b32.xlu0 %v6533, 64
      %v6590 = vpop.permute.xlu0 %6589
      %6591 = vrot.lane.b32.xlu0 %v6534, 64
      %v6592 = vpop.permute.xlu0 %6591
      %6593 = vrot.lane.b32.xlu0 %v6535, 64
      %v6594 = vpop.permute.xlu0 %6593
      %6595 = vrot.lane.b32.xlu0 %v6536, 64
      %v6596 = vpop.permute.xlu0 %6595
      %6597 = vrot.lane.b32.xlu0 %v6537, 64
      %v6598 = vpop.permute.xlu0 %6597
      %6599 = vrot.lane.b32.xlu0 %v6538, 64
      %v6600 = vpop.permute.xlu0 %6599
      %6601 = vrot.lane.b32.xlu0 %v6539, 64
      %v6602 = vpop.permute.xlu0 %6601
      %6603 = vrot.lane.b32.xlu0 %v6531, 64
      %v6604 = vpop.permute.xlu0 %6603
      %v6605 = vsel %vm5374, %v6570, %v6572
      %v6606 = vsel %vm5374, %v6572, %v6574
      %v6607 = vsel %vm5374, %v6574, %v6576
      %v6608 = vsel %vm5374, %v6576, %v6578
      %v6609 = vsel %vm5374, %v6578, %v6580
      %v6610 = vsel %vm5374, %v6580, %v6582
      %v6611 = vsel %vm5374, %v6582, %v6584
      %v6612 = vsel %vm5374, %v6584, %v6586
      %v6613 = vsel %vm5374, %v6588, %v6590
      %v6614 = vsel %vm5374, %v6590, %v6592
      %v6615 = vsel %vm5374, %v6592, %v6594
      %v6616 = vsel %vm5374, %v6594, %v6596
      %v6617 = vsel %vm5374, %v6596, %v6598
      %v6618 = vsel %vm5374, %v6598, %v6600
      %v6619 = vsel %vm5374, %v6600, %v6602
      %v6620 = vsel %vm5374, %v6602, %v6604
      %v6630 = vsel %vm6104, %v6559, 0
      %v6633 = vsel %vm4345, %v6613, 0
      %v6636 = vsel %vm4345, %v6614, 0
      %v6639 = vsel %vm4345, %v6615, 0
      %v6642 = vsel %vm4345, %v6616, 0
      %v6645 = vsel %vm4345, %v6617, 0
      %v6648 = vsel %vm4345, %v6618, 0
      %v6651 = vsel %vm4345, %v6619, 0
      %v6654 = vsel %vm4345, %v6620, 0
      %6656 = vmatprep.subr.bf16.mxu0 %v6606
      %6657 = vmatpush1.bf16.msra.mxu0 %v6605
      %6658 = vmatprep.subr.bf16.mxu0 %v6636
      %6659 = vmatpush1.bf16.msra.mxu0 %v6633
      %6660 = vmatprep.subr.bf16.mxu0 0
      %6661 = vmatpush1.bf16.msra.mxu0 0
      %6662 = vmatprep.subr.bf16.mxu0 0
      %6663 = vmatpush1.bf16.msra.mxu0 0
      %6664 = vmatprep.subr.bf16.mxu0 0
      %6665 = vmatpush1.bf16.msra.mxu0 0
      %6666 = vmatprep.subr.bf16.mxu0 0
      %6667 = vmatpush1.bf16.msra.mxu0 0
      %6668 = vmatprep.subr.bf16.mxu0 0
      %6669 = vmatpush1.bf16.msra.mxu0 0
      %6670 = vmatprep.subr.bf16.mxu0 0
      %6671 = vmatpush1.bf16.msra.mxu0 0
      %6672 = vmatprep.subr.bf16.mxu0 0
      %6673 = vmatpush1.bf16.msra.mxu0 0
      %6674 = vmatprep.subr.bf16.mxu0 0
      %6675 = vmatpush1.bf16.msra.mxu0 0
      %6676 = vmatprep.subr.bf16.mxu0 0
      %6677 = vmatpush1.bf16.msra.mxu0 0
      %6678 = vmatprep.subr.bf16.mxu0 0
      %6679 = vmatpush1.bf16.msra.mxu0 0
      %6680 = vmatprep.subr.bf16.mxu0 0
      %6681 = vmatpush1.bf16.msra.mxu0 0
      %6682 = vmatprep.subr.bf16.mxu0 0
      %6683 = vmatpush1.bf16.msra.mxu0 0
      %6684 = vmatprep.subr.bf16.mxu0 0
      %6685 = vmatpush1.bf16.msra.mxu0 0
      %6686 = vmatprep.subr.bf16.mxu0 0
      %6687 = vmatpush1.bf16.msra.mxu0 0
      %6688 = vmatprep.mubr.bf16.mxu0 0
      %6689 = vmatmul.mubr.bf16.gmra.mrb[0].mxu0 %v6630
      %v6690 = vpop.f32.mrb[0].mxu0
      %v6691 = vadd.f32 0.0, %v6690
      %v6692 = vpop.f32.mrb[0].mxu0
      %v6693 = vadd.f32 0.0, %v6692
      %v6694 = vpop.f32.mrb[0].mxu0
      %v6695 = vpop.f32.mrb[0].mxu0
      %6696 = vdwg.mxu0
      %6697 = vmatprep.subr.bf16.mxu0 %v6608
      %6698 = vmatpush1.bf16.msra.mxu0 %v6607
      %6699 = vmatprep.subr.bf16.mxu0 %v6642
      %6700 = vmatpush1.bf16.msra.mxu0 %v6639
      %6701 = vmatprep.subr.bf16.mxu0 0
      %6702 = vmatpush1.bf16.msra.mxu0 0
      %6703 = vmatprep.subr.bf16.mxu0 0
      %6704 = vmatpush1.bf16.msra.mxu0 0
      %6705 = vmatprep.subr.bf16.mxu0 0
      %6706 = vmatpush1.bf16.msra.mxu0 0
      %6707 = vmatprep.subr.bf16.mxu0 0
      %6708 = vmatpush1.bf16.msra.mxu0 0
      %6709 = vmatprep.subr.bf16.mxu0 0
      %6710 = vmatpush1.bf16.msra.mxu0 0
      %6711 = vmatprep.subr.bf16.mxu0 0
      %6712 = vmatpush1.bf16.msra.mxu0 0
      %6713 = vmatprep.subr.bf16.mxu0 0
      %6714 = vmatpush1.bf16.msra.mxu0 0
      %6715 = vmatprep.subr.bf16.mxu0 0
      %6716 = vmatpush1.bf16.msra.mxu0 0
      %6717 = vmatprep.subr.bf16.mxu0 0
      %6718 = vmatpush1.bf16.msra.mxu0 0
      %6719 = vmatprep.subr.bf16.mxu0 0
      %6720 = vmatpush1.bf16.msra.mxu0 0
      %6721 = vmatprep.subr.bf16.mxu0 0
      %6722 = vmatpush1.bf16.msra.mxu0 0
      %6723 = vmatprep.subr.bf16.mxu0 0
      %6724 = vmatpush1.bf16.msra.mxu0 0
      %6725 = vmatprep.subr.bf16.mxu0 0
      %6726 = vmatpush1.bf16.msra.mxu0 0
      %6727 = vmatprep.subr.bf16.mxu0 0
      %6728 = vmatpush1.bf16.msra.mxu0 0
      %6729 = vmatprep.mubr.bf16.mxu0 0
      %6730 = vmatmul.mubr.bf16.gmra.mrb[0].mxu0 %v6630
      %v6731 = vpop.f32.mrb[0].mxu0
      %v6732 = vadd.f32 0.0, %v6731
      %v6733 = vpop.f32.mrb[0].mxu0
      %v6734 = vadd.f32 0.0, %v6733
      %v6735 = vpop.f32.mrb[0].mxu0
      %v6736 = vpop.f32.mrb[0].mxu0
      %6737 = vdwg.mxu0
      %6738 = vmatprep.subr.bf16.mxu0 %v6610
      %6739 = vmatpush1.bf16.msra.mxu0 %v6609
      %6740 = vmatprep.subr.bf16.mxu0 %v6648
      %6741 = vmatpush1.bf16.msra.mxu0 %v6645
      %6742 = vmatprep.subr.bf16.mxu0 0
      %6743 = vmatpush1.bf16.msra.mxu0 0
      %6744 = vmatprep.subr.bf16.mxu0 0
      %6745 = vmatpush1.bf16.msra.mxu0 0
      %6746 = vmatprep.subr.bf16.mxu0 0
      %6747 = vmatpush1.bf16.msra.mxu0 0
      %6748 = vmatprep.subr.bf16.mxu0 0
      %6749 = vmatpush1.bf16.msra.mxu0 0
      %6750 = vmatprep.subr.bf16.mxu0 0
      %6751 = vmatpush1.bf16.msra.mxu0 0
      %6752 = vmatprep.subr.bf16.mxu0 0
      %6753 = vmatpush1.bf16.msra.mxu0 0
      %6754 = vmatprep.subr.bf16.mxu0 0
      %6755 = vmatpush1.bf16.msra.mxu0 0
      %6756 = vmatprep.subr.bf16.mxu0 0
      %6757 = vmatpush1.bf16.msra.mxu0 0
      %6758 = vmatprep.subr.bf16.mxu0 0
      %6759 = vmatpush1.bf16.msra.mxu0 0
      %6760 = vmatprep.subr.bf16.mxu0 0
      %6761 = vmatpush1.bf16.msra.mxu0 0
      %6762 = vmatprep.subr.bf16.mxu0 0
      %6763 = vmatpush1.bf16.msra.mxu0 0
      %6764 = vmatprep.subr.bf16.mxu0 0
      %6765 = vmatpush1.bf16.msra.mxu0 0
      %6766 = vmatprep.subr.bf16.mxu0 0
      %6767 = vmatpush1.bf16.msra.mxu0 0
      %6768 = vmatprep.subr.bf16.mxu0 0
      %6769 = vmatpush1.bf16.msra.mxu0 0
      %6770 = vmatprep.mubr.bf16.mxu0 0
      %6771 = vmatmul.mubr.bf16.gmra.mrb[0].mxu0 %v6630
      %v6772 = vpop.f32.mrb[0].mxu0
      %v6773 = vadd.f32 0.0, %v6772
      %v6774 = vpop.f32.mrb[0].mxu0
      %v6775 = vadd.f32 0.0, %v6774
      %v6776 = vpop.f32.mrb[0].mxu0
      %v6777 = vpop.f32.mrb[0].mxu0
      %6778 = vdwg.mxu0
      %6779 = vmatprep.subr.bf16.mxu0 %v6612
      %6780 = vmatpush1.bf16.msra.mxu0 %v6611
      %6781 = vmatprep.subr.bf16.mxu0 %v6654
      %6782 = vmatpush1.bf16.msra.mxu0 %v6651
      %6783 = vmatprep.subr.bf16.mxu0 0
      %6784 = vmatpush1.bf16.msra.mxu0 0
      %6785 = vmatprep.subr.bf16.mxu0 0
      %6786 = vmatpush1.bf16.msra.mxu0 0
      %6787 = vmatprep.subr.bf16.mxu0 0
      %6788 = vmatpush1.bf16.msra.mxu0 0
      %6789 = vmatprep.subr.bf16.mxu0 0
      %6790 = vmatpush1.bf16.msra.mxu0 0
      %6791 = vmatprep.subr.bf16.mxu0 0
      %6792 = vmatpush1.bf16.msra.mxu0 0
      %6793 = vmatprep.subr.bf16.mxu0 0
      %6794 = vmatpush1.bf16.msra.mxu0 0
      %6795 = vmatprep.subr.bf16.mxu0 0
      %6796 = vmatpush1.bf16.msra.mxu0 0
      %6797 = vmatprep.subr.bf16.mxu0 0
      %6798 = vmatpush1.bf16.msra.mxu0 0
      %6799 = vmatprep.subr.bf16.mxu0 0
      %6800 = vmatpush1.bf16.msra.mxu0 0
      %6801 = vmatprep.subr.bf16.mxu0 0
      %6802 = vmatpush1.bf16.msra.mxu0 0
      %6803 = vmatprep.subr.bf16.mxu0 0
      %6804 = vmatpush1.bf16.msra.mxu0 0
      %6805 = vmatprep.subr.bf16.mxu0 0
      %6806 = vmatpush1.bf16.msra.mxu0 0
      %6807 = vmatprep.subr.bf16.mxu0 0
      %6808 = vmatpush1.bf16.msra.mxu0 0
      %6809 = vmatprep.subr.bf16.mxu0 0
      %6810 = vmatpush1.bf16.msra.mxu0 0
      %6811 = vmatprep.mubr.bf16.mxu0 0
      %6812 = vmatmul.mubr.bf16.gmra.mrb[0].mxu0 %v6630
      %v6813 = vpop.f32.mrb[0].mxu0
      %v6814 = vadd.f32 0.0, %v6813
      %v6815 = vpop.f32.mrb[0].mxu0
      %v6816 = vadd.f32 0.0, %v6815
      %v6817 = vpop.f32.mrb[0].mxu0
      %v6818 = vpop.f32.mrb[0].mxu0
      %6819 = vdwg.mxu0
      %v6820 = vadd.f32 %v6358, %v6691
      %v6821 = vadd.f32 %v6360, %v6693
      %v6822 = vadd.f32 %v6399, %v6732
      %v6823 = vadd.f32 %v6401, %v6734
      %v6824 = vadd.f32 %v6440, %v6773
      %v6825 = vadd.f32 %v6442, %v6775
      %v6826 = vadd.f32 %v6481, %v6814
      %v6827 = vadd.f32 %v6483, %v6816
      %v6828 = vld [vmem:[%s8] sm:$0xff]
      %6830 = vset.pattern.permute.xlu0 0
      %6831 = vperm.xlu0 %6830, %v6828
      %v6832 = vpop.permute.xlu0 %6831
      %v6834 = vadd.f32 %v6820, %v6832
      %v6835 = vadd.f32 %v6821, %v6832
      %v6836 = vadd.f32 %v6822, %v6832
      %v6837 = vadd.f32 %v6823, %v6832
      %v6838 = vadd.f32 %v6824, %v6832
      %v6839 = vadd.f32 %v6825, %v6832
      %v6840 = vadd.f32 %v6826, %v6832
      %v6841 = vadd.f32 %v6827, %v6832
      %v6842 = vmax.f32 %v6834, 0.0
      %v6843 = vmax.f32 %v6835, 0.0
      %v6844 = vmax.f32 %v6836, 0.0
      %v6845 = vmax.f32 %v6837, 0.0
      %v6846 = vmax.f32 %v6838, 0.0
      %v6847 = vmax.f32 %v6839, 0.0
      %v6848 = vmax.f32 %v6840, 0.0
      %v6849 = vmax.f32 %v6841, 0.0
      %6850 = vst [vmem:[%s352] sm:$0xff] %v6842
      %6851 = vst [vmem:[%s352 + $0x8] sm:$0xff] %v6843
      %6852 = vst [vmem:[%s352 + $0x10] sm:$0xff] %v6844
      %6853 = vst [vmem:[%s352 + $0x18] sm:$0xff] %v6845
      %6854 = vst [vmem:[%s352 + $0x20] sm:$0xff] %v6846
      %6855 = vst [vmem:[%s352 + $0x28] sm:$0xff] %v6847
      %6856 = vst [vmem:[%s352 + $0x30] sm:$0xff] %v6848
      %6857 = vst [vmem:[%s352 + $0x38] sm:$0xff] %v6849
      %p6858 = scmp.lt.s32.totalorder %s20, 1
      %s6859 = scalar_select %p6858, %s20, 1
      %s6860 = smul.addr %s6859, 8
      %s6861 = smul.addr %s6860, 8
      %s6862 = scalar_lea.vmem %s9, %s6861
      // Predicated region
      $region57: #{decoder_forward.3} parent=55 // pred_check
        %p6863 = pneg %p237
      $region58: #{decoder_forward.3} parent=55 // pred_check_branch
        %6865 = sbr.rel (%p6863) target = $region60
      $region59: #{decoder_forward.3} parent=55 // pred_region
        _
      $region60: #{decoder_forward.3} parent=55 // pred_fallthru
        _
    $region56: #{decoder_forward.3} parent=5 // pred_fallthru
      _
    %p6866 = scmp.le.s32.totalorder 2, %s15
    // Predicated region
    $region61: #{decoder_forward.3} parent=5 // pred_check
      %p6867 = pneg %p6866
    $region62: #{decoder_forward.3} parent=5 // pred_check_branch
      %6869 = sbr.rel (%p6867) target = $region64
    $region63: #{decoder_forward.3} parent=5 // pred_region
      %s6870 = ssub.s32 %s15, 2
      // Predicated region
      $region65: #{decoder_forward.3} parent=63 // pred_check
        %p6871 = pneg %p243
      $region66: #{decoder_forward.3} parent=63 // pred_check_branch
        %6873 = sbr.rel (%p6871) target = $region68
      $region67: #{decoder_forward.3} parent=63 // pred_region
        %p6874 = scmp.lt.s32.totalorder %s21, 1
        %s6875 = scalar_select %p6874, %s21, 1
        %s6876 = smul.addr %s6875, 8
        %s6877 = smul.addr %s6876, 8
        %s6878 = scalar_lea.vmem %s9, %s6877
      $region68: #{decoder_forward.3} parent=63 // pred_fallthru
        _
    $region64: #{decoder_forward.3} parent=5 // pred_fallthru
      _
  $region6: #{decoder_forward.3} parent=0 // loop_footer
    %s19 = sadd.s32 1, %s15
  $region7: #{decoder_forward.3} parent=0 // loop_footer_branch
    %14 = sbr.rel target = $region3
  $region8: #{decoder_forward.3} parent=0 // loop_exit
    _

</llo_original>
